<compile_context>
chip_gen: v7x
topology: tpu7x:2x2x1
jax: 0.10.0
libtpu: 0.0.40
codegen_flags: <defaults>
</compile_context>

<pallas_src>
import numpy as np
import jax
import jax.numpy as jnp
from jax import lax
from jax.experimental import pallas as pl
from jax.experimental.pallas import tpu as pltpu


PHASES = ((0, 0), (0, 1), (1, 0), (1, 1))
# stride-2 / pad-1 / k=4 deconv on a dense grid: output parity r ->
#   ((kernel idx k, input offset d), ...)
_S = {0: ((1, 0), (3, -1)), 1: ((2, 0), (0, 1))}
# stride-2 deconv consuming a phase-separated (parity r over block grid) input:
#   output mod-4 phase p -> ((input parity r, kernel idx k, block offset d), ...)
_C5 = {
    0: ((0, 1, 0), (1, 3, -1)),
    1: ((0, 2, 0), (1, 0, 0)),
    2: ((0, 3, 0), (1, 1, 0)),
    3: ((0, 0, 1), (1, 2, 0)),
}


# --------------------------- host-side constant tables ----------------------

def _masks9_np(h, w, n):
    """(9, n*h*w) validity masks indexed by (dy+1)*3+(dx+1) for dy,dx in {-1,0,1}."""
    cols = np.arange(n * h * w)
    jx = cols % w
    jy = (cols // w) % h
    rows = []
    for dy in (-1, 0, 1):
        for dx in (-1, 0, 1):
            ok = ((jy + dy >= 0) & (jy + dy <= h - 1)
                  & (jx + dx >= 0) & (jx + dx <= w - 1))
            rows.append(ok.astype(np.float32))
    return np.stack(rows)


def _q_np(hin):
    """(4*hin*hin, 4*hin*hin) stacked 0/1 interleave: rows (phase, y, x) -> cols (Y, X)."""
    hout = 2 * hin
    q = np.zeros((4 * hin * hin, hout * hout), np.float32)
    for pidx, (ry, rx) in enumerate(PHASES):
        for y in range(hin):
            for x in range(hin):
                q[pidx * hin * hin + y * hin + x,
                  (2 * y + ry) * hout + (2 * x + rx)] = 1.0
    return q


def _full_spec(shape):
    zeros = (0,) * len(shape)
    return pl.BlockSpec(shape, lambda i: zeros)


# --------------------------------- forward ----------------------------------

def generator_forward(z_nchw, p):
    n, zdim = z_nchw.shape[0], z_nchw.shape[1]
    c1, c2 = p["w1"].shape[1], p["w2"].shape[1]
    c3, c4, c5 = p["w3"].shape[1], p["w4"].shape[1], p["w5"].shape[1]
    c4p = max(8, ((c4 + 7) // 8) * 8)
    c5p = max(8, ((c5 + 7) // 8) * 8)
    f32 = jnp.float32
    L = n * 256                      # columns of one 16x16 phase block

    # ---- weight layouts: tap-major rows ((ky*4+kx)*Cout + c, Cin) -----------
    def w_tap_major(w, cpad=None):
        cin, cout = w.shape[0], w.shape[1]
        cpad = cout if cpad is None else cpad
        wt = jnp.transpose(w, (2, 3, 1, 0)).reshape(16, cout, cin)
        if cpad > cout:
            wt = jnp.pad(wt, ((0, 0), (0, cpad - cout), (0, 0)))
        return wt.reshape(16 * cpad, cin).astype(f32)

    w2t = w_tap_major(p["w2"])                       # (16*c2,  c1)
    w3t = w_tap_major(p["w3"])                       # (16*c3,  c2)
    w4t = w_tap_major(p["w4"], c4p)                  # (16*c4p, c3)
    w5t = jnp.transpose(p["w5"], (2, 3, 1, 0)).reshape(16, c5, c4)
    w5t = jnp.pad(w5t, ((0, 0), (0, c5p - c5), (0, c4p - c4)))
    w5t = w5t.reshape(16 * c5p, c4p).astype(f32)     # (16*c5p, c4p)

    # ---- layer-1 operands: a1 = w1rT @ zexpT, columns = (n, oy*4+ox) --------
    z2 = z_nchw.reshape(n, zdim).astype(f32)
    eye = jnp.eye(16, dtype=f32)
    zexpT = jnp.einsum("nc,kl->cknl", z2, eye).reshape(zdim * 16, n * 16)
    w1rT = jnp.transpose(p["w1"], (1, 0, 2, 3)).reshape(c1, zdim * 16).astype(f32)

    # ---- packed per-channel parameter table (conv biases b1..b4 dropped) ----
    tab = jnp.zeros((c1, 9), f32)
    for idx, v in enumerate([p["g1"], p["be1"], p["g2"], p["be2"],
                             p["g3"], p["be3"], p["g4"], p["be4"], p["b5"]]):
        tab = tab.at[: v.shape[0], idx].set(v.astype(f32))

    q2 = jnp.asarray(_q_np(4))                       # (64, 64)
    q3 = jnp.asarray(_q_np(8))                       # (256, 256)
    m4 = jnp.asarray(_masks9_np(4, 4, n))            # (9, n*16)
    m8 = jnp.asarray(_masks9_np(8, 8, n))            # (9, n*64)
    m16 = jnp.asarray(_masks9_np(16, 16, n))         # (9, n*256)

    out_shape = (c5p, 16 * L)

    # ------------------------------ kernel ----------------------------------
    def kernel(zexpT_ref, w1_ref, w2_ref, w3_ref, w4_ref, w5_ref,
               tab_ref, q2_ref, q3_ref, m4_ref, m8_ref, m16_ref, out_ref):

        def shift_mask(x, dy, dx, width, masks):
            # out[:, c] = x[:, c + dy*width + dx] when the source is a valid
            # same-image grid neighbour, else 0 (circular concat + one mask).
            if dy == 0 and dx == 0:
                return x
            s = dy * width + dx
            y = jnp.concatenate([x[:, s:], x[:, :s]], axis=1)
            midx = (dy + 1) * 3 + (dx + 1)
            return y * masks[midx:midx + 1, :]

        def overlap_add(pt, cout, width, masks):
            # pt: (16*cout, L) per-tap projections -> 4 phase blocks (cout, L)
            phases = {}
            for ry, rx in PHASES:
                acc = None
                for ky, dy in _S[ry]:
                    for kx, dx in _S[rx]:
                        tap = ky * 4 + kx
                        t = shift_mask(pt[tap * cout:(tap + 1) * cout, :],
                                       dy, dx, width, masks)
                        acc = t if acc is None else acc + t
                phases[(ry, rx)] = acc
            return phases

        def interleave(phases, hin, q):
            # 4 phase blocks (C, n*hin*hin) -> dense (C, n*(2hin)^2) via one
            # stacked-contraction 0/1 matmul per image.
            hw = hin * hin
            outs = []
            for img in range(n):
                xn = jnp.concatenate(
                    [phases[ph][:, img * hw:(img + 1) * hw] for ph in PHASES],
                    axis=1)
                outs.append(jnp.dot(xn, q, preferred_element_type=f32))
            return jnp.concatenate(outs, axis=1)

        def bn_relu(x, g, be):
            # training-mode batch stats, biased variance, one pass (sum/sumsq)
            r = x.shape[1]
            s1 = jnp.sum(x, axis=1, keepdims=True)
            s2 = jnp.sum(x * x, axis=1, keepdims=True)
            mean = s1 * (1.0 / r)
            var = s2 * (1.0 / r) - mean * mean
            scale = g * lax.rsqrt(var + 1e-5)
            return jnp.maximum((x - mean) * scale + be, 0.0)

        tab = tab_ref[...]
        m4v, m8v, m16v = m4_ref[...], m8_ref[...], m16_ref[...]

        # ---- layer 1: ConvT(k=4, s=1, p=0) on 1x1 input (prebuilt Zexp) -----
        a1 = bn_relu(jnp.dot(w1_ref[...], zexpT_ref[...],
                             preferred_element_type=f32),
                     tab[:c1, 0:1], tab[:c1, 1:2])            # (c1, n*16)

        # ---- layer 2: 4x4 -> 8x8 --------------------------------------------
        p2 = jnp.dot(w2_ref[...], a1, preferred_element_type=f32)
        ph2 = overlap_add(p2, c2, 4, m4v)
        a2 = bn_relu(interleave(ph2, 4, q2_ref[...]),
                     tab[:c2, 2:3], tab[:c2, 3:4])            # (c2, n*64)

        # ---- layer 3: 8x8 -> 16x16 ------------------------------------------
        p3 = jnp.dot(w3_ref[...], a2, preferred_element_type=f32)
        ph3 = overlap_add(p3, c3, 8, m8v)
        a3 = bn_relu(interleave(ph3, 8, q3_ref[...]),
                     tab[:c3, 4:5], tab[:c3, 5:6])            # (c3, n*256)

        # ---- layer 4: 16x16 -> 32x32, kept phase-separated over 16x16 grid --
        p4 = jnp.dot(w4_ref[...], a3, preferred_element_type=f32)  # (16*c4p, L)
        ph4 = overlap_add(p4, c4p, 16, m16v)
        b4cat = jnp.concatenate([ph4[ph] for ph in PHASES], axis=1)  # (c4p, 4L)
        a4cat = bn_relu(b4cat, tab[:c4p, 6:7], tab[:c4p, 7:8])

        # ---- layer 5: per-tap projection then VPU overlap-add + tanh --------
        p5 = jnp.dot(w5_ref[...], a4cat, preferred_element_type=f32)  # (16*c5p, 4L)
        b5 = tab[:c5p, 8:9]
        blocks = []
        for py in range(4):
            for px in range(4):
                acc = None
                for ry, ky, dy in _C5[py]:
                    for rx, kx, dx in _C5[px]:
                        tap = ky * 4 + kx
                        pid = ry * 2 + rx
                        piece = p5[tap * c5p:(tap + 1) * c5p,
                                   pid * L:(pid + 1) * L]
                        t = shift_mask(piece, dy, dx, 16, m16v)
                        acc = t if acc is None else acc + t
                blocks.append(jnp.tanh(acc + b5))
        out_ref[...] = jnp.concatenate(blocks, axis=1)        # (c5p, 16*L)

    args = (zexpT, w1rT, w2t, w3t, w4t, w5t, tab, q2, q3, m4, m8, m16)

    out = pl.pallas_call(
        kernel,
        out_shape=jax.ShapeDtypeStruct(out_shape, f32),
        grid=(1,),
        in_specs=[_full_spec(a.shape) for a in args],
        out_specs=_full_spec(out_shape),
        compiler_params=pltpu.CompilerParams(
            dimension_semantics=("arbitrary",),
            vmem_limit_bytes=32 * 1024 * 1024),
    )(*args)

    # (c, py, px, n, my, mx) -> (n, c, 4*my+py, 4*mx+px): cheap host-side shuffle
    img = out[:c5].reshape(c5, 4, 4, n, 16, 16)
    img = img.transpose(3, 0, 4, 1, 5, 2).reshape(n, c5, 64, 64)
    return img


# --------------------------- pure-JAX reference -----------------------------

def _conv_transpose_ref(x_nchw, w, b, stride, padding):
    cin, cout, kh, kw = w.shape
    w_conv = jnp.flip(w, (2, 3)).transpose(1, 0, 2, 3)        # (Cout, Cin, kh, kw)
    y = lax.conv_general_dilated(
        x_nchw, w_conv, window_strides=(1, 1),
        padding=[(kh - 1 - padding, kh - 1 - padding),
                 (kw - 1 - padding, kw - 1 - padding)],
        lhs_dilation=(stride, stride),
        dimension_numbers=("NCHW", "OIHW", "NCHW"))
    return y + b.reshape(1, cout, 1, 1)


def _bn_relu_ref(y, g, be, eps=1e-5):
    mean = jnp.mean(y, axis=(0, 2, 3), keepdims=True)
    var = jnp.mean((y - mean) ** 2, axis=(0, 2, 3), keepdims=True)
    yn = (y - mean) / jnp.sqrt(var + eps) * g.reshape(1, -1, 1, 1) + be.reshape(1, -1, 1, 1)
    return jnp.maximum(yn, 0.0)


def generator_ref(z, p):
    x = _bn_relu_ref(_conv_transpose_ref(z, p["w1"], p["b1"], 1, 0), p["g1"], p["be1"])
    x = _bn_relu_ref(_conv_transpose_ref(x, p["w2"], p["b2"], 2, 1), p["g2"], p["be2"])
    x = _bn_relu_ref(_conv_transpose_ref(x, p["w3"], p["b3"], 2, 1), p["g3"], p["be3"])
    x = _bn_relu_ref(_conv_transpose_ref(x, p["w4"], p["b4"], 2, 1), p["g4"], p["be4"])
    return jnp.tanh(_conv_transpose_ref(x, p["w5"], p["b5"], 2, 1))


# ----------------------------------- main -----------------------------------

if __name__ == "__main__":
    # Small config consistent with the module: generator(d) with d=4, Z_DIM=16.
    N, Z_DIM, D = 2, 16, 4
    c1, c2, c3, c4, c5 = D * 64, D * 32, D * 16, D, 3

    key = jax.random.PRNGKey(0)
    ks = jax.random.split(key, 16)

    def conv_w(k, cin, cout):
        # matches weight_init(0.0, 0.02): weight ~ N(0, 0.02), bias = 0
        return 0.02 * jax.random.normal(k, (cin, cout, 4, 4), jnp.float32)

    params = {
        "w1": conv_w(ks[0], Z_DIM, c1), "b1": jnp.zeros((c1,), jnp.float32),
        "w2": conv_w(ks[1], c1, c2),   "b2": jnp.zeros((c2,), jnp.float32),
        "w3": conv_w(ks[2], c2, c3),   "b3": jnp.zeros((c3,), jnp.float32),
        "w4": conv_w(ks[3], c3, c4),   "b4": jnp.zeros((c4,), jnp.float32),
        "w5": conv_w(ks[4], c4, c5),   "b5": jnp.zeros((c5,), jnp.float32),
        "g1": 1.0 + 0.1 * jax.random.normal(ks[5], (c1,), jnp.float32),
        "be1": 0.05 * jax.random.normal(ks[6], (c1,), jnp.float32),
        "g2": 1.0 + 0.1 * jax.random.normal(ks[7], (c2,), jnp.float32),
        "be2": 0.05 * jax.random.normal(ks[8], (c2,), jnp.float32),
        "g3": 1.0 + 0.1 * jax.random.normal(ks[9], (c3,), jnp.float32),
        "be3": 0.05 * jax.random.normal(ks[10], (c3,), jnp.float32),
        "g4": 1.0 + 0.1 * jax.random.normal(ks[11], (c4,), jnp.float32),
        "be4": 0.05 * jax.random.normal(ks[12], (c4,), jnp.float32),
    }

    z = jax.random.normal(ks[13], (N, Z_DIM, 1, 1), jnp.float32)

    out = jax.jit(generator_forward)(z, params)
    out = jax.block_until_ready(out)
    assert out.shape == (N, 3, 64, 64), out.shape

    ref = jax.block_until_ready(generator_ref(z, params))
    assert jnp.allclose(out, ref, atol=2e-3, rtol=2e-3), float(jnp.max(jnp.abs(out - ref)))

    print("KERNEL_OK")
</pallas_src>

<mosaic_0001>
module attributes {stable_mosaic.version = 11 : i64} {
  func.func @kernel(%arg0: i32, %arg1: memref<256x32xf32, #tpu.memory_space<vmem>>, %arg2: memref<256x256xf32, #tpu.memory_space<vmem>>, %arg3: memref<2048x256xf32, #tpu.memory_space<vmem>>, %arg4: memref<1024x128xf32, #tpu.memory_space<vmem>>, %arg5: memref<128x64xf32, #tpu.memory_space<vmem>>, %arg6: memref<128x8xf32, #tpu.memory_space<vmem>>, %arg7: memref<256x9xf32, #tpu.memory_space<vmem>>, %arg8: memref<64x64xf32, #tpu.memory_space<vmem>>, %arg9: memref<256x256xf32, #tpu.memory_space<vmem>>, %arg10: memref<9x32xf32, #tpu.memory_space<vmem>>, %arg11: memref<9x128xf32, #tpu.memory_space<vmem>>, %arg12: memref<9x512xf32, #tpu.memory_space<vmem>>, %arg13: memref<8x8192xf32, #tpu.memory_space<vmem>>) attributes {dimension_semantics = [#tpu.dimension_semantics<arbitrary>], iteration_bounds = array<i64: 1>, scalar_prefetch = 0 : i64, scratch_operands = 0 : i64, tpu.core_type = #tpu.core_type<tc>, window_params = [{pipeline_mode = #tpu.pipeline_mode<synchronous>, transform_indices = @transform_0, window_bounds = array<i64: 256, 32>}, {pipeline_mode = #tpu.pipeline_mode<synchronous>, transform_indices = @transform_1, window_bounds = array<i64: 256, 256>}, {pipeline_mode = #tpu.pipeline_mode<synchronous>, transform_indices = @transform_2, window_bounds = array<i64: 2048, 256>}, {pipeline_mode = #tpu.pipeline_mode<synchronous>, transform_indices = @transform_3, window_bounds = array<i64: 1024, 128>}, {pipeline_mode = #tpu.pipeline_mode<synchronous>, transform_indices = @transform_4, window_bounds = array<i64: 128, 64>}, {pipeline_mode = #tpu.pipeline_mode<synchronous>, transform_indices = @transform_5, window_bounds = array<i64: 128, 8>}, {pipeline_mode = #tpu.pipeline_mode<synchronous>, transform_indices = @transform_6, window_bounds = array<i64: 256, 9>}, {pipeline_mode = #tpu.pipeline_mode<synchronous>, transform_indices = @transform_7, window_bounds = array<i64: 64, 64>}, {pipeline_mode = #tpu.pipeline_mode<synchronous>, transform_indices = @transform_8, window_bounds = array<i64: 256, 256>}, {pipeline_mode = #tpu.pipeline_mode<synchronous>, transform_indices = @transform_9, window_bounds = array<i64: 9, 32>}, {pipeline_mode = #tpu.pipeline_mode<synchronous>, transform_indices = @transform_10, window_bounds = array<i64: 9, 128>}, {pipeline_mode = #tpu.pipeline_mode<synchronous>, transform_indices = @transform_11, window_bounds = array<i64: 9, 512>}, {pipeline_mode = #tpu.pipeline_mode<synchronous>, transform_indices = @transform_12, window_bounds = array<i64: 8, 8192>}]} {
    %c0 = arith.constant 0 : index
    %c0_0 = arith.constant 0 : index
    %0 = vector.load %arg7[%c0, %c0_0] : memref<256x9xf32, #tpu.memory_space<vmem>>, vector<256x9xf32>
    %c0_1 = arith.constant 0 : index
    %c0_2 = arith.constant 0 : index
    %1 = vector.load %arg10[%c0_1, %c0_2] : memref<9x32xf32, #tpu.memory_space<vmem>>, vector<9x32xf32>
    %c0_3 = arith.constant 0 : index
    %c0_4 = arith.constant 0 : index
    %2 = vector.load %arg11[%c0_3, %c0_4] : memref<9x128xf32, #tpu.memory_space<vmem>>, vector<9x128xf32>
    %c0_5 = arith.constant 0 : index
    %c0_6 = arith.constant 0 : index
    %3 = vector.load %arg12[%c0_5, %c0_6] : memref<9x512xf32, #tpu.memory_space<vmem>>, vector<9x512xf32>
    %c0_7 = arith.constant 0 : index
    %c0_8 = arith.constant 0 : index
    %4 = vector.load %arg2[%c0_7, %c0_8] : memref<256x256xf32, #tpu.memory_space<vmem>>, vector<256x256xf32>
    %c0_9 = arith.constant 0 : index
    %c0_10 = arith.constant 0 : index
    %5 = vector.load %arg1[%c0_9, %c0_10] : memref<256x32xf32, #tpu.memory_space<vmem>>, vector<256x32xf32>
    %cst = arith.constant dense<0.000000e+00> : vector<256x32xf32>
    %6 = tpu.matmul %4, %5, %cst {dimension_numbers = #tpu.dot_dimension_numbers<[1], [0], [0], [1], [0, 0, 1, 1], [], []>} : vector<256x256xf32>, vector<256x32xf32>, vector<256x32xf32> -> vector<256x32xf32>
    %7 = vector.extract_strided_slice %0 {offsets = [0, 0], sizes = [256, 1], strides = [1, 1]} : vector<256x9xf32> to vector<256x1xf32>
    %8 = vector.extract_strided_slice %0 {offsets = [0, 1], sizes = [256, 1], strides = [1, 1]} : vector<256x9xf32> to vector<256x1xf32>
    %cst_11 = arith.constant dense<0.000000e+00> : vector<256xf32>
    %9 = vector.multi_reduction <add>, %6, %cst_11 [1] : vector<256x32xf32> to vector<256xf32>
    %10 = vector.shape_cast %9 : vector<256xf32> to vector<256x1xf32>
    %11 = arith.mulf %6, %6 : vector<256x32xf32>
    %cst_12 = arith.constant dense<0.000000e+00> : vector<256xf32>
    %12 = vector.multi_reduction <add>, %11, %cst_12 [1] : vector<256x32xf32> to vector<256xf32>
    %13 = vector.shape_cast %12 : vector<256xf32> to vector<256x1xf32>
    %cst_13 = arith.constant 3.125000e-02 : f32
    %14 = vector.broadcast %cst_13 : f32 to vector<256x1xf32>
    %15 = arith.mulf %10, %14 : vector<256x1xf32>
    %cst_14 = arith.constant 3.125000e-02 : f32
    %16 = vector.broadcast %cst_14 : f32 to vector<256x1xf32>
    %17 = arith.mulf %13, %16 : vector<256x1xf32>
    %18 = arith.mulf %15, %15 : vector<256x1xf32>
    %19 = arith.subf %17, %18 : vector<256x1xf32>
    %cst_15 = arith.constant 9.99999974E-6 : f32
    %20 = vector.broadcast %cst_15 : f32 to vector<256x1xf32>
    %21 = arith.addf %19, %20 : vector<256x1xf32>
    %22 = math.rsqrt %21 : vector<256x1xf32>
    %23 = arith.mulf %7, %22 : vector<256x1xf32>
    %24 = vector.broadcast %15 : vector<256x1xf32> to vector<256x32xf32>
    %25 = arith.subf %6, %24 : vector<256x32xf32>
    %26 = vector.broadcast %23 : vector<256x1xf32> to vector<256x32xf32>
    %27 = arith.mulf %25, %26 : vector<256x32xf32>
    %28 = vector.broadcast %8 : vector<256x1xf32> to vector<256x32xf32>
    %29 = arith.addf %27, %28 : vector<256x32xf32>
    %cst_16 = arith.constant 0.000000e+00 : f32
    %30 = vector.broadcast %cst_16 : f32 to vector<256x32xf32>
    %31 = arith.maximumf %29, %30 : vector<256x32xf32>
    %c0_17 = arith.constant 0 : index
    %c0_18 = arith.constant 0 : index
    %32 = vector.load %arg3[%c0_17, %c0_18] : memref<2048x256xf32, #tpu.memory_space<vmem>>, vector<2048x256xf32>
    %cst_19 = arith.constant dense<0.000000e+00> : vector<2048x32xf32>
    %33 = tpu.matmul %32, %31, %cst_19 {dimension_numbers = #tpu.dot_dimension_numbers<[1], [0], [0], [1], [0, 0, 1, 1], [], []>} : vector<2048x256xf32>, vector<256x32xf32>, vector<2048x32xf32> -> vector<2048x32xf32>
    %34 = vector.extract_strided_slice %33 {offsets = [640, 0], sizes = [128, 32], strides = [1, 1]} : vector<2048x32xf32> to vector<128x32xf32>
    %35 = vector.extract_strided_slice %33 {offsets = [896, 0], sizes = [128, 32], strides = [1, 1]} : vector<2048x32xf32> to vector<128x32xf32>
    %36 = vector.extract_strided_slice %35 {offsets = [0, 31], sizes = [128, 1], strides = [1, 1]} : vector<128x32xf32> to vector<128x1xf32>
    %37 = vector.extract_strided_slice %35 {offsets = [0, 0], sizes = [128, 31], strides = [1, 1]} : vector<128x32xf32> to vector<128x31xf32>
    %38 = tpu.concatenate %36, %37 in 1 : vector<128x1xf32>, vector<128x31xf32> -> vector<128x32xf32>
    %39 = vector.extract_strided_slice %1 {offsets = [3, 0], sizes = [1, 32], strides = [1, 1]} : vector<9x32xf32> to vector<1x32xf32>
    %40 = vector.broadcast %39 : vector<1x32xf32> to vector<128x32xf32>
    %41 = arith.mulf %38, %40 : vector<128x32xf32>
    %42 = arith.addf %34, %41 : vector<128x32xf32>
    %43 = vector.extract_strided_slice %33 {offsets = [1664, 0], sizes = [128, 32], strides = [1, 1]} : vector<2048x32xf32> to vector<128x32xf32>
    %44 = vector.extract_strided_slice %43 {offsets = [0, 28], sizes = [128, 4], strides = [1, 1]} : vector<128x32xf32> to vector<128x4xf32>
    %45 = vector.extract_strided_slice %43 {offsets = [0, 0], sizes = [128, 28], strides = [1, 1]} : vector<128x32xf32> to vector<128x28xf32>
    %46 = tpu.concatenate %44, %45 in 1 : vector<128x4xf32>, vector<128x28xf32> -> vector<128x32xf32>
    %47 = vector.extract_strided_slice %1 {offsets = [1, 0], sizes = [1, 32], strides = [1, 1]} : vector<9x32xf32> to vector<1x32xf32>
    %48 = vector.broadcast %47 : vector<1x32xf32> to vector<128x32xf32>
    %49 = arith.mulf %46, %48 : vector<128x32xf32>
    %50 = arith.addf %42, %49 : vector<128x32xf32>
    %51 = vector.extract_strided_slice %33 {offsets = [1920, 0], sizes = [128, 32], strides = [1, 1]} : vector<2048x32xf32> to vector<128x32xf32>
    %52 = vector.extract_strided_slice %51 {offsets = [0, 27], sizes = [128, 5], strides = [1, 1]} : vector<128x32xf32> to vector<128x5xf32>
    %53 = vector.extract_strided_slice %51 {offsets = [0, 0], sizes = [128, 27], strides = [1, 1]} : vector<128x32xf32> to vector<128x27xf32>
    %54 = tpu.concatenate %52, %53 in 1 : vector<128x5xf32>, vector<128x27xf32> -> vector<128x32xf32>
    %55 = vector.extract_strided_slice %1 {offsets = [0, 0], sizes = [1, 32], strides = [1, 1]} : vector<9x32xf32> to vector<1x32xf32>
    %56 = vector.broadcast %55 : vector<1x32xf32> to vector<128x32xf32>
    %57 = arith.mulf %54, %56 : vector<128x32xf32>
    %58 = arith.addf %50, %57 : vector<128x32xf32>
    %59 = vector.extract_strided_slice %33 {offsets = [768, 0], sizes = [128, 32], strides = [1, 1]} : vector<2048x32xf32> to vector<128x32xf32>
    %60 = vector.extract_strided_slice %33 {offsets = [512, 0], sizes = [128, 32], strides = [1, 1]} : vector<2048x32xf32> to vector<128x32xf32>
    %61 = vector.extract_strided_slice %60 {offsets = [0, 1], sizes = [128, 31], strides = [1, 1]} : vector<128x32xf32> to vector<128x31xf32>
    %62 = vector.extract_strided_slice %60 {offsets = [0, 0], sizes = [128, 1], strides = [1, 1]} : vector<128x32xf32> to vector<128x1xf32>
    %63 = tpu.concatenate %61, %62 in 1 : vector<128x31xf32>, vector<128x1xf32> -> vector<128x32xf32>
    %64 = vector.extract_strided_slice %1 {offsets = [5, 0], sizes = [1, 32], strides = [1, 1]} : vector<9x32xf32> to vector<1x32xf32>
    %65 = vector.broadcast %64 : vector<1x32xf32> to vector<128x32xf32>
    %66 = arith.mulf %63, %65 : vector<128x32xf32>
    %67 = arith.addf %59, %66 : vector<128x32xf32>
    %68 = vector.extract_strided_slice %33 {offsets = [1792, 0], sizes = [128, 32], strides = [1, 1]} : vector<2048x32xf32> to vector<128x32xf32>
    %69 = vector.extract_strided_slice %68 {offsets = [0, 28], sizes = [128, 4], strides = [1, 1]} : vector<128x32xf32> to vector<128x4xf32>
    %70 = vector.extract_strided_slice %68 {offsets = [0, 0], sizes = [128, 28], strides = [1, 1]} : vector<128x32xf32> to vector<128x28xf32>
    %71 = tpu.concatenate %69, %70 in 1 : vector<128x4xf32>, vector<128x28xf32> -> vector<128x32xf32>
    %72 = vector.extract_strided_slice %1 {offsets = [1, 0], sizes = [1, 32], strides = [1, 1]} : vector<9x32xf32> to vector<1x32xf32>
    %73 = vector.broadcast %72 : vector<1x32xf32> to vector<128x32xf32>
    %74 = arith.mulf %71, %73 : vector<128x32xf32>
    %75 = arith.addf %67, %74 : vector<128x32xf32>
    %76 = vector.extract_strided_slice %33 {offsets = [1536, 0], sizes = [128, 32], strides = [1, 1]} : vector<2048x32xf32> to vector<128x32xf32>
    %77 = vector.extract_strided_slice %76 {offsets = [0, 29], sizes = [128, 3], strides = [1, 1]} : vector<128x32xf32> to vector<128x3xf32>
    %78 = vector.extract_strided_slice %76 {offsets = [0, 0], sizes = [128, 29], strides = [1, 1]} : vector<128x32xf32> to vector<128x29xf32>
    %79 = tpu.concatenate %77, %78 in 1 : vector<128x3xf32>, vector<128x29xf32> -> vector<128x32xf32>
    %80 = vector.extract_strided_slice %1 {offsets = [2, 0], sizes = [1, 32], strides = [1, 1]} : vector<9x32xf32> to vector<1x32xf32>
    %81 = vector.broadcast %80 : vector<1x32xf32> to vector<128x32xf32>
    %82 = arith.mulf %79, %81 : vector<128x32xf32>
    %83 = arith.addf %75, %82 : vector<128x32xf32>
    %84 = vector.extract_strided_slice %33 {offsets = [1152, 0], sizes = [128, 32], strides = [1, 1]} : vector<2048x32xf32> to vector<128x32xf32>
    %85 = vector.extract_strided_slice %33 {offsets = [1408, 0], sizes = [128, 32], strides = [1, 1]} : vector<2048x32xf32> to vector<128x32xf32>
    %86 = vector.extract_strided_slice %85 {offsets = [0, 31], sizes = [128, 1], strides = [1, 1]} : vector<128x32xf32> to vector<128x1xf32>
    %87 = vector.extract_strided_slice %85 {offsets = [0, 0], sizes = [128, 31], strides = [1, 1]} : vector<128x32xf32> to vector<128x31xf32>
    %88 = tpu.concatenate %86, %87 in 1 : vector<128x1xf32>, vector<128x31xf32> -> vector<128x32xf32>
    %89 = vector.extract_strided_slice %1 {offsets = [3, 0], sizes = [1, 32], strides = [1, 1]} : vector<9x32xf32> to vector<1x32xf32>
    %90 = vector.broadcast %89 : vector<1x32xf32> to vector<128x32xf32>
    %91 = arith.mulf %88, %90 : vector<128x32xf32>
    %92 = arith.addf %84, %91 : vector<128x32xf32>
    %93 = vector.extract_strided_slice %33 {offsets = [128, 0], sizes = [128, 32], strides = [1, 1]} : vector<2048x32xf32> to vector<128x32xf32>
    %94 = vector.extract_strided_slice %93 {offsets = [0, 4], sizes = [128, 28], strides = [1, 1]} : vector<128x32xf32> to vector<128x28xf32>
    %95 = vector.extract_strided_slice %93 {offsets = [0, 0], sizes = [128, 4], strides = [1, 1]} : vector<128x32xf32> to vector<128x4xf32>
    %96 = tpu.concatenate %94, %95 in 1 : vector<128x28xf32>, vector<128x4xf32> -> vector<128x32xf32>
    %97 = vector.extract_strided_slice %1 {offsets = [7, 0], sizes = [1, 32], strides = [1, 1]} : vector<9x32xf32> to vector<1x32xf32>
    %98 = vector.broadcast %97 : vector<1x32xf32> to vector<128x32xf32>
    %99 = arith.mulf %96, %98 : vector<128x32xf32>
    %100 = arith.addf %92, %99 : vector<128x32xf32>
    %101 = vector.extract_strided_slice %33 {offsets = [384, 0], sizes = [128, 32], strides = [1, 1]} : vector<2048x32xf32> to vector<128x32xf32>
    %102 = vector.extract_strided_slice %101 {offsets = [0, 3], sizes = [128, 29], strides = [1, 1]} : vector<128x32xf32> to vector<128x29xf32>
    %103 = vector.extract_strided_slice %101 {offsets = [0, 0], sizes = [128, 3], strides = [1, 1]} : vector<128x32xf32> to vector<128x3xf32>
    %104 = tpu.concatenate %102, %103 in 1 : vector<128x29xf32>, vector<128x3xf32> -> vector<128x32xf32>
    %105 = vector.extract_strided_slice %1 {offsets = [6, 0], sizes = [1, 32], strides = [1, 1]} : vector<9x32xf32> to vector<1x32xf32>
    %106 = vector.broadcast %105 : vector<1x32xf32> to vector<128x32xf32>
    %107 = arith.mulf %104, %106 : vector<128x32xf32>
    %108 = arith.addf %100, %107 : vector<128x32xf32>
    %109 = vector.extract_strided_slice %33 {offsets = [1280, 0], sizes = [128, 32], strides = [1, 1]} : vector<2048x32xf32> to vector<128x32xf32>
    %110 = vector.extract_strided_slice %33 {offsets = [1024, 0], sizes = [128, 32], strides = [1, 1]} : vector<2048x32xf32> to vector<128x32xf32>
    %111 = vector.extract_strided_slice %110 {offsets = [0, 1], sizes = [128, 31], strides = [1, 1]} : vector<128x32xf32> to vector<128x31xf32>
    %112 = vector.extract_strided_slice %110 {offsets = [0, 0], sizes = [128, 1], strides = [1, 1]} : vector<128x32xf32> to vector<128x1xf32>
    %113 = tpu.concatenate %111, %112 in 1 : vector<128x31xf32>, vector<128x1xf32> -> vector<128x32xf32>
    %114 = vector.extract_strided_slice %1 {offsets = [5, 0], sizes = [1, 32], strides = [1, 1]} : vector<9x32xf32> to vector<1x32xf32>
    %115 = vector.broadcast %114 : vector<1x32xf32> to vector<128x32xf32>
    %116 = arith.mulf %113, %115 : vector<128x32xf32>
    %117 = arith.addf %109, %116 : vector<128x32xf32>
    %118 = vector.extract_strided_slice %33 {offsets = [256, 0], sizes = [128, 32], strides = [1, 1]} : vector<2048x32xf32> to vector<128x32xf32>
    %119 = vector.extract_strided_slice %118 {offsets = [0, 4], sizes = [128, 28], strides = [1, 1]} : vector<128x32xf32> to vector<128x28xf32>
    %120 = vector.extract_strided_slice %118 {offsets = [0, 0], sizes = [128, 4], strides = [1, 1]} : vector<128x32xf32> to vector<128x4xf32>
    %121 = tpu.concatenate %119, %120 in 1 : vector<128x28xf32>, vector<128x4xf32> -> vector<128x32xf32>
    %122 = vector.extract_strided_slice %1 {offsets = [7, 0], sizes = [1, 32], strides = [1, 1]} : vector<9x32xf32> to vector<1x32xf32>
    %123 = vector.broadcast %122 : vector<1x32xf32> to vector<128x32xf32>
    %124 = arith.mulf %121, %123 : vector<128x32xf32>
    %125 = arith.addf %117, %124 : vector<128x32xf32>
    %126 = vector.extract_strided_slice %33 {offsets = [0, 0], sizes = [128, 32], strides = [1, 1]} : vector<2048x32xf32> to vector<128x32xf32>
    %127 = vector.extract_strided_slice %126 {offsets = [0, 5], sizes = [128, 27], strides = [1, 1]} : vector<128x32xf32> to vector<128x27xf32>
    %128 = vector.extract_strided_slice %126 {offsets = [0, 0], sizes = [128, 5], strides = [1, 1]} : vector<128x32xf32> to vector<128x5xf32>
    %129 = tpu.concatenate %127, %128 in 1 : vector<128x27xf32>, vector<128x5xf32> -> vector<128x32xf32>
    %130 = vector.extract_strided_slice %1 {offsets = [8, 0], sizes = [1, 32], strides = [1, 1]} : vector<9x32xf32> to vector<1x32xf32>
    %131 = vector.broadcast %130 : vector<1x32xf32> to vector<128x32xf32>
    %132 = arith.mulf %129, %131 : vector<128x32xf32>
    %133 = arith.addf %125, %132 : vector<128x32xf32>
    %c0_20 = arith.constant 0 : index
    %c0_21 = arith.constant 0 : index
    %134 = vector.load %arg8[%c0_20, %c0_21] : memref<64x64xf32, #tpu.memory_space<vmem>>, vector<64x64xf32>
    %135 = vector.extract_strided_slice %58 {offsets = [0, 0], sizes = [128, 16], strides = [1, 1]} : vector<128x32xf32> to vector<128x16xf32>
    %136 = vector.extract_strided_slice %83 {offsets = [0, 0], sizes = [128, 16], strides = [1, 1]} : vector<128x32xf32> to vector<128x16xf32>
    %137 = vector.extract_strided_slice %108 {offsets = [0, 0], sizes = [128, 16], strides = [1, 1]} : vector<128x32xf32> to vector<128x16xf32>
    %138 = vector.extract_strided_slice %133 {offsets = [0, 0], sizes = [128, 16], strides = [1, 1]} : vector<128x32xf32> to vector<128x16xf32>
    %139 = tpu.concatenate %135, %136, %137, %138 in 1 : vector<128x16xf32>, vector<128x16xf32>, vector<128x16xf32>, vector<128x16xf32> -> vector<128x64xf32>
    %cst_22 = arith.constant dense<0.000000e+00> : vector<128x64xf32>
    %140 = tpu.matmul %139, %134, %cst_22 {dimension_numbers = #tpu.dot_dimension_numbers<[1], [0], [0], [1], [0, 0, 1, 1], [], []>} : vector<128x64xf32>, vector<64x64xf32>, vector<128x64xf32> -> vector<128x64xf32>
    %141 = vector.extract_strided_slice %58 {offsets = [0, 16], sizes = [128, 16], strides = [1, 1]} : vector<128x32xf32> to vector<128x16xf32>
    %142 = vector.extract_strided_slice %83 {offsets = [0, 16], sizes = [128, 16], strides = [1, 1]} : vector<128x32xf32> to vector<128x16xf32>
    %143 = vector.extract_strided_slice %108 {offsets = [0, 16], sizes = [128, 16], strides = [1, 1]} : vector<128x32xf32> to vector<128x16xf32>
    %144 = vector.extract_strided_slice %133 {offsets = [0, 16], sizes = [128, 16], strides = [1, 1]} : vector<128x32xf32> to vector<128x16xf32>
    %145 = tpu.concatenate %141, %142, %143, %144 in 1 : vector<128x16xf32>, vector<128x16xf32>, vector<128x16xf32>, vector<128x16xf32> -> vector<128x64xf32>
    %cst_23 = arith.constant dense<0.000000e+00> : vector<128x64xf32>
    %146 = tpu.matmul %145, %134, %cst_23 {dimension_numbers = #tpu.dot_dimension_numbers<[1], [0], [0], [1], [0, 0, 1, 1], [], []>} : vector<128x64xf32>, vector<64x64xf32>, vector<128x64xf32> -> vector<128x64xf32>
    %147 = tpu.concatenate %140, %146 in 1 : vector<128x64xf32>, vector<128x64xf32> -> vector<128x128xf32>
    %148 = vector.extract_strided_slice %0 {offsets = [0, 2], sizes = [128, 1], strides = [1, 1]} : vector<256x9xf32> to vector<128x1xf32>
    %149 = vector.extract_strided_slice %0 {offsets = [0, 3], sizes = [128, 1], strides = [1, 1]} : vector<256x9xf32> to vector<128x1xf32>
    %cst_24 = arith.constant dense<0.000000e+00> : vector<128xf32>
    %150 = vector.multi_reduction <add>, %147, %cst_24 [1] : vector<128x128xf32> to vector<128xf32>
    %151 = vector.shape_cast %150 : vector<128xf32> to vector<128x1xf32>
    %152 = arith.mulf %147, %147 : vector<128x128xf32>
    %cst_25 = arith.constant dense<0.000000e+00> : vector<128xf32>
    %153 = vector.multi_reduction <add>, %152, %cst_25 [1] : vector<128x128xf32> to vector<128xf32>
    %154 = vector.shape_cast %153 : vector<128xf32> to vector<128x1xf32>
    %cst_26 = arith.constant 7.812500e-03 : f32
    %155 = vector.broadcast %cst_26 : f32 to vector<128x1xf32>
    %156 = arith.mulf %151, %155 : vector<128x1xf32>
    %cst_27 = arith.constant 7.812500e-03 : f32
    %157 = vector.broadcast %cst_27 : f32 to vector<128x1xf32>
    %158 = arith.mulf %154, %157 : vector<128x1xf32>
    %159 = arith.mulf %156, %156 : vector<128x1xf32>
    %160 = arith.subf %158, %159 : vector<128x1xf32>
    %cst_28 = arith.constant 9.99999974E-6 : f32
    %161 = vector.broadcast %cst_28 : f32 to vector<128x1xf32>
    %162 = arith.addf %160, %161 : vector<128x1xf32>
    %163 = math.rsqrt %162 : vector<128x1xf32>
    %164 = arith.mulf %148, %163 : vector<128x1xf32>
    %165 = vector.broadcast %156 : vector<128x1xf32> to vector<128x128xf32>
    %166 = arith.subf %147, %165 : vector<128x128xf32>
    %167 = vector.broadcast %164 : vector<128x1xf32> to vector<128x128xf32>
    %168 = arith.mulf %166, %167 : vector<128x128xf32>
    %169 = vector.broadcast %149 : vector<128x1xf32> to vector<128x128xf32>
    %170 = arith.addf %168, %169 : vector<128x128xf32>
    %cst_29 = arith.constant 0.000000e+00 : f32
    %171 = vector.broadcast %cst_29 : f32 to vector<128x128xf32>
    %172 = arith.maximumf %170, %171 : vector<128x128xf32>
    %c0_30 = arith.constant 0 : index
    %c0_31 = arith.constant 0 : index
    %173 = vector.load %arg4[%c0_30, %c0_31] : memref<1024x128xf32, #tpu.memory_space<vmem>>, vector<1024x128xf32>
    %cst_32 = arith.constant dense<0.000000e+00> : vector<1024x128xf32>
    %174 = tpu.matmul %173, %172, %cst_32 {dimension_numbers = #tpu.dot_dimension_numbers<[1], [0], [0], [1], [0, 0, 1, 1], [], []>} : vector<1024x128xf32>, vector<128x128xf32>, vector<1024x128xf32> -> vector<1024x128xf32>
    %175 = vector.extract_strided_slice %174 {offsets = [320, 0], sizes = [64, 128], strides = [1, 1]} : vector<1024x128xf32> to vector<64x128xf32>
    %176 = vector.extract_strided_slice %174 {offsets = [448, 0], sizes = [64, 128], strides = [1, 1]} : vector<1024x128xf32> to vector<64x128xf32>
    %177 = vector.extract_strided_slice %176 {offsets = [0, 127], sizes = [64, 1], strides = [1, 1]} : vector<64x128xf32> to vector<64x1xf32>
    %178 = vector.extract_strided_slice %176 {offsets = [0, 0], sizes = [64, 127], strides = [1, 1]} : vector<64x128xf32> to vector<64x127xf32>
    %179 = tpu.concatenate %177, %178 in 1 : vector<64x1xf32>, vector<64x127xf32> -> vector<64x128xf32>
    %180 = vector.extract_strided_slice %2 {offsets = [3, 0], sizes = [1, 128], strides = [1, 1]} : vector<9x128xf32> to vector<1x128xf32>
    %181 = vector.broadcast %180 : vector<1x128xf32> to vector<64x128xf32>
    %182 = arith.mulf %179, %181 : vector<64x128xf32>
    %183 = arith.addf %175, %182 : vector<64x128xf32>
    %184 = vector.extract_strided_slice %174 {offsets = [832, 0], sizes = [64, 128], strides = [1, 1]} : vector<1024x128xf32> to vector<64x128xf32>
    %185 = vector.extract_strided_slice %184 {offsets = [0, 120], sizes = [64, 8], strides = [1, 1]} : vector<64x128xf32> to vector<64x8xf32>
    %186 = vector.extract_strided_slice %184 {offsets = [0, 0], sizes = [64, 120], strides = [1, 1]} : vector<64x128xf32> to vector<64x120xf32>
    %187 = tpu.concatenate %185, %186 in 1 : vector<64x8xf32>, vector<64x120xf32> -> vector<64x128xf32>
    %188 = vector.extract_strided_slice %2 {offsets = [1, 0], sizes = [1, 128], strides = [1, 1]} : vector<9x128xf32> to vector<1x128xf32>
    %189 = vector.broadcast %188 : vector<1x128xf32> to vector<64x128xf32>
    %190 = arith.mulf %187, %189 : vector<64x128xf32>
    %191 = arith.addf %183, %190 : vector<64x128xf32>
    %192 = vector.extract_strided_slice %174 {offsets = [960, 0], sizes = [64, 128], strides = [1, 1]} : vector<1024x128xf32> to vector<64x128xf32>
    %193 = vector.extract_strided_slice %192 {offsets = [0, 119], sizes = [64, 9], strides = [1, 1]} : vector<64x128xf32> to vector<64x9xf32>
    %194 = vector.extract_strided_slice %192 {offsets = [0, 0], sizes = [64, 119], strides = [1, 1]} : vector<64x128xf32> to vector<64x119xf32>
    %195 = tpu.concatenate %193, %194 in 1 : vector<64x9xf32>, vector<64x119xf32> -> vector<64x128xf32>
    %196 = vector.extract_strided_slice %2 {offsets = [0, 0], sizes = [1, 128], strides = [1, 1]} : vector<9x128xf32> to vector<1x128xf32>
    %197 = vector.broadcast %196 : vector<1x128xf32> to vector<64x128xf32>
    %198 = arith.mulf %195, %197 : vector<64x128xf32>
    %199 = arith.addf %191, %198 : vector<64x128xf32>
    %200 = vector.extract_strided_slice %174 {offsets = [384, 0], sizes = [64, 128], strides = [1, 1]} : vector<1024x128xf32> to vector<64x128xf32>
    %201 = vector.extract_strided_slice %174 {offsets = [256, 0], sizes = [64, 128], strides = [1, 1]} : vector<1024x128xf32> to vector<64x128xf32>
    %202 = vector.extract_strided_slice %201 {offsets = [0, 1], sizes = [64, 127], strides = [1, 1]} : vector<64x128xf32> to vector<64x127xf32>
    %203 = vector.extract_strided_slice %201 {offsets = [0, 0], sizes = [64, 1], strides = [1, 1]} : vector<64x128xf32> to vector<64x1xf32>
    %204 = tpu.concatenate %202, %203 in 1 : vector<64x127xf32>, vector<64x1xf32> -> vector<64x128xf32>
    %205 = vector.extract_strided_slice %2 {offsets = [5, 0], sizes = [1, 128], strides = [1, 1]} : vector<9x128xf32> to vector<1x128xf32>
    %206 = vector.broadcast %205 : vector<1x128xf32> to vector<64x128xf32>
    %207 = arith.mulf %204, %206 : vector<64x128xf32>
    %208 = arith.addf %200, %207 : vector<64x128xf32>
    %209 = vector.extract_strided_slice %174 {offsets = [896, 0], sizes = [64, 128], strides = [1, 1]} : vector<1024x128xf32> to vector<64x128xf32>
    %210 = vector.extract_strided_slice %209 {offsets = [0, 120], sizes = [64, 8], strides = [1, 1]} : vector<64x128xf32> to vector<64x8xf32>
    %211 = vector.extract_strided_slice %209 {offsets = [0, 0], sizes = [64, 120], strides = [1, 1]} : vector<64x128xf32> to vector<64x120xf32>
    %212 = tpu.concatenate %210, %211 in 1 : vector<64x8xf32>, vector<64x120xf32> -> vector<64x128xf32>
    %213 = vector.extract_strided_slice %2 {offsets = [1, 0], sizes = [1, 128], strides = [1, 1]} : vector<9x128xf32> to vector<1x128xf32>
    %214 = vector.broadcast %213 : vector<1x128xf32> to vector<64x128xf32>
    %215 = arith.mulf %212, %214 : vector<64x128xf32>
    %216 = arith.addf %208, %215 : vector<64x128xf32>
    %217 = vector.extract_strided_slice %174 {offsets = [768, 0], sizes = [64, 128], strides = [1, 1]} : vector<1024x128xf32> to vector<64x128xf32>
    %218 = vector.extract_strided_slice %217 {offsets = [0, 121], sizes = [64, 7], strides = [1, 1]} : vector<64x128xf32> to vector<64x7xf32>
    %219 = vector.extract_strided_slice %217 {offsets = [0, 0], sizes = [64, 121], strides = [1, 1]} : vector<64x128xf32> to vector<64x121xf32>
    %220 = tpu.concatenate %218, %219 in 1 : vector<64x7xf32>, vector<64x121xf32> -> vector<64x128xf32>
    %221 = vector.extract_strided_slice %2 {offsets = [2, 0], sizes = [1, 128], strides = [1, 1]} : vector<9x128xf32> to vector<1x128xf32>
    %222 = vector.broadcast %221 : vector<1x128xf32> to vector<64x128xf32>
    %223 = arith.mulf %220, %222 : vector<64x128xf32>
    %224 = arith.addf %216, %223 : vector<64x128xf32>
    %225 = vector.extract_strided_slice %174 {offsets = [576, 0], sizes = [64, 128], strides = [1, 1]} : vector<1024x128xf32> to vector<64x128xf32>
    %226 = vector.extract_strided_slice %174 {offsets = [704, 0], sizes = [64, 128], strides = [1, 1]} : vector<1024x128xf32> to vector<64x128xf32>
    %227 = vector.extract_strided_slice %226 {offsets = [0, 127], sizes = [64, 1], strides = [1, 1]} : vector<64x128xf32> to vector<64x1xf32>
    %228 = vector.extract_strided_slice %226 {offsets = [0, 0], sizes = [64, 127], strides = [1, 1]} : vector<64x128xf32> to vector<64x127xf32>
    %229 = tpu.concatenate %227, %228 in 1 : vector<64x1xf32>, vector<64x127xf32> -> vector<64x128xf32>
    %230 = vector.extract_strided_slice %2 {offsets = [3, 0], sizes = [1, 128], strides = [1, 1]} : vector<9x128xf32> to vector<1x128xf32>
    %231 = vector.broadcast %230 : vector<1x128xf32> to vector<64x128xf32>
    %232 = arith.mulf %229, %231 : vector<64x128xf32>
    %233 = arith.addf %225, %232 : vector<64x128xf32>
    %234 = vector.extract_strided_slice %174 {offsets = [64, 0], sizes = [64, 128], strides = [1, 1]} : vector<1024x128xf32> to vector<64x128xf32>
    %235 = vector.extract_strided_slice %234 {offsets = [0, 8], sizes = [64, 120], strides = [1, 1]} : vector<64x128xf32> to vector<64x120xf32>
    %236 = vector.extract_strided_slice %234 {offsets = [0, 0], sizes = [64, 8], strides = [1, 1]} : vector<64x128xf32> to vector<64x8xf32>
    %237 = tpu.concatenate %235, %236 in 1 : vector<64x120xf32>, vector<64x8xf32> -> vector<64x128xf32>
    %238 = vector.extract_strided_slice %2 {offsets = [7, 0], sizes = [1, 128], strides = [1, 1]} : vector<9x128xf32> to vector<1x128xf32>
    %239 = vector.broadcast %238 : vector<1x128xf32> to vector<64x128xf32>
    %240 = arith.mulf %237, %239 : vector<64x128xf32>
    %241 = arith.addf %233, %240 : vector<64x128xf32>
    %242 = vector.extract_strided_slice %174 {offsets = [192, 0], sizes = [64, 128], strides = [1, 1]} : vector<1024x128xf32> to vector<64x128xf32>
    %243 = vector.extract_strided_slice %242 {offsets = [0, 7], sizes = [64, 121], strides = [1, 1]} : vector<64x128xf32> to vector<64x121xf32>
    %244 = vector.extract_strided_slice %242 {offsets = [0, 0], sizes = [64, 7], strides = [1, 1]} : vector<64x128xf32> to vector<64x7xf32>
    %245 = tpu.concatenate %243, %244 in 1 : vector<64x121xf32>, vector<64x7xf32> -> vector<64x128xf32>
    %246 = vector.extract_strided_slice %2 {offsets = [6, 0], sizes = [1, 128], strides = [1, 1]} : vector<9x128xf32> to vector<1x128xf32>
    %247 = vector.broadcast %246 : vector<1x128xf32> to vector<64x128xf32>
    %248 = arith.mulf %245, %247 : vector<64x128xf32>
    %249 = arith.addf %241, %248 : vector<64x128xf32>
    %250 = vector.extract_strided_slice %174 {offsets = [640, 0], sizes = [64, 128], strides = [1, 1]} : vector<1024x128xf32> to vector<64x128xf32>
    %251 = vector.extract_strided_slice %174 {offsets = [512, 0], sizes = [64, 128], strides = [1, 1]} : vector<1024x128xf32> to vector<64x128xf32>
    %252 = vector.extract_strided_slice %251 {offsets = [0, 1], sizes = [64, 127], strides = [1, 1]} : vector<64x128xf32> to vector<64x127xf32>
    %253 = vector.extract_strided_slice %251 {offsets = [0, 0], sizes = [64, 1], strides = [1, 1]} : vector<64x128xf32> to vector<64x1xf32>
    %254 = tpu.concatenate %252, %253 in 1 : vector<64x127xf32>, vector<64x1xf32> -> vector<64x128xf32>
    %255 = vector.extract_strided_slice %2 {offsets = [5, 0], sizes = [1, 128], strides = [1, 1]} : vector<9x128xf32> to vector<1x128xf32>
    %256 = vector.broadcast %255 : vector<1x128xf32> to vector<64x128xf32>
    %257 = arith.mulf %254, %256 : vector<64x128xf32>
    %258 = arith.addf %250, %257 : vector<64x128xf32>
    %259 = vector.extract_strided_slice %174 {offsets = [128, 0], sizes = [64, 128], strides = [1, 1]} : vector<1024x128xf32> to vector<64x128xf32>
    %260 = vector.extract_strided_slice %259 {offsets = [0, 8], sizes = [64, 120], strides = [1, 1]} : vector<64x128xf32> to vector<64x120xf32>
    %261 = vector.extract_strided_slice %259 {offsets = [0, 0], sizes = [64, 8], strides = [1, 1]} : vector<64x128xf32> to vector<64x8xf32>
    %262 = tpu.concatenate %260, %261 in 1 : vector<64x120xf32>, vector<64x8xf32> -> vector<64x128xf32>
    %263 = vector.extract_strided_slice %2 {offsets = [7, 0], sizes = [1, 128], strides = [1, 1]} : vector<9x128xf32> to vector<1x128xf32>
    %264 = vector.broadcast %263 : vector<1x128xf32> to vector<64x128xf32>
    %265 = arith.mulf %262, %264 : vector<64x128xf32>
    %266 = arith.addf %258, %265 : vector<64x128xf32>
    %267 = vector.extract_strided_slice %174 {offsets = [0, 0], sizes = [64, 128], strides = [1, 1]} : vector<1024x128xf32> to vector<64x128xf32>
    %268 = vector.extract_strided_slice %267 {offsets = [0, 9], sizes = [64, 119], strides = [1, 1]} : vector<64x128xf32> to vector<64x119xf32>
    %269 = vector.extract_strided_slice %267 {offsets = [0, 0], sizes = [64, 9], strides = [1, 1]} : vector<64x128xf32> to vector<64x9xf32>
    %270 = tpu.concatenate %268, %269 in 1 : vector<64x119xf32>, vector<64x9xf32> -> vector<64x128xf32>
    %271 = vector.extract_strided_slice %2 {offsets = [8, 0], sizes = [1, 128], strides = [1, 1]} : vector<9x128xf32> to vector<1x128xf32>
    %272 = vector.broadcast %271 : vector<1x128xf32> to vector<64x128xf32>
    %273 = arith.mulf %270, %272 : vector<64x128xf32>
    %274 = arith.addf %266, %273 : vector<64x128xf32>
    %c0_33 = arith.constant 0 : index
    %c0_34 = arith.constant 0 : index
    %275 = vector.load %arg9[%c0_33, %c0_34] : memref<256x256xf32, #tpu.memory_space<vmem>>, vector<256x256xf32>
    %276 = vector.extract_strided_slice %199 {offsets = [0, 0], sizes = [64, 64], strides = [1, 1]} : vector<64x128xf32> to vector<64x64xf32>
    %277 = vector.extract_strided_slice %224 {offsets = [0, 0], sizes = [64, 64], strides = [1, 1]} : vector<64x128xf32> to vector<64x64xf32>
    %278 = vector.extract_strided_slice %249 {offsets = [0, 0], sizes = [64, 64], strides = [1, 1]} : vector<64x128xf32> to vector<64x64xf32>
    %279 = vector.extract_strided_slice %274 {offsets = [0, 0], sizes = [64, 64], strides = [1, 1]} : vector<64x128xf32> to vector<64x64xf32>
    %280 = tpu.concatenate %276, %277, %278, %279 in 1 : vector<64x64xf32>, vector<64x64xf32>, vector<64x64xf32>, vector<64x64xf32> -> vector<64x256xf32>
    %cst_35 = arith.constant dense<0.000000e+00> : vector<64x256xf32>
    %281 = tpu.matmul %280, %275, %cst_35 {dimension_numbers = #tpu.dot_dimension_numbers<[1], [0], [0], [1], [0, 0, 1, 1], [], []>} : vector<64x256xf32>, vector<256x256xf32>, vector<64x256xf32> -> vector<64x256xf32>
    %282 = vector.extract_strided_slice %199 {offsets = [0, 64], sizes = [64, 64], strides = [1, 1]} : vector<64x128xf32> to vector<64x64xf32>
    %283 = vector.extract_strided_slice %224 {offsets = [0, 64], sizes = [64, 64], strides = [1, 1]} : vector<64x128xf32> to vector<64x64xf32>
    %284 = vector.extract_strided_slice %249 {offsets = [0, 64], sizes = [64, 64], strides = [1, 1]} : vector<64x128xf32> to vector<64x64xf32>
    %285 = vector.extract_strided_slice %274 {offsets = [0, 64], sizes = [64, 64], strides = [1, 1]} : vector<64x128xf32> to vector<64x64xf32>
    %286 = tpu.concatenate %282, %283, %284, %285 in 1 : vector<64x64xf32>, vector<64x64xf32>, vector<64x64xf32>, vector<64x64xf32> -> vector<64x256xf32>
    %cst_36 = arith.constant dense<0.000000e+00> : vector<64x256xf32>
    %287 = tpu.matmul %286, %275, %cst_36 {dimension_numbers = #tpu.dot_dimension_numbers<[1], [0], [0], [1], [0, 0, 1, 1], [], []>} : vector<64x256xf32>, vector<256x256xf32>, vector<64x256xf32> -> vector<64x256xf32>
    %288 = tpu.concatenate %281, %287 in 1 : vector<64x256xf32>, vector<64x256xf32> -> vector<64x512xf32>
    %289 = vector.extract_strided_slice %0 {offsets = [0, 4], sizes = [64, 1], strides = [1, 1]} : vector<256x9xf32> to vector<64x1xf32>
    %290 = vector.extract_strided_slice %0 {offsets = [0, 5], sizes = [64, 1], strides = [1, 1]} : vector<256x9xf32> to vector<64x1xf32>
    %cst_37 = arith.constant dense<0.000000e+00> : vector<64xf32>
    %291 = vector.multi_reduction <add>, %288, %cst_37 [1] : vector<64x512xf32> to vector<64xf32>
    %292 = vector.shape_cast %291 : vector<64xf32> to vector<64x1xf32>
    %293 = arith.mulf %288, %288 : vector<64x512xf32>
    %cst_38 = arith.constant dense<0.000000e+00> : vector<64xf32>
    %294 = vector.multi_reduction <add>, %293, %cst_38 [1] : vector<64x512xf32> to vector<64xf32>
    %295 = vector.shape_cast %294 : vector<64xf32> to vector<64x1xf32>
    %cst_39 = arith.constant 0.001953125 : f32
    %296 = vector.broadcast %cst_39 : f32 to vector<64x1xf32>
    %297 = arith.mulf %292, %296 : vector<64x1xf32>
    %cst_40 = arith.constant 0.001953125 : f32
    %298 = vector.broadcast %cst_40 : f32 to vector<64x1xf32>
    %299 = arith.mulf %295, %298 : vector<64x1xf32>
    %300 = arith.mulf %297, %297 : vector<64x1xf32>
    %301 = arith.subf %299, %300 : vector<64x1xf32>
    %cst_41 = arith.constant 9.99999974E-6 : f32
    %302 = vector.broadcast %cst_41 : f32 to vector<64x1xf32>
    %303 = arith.addf %301, %302 : vector<64x1xf32>
    %304 = math.rsqrt %303 : vector<64x1xf32>
    %305 = arith.mulf %289, %304 : vector<64x1xf32>
    %306 = vector.broadcast %297 : vector<64x1xf32> to vector<64x512xf32>
    %307 = arith.subf %288, %306 : vector<64x512xf32>
    %308 = vector.broadcast %305 : vector<64x1xf32> to vector<64x512xf32>
    %309 = arith.mulf %307, %308 : vector<64x512xf32>
    %310 = vector.broadcast %290 : vector<64x1xf32> to vector<64x512xf32>
    %311 = arith.addf %309, %310 : vector<64x512xf32>
    %cst_42 = arith.constant 0.000000e+00 : f32
    %312 = vector.broadcast %cst_42 : f32 to vector<64x512xf32>
    %313 = arith.maximumf %311, %312 : vector<64x512xf32>
    %c0_43 = arith.constant 0 : index
    %c0_44 = arith.constant 0 : index
    %314 = vector.load %arg5[%c0_43, %c0_44] : memref<128x64xf32, #tpu.memory_space<vmem>>, vector<128x64xf32>
    %cst_45 = arith.constant dense<0.000000e+00> : vector<128x512xf32>
    %315 = tpu.matmul %314, %313, %cst_45 {dimension_numbers = #tpu.dot_dimension_numbers<[1], [0], [0], [1], [0, 0, 1, 1], [], []>} : vector<128x64xf32>, vector<64x512xf32>, vector<128x512xf32> -> vector<128x512xf32>
    %316 = vector.extract_strided_slice %315 {offsets = [40, 0], sizes = [8, 512], strides = [1, 1]} : vector<128x512xf32> to vector<8x512xf32>
    %317 = vector.extract_strided_slice %315 {offsets = [56, 0], sizes = [8, 512], strides = [1, 1]} : vector<128x512xf32> to vector<8x512xf32>
    %318 = vector.extract_strided_slice %317 {offsets = [0, 511], sizes = [8, 1], strides = [1, 1]} : vector<8x512xf32> to vector<8x1xf32>
    %319 = vector.extract_strided_slice %317 {offsets = [0, 0], sizes = [8, 511], strides = [1, 1]} : vector<8x512xf32> to vector<8x511xf32>
    %320 = tpu.concatenate %318, %319 in 1 : vector<8x1xf32>, vector<8x511xf32> -> vector<8x512xf32>
    %321 = vector.extract_strided_slice %3 {offsets = [3, 0], sizes = [1, 512], strides = [1, 1]} : vector<9x512xf32> to vector<1x512xf32>
    %322 = vector.broadcast %321 : vector<1x512xf32> to vector<8x512xf32>
    %323 = arith.mulf %320, %322 : vector<8x512xf32>
    %324 = arith.addf %316, %323 : vector<8x512xf32>
    %325 = vector.extract_strided_slice %315 {offsets = [104, 0], sizes = [8, 512], strides = [1, 1]} : vector<128x512xf32> to vector<8x512xf32>
    %326 = vector.extract_strided_slice %325 {offsets = [0, 496], sizes = [8, 16], strides = [1, 1]} : vector<8x512xf32> to vector<8x16xf32>
    %327 = vector.extract_strided_slice %325 {offsets = [0, 0], sizes = [8, 496], strides = [1, 1]} : vector<8x512xf32> to vector<8x496xf32>
    %328 = tpu.concatenate %326, %327 in 1 : vector<8x16xf32>, vector<8x496xf32> -> vector<8x512xf32>
    %329 = vector.extract_strided_slice %3 {offsets = [1, 0], sizes = [1, 512], strides = [1, 1]} : vector<9x512xf32> to vector<1x512xf32>
    %330 = vector.broadcast %329 : vector<1x512xf32> to vector<8x512xf32>
    %331 = arith.mulf %328, %330 : vector<8x512xf32>
    %332 = arith.addf %324, %331 : vector<8x512xf32>
    %333 = vector.extract_strided_slice %315 {offsets = [120, 0], sizes = [8, 512], strides = [1, 1]} : vector<128x512xf32> to vector<8x512xf32>
    %334 = vector.extract_strided_slice %333 {offsets = [0, 495], sizes = [8, 17], strides = [1, 1]} : vector<8x512xf32> to vector<8x17xf32>
    %335 = vector.extract_strided_slice %333 {offsets = [0, 0], sizes = [8, 495], strides = [1, 1]} : vector<8x512xf32> to vector<8x495xf32>
    %336 = tpu.concatenate %334, %335 in 1 : vector<8x17xf32>, vector<8x495xf32> -> vector<8x512xf32>
    %337 = vector.extract_strided_slice %3 {offsets = [0, 0], sizes = [1, 512], strides = [1, 1]} : vector<9x512xf32> to vector<1x512xf32>
    %338 = vector.broadcast %337 : vector<1x512xf32> to vector<8x512xf32>
    %339 = arith.mulf %336, %338 : vector<8x512xf32>
    %340 = arith.addf %332, %339 : vector<8x512xf32>
    %341 = vector.extract_strided_slice %315 {offsets = [48, 0], sizes = [8, 512], strides = [1, 1]} : vector<128x512xf32> to vector<8x512xf32>
    %342 = vector.extract_strided_slice %315 {offsets = [32, 0], sizes = [8, 512], strides = [1, 1]} : vector<128x512xf32> to vector<8x512xf32>
    %343 = vector.extract_strided_slice %342 {offsets = [0, 1], sizes = [8, 511], strides = [1, 1]} : vector<8x512xf32> to vector<8x511xf32>
    %344 = vector.extract_strided_slice %342 {offsets = [0, 0], sizes = [8, 1], strides = [1, 1]} : vector<8x512xf32> to vector<8x1xf32>
    %345 = tpu.concatenate %343, %344 in 1 : vector<8x511xf32>, vector<8x1xf32> -> vector<8x512xf32>
    %346 = vector.extract_strided_slice %3 {offsets = [5, 0], sizes = [1, 512], strides = [1, 1]} : vector<9x512xf32> to vector<1x512xf32>
    %347 = vector.broadcast %346 : vector<1x512xf32> to vector<8x512xf32>
    %348 = arith.mulf %345, %347 : vector<8x512xf32>
    %349 = arith.addf %341, %348 : vector<8x512xf32>
    %350 = vector.extract_strided_slice %315 {offsets = [112, 0], sizes = [8, 512], strides = [1, 1]} : vector<128x512xf32> to vector<8x512xf32>
    %351 = vector.extract_strided_slice %350 {offsets = [0, 496], sizes = [8, 16], strides = [1, 1]} : vector<8x512xf32> to vector<8x16xf32>
    %352 = vector.extract_strided_slice %350 {offsets = [0, 0], sizes = [8, 496], strides = [1, 1]} : vector<8x512xf32> to vector<8x496xf32>
    %353 = tpu.concatenate %351, %352 in 1 : vector<8x16xf32>, vector<8x496xf32> -> vector<8x512xf32>
    %354 = vector.extract_strided_slice %3 {offsets = [1, 0], sizes = [1, 512], strides = [1, 1]} : vector<9x512xf32> to vector<1x512xf32>
    %355 = vector.broadcast %354 : vector<1x512xf32> to vector<8x512xf32>
    %356 = arith.mulf %353, %355 : vector<8x512xf32>
    %357 = arith.addf %349, %356 : vector<8x512xf32>
    %358 = vector.extract_strided_slice %315 {offsets = [96, 0], sizes = [8, 512], strides = [1, 1]} : vector<128x512xf32> to vector<8x512xf32>
    %359 = vector.extract_strided_slice %358 {offsets = [0, 497], sizes = [8, 15], strides = [1, 1]} : vector<8x512xf32> to vector<8x15xf32>
    %360 = vector.extract_strided_slice %358 {offsets = [0, 0], sizes = [8, 497], strides = [1, 1]} : vector<8x512xf32> to vector<8x497xf32>
    %361 = tpu.concatenate %359, %360 in 1 : vector<8x15xf32>, vector<8x497xf32> -> vector<8x512xf32>
    %362 = vector.extract_strided_slice %3 {offsets = [2, 0], sizes = [1, 512], strides = [1, 1]} : vector<9x512xf32> to vector<1x512xf32>
    %363 = vector.broadcast %362 : vector<1x512xf32> to vector<8x512xf32>
    %364 = arith.mulf %361, %363 : vector<8x512xf32>
    %365 = arith.addf %357, %364 : vector<8x512xf32>
    %366 = vector.extract_strided_slice %315 {offsets = [72, 0], sizes = [8, 512], strides = [1, 1]} : vector<128x512xf32> to vector<8x512xf32>
    %367 = vector.extract_strided_slice %315 {offsets = [88, 0], sizes = [8, 512], strides = [1, 1]} : vector<128x512xf32> to vector<8x512xf32>
    %368 = vector.extract_strided_slice %367 {offsets = [0, 511], sizes = [8, 1], strides = [1, 1]} : vector<8x512xf32> to vector<8x1xf32>
    %369 = vector.extract_strided_slice %367 {offsets = [0, 0], sizes = [8, 511], strides = [1, 1]} : vector<8x512xf32> to vector<8x511xf32>
    %370 = tpu.concatenate %368, %369 in 1 : vector<8x1xf32>, vector<8x511xf32> -> vector<8x512xf32>
    %371 = vector.extract_strided_slice %3 {offsets = [3, 0], sizes = [1, 512], strides = [1, 1]} : vector<9x512xf32> to vector<1x512xf32>
    %372 = vector.broadcast %371 : vector<1x512xf32> to vector<8x512xf32>
    %373 = arith.mulf %370, %372 : vector<8x512xf32>
    %374 = arith.addf %366, %373 : vector<8x512xf32>
    %375 = vector.extract_strided_slice %315 {offsets = [8, 0], sizes = [8, 512], strides = [1, 1]} : vector<128x512xf32> to vector<8x512xf32>
    %376 = vector.extract_strided_slice %375 {offsets = [0, 16], sizes = [8, 496], strides = [1, 1]} : vector<8x512xf32> to vector<8x496xf32>
    %377 = vector.extract_strided_slice %375 {offsets = [0, 0], sizes = [8, 16], strides = [1, 1]} : vector<8x512xf32> to vector<8x16xf32>
    %378 = tpu.concatenate %376, %377 in 1 : vector<8x496xf32>, vector<8x16xf32> -> vector<8x512xf32>
    %379 = vector.extract_strided_slice %3 {offsets = [7, 0], sizes = [1, 512], strides = [1, 1]} : vector<9x512xf32> to vector<1x512xf32>
    %380 = vector.broadcast %379 : vector<1x512xf32> to vector<8x512xf32>
    %381 = arith.mulf %378, %380 : vector<8x512xf32>
    %382 = arith.addf %374, %381 : vector<8x512xf32>
    %383 = vector.extract_strided_slice %315 {offsets = [24, 0], sizes = [8, 512], strides = [1, 1]} : vector<128x512xf32> to vector<8x512xf32>
    %384 = vector.extract_strided_slice %383 {offsets = [0, 15], sizes = [8, 497], strides = [1, 1]} : vector<8x512xf32> to vector<8x497xf32>
    %385 = vector.extract_strided_slice %383 {offsets = [0, 0], sizes = [8, 15], strides = [1, 1]} : vector<8x512xf32> to vector<8x15xf32>
    %386 = tpu.concatenate %384, %385 in 1 : vector<8x497xf32>, vector<8x15xf32> -> vector<8x512xf32>
    %387 = vector.extract_strided_slice %3 {offsets = [6, 0], sizes = [1, 512], strides = [1, 1]} : vector<9x512xf32> to vector<1x512xf32>
    %388 = vector.broadcast %387 : vector<1x512xf32> to vector<8x512xf32>
    %389 = arith.mulf %386, %388 : vector<8x512xf32>
    %390 = arith.addf %382, %389 : vector<8x512xf32>
    %391 = vector.extract_strided_slice %315 {offsets = [80, 0], sizes = [8, 512], strides = [1, 1]} : vector<128x512xf32> to vector<8x512xf32>
    %392 = vector.extract_strided_slice %315 {offsets = [64, 0], sizes = [8, 512], strides = [1, 1]} : vector<128x512xf32> to vector<8x512xf32>
    %393 = vector.extract_strided_slice %392 {offsets = [0, 1], sizes = [8, 511], strides = [1, 1]} : vector<8x512xf32> to vector<8x511xf32>
    %394 = vector.extract_strided_slice %392 {offsets = [0, 0], sizes = [8, 1], strides = [1, 1]} : vector<8x512xf32> to vector<8x1xf32>
    %395 = tpu.concatenate %393, %394 in 1 : vector<8x511xf32>, vector<8x1xf32> -> vector<8x512xf32>
    %396 = vector.extract_strided_slice %3 {offsets = [5, 0], sizes = [1, 512], strides = [1, 1]} : vector<9x512xf32> to vector<1x512xf32>
    %397 = vector.broadcast %396 : vector<1x512xf32> to vector<8x512xf32>
    %398 = arith.mulf %395, %397 : vector<8x512xf32>
    %399 = arith.addf %391, %398 : vector<8x512xf32>
    %400 = vector.extract_strided_slice %315 {offsets = [16, 0], sizes = [8, 512], strides = [1, 1]} : vector<128x512xf32> to vector<8x512xf32>
    %401 = vector.extract_strided_slice %400 {offsets = [0, 16], sizes = [8, 496], strides = [1, 1]} : vector<8x512xf32> to vector<8x496xf32>
    %402 = vector.extract_strided_slice %400 {offsets = [0, 0], sizes = [8, 16], strides = [1, 1]} : vector<8x512xf32> to vector<8x16xf32>
    %403 = tpu.concatenate %401, %402 in 1 : vector<8x496xf32>, vector<8x16xf32> -> vector<8x512xf32>
    %404 = vector.extract_strided_slice %3 {offsets = [7, 0], sizes = [1, 512], strides = [1, 1]} : vector<9x512xf32> to vector<1x512xf32>
    %405 = vector.broadcast %404 : vector<1x512xf32> to vector<8x512xf32>
    %406 = arith.mulf %403, %405 : vector<8x512xf32>
    %407 = arith.addf %399, %406 : vector<8x512xf32>
    %408 = vector.extract_strided_slice %315 {offsets = [0, 0], sizes = [8, 512], strides = [1, 1]} : vector<128x512xf32> to vector<8x512xf32>
    %409 = vector.extract_strided_slice %408 {offsets = [0, 17], sizes = [8, 495], strides = [1, 1]} : vector<8x512xf32> to vector<8x495xf32>
    %410 = vector.extract_strided_slice %408 {offsets = [0, 0], sizes = [8, 17], strides = [1, 1]} : vector<8x512xf32> to vector<8x17xf32>
    %411 = tpu.concatenate %409, %410 in 1 : vector<8x495xf32>, vector<8x17xf32> -> vector<8x512xf32>
    %412 = vector.extract_strided_slice %3 {offsets = [8, 0], sizes = [1, 512], strides = [1, 1]} : vector<9x512xf32> to vector<1x512xf32>
    %413 = vector.broadcast %412 : vector<1x512xf32> to vector<8x512xf32>
    %414 = arith.mulf %411, %413 : vector<8x512xf32>
    %415 = arith.addf %407, %414 : vector<8x512xf32>
    %416 = tpu.concatenate %340, %365, %390, %415 in 1 : vector<8x512xf32>, vector<8x512xf32>, vector<8x512xf32>, vector<8x512xf32> -> vector<8x2048xf32>
    %417 = vector.extract_strided_slice %0 {offsets = [0, 6], sizes = [8, 1], strides = [1, 1]} : vector<256x9xf32> to vector<8x1xf32>
    %418 = vector.extract_strided_slice %0 {offsets = [0, 7], sizes = [8, 1], strides = [1, 1]} : vector<256x9xf32> to vector<8x1xf32>
    %cst_46 = arith.constant dense<0.000000e+00> : vector<8xf32>
    %419 = vector.multi_reduction <add>, %416, %cst_46 [1] : vector<8x2048xf32> to vector<8xf32>
    %420 = vector.shape_cast %419 : vector<8xf32> to vector<8x1xf32>
    %421 = arith.mulf %416, %416 : vector<8x2048xf32>
    %cst_47 = arith.constant dense<0.000000e+00> : vector<8xf32>
    %422 = vector.multi_reduction <add>, %421, %cst_47 [1] : vector<8x2048xf32> to vector<8xf32>
    %423 = vector.shape_cast %422 : vector<8xf32> to vector<8x1xf32>
    %cst_48 = arith.constant 4.8828125E-4 : f32
    %424 = vector.broadcast %cst_48 : f32 to vector<8x1xf32>
    %425 = arith.mulf %420, %424 : vector<8x1xf32>
    %cst_49 = arith.constant 4.8828125E-4 : f32
    %426 = vector.broadcast %cst_49 : f32 to vector<8x1xf32>
    %427 = arith.mulf %423, %426 : vector<8x1xf32>
    %428 = arith.mulf %425, %425 : vector<8x1xf32>
    %429 = arith.subf %427, %428 : vector<8x1xf32>
    %cst_50 = arith.constant 9.99999974E-6 : f32
    %430 = vector.broadcast %cst_50 : f32 to vector<8x1xf32>
    %431 = arith.addf %429, %430 : vector<8x1xf32>
    %432 = math.rsqrt %431 : vector<8x1xf32>
    %433 = arith.mulf %417, %432 : vector<8x1xf32>
    %434 = vector.broadcast %425 : vector<8x1xf32> to vector<8x2048xf32>
    %435 = arith.subf %416, %434 : vector<8x2048xf32>
    %436 = vector.broadcast %433 : vector<8x1xf32> to vector<8x2048xf32>
    %437 = arith.mulf %435, %436 : vector<8x2048xf32>
    %438 = vector.broadcast %418 : vector<8x1xf32> to vector<8x2048xf32>
    %439 = arith.addf %437, %438 : vector<8x2048xf32>
    %cst_51 = arith.constant 0.000000e+00 : f32
    %440 = vector.broadcast %cst_51 : f32 to vector<8x2048xf32>
    %441 = arith.maximumf %439, %440 : vector<8x2048xf32>
    %c0_52 = arith.constant 0 : index
    %c0_53 = arith.constant 0 : index
    %442 = vector.load %arg6[%c0_52, %c0_53] : memref<128x8xf32, #tpu.memory_space<vmem>>, vector<128x8xf32>
    %cst_54 = arith.constant dense<0.000000e+00> : vector<128x2048xf32>
    %443 = tpu.matmul %442, %441, %cst_54 {dimension_numbers = #tpu.dot_dimension_numbers<[1], [0], [0], [1], [0, 0, 1, 1], [], []>} : vector<128x8xf32>, vector<8x2048xf32>, vector<128x2048xf32> -> vector<128x2048xf32>
    %444 = vector.extract_strided_slice %0 {offsets = [0, 8], sizes = [8, 1], strides = [1, 1]} : vector<256x9xf32> to vector<8x1xf32>
    %445 = vector.extract_strided_slice %443 {offsets = [40, 0], sizes = [8, 512], strides = [1, 1]} : vector<128x2048xf32> to vector<8x512xf32>
    %446 = vector.extract_strided_slice %443 {offsets = [56, 512], sizes = [8, 512], strides = [1, 1]} : vector<128x2048xf32> to vector<8x512xf32>
    %447 = vector.extract_strided_slice %446 {offsets = [0, 511], sizes = [8, 1], strides = [1, 1]} : vector<8x512xf32> to vector<8x1xf32>
    %448 = vector.extract_strided_slice %446 {offsets = [0, 0], sizes = [8, 511], strides = [1, 1]} : vector<8x512xf32> to vector<8x511xf32>
    %449 = tpu.concatenate %447, %448 in 1 : vector<8x1xf32>, vector<8x511xf32> -> vector<8x512xf32>
    %450 = vector.extract_strided_slice %3 {offsets = [3, 0], sizes = [1, 512], strides = [1, 1]} : vector<9x512xf32> to vector<1x512xf32>
    %451 = vector.broadcast %450 : vector<1x512xf32> to vector<8x512xf32>
    %452 = arith.mulf %449, %451 : vector<8x512xf32>
    %453 = arith.addf %445, %452 : vector<8x512xf32>
    %454 = vector.extract_strided_slice %443 {offsets = [104, 1024], sizes = [8, 512], strides = [1, 1]} : vector<128x2048xf32> to vector<8x512xf32>
    %455 = vector.extract_strided_slice %454 {offsets = [0, 496], sizes = [8, 16], strides = [1, 1]} : vector<8x512xf32> to vector<8x16xf32>
    %456 = vector.extract_strided_slice %454 {offsets = [0, 0], sizes = [8, 496], strides = [1, 1]} : vector<8x512xf32> to vector<8x496xf32>
    %457 = tpu.concatenate %455, %456 in 1 : vector<8x16xf32>, vector<8x496xf32> -> vector<8x512xf32>
    %458 = vector.extract_strided_slice %3 {offsets = [1, 0], sizes = [1, 512], strides = [1, 1]} : vector<9x512xf32> to vector<1x512xf32>
    %459 = vector.broadcast %458 : vector<1x512xf32> to vector<8x512xf32>
    %460 = arith.mulf %457, %459 : vector<8x512xf32>
    %461 = arith.addf %453, %460 : vector<8x512xf32>
    %462 = vector.extract_strided_slice %443 {offsets = [120, 1536], sizes = [8, 512], strides = [1, 1]} : vector<128x2048xf32> to vector<8x512xf32>
    %463 = vector.extract_strided_slice %462 {offsets = [0, 495], sizes = [8, 17], strides = [1, 1]} : vector<8x512xf32> to vector<8x17xf32>
    %464 = vector.extract_strided_slice %462 {offsets = [0, 0], sizes = [8, 495], strides = [1, 1]} : vector<8x512xf32> to vector<8x495xf32>
    %465 = tpu.concatenate %463, %464 in 1 : vector<8x17xf32>, vector<8x495xf32> -> vector<8x512xf32>
    %466 = vector.extract_strided_slice %3 {offsets = [0, 0], sizes = [1, 512], strides = [1, 1]} : vector<9x512xf32> to vector<1x512xf32>
    %467 = vector.broadcast %466 : vector<1x512xf32> to vector<8x512xf32>
    %468 = arith.mulf %465, %467 : vector<8x512xf32>
    %469 = arith.addf %461, %468 : vector<8x512xf32>
    %470 = vector.broadcast %444 : vector<8x1xf32> to vector<8x512xf32>
    %471 = arith.addf %469, %470 : vector<8x512xf32>
    %472 = math.tanh %471 : vector<8x512xf32>
    %473 = vector.extract_strided_slice %443 {offsets = [48, 0], sizes = [8, 512], strides = [1, 1]} : vector<128x2048xf32> to vector<8x512xf32>
    %474 = vector.extract_strided_slice %443 {offsets = [32, 512], sizes = [8, 512], strides = [1, 1]} : vector<128x2048xf32> to vector<8x512xf32>
    %475 = arith.addf %473, %474 : vector<8x512xf32>
    %476 = vector.extract_strided_slice %443 {offsets = [112, 1024], sizes = [8, 512], strides = [1, 1]} : vector<128x2048xf32> to vector<8x512xf32>
    %477 = vector.extract_strided_slice %476 {offsets = [0, 496], sizes = [8, 16], strides = [1, 1]} : vector<8x512xf32> to vector<8x16xf32>
    %478 = vector.extract_strided_slice %476 {offsets = [0, 0], sizes = [8, 496], strides = [1, 1]} : vector<8x512xf32> to vector<8x496xf32>
    %479 = tpu.concatenate %477, %478 in 1 : vector<8x16xf32>, vector<8x496xf32> -> vector<8x512xf32>
    %480 = vector.extract_strided_slice %3 {offsets = [1, 0], sizes = [1, 512], strides = [1, 1]} : vector<9x512xf32> to vector<1x512xf32>
    %481 = vector.broadcast %480 : vector<1x512xf32> to vector<8x512xf32>
    %482 = arith.mulf %479, %481 : vector<8x512xf32>
    %483 = arith.addf %475, %482 : vector<8x512xf32>
    %484 = vector.extract_strided_slice %443 {offsets = [96, 1536], sizes = [8, 512], strides = [1, 1]} : vector<128x2048xf32> to vector<8x512xf32>
    %485 = vector.extract_strided_slice %484 {offsets = [0, 496], sizes = [8, 16], strides = [1, 1]} : vector<8x512xf32> to vector<8x16xf32>
    %486 = vector.extract_strided_slice %484 {offsets = [0, 0], sizes = [8, 496], strides = [1, 1]} : vector<8x512xf32> to vector<8x496xf32>
    %487 = tpu.concatenate %485, %486 in 1 : vector<8x16xf32>, vector<8x496xf32> -> vector<8x512xf32>
    %488 = vector.extract_strided_slice %3 {offsets = [1, 0], sizes = [1, 512], strides = [1, 1]} : vector<9x512xf32> to vector<1x512xf32>
    %489 = vector.broadcast %488 : vector<1x512xf32> to vector<8x512xf32>
    %490 = arith.mulf %487, %489 : vector<8x512xf32>
    %491 = arith.addf %483, %490 : vector<8x512xf32>
    %492 = vector.broadcast %444 : vector<8x1xf32> to vector<8x512xf32>
    %493 = arith.addf %491, %492 : vector<8x512xf32>
    %494 = math.tanh %493 : vector<8x512xf32>
    %495 = vector.extract_strided_slice %443 {offsets = [56, 0], sizes = [8, 512], strides = [1, 1]} : vector<128x2048xf32> to vector<8x512xf32>
    %496 = vector.extract_strided_slice %443 {offsets = [40, 512], sizes = [8, 512], strides = [1, 1]} : vector<128x2048xf32> to vector<8x512xf32>
    %497 = arith.addf %495, %496 : vector<8x512xf32>
    %498 = vector.extract_strided_slice %443 {offsets = [120, 1024], sizes = [8, 512], strides = [1, 1]} : vector<128x2048xf32> to vector<8x512xf32>
    %499 = vector.extract_strided_slice %498 {offsets = [0, 496], sizes = [8, 16], strides = [1, 1]} : vector<8x512xf32> to vector<8x16xf32>
    %500 = vector.extract_strided_slice %498 {offsets = [0, 0], sizes = [8, 496], strides = [1, 1]} : vector<8x512xf32> to vector<8x496xf32>
    %501 = tpu.concatenate %499, %500 in 1 : vector<8x16xf32>, vector<8x496xf32> -> vector<8x512xf32>
    %502 = vector.extract_strided_slice %3 {offsets = [1, 0], sizes = [1, 512], strides = [1, 1]} : vector<9x512xf32> to vector<1x512xf32>
    %503 = vector.broadcast %502 : vector<1x512xf32> to vector<8x512xf32>
    %504 = arith.mulf %501, %503 : vector<8x512xf32>
    %505 = arith.addf %497, %504 : vector<8x512xf32>
    %506 = vector.extract_strided_slice %443 {offsets = [104, 1536], sizes = [8, 512], strides = [1, 1]} : vector<128x2048xf32> to vector<8x512xf32>
    %507 = vector.extract_strided_slice %506 {offsets = [0, 496], sizes = [8, 16], strides = [1, 1]} : vector<8x512xf32> to vector<8x16xf32>
    %508 = vector.extract_strided_slice %506 {offsets = [0, 0], sizes = [8, 496], strides = [1, 1]} : vector<8x512xf32> to vector<8x496xf32>
    %509 = tpu.concatenate %507, %508 in 1 : vector<8x16xf32>, vector<8x496xf32> -> vector<8x512xf32>
    %510 = vector.extract_strided_slice %3 {offsets = [1, 0], sizes = [1, 512], strides = [1, 1]} : vector<9x512xf32> to vector<1x512xf32>
    %511 = vector.broadcast %510 : vector<1x512xf32> to vector<8x512xf32>
    %512 = arith.mulf %509, %511 : vector<8x512xf32>
    %513 = arith.addf %505, %512 : vector<8x512xf32>
    %514 = vector.broadcast %444 : vector<8x1xf32> to vector<8x512xf32>
    %515 = arith.addf %513, %514 : vector<8x512xf32>
    %516 = math.tanh %515 : vector<8x512xf32>
    %517 = vector.extract_strided_slice %443 {offsets = [32, 0], sizes = [8, 512], strides = [1, 1]} : vector<128x2048xf32> to vector<8x512xf32>
    %518 = vector.extract_strided_slice %517 {offsets = [0, 1], sizes = [8, 511], strides = [1, 1]} : vector<8x512xf32> to vector<8x511xf32>
    %519 = vector.extract_strided_slice %517 {offsets = [0, 0], sizes = [8, 1], strides = [1, 1]} : vector<8x512xf32> to vector<8x1xf32>
    %520 = tpu.concatenate %518, %519 in 1 : vector<8x511xf32>, vector<8x1xf32> -> vector<8x512xf32>
    %521 = vector.extract_strided_slice %3 {offsets = [5, 0], sizes = [1, 512], strides = [1, 1]} : vector<9x512xf32> to vector<1x512xf32>
    %522 = vector.broadcast %521 : vector<1x512xf32> to vector<8x512xf32>
    %523 = arith.mulf %520, %522 : vector<8x512xf32>
    %524 = vector.extract_strided_slice %443 {offsets = [48, 512], sizes = [8, 512], strides = [1, 1]} : vector<128x2048xf32> to vector<8x512xf32>
    %525 = arith.addf %523, %524 : vector<8x512xf32>
    %526 = vector.extract_strided_slice %443 {offsets = [96, 1024], sizes = [8, 512], strides = [1, 1]} : vector<128x2048xf32> to vector<8x512xf32>
    %527 = vector.extract_strided_slice %526 {offsets = [0, 497], sizes = [8, 15], strides = [1, 1]} : vector<8x512xf32> to vector<8x15xf32>
    %528 = vector.extract_strided_slice %526 {offsets = [0, 0], sizes = [8, 497], strides = [1, 1]} : vector<8x512xf32> to vector<8x497xf32>
    %529 = tpu.concatenate %527, %528 in 1 : vector<8x15xf32>, vector<8x497xf32> -> vector<8x512xf32>
    %530 = vector.extract_strided_slice %3 {offsets = [2, 0], sizes = [1, 512], strides = [1, 1]} : vector<9x512xf32> to vector<1x512xf32>
    %531 = vector.broadcast %530 : vector<1x512xf32> to vector<8x512xf32>
    %532 = arith.mulf %529, %531 : vector<8x512xf32>
    %533 = arith.addf %525, %532 : vector<8x512xf32>
    %534 = vector.extract_strided_slice %443 {offsets = [112, 1536], sizes = [8, 512], strides = [1, 1]} : vector<128x2048xf32> to vector<8x512xf32>
    %535 = vector.extract_strided_slice %534 {offsets = [0, 496], sizes = [8, 16], strides = [1, 1]} : vector<8x512xf32> to vector<8x16xf32>
    %536 = vector.extract_strided_slice %534 {offsets = [0, 0], sizes = [8, 496], strides = [1, 1]} : vector<8x512xf32> to vector<8x496xf32>
    %537 = tpu.concatenate %535, %536 in 1 : vector<8x16xf32>, vector<8x496xf32> -> vector<8x512xf32>
    %538 = vector.extract_strided_slice %3 {offsets = [1, 0], sizes = [1, 512], strides = [1, 1]} : vector<9x512xf32> to vector<1x512xf32>
    %539 = vector.broadcast %538 : vector<1x512xf32> to vector<8x512xf32>
    %540 = arith.mulf %537, %539 : vector<8x512xf32>
    %541 = arith.addf %533, %540 : vector<8x512xf32>
    %542 = vector.broadcast %444 : vector<8x1xf32> to vector<8x512xf32>
    %543 = arith.addf %541, %542 : vector<8x512xf32>
    %544 = math.tanh %543 : vector<8x512xf32>
    %545 = vector.extract_strided_slice %443 {offsets = [72, 0], sizes = [8, 512], strides = [1, 1]} : vector<128x2048xf32> to vector<8x512xf32>
    %546 = vector.extract_strided_slice %443 {offsets = [88, 512], sizes = [8, 512], strides = [1, 1]} : vector<128x2048xf32> to vector<8x512xf32>
    %547 = vector.extract_strided_slice %546 {offsets = [0, 511], sizes = [8, 1], strides = [1, 1]} : vector<8x512xf32> to vector<8x1xf32>
    %548 = vector.extract_strided_slice %546 {offsets = [0, 0], sizes = [8, 511], strides = [1, 1]} : vector<8x512xf32> to vector<8x511xf32>
    %549 = tpu.concatenate %547, %548 in 1 : vector<8x1xf32>, vector<8x511xf32> -> vector<8x512xf32>
    %550 = vector.extract_strided_slice %3 {offsets = [3, 0], sizes = [1, 512], strides = [1, 1]} : vector<9x512xf32> to vector<1x512xf32>
    %551 = vector.broadcast %550 : vector<1x512xf32> to vector<8x512xf32>
    %552 = arith.mulf %549, %551 : vector<8x512xf32>
    %553 = arith.addf %545, %552 : vector<8x512xf32>
    %554 = vector.extract_strided_slice %443 {offsets = [8, 1024], sizes = [8, 512], strides = [1, 1]} : vector<128x2048xf32> to vector<8x512xf32>
    %555 = arith.addf %553, %554 : vector<8x512xf32>
    %556 = vector.extract_strided_slice %443 {offsets = [24, 1536], sizes = [8, 512], strides = [1, 1]} : vector<128x2048xf32> to vector<8x512xf32>
    %557 = vector.extract_strided_slice %556 {offsets = [0, 511], sizes = [8, 1], strides = [1, 1]} : vector<8x512xf32> to vector<8x1xf32>
    %558 = vector.extract_strided_slice %556 {offsets = [0, 0], sizes = [8, 511], strides = [1, 1]} : vector<8x512xf32> to vector<8x511xf32>
    %559 = tpu.concatenate %557, %558 in 1 : vector<8x1xf32>, vector<8x511xf32> -> vector<8x512xf32>
    %560 = vector.extract_strided_slice %3 {offsets = [3, 0], sizes = [1, 512], strides = [1, 1]} : vector<9x512xf32> to vector<1x512xf32>
    %561 = vector.broadcast %560 : vector<1x512xf32> to vector<8x512xf32>
    %562 = arith.mulf %559, %561 : vector<8x512xf32>
    %563 = arith.addf %555, %562 : vector<8x512xf32>
    %564 = vector.broadcast %444 : vector<8x1xf32> to vector<8x512xf32>
    %565 = arith.addf %563, %564 : vector<8x512xf32>
    %566 = math.tanh %565 : vector<8x512xf32>
    %567 = vector.extract_strided_slice %443 {offsets = [80, 0], sizes = [8, 512], strides = [1, 1]} : vector<128x2048xf32> to vector<8x512xf32>
    %568 = vector.extract_strided_slice %443 {offsets = [64, 512], sizes = [8, 512], strides = [1, 1]} : vector<128x2048xf32> to vector<8x512xf32>
    %569 = arith.addf %567, %568 : vector<8x512xf32>
    %570 = vector.extract_strided_slice %443 {offsets = [16, 1024], sizes = [8, 512], strides = [1, 1]} : vector<128x2048xf32> to vector<8x512xf32>
    %571 = arith.addf %569, %570 : vector<8x512xf32>
    %572 = vector.extract_strided_slice %443 {offsets = [0, 1536], sizes = [8, 512], strides = [1, 1]} : vector<128x2048xf32> to vector<8x512xf32>
    %573 = arith.addf %571, %572 : vector<8x512xf32>
    %574 = vector.broadcast %444 : vector<8x1xf32> to vector<8x512xf32>
    %575 = arith.addf %573, %574 : vector<8x512xf32>
    %576 = math.tanh %575 : vector<8x512xf32>
    %577 = vector.extract_strided_slice %443 {offsets = [88, 0], sizes = [8, 512], strides = [1, 1]} : vector<128x2048xf32> to vector<8x512xf32>
    %578 = vector.extract_strided_slice %443 {offsets = [72, 512], sizes = [8, 512], strides = [1, 1]} : vector<128x2048xf32> to vector<8x512xf32>
    %579 = arith.addf %577, %578 : vector<8x512xf32>
    %580 = vector.extract_strided_slice %443 {offsets = [24, 1024], sizes = [8, 512], strides = [1, 1]} : vector<128x2048xf32> to vector<8x512xf32>
    %581 = arith.addf %579, %580 : vector<8x512xf32>
    %582 = vector.extract_strided_slice %443 {offsets = [8, 1536], sizes = [8, 512], strides = [1, 1]} : vector<128x2048xf32> to vector<8x512xf32>
    %583 = arith.addf %581, %582 : vector<8x512xf32>
    %584 = vector.broadcast %444 : vector<8x1xf32> to vector<8x512xf32>
    %585 = arith.addf %583, %584 : vector<8x512xf32>
    %586 = math.tanh %585 : vector<8x512xf32>
    %587 = vector.extract_strided_slice %443 {offsets = [64, 0], sizes = [8, 512], strides = [1, 1]} : vector<128x2048xf32> to vector<8x512xf32>
    %588 = vector.extract_strided_slice %587 {offsets = [0, 1], sizes = [8, 511], strides = [1, 1]} : vector<8x512xf32> to vector<8x511xf32>
    %589 = vector.extract_strided_slice %587 {offsets = [0, 0], sizes = [8, 1], strides = [1, 1]} : vector<8x512xf32> to vector<8x1xf32>
    %590 = tpu.concatenate %588, %589 in 1 : vector<8x511xf32>, vector<8x1xf32> -> vector<8x512xf32>
    %591 = vector.extract_strided_slice %3 {offsets = [5, 0], sizes = [1, 512], strides = [1, 1]} : vector<9x512xf32> to vector<1x512xf32>
    %592 = vector.broadcast %591 : vector<1x512xf32> to vector<8x512xf32>
    %593 = arith.mulf %590, %592 : vector<8x512xf32>
    %594 = vector.extract_strided_slice %443 {offsets = [80, 512], sizes = [8, 512], strides = [1, 1]} : vector<128x2048xf32> to vector<8x512xf32>
    %595 = arith.addf %593, %594 : vector<8x512xf32>
    %596 = vector.extract_strided_slice %443 {offsets = [0, 1024], sizes = [8, 512], strides = [1, 1]} : vector<128x2048xf32> to vector<8x512xf32>
    %597 = vector.extract_strided_slice %596 {offsets = [0, 1], sizes = [8, 511], strides = [1, 1]} : vector<8x512xf32> to vector<8x511xf32>
    %598 = vector.extract_strided_slice %596 {offsets = [0, 0], sizes = [8, 1], strides = [1, 1]} : vector<8x512xf32> to vector<8x1xf32>
    %599 = tpu.concatenate %597, %598 in 1 : vector<8x511xf32>, vector<8x1xf32> -> vector<8x512xf32>
    %600 = vector.extract_strided_slice %3 {offsets = [5, 0], sizes = [1, 512], strides = [1, 1]} : vector<9x512xf32> to vector<1x512xf32>
    %601 = vector.broadcast %600 : vector<1x512xf32> to vector<8x512xf32>
    %602 = arith.mulf %599, %601 : vector<8x512xf32>
    %603 = arith.addf %595, %602 : vector<8x512xf32>
    %604 = vector.extract_strided_slice %443 {offsets = [16, 1536], sizes = [8, 512], strides = [1, 1]} : vector<128x2048xf32> to vector<8x512xf32>
    %605 = arith.addf %603, %604 : vector<8x512xf32>
    %606 = vector.broadcast %444 : vector<8x1xf32> to vector<8x512xf32>
    %607 = arith.addf %605, %606 : vector<8x512xf32>
    %608 = math.tanh %607 : vector<8x512xf32>
    %609 = vector.extract_strided_slice %443 {offsets = [104, 0], sizes = [8, 512], strides = [1, 1]} : vector<128x2048xf32> to vector<8x512xf32>
    %610 = vector.extract_strided_slice %443 {offsets = [120, 512], sizes = [8, 512], strides = [1, 1]} : vector<128x2048xf32> to vector<8x512xf32>
    %611 = vector.extract_strided_slice %610 {offsets = [0, 511], sizes = [8, 1], strides = [1, 1]} : vector<8x512xf32> to vector<8x1xf32>
    %612 = vector.extract_strided_slice %610 {offsets = [0, 0], sizes = [8, 511], strides = [1, 1]} : vector<8x512xf32> to vector<8x511xf32>
    %613 = tpu.concatenate %611, %612 in 1 : vector<8x1xf32>, vector<8x511xf32> -> vector<8x512xf32>
    %614 = vector.extract_strided_slice %3 {offsets = [3, 0], sizes = [1, 512], strides = [1, 1]} : vector<9x512xf32> to vector<1x512xf32>
    %615 = vector.broadcast %614 : vector<1x512xf32> to vector<8x512xf32>
    %616 = arith.mulf %613, %615 : vector<8x512xf32>
    %617 = arith.addf %609, %616 : vector<8x512xf32>
    %618 = vector.extract_strided_slice %443 {offsets = [40, 1024], sizes = [8, 512], strides = [1, 1]} : vector<128x2048xf32> to vector<8x512xf32>
    %619 = arith.addf %617, %618 : vector<8x512xf32>
    %620 = vector.extract_strided_slice %443 {offsets = [56, 1536], sizes = [8, 512], strides = [1, 1]} : vector<128x2048xf32> to vector<8x512xf32>
    %621 = vector.extract_strided_slice %620 {offsets = [0, 511], sizes = [8, 1], strides = [1, 1]} : vector<8x512xf32> to vector<8x1xf32>
    %622 = vector.extract_strided_slice %620 {offsets = [0, 0], sizes = [8, 511], strides = [1, 1]} : vector<8x512xf32> to vector<8x511xf32>
    %623 = tpu.concatenate %621, %622 in 1 : vector<8x1xf32>, vector<8x511xf32> -> vector<8x512xf32>
    %624 = vector.extract_strided_slice %3 {offsets = [3, 0], sizes = [1, 512], strides = [1, 1]} : vector<9x512xf32> to vector<1x512xf32>
    %625 = vector.broadcast %624 : vector<1x512xf32> to vector<8x512xf32>
    %626 = arith.mulf %623, %625 : vector<8x512xf32>
    %627 = arith.addf %619, %626 : vector<8x512xf32>
    %628 = vector.broadcast %444 : vector<8x1xf32> to vector<8x512xf32>
    %629 = arith.addf %627, %628 : vector<8x512xf32>
    %630 = math.tanh %629 : vector<8x512xf32>
    %631 = vector.extract_strided_slice %443 {offsets = [112, 0], sizes = [8, 512], strides = [1, 1]} : vector<128x2048xf32> to vector<8x512xf32>
    %632 = vector.extract_strided_slice %443 {offsets = [96, 512], sizes = [8, 512], strides = [1, 1]} : vector<128x2048xf32> to vector<8x512xf32>
    %633 = arith.addf %631, %632 : vector<8x512xf32>
    %634 = vector.extract_strided_slice %443 {offsets = [48, 1024], sizes = [8, 512], strides = [1, 1]} : vector<128x2048xf32> to vector<8x512xf32>
    %635 = arith.addf %633, %634 : vector<8x512xf32>
    %636 = vector.extract_strided_slice %443 {offsets = [32, 1536], sizes = [8, 512], strides = [1, 1]} : vector<128x2048xf32> to vector<8x512xf32>
    %637 = arith.addf %635, %636 : vector<8x512xf32>
    %638 = vector.broadcast %444 : vector<8x1xf32> to vector<8x512xf32>
    %639 = arith.addf %637, %638 : vector<8x512xf32>
    %640 = math.tanh %639 : vector<8x512xf32>
    %641 = vector.extract_strided_slice %443 {offsets = [120, 0], sizes = [8, 512], strides = [1, 1]} : vector<128x2048xf32> to vector<8x512xf32>
    %642 = vector.extract_strided_slice %443 {offsets = [104, 512], sizes = [8, 512], strides = [1, 1]} : vector<128x2048xf32> to vector<8x512xf32>
    %643 = arith.addf %641, %642 : vector<8x512xf32>
    %644 = vector.extract_strided_slice %443 {offsets = [56, 1024], sizes = [8, 512], strides = [1, 1]} : vector<128x2048xf32> to vector<8x512xf32>
    %645 = arith.addf %643, %644 : vector<8x512xf32>
    %646 = vector.extract_strided_slice %443 {offsets = [40, 1536], sizes = [8, 512], strides = [1, 1]} : vector<128x2048xf32> to vector<8x512xf32>
    %647 = arith.addf %645, %646 : vector<8x512xf32>
    %648 = vector.broadcast %444 : vector<8x1xf32> to vector<8x512xf32>
    %649 = arith.addf %647, %648 : vector<8x512xf32>
    %650 = math.tanh %649 : vector<8x512xf32>
    %651 = vector.extract_strided_slice %443 {offsets = [96, 0], sizes = [8, 512], strides = [1, 1]} : vector<128x2048xf32> to vector<8x512xf32>
    %652 = vector.extract_strided_slice %651 {offsets = [0, 1], sizes = [8, 511], strides = [1, 1]} : vector<8x512xf32> to vector<8x511xf32>
    %653 = vector.extract_strided_slice %651 {offsets = [0, 0], sizes = [8, 1], strides = [1, 1]} : vector<8x512xf32> to vector<8x1xf32>
    %654 = tpu.concatenate %652, %653 in 1 : vector<8x511xf32>, vector<8x1xf32> -> vector<8x512xf32>
    %655 = vector.extract_strided_slice %3 {offsets = [5, 0], sizes = [1, 512], strides = [1, 1]} : vector<9x512xf32> to vector<1x512xf32>
    %656 = vector.broadcast %655 : vector<1x512xf32> to vector<8x512xf32>
    %657 = arith.mulf %654, %656 : vector<8x512xf32>
    %658 = vector.extract_strided_slice %443 {offsets = [112, 512], sizes = [8, 512], strides = [1, 1]} : vector<128x2048xf32> to vector<8x512xf32>
    %659 = arith.addf %657, %658 : vector<8x512xf32>
    %660 = vector.extract_strided_slice %443 {offsets = [32, 1024], sizes = [8, 512], strides = [1, 1]} : vector<128x2048xf32> to vector<8x512xf32>
    %661 = vector.extract_strided_slice %660 {offsets = [0, 1], sizes = [8, 511], strides = [1, 1]} : vector<8x512xf32> to vector<8x511xf32>
    %662 = vector.extract_strided_slice %660 {offsets = [0, 0], sizes = [8, 1], strides = [1, 1]} : vector<8x512xf32> to vector<8x1xf32>
    %663 = tpu.concatenate %661, %662 in 1 : vector<8x511xf32>, vector<8x1xf32> -> vector<8x512xf32>
    %664 = vector.extract_strided_slice %3 {offsets = [5, 0], sizes = [1, 512], strides = [1, 1]} : vector<9x512xf32> to vector<1x512xf32>
    %665 = vector.broadcast %664 : vector<1x512xf32> to vector<8x512xf32>
    %666 = arith.mulf %663, %665 : vector<8x512xf32>
    %667 = arith.addf %659, %666 : vector<8x512xf32>
    %668 = vector.extract_strided_slice %443 {offsets = [48, 1536], sizes = [8, 512], strides = [1, 1]} : vector<128x2048xf32> to vector<8x512xf32>
    %669 = arith.addf %667, %668 : vector<8x512xf32>
    %670 = vector.broadcast %444 : vector<8x1xf32> to vector<8x512xf32>
    %671 = arith.addf %669, %670 : vector<8x512xf32>
    %672 = math.tanh %671 : vector<8x512xf32>
    %673 = vector.extract_strided_slice %443 {offsets = [8, 0], sizes = [8, 512], strides = [1, 1]} : vector<128x2048xf32> to vector<8x512xf32>
    %674 = vector.extract_strided_slice %673 {offsets = [0, 16], sizes = [8, 496], strides = [1, 1]} : vector<8x512xf32> to vector<8x496xf32>
    %675 = vector.extract_strided_slice %673 {offsets = [0, 0], sizes = [8, 16], strides = [1, 1]} : vector<8x512xf32> to vector<8x16xf32>
    %676 = tpu.concatenate %674, %675 in 1 : vector<8x496xf32>, vector<8x16xf32> -> vector<8x512xf32>
    %677 = vector.extract_strided_slice %3 {offsets = [7, 0], sizes = [1, 512], strides = [1, 1]} : vector<9x512xf32> to vector<1x512xf32>
    %678 = vector.broadcast %677 : vector<1x512xf32> to vector<8x512xf32>
    %679 = arith.mulf %676, %678 : vector<8x512xf32>
    %680 = vector.extract_strided_slice %443 {offsets = [24, 512], sizes = [8, 512], strides = [1, 1]} : vector<128x2048xf32> to vector<8x512xf32>
    %681 = vector.extract_strided_slice %680 {offsets = [0, 15], sizes = [8, 497], strides = [1, 1]} : vector<8x512xf32> to vector<8x497xf32>
    %682 = vector.extract_strided_slice %680 {offsets = [0, 0], sizes = [8, 15], strides = [1, 1]} : vector<8x512xf32> to vector<8x15xf32>
    %683 = tpu.concatenate %681, %682 in 1 : vector<8x497xf32>, vector<8x15xf32> -> vector<8x512xf32>
    %684 = vector.extract_strided_slice %3 {offsets = [6, 0], sizes = [1, 512], strides = [1, 1]} : vector<9x512xf32> to vector<1x512xf32>
    %685 = vector.broadcast %684 : vector<1x512xf32> to vector<8x512xf32>
    %686 = arith.mulf %683, %685 : vector<8x512xf32>
    %687 = arith.addf %679, %686 : vector<8x512xf32>
    %688 = vector.extract_strided_slice %443 {offsets = [72, 1024], sizes = [8, 512], strides = [1, 1]} : vector<128x2048xf32> to vector<8x512xf32>
    %689 = arith.addf %687, %688 : vector<8x512xf32>
    %690 = vector.extract_strided_slice %443 {offsets = [88, 1536], sizes = [8, 512], strides = [1, 1]} : vector<128x2048xf32> to vector<8x512xf32>
    %691 = vector.extract_strided_slice %690 {offsets = [0, 511], sizes = [8, 1], strides = [1, 1]} : vector<8x512xf32> to vector<8x1xf32>
    %692 = vector.extract_strided_slice %690 {offsets = [0, 0], sizes = [8, 511], strides = [1, 1]} : vector<8x512xf32> to vector<8x511xf32>
    %693 = tpu.concatenate %691, %692 in 1 : vector<8x1xf32>, vector<8x511xf32> -> vector<8x512xf32>
    %694 = vector.extract_strided_slice %3 {offsets = [3, 0], sizes = [1, 512], strides = [1, 1]} : vector<9x512xf32> to vector<1x512xf32>
    %695 = vector.broadcast %694 : vector<1x512xf32> to vector<8x512xf32>
    %696 = arith.mulf %693, %695 : vector<8x512xf32>
    %697 = arith.addf %689, %696 : vector<8x512xf32>
    %698 = vector.broadcast %444 : vector<8x1xf32> to vector<8x512xf32>
    %699 = arith.addf %697, %698 : vector<8x512xf32>
    %700 = math.tanh %699 : vector<8x512xf32>
    %701 = vector.extract_strided_slice %443 {offsets = [16, 0], sizes = [8, 512], strides = [1, 1]} : vector<128x2048xf32> to vector<8x512xf32>
    %702 = vector.extract_strided_slice %701 {offsets = [0, 16], sizes = [8, 496], strides = [1, 1]} : vector<8x512xf32> to vector<8x496xf32>
    %703 = vector.extract_strided_slice %701 {offsets = [0, 0], sizes = [8, 16], strides = [1, 1]} : vector<8x512xf32> to vector<8x16xf32>
    %704 = tpu.concatenate %702, %703 in 1 : vector<8x496xf32>, vector<8x16xf32> -> vector<8x512xf32>
    %705 = vector.extract_strided_slice %3 {offsets = [7, 0], sizes = [1, 512], strides = [1, 1]} : vector<9x512xf32> to vector<1x512xf32>
    %706 = vector.broadcast %705 : vector<1x512xf32> to vector<8x512xf32>
    %707 = arith.mulf %704, %706 : vector<8x512xf32>
    %708 = vector.extract_strided_slice %443 {offsets = [0, 512], sizes = [8, 512], strides = [1, 1]} : vector<128x2048xf32> to vector<8x512xf32>
    %709 = vector.extract_strided_slice %708 {offsets = [0, 16], sizes = [8, 496], strides = [1, 1]} : vector<8x512xf32> to vector<8x496xf32>
    %710 = vector.extract_strided_slice %708 {offsets = [0, 0], sizes = [8, 16], strides = [1, 1]} : vector<8x512xf32> to vector<8x16xf32>
    %711 = tpu.concatenate %709, %710 in 1 : vector<8x496xf32>, vector<8x16xf32> -> vector<8x512xf32>
    %712 = vector.extract_strided_slice %3 {offsets = [7, 0], sizes = [1, 512], strides = [1, 1]} : vector<9x512xf32> to vector<1x512xf32>
    %713 = vector.broadcast %712 : vector<1x512xf32> to vector<8x512xf32>
    %714 = arith.mulf %711, %713 : vector<8x512xf32>
    %715 = arith.addf %707, %714 : vector<8x512xf32>
    %716 = vector.extract_strided_slice %443 {offsets = [80, 1024], sizes = [8, 512], strides = [1, 1]} : vector<128x2048xf32> to vector<8x512xf32>
    %717 = arith.addf %715, %716 : vector<8x512xf32>
    %718 = vector.extract_strided_slice %443 {offsets = [64, 1536], sizes = [8, 512], strides = [1, 1]} : vector<128x2048xf32> to vector<8x512xf32>
    %719 = arith.addf %717, %718 : vector<8x512xf32>
    %720 = vector.broadcast %444 : vector<8x1xf32> to vector<8x512xf32>
    %721 = arith.addf %719, %720 : vector<8x512xf32>
    %722 = math.tanh %721 : vector<8x512xf32>
    %723 = vector.extract_strided_slice %443 {offsets = [24, 0], sizes = [8, 512], strides = [1, 1]} : vector<128x2048xf32> to vector<8x512xf32>
    %724 = vector.extract_strided_slice %723 {offsets = [0, 16], sizes = [8, 496], strides = [1, 1]} : vector<8x512xf32> to vector<8x496xf32>
    %725 = vector.extract_strided_slice %723 {offsets = [0, 0], sizes = [8, 16], strides = [1, 1]} : vector<8x512xf32> to vector<8x16xf32>
    %726 = tpu.concatenate %724, %725 in 1 : vector<8x496xf32>, vector<8x16xf32> -> vector<8x512xf32>
    %727 = vector.extract_strided_slice %3 {offsets = [7, 0], sizes = [1, 512], strides = [1, 1]} : vector<9x512xf32> to vector<1x512xf32>
    %728 = vector.broadcast %727 : vector<1x512xf32> to vector<8x512xf32>
    %729 = arith.mulf %726, %728 : vector<8x512xf32>
    %730 = vector.extract_strided_slice %443 {offsets = [8, 512], sizes = [8, 512], strides = [1, 1]} : vector<128x2048xf32> to vector<8x512xf32>
    %731 = vector.extract_strided_slice %730 {offsets = [0, 16], sizes = [8, 496], strides = [1, 1]} : vector<8x512xf32> to vector<8x496xf32>
    %732 = vector.extract_strided_slice %730 {offsets = [0, 0], sizes = [8, 16], strides = [1, 1]} : vector<8x512xf32> to vector<8x16xf32>
    %733 = tpu.concatenate %731, %732 in 1 : vector<8x496xf32>, vector<8x16xf32> -> vector<8x512xf32>
    %734 = vector.extract_strided_slice %3 {offsets = [7, 0], sizes = [1, 512], strides = [1, 1]} : vector<9x512xf32> to vector<1x512xf32>
    %735 = vector.broadcast %734 : vector<1x512xf32> to vector<8x512xf32>
    %736 = arith.mulf %733, %735 : vector<8x512xf32>
    %737 = arith.addf %729, %736 : vector<8x512xf32>
    %738 = vector.extract_strided_slice %443 {offsets = [88, 1024], sizes = [8, 512], strides = [1, 1]} : vector<128x2048xf32> to vector<8x512xf32>
    %739 = arith.addf %737, %738 : vector<8x512xf32>
    %740 = vector.extract_strided_slice %443 {offsets = [72, 1536], sizes = [8, 512], strides = [1, 1]} : vector<128x2048xf32> to vector<8x512xf32>
    %741 = arith.addf %739, %740 : vector<8x512xf32>
    %742 = vector.broadcast %444 : vector<8x1xf32> to vector<8x512xf32>
    %743 = arith.addf %741, %742 : vector<8x512xf32>
    %744 = math.tanh %743 : vector<8x512xf32>
    %745 = vector.extract_strided_slice %443 {offsets = [0, 0], sizes = [8, 512], strides = [1, 1]} : vector<128x2048xf32> to vector<8x512xf32>
    %746 = vector.extract_strided_slice %745 {offsets = [0, 17], sizes = [8, 495], strides = [1, 1]} : vector<8x512xf32> to vector<8x495xf32>
    %747 = vector.extract_strided_slice %745 {offsets = [0, 0], sizes = [8, 17], strides = [1, 1]} : vector<8x512xf32> to vector<8x17xf32>
    %748 = tpu.concatenate %746, %747 in 1 : vector<8x495xf32>, vector<8x17xf32> -> vector<8x512xf32>
    %749 = vector.extract_strided_slice %3 {offsets = [8, 0], sizes = [1, 512], strides = [1, 1]} : vector<9x512xf32> to vector<1x512xf32>
    %750 = vector.broadcast %749 : vector<1x512xf32> to vector<8x512xf32>
    %751 = arith.mulf %748, %750 : vector<8x512xf32>
    %752 = vector.extract_strided_slice %443 {offsets = [16, 512], sizes = [8, 512], strides = [1, 1]} : vector<128x2048xf32> to vector<8x512xf32>
    %753 = vector.extract_strided_slice %752 {offsets = [0, 16], sizes = [8, 496], strides = [1, 1]} : vector<8x512xf32> to vector<8x496xf32>
    %754 = vector.extract_strided_slice %752 {offsets = [0, 0], sizes = [8, 16], strides = [1, 1]} : vector<8x512xf32> to vector<8x16xf32>
    %755 = tpu.concatenate %753, %754 in 1 : vector<8x496xf32>, vector<8x16xf32> -> vector<8x512xf32>
    %756 = vector.extract_strided_slice %3 {offsets = [7, 0], sizes = [1, 512], strides = [1, 1]} : vector<9x512xf32> to vector<1x512xf32>
    %757 = vector.broadcast %756 : vector<1x512xf32> to vector<8x512xf32>
    %758 = arith.mulf %755, %757 : vector<8x512xf32>
    %759 = arith.addf %751, %758 : vector<8x512xf32>
    %760 = vector.extract_strided_slice %443 {offsets = [64, 1024], sizes = [8, 512], strides = [1, 1]} : vector<128x2048xf32> to vector<8x512xf32>
    %761 = vector.extract_strided_slice %760 {offsets = [0, 1], sizes = [8, 511], strides = [1, 1]} : vector<8x512xf32> to vector<8x511xf32>
    %762 = vector.extract_strided_slice %760 {offsets = [0, 0], sizes = [8, 1], strides = [1, 1]} : vector<8x512xf32> to vector<8x1xf32>
    %763 = tpu.concatenate %761, %762 in 1 : vector<8x511xf32>, vector<8x1xf32> -> vector<8x512xf32>
    %764 = vector.extract_strided_slice %3 {offsets = [5, 0], sizes = [1, 512], strides = [1, 1]} : vector<9x512xf32> to vector<1x512xf32>
    %765 = vector.broadcast %764 : vector<1x512xf32> to vector<8x512xf32>
    %766 = arith.mulf %763, %765 : vector<8x512xf32>
    %767 = arith.addf %759, %766 : vector<8x512xf32>
    %768 = vector.extract_strided_slice %443 {offsets = [80, 1536], sizes = [8, 512], strides = [1, 1]} : vector<128x2048xf32> to vector<8x512xf32>
    %769 = arith.addf %767, %768 : vector<8x512xf32>
    %770 = vector.broadcast %444 : vector<8x1xf32> to vector<8x512xf32>
    %771 = arith.addf %769, %770 : vector<8x512xf32>
    %772 = math.tanh %771 : vector<8x512xf32>
    %773 = tpu.concatenate %472, %494, %516, %544, %566, %576, %586, %608, %630, %640, %650, %672, %700, %722, %744, %772 in 1 : vector<8x512xf32>, vector<8x512xf32>, vector<8x512xf32>, vector<8x512xf32>, vector<8x512xf32>, vector<8x512xf32>, vector<8x512xf32>, vector<8x512xf32>, vector<8x512xf32>, vector<8x512xf32>, vector<8x512xf32>, vector<8x512xf32>, vector<8x512xf32>, vector<8x512xf32>, vector<8x512xf32>, vector<8x512xf32> -> vector<8x8192xf32>
    %c0_55 = arith.constant 0 : index
    %c0_56 = arith.constant 0 : index
    %774 = vector.load %arg13[%c0_55, %c0_56] : memref<8x8192xf32, #tpu.memory_space<vmem>>, vector<8x8192xf32>
    tpu.vector_store %arg13[%c0_55, %c0_56], %773 {strides = array<i32>} : memref<8x8192xf32, #tpu.memory_space<vmem>>, vector<8x8192xf32>,
    return
  }
  func.func @transform_0(%arg0: i32) -> (i32, i32) {
    %c0_i32 = arith.constant 0 : i32
    %c0_i32_0 = arith.constant 0 : i32
    %c0_i32_1 = arith.constant 0 : i32
    return %c0_i32, %c0_i32_0 : i32, i32
  }
  func.func @transform_1(%arg0: i32) -> (i32, i32) {
    %c0_i32 = arith.constant 0 : i32
    %c0_i32_0 = arith.constant 0 : i32
    %c0_i32_1 = arith.constant 0 : i32
    return %c0_i32, %c0_i32_0 : i32, i32
  }
  func.func @transform_2(%arg0: i32) -> (i32, i32) {
    %c0_i32 = arith.constant 0 : i32
    %c0_i32_0 = arith.constant 0 : i32
    %c0_i32_1 = arith.constant 0 : i32
    return %c0_i32, %c0_i32_0 : i32, i32
  }
  func.func @transform_3(%arg0: i32) -> (i32, i32) {
    %c0_i32 = arith.constant 0 : i32
    %c0_i32_0 = arith.constant 0 : i32
    %c0_i32_1 = arith.constant 0 : i32
    return %c0_i32, %c0_i32_0 : i32, i32
  }
  func.func @transform_4(%arg0: i32) -> (i32, i32) {
    %c0_i32 = arith.constant 0 : i32
    %c0_i32_0 = arith.constant 0 : i32
    %c0_i32_1 = arith.constant 0 : i32
    return %c0_i32, %c0_i32_0 : i32, i32
  }
  func.func @transform_5(%arg0: i32) -> (i32, i32) {
    %c0_i32 = arith.constant 0 : i32
    %c0_i32_0 = arith.constant 0 : i32
    %c0_i32_1 = arith.constant 0 : i32
    return %c0_i32, %c0_i32_0 : i32, i32
  }
  func.func @transform_6(%arg0: i32) -> (i32, i32) {
    %c0_i32 = arith.constant 0 : i32
    %c0_i32_0 = arith.constant 0 : i32
    %c0_i32_1 = arith.constant 0 : i32
    return %c0_i32, %c0_i32_0 : i32, i32
  }
  func.func @transform_7(%arg0: i32) -> (i32, i32) {
    %c0_i32 = arith.constant 0 : i32
    %c0_i32_0 = arith.constant 0 : i32
    %c0_i32_1 = arith.constant 0 : i32
    return %c0_i32, %c0_i32_0 : i32, i32
  }
  func.func @transform_8(%arg0: i32) -> (i32, i32) {
    %c0_i32 = arith.constant 0 : i32
    %c0_i32_0 = arith.constant 0 : i32
    %c0_i32_1 = arith.constant 0 : i32
    return %c0_i32, %c0_i32_0 : i32, i32
  }
  func.func @transform_9(%arg0: i32) -> (i32, i32) {
    %c0_i32 = arith.constant 0 : i32
    %c0_i32_0 = arith.constant 0 : i32
    %c0_i32_1 = arith.constant 0 : i32
    return %c0_i32, %c0_i32_0 : i32, i32
  }
  func.func @transform_10(%arg0: i32) -> (i32, i32) {
    %c0_i32 = arith.constant 0 : i32
    %c0_i32_0 = arith.constant 0 : i32
    %c0_i32_1 = arith.constant 0 : i32
    return %c0_i32, %c0_i32_0 : i32, i32
  }
  func.func @transform_11(%arg0: i32) -> (i32, i32) {
    %c0_i32 = arith.constant 0 : i32
    %c0_i32_0 = arith.constant 0 : i32
    %c0_i32_1 = arith.constant 0 : i32
    return %c0_i32, %c0_i32_0 : i32, i32
  }
  func.func @transform_12(%arg0: i32) -> (i32, i32) {
    %c0_i32 = arith.constant 0 : i32
    %c0_i32_0 = arith.constant 0 : i32
    %c0_i32_1 = arith.constant 0 : i32
    return %c0_i32, %c0_i32_0 : i32, i32
  }
}

</mosaic_0001>

<llo_original>
// kernel: generator_forward.1
$region0: #{generator_forward.1}
  #allocation0 [shape = 'u32[]', space=smem, size = 0x4, offset = 0x4, fixed_abs, tag = 'smem constant byte address 0x4 - core index']
  #allocation1 [shape = 'u32[144,128]{1,0:T(1,128)}', space=vmem, size = 0x12000, scoped, tag = 'internal scratch']
  %s0 = inlined_call_operand.vmem [shape: f32[256,32], index: 0, kind: input, shape index: {}]
  %s1 = inlined_call_operand.vmem [shape: f32[256,256], index: 1, kind: input, shape index: {}]
  %s2 = inlined_call_operand.vmem [shape: f32[2048,256], index: 2, kind: input, shape index: {}]
  %s3 = inlined_call_operand.vmem [shape: f32[1024,128], index: 3, kind: input, shape index: {}]
  %s4 = inlined_call_operand.vmem [shape: f32[128,64], index: 4, kind: input, shape index: {}]
  %s5 = inlined_call_operand.vmem [shape: f32[128,8], index: 5, kind: input, shape index: {}]
  %s6 = inlined_call_operand.vmem [shape: f32[256,9], index: 6, kind: input, shape index: {}]
  %s7 = inlined_call_operand.vmem [shape: f32[64,64], index: 7, kind: input, shape index: {}]
  %s8 = inlined_call_operand.vmem [shape: f32[256,256], index: 8, kind: input, shape index: {}]
  %s9 = inlined_call_operand.vmem [shape: f32[9,32], index: 9, kind: input, shape index: {}]
  %s10 = inlined_call_operand.vmem [shape: f32[9,128], index: 10, kind: input, shape index: {}]
  %s11 = inlined_call_operand.vmem [shape: f32[9,512], index: 11, kind: input, shape index: {}]
  %s12 = inlined_call_operand.vmem [shape: f32[8,8192], index: 12, kind: output, shape index: {}]
  %s13 = sld [smem:[#allocation0]]
  $region58: #{generator_forward.1} parent=0
    _
  %s15 = ssub.s32 1, %s13
  %s16 = scalar_select 0, %s15, %s13
  // Predicated region
  $region2: #{generator_forward.1} parent=0 // pred_check
    _
  $region3: #{generator_forward.1} parent=0 // pred_check_branch
    %18 = sbr.rel (0) target = $region5
  $region4: #{generator_forward.1} parent=0 // pred_region
    _
  $region5: #{generator_forward.1} parent=0 // pred_fallthru
    _
  // Predicated region
  $region6: #{generator_forward.1} parent=0 // pred_check
    _
  $region7: #{generator_forward.1} parent=0 // pred_check_branch
    %20 = sbr.rel (0) target = $region9
  $region8: #{generator_forward.1} parent=0 // pred_region
    _
  $region9: #{generator_forward.1} parent=0 // pred_fallthru
    _
  // Predicated region
  $region10: #{generator_forward.1} parent=0 // pred_check
    _
  $region11: #{generator_forward.1} parent=0 // pred_check_branch
    %22 = sbr.rel (0) target = $region13
  $region12: #{generator_forward.1} parent=0 // pred_region
    _
  $region13: #{generator_forward.1} parent=0 // pred_fallthru
    _
  // Predicated region
  $region14: #{generator_forward.1} parent=0 // pred_check
    _
  $region15: #{generator_forward.1} parent=0 // pred_check_branch
    %24 = sbr.rel (0) target = $region17
  $region16: #{generator_forward.1} parent=0 // pred_region
    _
  $region17: #{generator_forward.1} parent=0 // pred_fallthru
    _
  // Predicated region
  $region18: #{generator_forward.1} parent=0 // pred_check
    _
  $region19: #{generator_forward.1} parent=0 // pred_check_branch
    %26 = sbr.rel (0) target = $region21
  $region20: #{generator_forward.1} parent=0 // pred_region
    _
  $region21: #{generator_forward.1} parent=0 // pred_fallthru
    _
  // Predicated region
  $region22: #{generator_forward.1} parent=0 // pred_check
    _
  $region23: #{generator_forward.1} parent=0 // pred_check_branch
    %28 = sbr.rel (0) target = $region25
  $region24: #{generator_forward.1} parent=0 // pred_region
    _
  $region25: #{generator_forward.1} parent=0 // pred_fallthru
    _
  // Predicated region
  $region26: #{generator_forward.1} parent=0 // pred_check
    _
  $region27: #{generator_forward.1} parent=0 // pred_check_branch
    %30 = sbr.rel (0) target = $region29
  $region28: #{generator_forward.1} parent=0 // pred_region
    _
  $region29: #{generator_forward.1} parent=0 // pred_fallthru
    _
  // Predicated region
  $region30: #{generator_forward.1} parent=0 // pred_check
    _
  $region31: #{generator_forward.1} parent=0 // pred_check_branch
    %32 = sbr.rel (0) target = $region33
  $region32: #{generator_forward.1} parent=0 // pred_region
    _
  $region33: #{generator_forward.1} parent=0 // pred_fallthru
    _
  // Predicated region
  $region34: #{generator_forward.1} parent=0 // pred_check
    _
  $region35: #{generator_forward.1} parent=0 // pred_check_branch
    %34 = sbr.rel (0) target = $region37
  $region36: #{generator_forward.1} parent=0 // pred_region
    _
  $region37: #{generator_forward.1} parent=0 // pred_fallthru
    _
  // Predicated region
  $region38: #{generator_forward.1} parent=0 // pred_check
    _
  $region39: #{generator_forward.1} parent=0 // pred_check_branch
    %36 = sbr.rel (0) target = $region41
  $region40: #{generator_forward.1} parent=0 // pred_region
    _
  $region41: #{generator_forward.1} parent=0 // pred_fallthru
    _
  // Predicated region
  $region42: #{generator_forward.1} parent=0 // pred_check
    _
  $region43: #{generator_forward.1} parent=0 // pred_check_branch
    %38 = sbr.rel (0) target = $region45
  $region44: #{generator_forward.1} parent=0 // pred_region
    _
  $region45: #{generator_forward.1} parent=0 // pred_fallthru
    _
  // Predicated region
  $region46: #{generator_forward.1} parent=0 // pred_check
    _
  $region47: #{generator_forward.1} parent=0 // pred_check_branch
    %40 = sbr.rel (0) target = $region49
  $region48: #{generator_forward.1} parent=0 // pred_region
    _
  $region49: #{generator_forward.1} parent=0 // pred_fallthru
    _
  %v41 = vld [vmem:[%s6] sm:$0xff]
  %v42 = vld [vmem:[%s6 + $0x8] sm:$0xff]
  %v43 = vld [vmem:[%s6 + $0x10] sm:$0xff]
  %v44 = vld [vmem:[%s6 + $0x18] sm:$0xff]
  %v45 = vld [vmem:[%s6 + $0x20] sm:$0xff]
  %v46 = vld [vmem:[%s6 + $0x28] sm:$0xff]
  %v47 = vld [vmem:[%s6 + $0x30] sm:$0xff]
  %v48 = vld [vmem:[%s6 + $0x38] sm:$0xff]
  %v49 = vld [vmem:[%s6 + $0x40] sm:$0xff]
  %v50 = vld [vmem:[%s6 + $0x48] sm:$0xff]
  %v51 = vld [vmem:[%s6 + $0x50] sm:$0xff]
  %v52 = vld [vmem:[%s6 + $0x58] sm:$0xff]
  %v53 = vld [vmem:[%s6 + $0x60] sm:$0xff]
  %v54 = vld [vmem:[%s6 + $0x68] sm:$0xff]
  %v55 = vld [vmem:[%s6 + $0x70] sm:$0xff]
  %v56 = vld [vmem:[%s6 + $0x78] sm:$0xff]
  %v57 = vld [vmem:[%s6 + $0x80] sm:$0xff]
  %v58 = vld [vmem:[%s6 + $0x88] sm:$0xff]
  %v59 = vld [vmem:[%s6 + $0x90] sm:$0xff]
  %v60 = vld [vmem:[%s6 + $0x98] sm:$0xff]
  %v61 = vld [vmem:[%s6 + $0xa0] sm:$0xff]
  %v62 = vld [vmem:[%s6 + $0xa8] sm:$0xff]
  %v63 = vld [vmem:[%s6 + $0xb0] sm:$0xff]
  %v64 = vld [vmem:[%s6 + $0xb8] sm:$0xff]
  %v65 = vld [vmem:[%s6 + $0xc0] sm:$0xff]
  %v66 = vld [vmem:[%s6 + $0xc8] sm:$0xff]
  %v67 = vld [vmem:[%s6 + $0xd0] sm:$0xff]
  %v68 = vld [vmem:[%s6 + $0xd8] sm:$0xff]
  %v69 = vld [vmem:[%s6 + $0xe0] sm:$0xff]
  %v70 = vld [vmem:[%s6 + $0xe8] sm:$0xff]
  %v71 = vld [vmem:[%s6 + $0xf0] sm:$0xff]
  %v72 = vld [vmem:[%s6 + $0xf8] sm:$0xff]
  %v73 = vld [vmem:[%s9] sm:$0xff]
  %v74 = vld [vmem:[%s9 + $0x8] sm:$0x1]
  %v75 = vld [vmem:[%s10] sm:$0xff]
  %v76 = vld [vmem:[%s10 + $0x8] sm:$0x1]
  %v77 = vld [vmem:[%s11] sm:$0xff]
  %v78 = vld [vmem:[%s11 + $0x8] sm:$0xff]
  %v79 = vld [vmem:[%s11 + $0x10] sm:$0xff]
  %v80 = vld [vmem:[%s11 + $0x18] sm:$0xff]
  %v81 = vld [vmem:[%s11 + $0x20] sm:$0x1]
  %v82 = vld [vmem:[%s11 + $0x28] sm:$0x1]
  %v83 = vld [vmem:[%s11 + $0x30] sm:$0x1]
  %v84 = vld [vmem:[%s11 + $0x38] sm:$0x1]
  %v85 = vld [vmem:[%s1] sm:$0xff]
  %v86 = vld [vmem:[%s1 + $0x8] sm:$0xff]
  %v87 = vld [vmem:[%s1 + $0x10] sm:$0xff]
  %v88 = vld [vmem:[%s1 + $0x18] sm:$0xff]
  %v89 = vld [vmem:[%s1 + $0x20] sm:$0xff]
  %v90 = vld [vmem:[%s1 + $0x28] sm:$0xff]
  %v91 = vld [vmem:[%s1 + $0x30] sm:$0xff]
  %v92 = vld [vmem:[%s1 + $0x38] sm:$0xff]
  %v93 = vld [vmem:[%s1 + $0x40] sm:$0xff]
  %v94 = vld [vmem:[%s1 + $0x48] sm:$0xff]
  %v95 = vld [vmem:[%s1 + $0x50] sm:$0xff]
  %v96 = vld [vmem:[%s1 + $0x58] sm:$0xff]
  %v97 = vld [vmem:[%s1 + $0x60] sm:$0xff]
  %v98 = vld [vmem:[%s1 + $0x68] sm:$0xff]
  %v99 = vld [vmem:[%s1 + $0x70] sm:$0xff]
  %v100 = vld [vmem:[%s1 + $0x78] sm:$0xff]
  %v101 = vld [vmem:[%s1 + $0x80] sm:$0xff]
  %v102 = vld [vmem:[%s1 + $0x88] sm:$0xff]
  %v103 = vld [vmem:[%s1 + $0x90] sm:$0xff]
  %v104 = vld [vmem:[%s1 + $0x98] sm:$0xff]
  %v105 = vld [vmem:[%s1 + $0xa0] sm:$0xff]
  %v106 = vld [vmem:[%s1 + $0xa8] sm:$0xff]
  %v107 = vld [vmem:[%s1 + $0xb0] sm:$0xff]
  %v108 = vld [vmem:[%s1 + $0xb8] sm:$0xff]
  %v109 = vld [vmem:[%s1 + $0xc0] sm:$0xff]
  %v110 = vld [vmem:[%s1 + $0xc8] sm:$0xff]
  %v111 = vld [vmem:[%s1 + $0xd0] sm:$0xff]
  %v112 = vld [vmem:[%s1 + $0xd8] sm:$0xff]
  %v113 = vld [vmem:[%s1 + $0xe0] sm:$0xff]
  %v114 = vld [vmem:[%s1 + $0xe8] sm:$0xff]
  %v115 = vld [vmem:[%s1 + $0xf0] sm:$0xff]
  %v116 = vld [vmem:[%s1 + $0xf8] sm:$0xff]
  %v117 = vld [vmem:[%s1 + $0x100] sm:$0xff]
  %v118 = vld [vmem:[%s1 + $0x108] sm:$0xff]
  %v119 = vld [vmem:[%s1 + $0x110] sm:$0xff]
  %v120 = vld [vmem:[%s1 + $0x118] sm:$0xff]
  %v121 = vld [vmem:[%s1 + $0x120] sm:$0xff]
  %v122 = vld [vmem:[%s1 + $0x128] sm:$0xff]
  %v123 = vld [vmem:[%s1 + $0x130] sm:$0xff]
  %v124 = vld [vmem:[%s1 + $0x138] sm:$0xff]
  %v125 = vld [vmem:[%s1 + $0x140] sm:$0xff]
  %v126 = vld [vmem:[%s1 + $0x148] sm:$0xff]
  %v127 = vld [vmem:[%s1 + $0x150] sm:$0xff]
  %v128 = vld [vmem:[%s1 + $0x158] sm:$0xff]
  %v129 = vld [vmem:[%s1 + $0x160] sm:$0xff]
  %v130 = vld [vmem:[%s1 + $0x168] sm:$0xff]
  %v131 = vld [vmem:[%s1 + $0x170] sm:$0xff]
  %v132 = vld [vmem:[%s1 + $0x178] sm:$0xff]
  %v133 = vld [vmem:[%s1 + $0x180] sm:$0xff]
  %v134 = vld [vmem:[%s1 + $0x188] sm:$0xff]
  %v135 = vld [vmem:[%s1 + $0x190] sm:$0xff]
  %v136 = vld [vmem:[%s1 + $0x198] sm:$0xff]
  %v137 = vld [vmem:[%s1 + $0x1a0] sm:$0xff]
  %v138 = vld [vmem:[%s1 + $0x1a8] sm:$0xff]
  %v139 = vld [vmem:[%s1 + $0x1b0] sm:$0xff]
  %v140 = vld [vmem:[%s1 + $0x1b8] sm:$0xff]
  %v141 = vld [vmem:[%s1 + $0x1c0] sm:$0xff]
  %v142 = vld [vmem:[%s1 + $0x1c8] sm:$0xff]
  %v143 = vld [vmem:[%s1 + $0x1d0] sm:$0xff]
  %v144 = vld [vmem:[%s1 + $0x1d8] sm:$0xff]
  %v145 = vld [vmem:[%s1 + $0x1e0] sm:$0xff]
  %v146 = vld [vmem:[%s1 + $0x1e8] sm:$0xff]
  %v147 = vld [vmem:[%s1 + $0x1f0] sm:$0xff]
  %v148 = vld [vmem:[%s1 + $0x1f8] sm:$0xff]
  %v149 = vld [vmem:[%s0] sm:$0xff]
  %v150 = vld [vmem:[%s0 + $0x8] sm:$0xff]
  %v151 = vld [vmem:[%s0 + $0x10] sm:$0xff]
  %v152 = vld [vmem:[%s0 + $0x18] sm:$0xff]
  %v153 = vld [vmem:[%s0 + $0x20] sm:$0xff]
  %v154 = vld [vmem:[%s0 + $0x28] sm:$0xff]
  %v155 = vld [vmem:[%s0 + $0x30] sm:$0xff]
  %v156 = vld [vmem:[%s0 + $0x38] sm:$0xff]
  %v157 = vld [vmem:[%s0 + $0x40] sm:$0xff]
  %v158 = vld [vmem:[%s0 + $0x48] sm:$0xff]
  %v159 = vld [vmem:[%s0 + $0x50] sm:$0xff]
  %v160 = vld [vmem:[%s0 + $0x58] sm:$0xff]
  %v161 = vld [vmem:[%s0 + $0x60] sm:$0xff]
  %v162 = vld [vmem:[%s0 + $0x68] sm:$0xff]
  %v163 = vld [vmem:[%s0 + $0x70] sm:$0xff]
  %v164 = vld [vmem:[%s0 + $0x78] sm:$0xff]
  %v165 = vld [vmem:[%s0 + $0x80] sm:$0xff]
  %v166 = vld [vmem:[%s0 + $0x88] sm:$0xff]
  %v167 = vld [vmem:[%s0 + $0x90] sm:$0xff]
  %v168 = vld [vmem:[%s0 + $0x98] sm:$0xff]
  %v169 = vld [vmem:[%s0 + $0xa0] sm:$0xff]
  %v170 = vld [vmem:[%s0 + $0xa8] sm:$0xff]
  %v171 = vld [vmem:[%s0 + $0xb0] sm:$0xff]
  %v172 = vld [vmem:[%s0 + $0xb8] sm:$0xff]
  %v173 = vld [vmem:[%s0 + $0xc0] sm:$0xff]
  %v174 = vld [vmem:[%s0 + $0xc8] sm:$0xff]
  %v175 = vld [vmem:[%s0 + $0xd0] sm:$0xff]
  %v176 = vld [vmem:[%s0 + $0xd8] sm:$0xff]
  %v177 = vld [vmem:[%s0 + $0xe0] sm:$0xff]
  %v178 = vld [vmem:[%s0 + $0xe8] sm:$0xff]
  %v179 = vld [vmem:[%s0 + $0xf0] sm:$0xff]
  %v180 = vld [vmem:[%s0 + $0xf8] sm:$0xff]
  %181 = vmatprep.subr.mxu0 0.0
  %182 = vmatpush1.msra.mxu0 %v149
  %183 = vmatprep.subr.mxu0 0.0
  %184 = vmatpush1.msra.mxu0 %v150
  %185 = vmatprep.subr.mxu0 0.0
  %186 = vmatpush1.msra.mxu0 %v151
  %187 = vmatprep.subr.mxu0 0.0
  %188 = vmatpush1.msra.mxu0 %v152
  %189 = vmatprep.subr.mxu0 0.0
  %190 = vmatpush1.msra.mxu0 %v153
  %191 = vmatprep.subr.mxu0 0.0
  %192 = vmatpush1.msra.mxu0 %v154
  %193 = vmatprep.subr.mxu0 0.0
  %194 = vmatpush1.msra.mxu0 %v155
  %195 = vmatprep.subr.mxu0 0.0
  %196 = vmatpush1.msra.mxu0 %v156
  %197 = vmatprep.subr.mxu0 0.0
  %198 = vmatpush1.msra.mxu0 %v157
  %199 = vmatprep.subr.mxu0 0.0
  %200 = vmatpush1.msra.mxu0 %v158
  %201 = vmatprep.subr.mxu0 0.0
  %202 = vmatpush1.msra.mxu0 %v159
  %203 = vmatprep.subr.mxu0 0.0
  %204 = vmatpush1.msra.mxu0 %v160
  %205 = vmatprep.subr.mxu0 0.0
  %206 = vmatpush1.msra.mxu0 %v161
  %207 = vmatprep.subr.mxu0 0.0
  %208 = vmatpush1.msra.mxu0 %v162
  %209 = vmatprep.subr.mxu0 0.0
  %210 = vmatpush1.msra.mxu0 %v163
  %211 = vmatprep.subr.mxu0 0.0
  %212 = vmatpush1.msra.mxu0 %v164
  %213 = vmatprep.subr.mxu0 0.0
  %214 = vmatpush1.msra.mxu0 %v165
  %215 = vmatprep.subr.mxu0 0.0
  %216 = vmatpush1.msra.mxu0 %v166
  %217 = vmatprep.subr.mxu0 0.0
  %218 = vmatpush1.msra.mxu0 %v167
  %219 = vmatprep.subr.mxu0 0.0
  %220 = vmatpush1.msra.mxu0 %v168
  %221 = vmatprep.subr.mxu0 0.0
  %222 = vmatpush1.msra.mxu0 %v169
  %223 = vmatprep.subr.mxu0 0.0
  %224 = vmatpush1.msra.mxu0 %v170
  %225 = vmatprep.subr.mxu0 0.0
  %226 = vmatpush1.msra.mxu0 %v171
  %227 = vmatprep.subr.mxu0 0.0
  %228 = vmatpush1.msra.mxu0 %v172
  %229 = vmatprep.subr.mxu0 0.0
  %230 = vmatpush1.msra.mxu0 %v173
  %231 = vmatprep.subr.mxu0 0.0
  %232 = vmatpush1.msra.mxu0 %v174
  %233 = vmatprep.subr.mxu0 0.0
  %234 = vmatpush1.msra.mxu0 %v175
  %235 = vmatprep.subr.mxu0 0.0
  %236 = vmatpush1.msra.mxu0 %v176
  %237 = vmatprep.subr.mxu0 0.0
  %238 = vmatpush1.msra.mxu0 %v177
  %239 = vmatprep.subr.mxu0 0.0
  %240 = vmatpush1.msra.mxu0 %v178
  %241 = vmatprep.subr.mxu0 0.0
  %242 = vmatpush1.msra.mxu0 %v179
  %243 = vmatprep.subr.mxu0 0.0
  %244 = vmatpush1.msra.mxu0 %v180
  %245 = vmatprep.mubr.f32.mxu0 %v86
  %246 = vmatmul.mubr.f32.gmra.mrb[0].mxu0 %v85
  %v247 = vpop.f32.mrb[0].mxu0
  %v248 = vadd.f32 0.0, %v247
  %v249 = vpop.f32.mrb[0].mxu0
  %250 = vmatprep.mubr.f32.mxu0 %v88
  %251 = vmatmul.mubr.f32.gmra.mrb[0].mxu0 %v87
  %v252 = vpop.f32.mrb[0].mxu0
  %v253 = vadd.f32 0.0, %v252
  %v254 = vpop.f32.mrb[0].mxu0
  %255 = vmatprep.mubr.f32.mxu0 %v90
  %256 = vmatmul.mubr.f32.gmra.mrb[0].mxu0 %v89
  %v257 = vpop.f32.mrb[0].mxu0
  %v258 = vadd.f32 0.0, %v257
  %v259 = vpop.f32.mrb[0].mxu0
  %260 = vmatprep.mubr.f32.mxu0 %v92
  %261 = vmatmul.mubr.f32.gmra.mrb[0].mxu0 %v91
  %v262 = vpop.f32.mrb[0].mxu0
  %v263 = vadd.f32 0.0, %v262
  %v264 = vpop.f32.mrb[0].mxu0
  %265 = vmatprep.mubr.f32.mxu0 %v94
  %266 = vmatmul.mubr.f32.gmra.mrb[0].mxu0 %v93
  %v267 = vpop.f32.mrb[0].mxu0
  %v268 = vadd.f32 0.0, %v267
  %v269 = vpop.f32.mrb[0].mxu0
  %270 = vmatprep.mubr.f32.mxu0 %v96
  %271 = vmatmul.mubr.f32.gmra.mrb[0].mxu0 %v95
  %v272 = vpop.f32.mrb[0].mxu0
  %v273 = vadd.f32 0.0, %v272
  %v274 = vpop.f32.mrb[0].mxu0
  %275 = vmatprep.mubr.f32.mxu0 %v98
  %276 = vmatmul.mubr.f32.gmra.mrb[0].mxu0 %v97
  %v277 = vpop.f32.mrb[0].mxu0
  %v278 = vadd.f32 0.0, %v277
  %v279 = vpop.f32.mrb[0].mxu0
  %280 = vmatprep.mubr.f32.mxu0 %v100
  %281 = vmatmul.mubr.f32.gmra.mrb[0].mxu0 %v99
  %v282 = vpop.f32.mrb[0].mxu0
  %v283 = vadd.f32 0.0, %v282
  %v284 = vpop.f32.mrb[0].mxu0
  %285 = vmatprep.mubr.f32.mxu0 %v102
  %286 = vmatmul.mubr.f32.gmra.mrb[0].mxu0 %v101
  %v287 = vpop.f32.mrb[0].mxu0
  %v288 = vadd.f32 0.0, %v287
  %v289 = vpop.f32.mrb[0].mxu0
  %290 = vmatprep.mubr.f32.mxu0 %v104
  %291 = vmatmul.mubr.f32.gmra.mrb[0].mxu0 %v103
  %v292 = vpop.f32.mrb[0].mxu0
  %v293 = vadd.f32 0.0, %v292
  %v294 = vpop.f32.mrb[0].mxu0
  %295 = vmatprep.mubr.f32.mxu0 %v106
  %296 = vmatmul.mubr.f32.gmra.mrb[0].mxu0 %v105
  %v297 = vpop.f32.mrb[0].mxu0
  %v298 = vadd.f32 0.0, %v297
  %v299 = vpop.f32.mrb[0].mxu0
  %300 = vmatprep.mubr.f32.mxu0 %v108
  %301 = vmatmul.mubr.f32.gmra.mrb[0].mxu0 %v107
  %v302 = vpop.f32.mrb[0].mxu0
  %v303 = vadd.f32 0.0, %v302
  %v304 = vpop.f32.mrb[0].mxu0
  %305 = vmatprep.mubr.f32.mxu0 %v110
  %306 = vmatmul.mubr.f32.gmra.mrb[0].mxu0 %v109
  %v307 = vpop.f32.mrb[0].mxu0
  %v308 = vadd.f32 0.0, %v307
  %v309 = vpop.f32.mrb[0].mxu0
  %310 = vmatprep.mubr.f32.mxu0 %v112
  %311 = vmatmul.mubr.f32.gmra.mrb[0].mxu0 %v111
  %v312 = vpop.f32.mrb[0].mxu0
  %v313 = vadd.f32 0.0, %v312
  %v314 = vpop.f32.mrb[0].mxu0
  %315 = vmatprep.mubr.f32.mxu0 %v114
  %316 = vmatmul.mubr.f32.gmra.mrb[0].mxu0 %v113
  %v317 = vpop.f32.mrb[0].mxu0
  %v318 = vadd.f32 0.0, %v317
  %v319 = vpop.f32.mrb[0].mxu0
  %320 = vmatprep.mubr.f32.mxu0 %v116
  %321 = vmatmul.mubr.f32.gmra.mrb[0].mxu0 %v115
  %v322 = vpop.f32.mrb[0].mxu0
  %v323 = vadd.f32 0.0, %v322
  %v324 = vpop.f32.mrb[0].mxu0
  %325 = vmatprep.mubr.f32.mxu0 %v118
  %326 = vmatmul.mubr.f32.gmra.mrb[0].mxu0 %v117
  %v327 = vpop.f32.mrb[0].mxu0
  %v328 = vadd.f32 0.0, %v327
  %v329 = vpop.f32.mrb[0].mxu0
  %330 = vmatprep.mubr.f32.mxu0 %v120
  %331 = vmatmul.mubr.f32.gmra.mrb[0].mxu0 %v119
  %v332 = vpop.f32.mrb[0].mxu0
  %v333 = vadd.f32 0.0, %v332
  %v334 = vpop.f32.mrb[0].mxu0
  %335 = vmatprep.mubr.f32.mxu0 %v122
  %336 = vmatmul.mubr.f32.gmra.mrb[0].mxu0 %v121
  %v337 = vpop.f32.mrb[0].mxu0
  %v338 = vadd.f32 0.0, %v337
  %v339 = vpop.f32.mrb[0].mxu0
  %340 = vmatprep.mubr.f32.mxu0 %v124
  %341 = vmatmul.mubr.f32.gmra.mrb[0].mxu0 %v123
  %v342 = vpop.f32.mrb[0].mxu0
  %v343 = vadd.f32 0.0, %v342
  %v344 = vpop.f32.mrb[0].mxu0
  %345 = vmatprep.mubr.f32.mxu0 %v126
  %346 = vmatmul.mubr.f32.gmra.mrb[0].mxu0 %v125
  %v347 = vpop.f32.mrb[0].mxu0
  %v348 = vadd.f32 0.0, %v347
  %v349 = vpop.f32.mrb[0].mxu0
  %350 = vmatprep.mubr.f32.mxu0 %v128
  %351 = vmatmul.mubr.f32.gmra.mrb[0].mxu0 %v127
  %v352 = vpop.f32.mrb[0].mxu0
  %v353 = vadd.f32 0.0, %v352
  %v354 = vpop.f32.mrb[0].mxu0
  %355 = vmatprep.mubr.f32.mxu0 %v130
  %356 = vmatmul.mubr.f32.gmra.mrb[0].mxu0 %v129
  %v357 = vpop.f32.mrb[0].mxu0
  %v358 = vadd.f32 0.0, %v357
  %v359 = vpop.f32.mrb[0].mxu0
  %360 = vmatprep.mubr.f32.mxu0 %v132
  %361 = vmatmul.mubr.f32.gmra.mrb[0].mxu0 %v131
  %v362 = vpop.f32.mrb[0].mxu0
  %v363 = vadd.f32 0.0, %v362
  %v364 = vpop.f32.mrb[0].mxu0
  %365 = vmatprep.mubr.f32.mxu0 %v134
  %366 = vmatmul.mubr.f32.gmra.mrb[0].mxu0 %v133
  %v367 = vpop.f32.mrb[0].mxu0
  %v368 = vadd.f32 0.0, %v367
  %v369 = vpop.f32.mrb[0].mxu0
  %370 = vmatprep.mubr.f32.mxu0 %v136
  %371 = vmatmul.mubr.f32.gmra.mrb[0].mxu0 %v135
  %v372 = vpop.f32.mrb[0].mxu0
  %v373 = vadd.f32 0.0, %v372
  %v374 = vpop.f32.mrb[0].mxu0
  %375 = vmatprep.mubr.f32.mxu0 %v138
  %376 = vmatmul.mubr.f32.gmra.mrb[0].mxu0 %v137
  %v377 = vpop.f32.mrb[0].mxu0
  %v378 = vadd.f32 0.0, %v377
  %v379 = vpop.f32.mrb[0].mxu0
  %380 = vmatprep.mubr.f32.mxu0 %v140
  %381 = vmatmul.mubr.f32.gmra.mrb[0].mxu0 %v139
  %v382 = vpop.f32.mrb[0].mxu0
  %v383 = vadd.f32 0.0, %v382
  %v384 = vpop.f32.mrb[0].mxu0
  %385 = vmatprep.mubr.f32.mxu0 %v142
  %386 = vmatmul.mubr.f32.gmra.mrb[0].mxu0 %v141
  %v387 = vpop.f32.mrb[0].mxu0
  %v388 = vadd.f32 0.0, %v387
  %v389 = vpop.f32.mrb[0].mxu0
  %390 = vmatprep.mubr.f32.mxu0 %v144
  %391 = vmatmul.mubr.f32.gmra.mrb[0].mxu0 %v143
  %v392 = vpop.f32.mrb[0].mxu0
  %v393 = vadd.f32 0.0, %v392
  %v394 = vpop.f32.mrb[0].mxu0
  %395 = vmatprep.mubr.f32.mxu0 %v146
  %396 = vmatmul.mubr.f32.gmra.mrb[0].mxu0 %v145
  %v397 = vpop.f32.mrb[0].mxu0
  %v398 = vadd.f32 0.0, %v397
  %v399 = vpop.f32.mrb[0].mxu0
  %400 = vmatprep.mubr.f32.mxu0 %v148
  %401 = vmatmul.mubr.f32.gmra.mrb[0].mxu0 %v147
  %v402 = vpop.f32.mrb[0].mxu0
  %v403 = vadd.f32 0.0, %v402
  %v404 = vpop.f32.mrb[0].mxu0
  %405 = vdwg.mxu0
  %vm406 = vcmask 261120
  %v407 = vsel %vm406, %v248, 0.0
  %408 = vadd.xlane.f32.xlu0 %v407
  %v409 = vpop.xlane.xlu0 %408
  %v410 = vsel %vm406, %v253, 0.0
  %411 = vadd.xlane.f32.xlu0 %v410
  %v412 = vpop.xlane.xlu0 %411
  %v413 = vsel %vm406, %v258, 0.0
  %414 = vadd.xlane.f32.xlu0 %v413
  %v415 = vpop.xlane.xlu0 %414
  %v416 = vsel %vm406, %v263, 0.0
  %417 = vadd.xlane.f32.xlu0 %v416
  %v418 = vpop.xlane.xlu0 %417
  %v419 = vsel %vm406, %v268, 0.0
  %420 = vadd.xlane.f32.xlu0 %v419
  %v421 = vpop.xlane.xlu0 %420
  %v422 = vsel %vm406, %v273, 0.0
  %423 = vadd.xlane.f32.xlu0 %v422
  %v424 = vpop.xlane.xlu0 %423
  %v425 = vsel %vm406, %v278, 0.0
  %426 = vadd.xlane.f32.xlu0 %v425
  %v427 = vpop.xlane.xlu0 %426
  %v428 = vsel %vm406, %v283, 0.0
  %429 = vadd.xlane.f32.xlu0 %v428
  %v430 = vpop.xlane.xlu0 %429
  %v431 = vsel %vm406, %v288, 0.0
  %432 = vadd.xlane.f32.xlu0 %v431
  %v433 = vpop.xlane.xlu0 %432
  %v434 = vsel %vm406, %v293, 0.0
  %435 = vadd.xlane.f32.xlu0 %v434
  %v436 = vpop.xlane.xlu0 %435
  %v437 = vsel %vm406, %v298, 0.0
  %438 = vadd.xlane.f32.xlu0 %v437
  %v439 = vpop.xlane.xlu0 %438
  %v440 = vsel %vm406, %v303, 0.0
  %441 = vadd.xlane.f32.xlu0 %v440
  %v442 = vpop.xlane.xlu0 %441
  %v443 = vsel %vm406, %v308, 0.0
  %444 = vadd.xlane.f32.xlu0 %v443
  %v445 = vpop.xlane.xlu0 %444
  %v446 = vsel %vm406, %v313, 0.0
  %447 = vadd.xlane.f32.xlu0 %v446
  %v448 = vpop.xlane.xlu0 %447
  %v449 = vsel %vm406, %v318, 0.0
  %450 = vadd.xlane.f32.xlu0 %v449
  %v451 = vpop.xlane.xlu0 %450
  %v452 = vsel %vm406, %v323, 0.0
  %453 = vadd.xlane.f32.xlu0 %v452
  %v454 = vpop.xlane.xlu0 %453
  %v455 = vsel %vm406, %v328, 0.0
  %456 = vadd.xlane.f32.xlu0 %v455
  %v457 = vpop.xlane.xlu0 %456
  %v458 = vsel %vm406, %v333, 0.0
  %459 = vadd.xlane.f32.xlu0 %v458
  %v460 = vpop.xlane.xlu0 %459
  %v461 = vsel %vm406, %v338, 0.0
  %462 = vadd.xlane.f32.xlu0 %v461
  %v463 = vpop.xlane.xlu0 %462
  %v464 = vsel %vm406, %v343, 0.0
  %465 = vadd.xlane.f32.xlu0 %v464
  %v466 = vpop.xlane.xlu0 %465
  %v467 = vsel %vm406, %v348, 0.0
  %468 = vadd.xlane.f32.xlu0 %v467
  %v469 = vpop.xlane.xlu0 %468
  %v470 = vsel %vm406, %v353, 0.0
  %471 = vadd.xlane.f32.xlu0 %v470
  %v472 = vpop.xlane.xlu0 %471
  %v473 = vsel %vm406, %v358, 0.0
  %474 = vadd.xlane.f32.xlu0 %v473
  %v475 = vpop.xlane.xlu0 %474
  %v476 = vsel %vm406, %v363, 0.0
  %477 = vadd.xlane.f32.xlu0 %v476
  %v478 = vpop.xlane.xlu0 %477
  %v479 = vsel %vm406, %v368, 0.0
  %480 = vadd.xlane.f32.xlu0 %v479
  %v481 = vpop.xlane.xlu0 %480
  %v482 = vsel %vm406, %v373, 0.0
  %483 = vadd.xlane.f32.xlu0 %v482
  %v484 = vpop.xlane.xlu0 %483
  %v485 = vsel %vm406, %v378, 0.0
  %486 = vadd.xlane.f32.xlu0 %v485
  %v487 = vpop.xlane.xlu0 %486
  %v488 = vsel %vm406, %v383, 0.0
  %489 = vadd.xlane.f32.xlu0 %v488
  %v490 = vpop.xlane.xlu0 %489
  %v491 = vsel %vm406, %v388, 0.0
  %492 = vadd.xlane.f32.xlu0 %v491
  %v493 = vpop.xlane.xlu0 %492
  %v494 = vsel %vm406, %v393, 0.0
  %495 = vadd.xlane.f32.xlu0 %v494
  %v496 = vpop.xlane.xlu0 %495
  %v497 = vsel %vm406, %v398, 0.0
  %498 = vadd.xlane.f32.xlu0 %v497
  %v499 = vpop.xlane.xlu0 %498
  %v500 = vsel %vm406, %v403, 0.0
  %501 = vadd.xlane.f32.xlu0 %v500
  %v502 = vpop.xlane.xlu0 %501
  %v503 = vmul.f32 %v248, %v248
  %v504 = vmul.f32 %v253, %v253
  %v505 = vmul.f32 %v258, %v258
  %v506 = vmul.f32 %v263, %v263
  %v507 = vmul.f32 %v268, %v268
  %v508 = vmul.f32 %v273, %v273
  %v509 = vmul.f32 %v278, %v278
  %v510 = vmul.f32 %v283, %v283
  %v511 = vmul.f32 %v288, %v288
  %v512 = vmul.f32 %v293, %v293
  %v513 = vmul.f32 %v298, %v298
  %v514 = vmul.f32 %v303, %v303
  %v515 = vmul.f32 %v308, %v308
  %v516 = vmul.f32 %v313, %v313
  %v517 = vmul.f32 %v318, %v318
  %v518 = vmul.f32 %v323, %v323
  %v519 = vmul.f32 %v328, %v328
  %v520 = vmul.f32 %v333, %v333
  %v521 = vmul.f32 %v338, %v338
  %v522 = vmul.f32 %v343, %v343
  %v523 = vmul.f32 %v348, %v348
  %v524 = vmul.f32 %v353, %v353
  %v525 = vmul.f32 %v358, %v358
  %v526 = vmul.f32 %v363, %v363
  %v527 = vmul.f32 %v368, %v368
  %v528 = vmul.f32 %v373, %v373
  %v529 = vmul.f32 %v378, %v378
  %v530 = vmul.f32 %v383, %v383
  %v531 = vmul.f32 %v388, %v388
  %v532 = vmul.f32 %v393, %v393
  %v533 = vmul.f32 %v398, %v398
  %v534 = vmul.f32 %v403, %v403
  %v535 = vsel %vm406, %v503, 0.0
  %536 = vadd.xlane.f32.xlu0 %v535
  %v537 = vpop.xlane.xlu0 %536
  %v538 = vsel %vm406, %v504, 0.0
  %539 = vadd.xlane.f32.xlu0 %v538
  %v540 = vpop.xlane.xlu0 %539
  %v541 = vsel %vm406, %v505, 0.0
  %542 = vadd.xlane.f32.xlu0 %v541
  %v543 = vpop.xlane.xlu0 %542
  %v544 = vsel %vm406, %v506, 0.0
  %545 = vadd.xlane.f32.xlu0 %v544
  %v546 = vpop.xlane.xlu0 %545
  %v547 = vsel %vm406, %v507, 0.0
  %548 = vadd.xlane.f32.xlu0 %v547
  %v549 = vpop.xlane.xlu0 %548
  %v550 = vsel %vm406, %v508, 0.0
  %551 = vadd.xlane.f32.xlu0 %v550
  %v552 = vpop.xlane.xlu0 %551
  %v553 = vsel %vm406, %v509, 0.0
  %554 = vadd.xlane.f32.xlu0 %v553
  %v555 = vpop.xlane.xlu0 %554
  %v556 = vsel %vm406, %v510, 0.0
  %557 = vadd.xlane.f32.xlu0 %v556
  %v558 = vpop.xlane.xlu0 %557
  %v559 = vsel %vm406, %v511, 0.0
  %560 = vadd.xlane.f32.xlu0 %v559
  %v561 = vpop.xlane.xlu0 %560
  %v562 = vsel %vm406, %v512, 0.0
  %563 = vadd.xlane.f32.xlu0 %v562
  %v564 = vpop.xlane.xlu0 %563
  %v565 = vsel %vm406, %v513, 0.0
  %566 = vadd.xlane.f32.xlu0 %v565
  %v567 = vpop.xlane.xlu0 %566
  %v568 = vsel %vm406, %v514, 0.0
  %569 = vadd.xlane.f32.xlu0 %v568
  %v570 = vpop.xlane.xlu0 %569
  %v571 = vsel %vm406, %v515, 0.0
  %572 = vadd.xlane.f32.xlu0 %v571
  %v573 = vpop.xlane.xlu0 %572
  %v574 = vsel %vm406, %v516, 0.0
  %575 = vadd.xlane.f32.xlu0 %v574
  %v576 = vpop.xlane.xlu0 %575
  %v577 = vsel %vm406, %v517, 0.0
  %578 = vadd.xlane.f32.xlu0 %v577
  %v579 = vpop.xlane.xlu0 %578
  %v580 = vsel %vm406, %v518, 0.0
  %581 = vadd.xlane.f32.xlu0 %v580
  %v582 = vpop.xlane.xlu0 %581
  %v583 = vsel %vm406, %v519, 0.0
  %584 = vadd.xlane.f32.xlu0 %v583
  %v585 = vpop.xlane.xlu0 %584
  %v586 = vsel %vm406, %v520, 0.0
  %587 = vadd.xlane.f32.xlu0 %v586
  %v588 = vpop.xlane.xlu0 %587
  %v589 = vsel %vm406, %v521, 0.0
  %590 = vadd.xlane.f32.xlu0 %v589
  %v591 = vpop.xlane.xlu0 %590
  %v592 = vsel %vm406, %v522, 0.0
  %593 = vadd.xlane.f32.xlu0 %v592
  %v594 = vpop.xlane.xlu0 %593
  %v595 = vsel %vm406, %v523, 0.0
  %596 = vadd.xlane.f32.xlu0 %v595
  %v597 = vpop.xlane.xlu0 %596
  %v598 = vsel %vm406, %v524, 0.0
  %599 = vadd.xlane.f32.xlu0 %v598
  %v600 = vpop.xlane.xlu0 %599
  %v601 = vsel %vm406, %v525, 0.0
  %602 = vadd.xlane.f32.xlu0 %v601
  %v603 = vpop.xlane.xlu0 %602
  %v604 = vsel %vm406, %v526, 0.0
  %605 = vadd.xlane.f32.xlu0 %v604
  %v606 = vpop.xlane.xlu0 %605
  %v607 = vsel %vm406, %v527, 0.0
  %608 = vadd.xlane.f32.xlu0 %v607
  %v609 = vpop.xlane.xlu0 %608
  %v610 = vsel %vm406, %v528, 0.0
  %611 = vadd.xlane.f32.xlu0 %v610
  %v612 = vpop.xlane.xlu0 %611
  %v613 = vsel %vm406, %v529, 0.0
  %614 = vadd.xlane.f32.xlu0 %v613
  %v615 = vpop.xlane.xlu0 %614
  %v616 = vsel %vm406, %v530, 0.0
  %617 = vadd.xlane.f32.xlu0 %v616
  %v618 = vpop.xlane.xlu0 %617
  %v619 = vsel %vm406, %v531, 0.0
  %620 = vadd.xlane.f32.xlu0 %v619
  %v621 = vpop.xlane.xlu0 %620
  %v622 = vsel %vm406, %v532, 0.0
  %623 = vadd.xlane.f32.xlu0 %v622
  %v624 = vpop.xlane.xlu0 %623
  %v625 = vsel %vm406, %v533, 0.0
  %626 = vadd.xlane.f32.xlu0 %v625
  %v627 = vpop.xlane.xlu0 %626
  %v628 = vsel %vm406, %v534, 0.0
  %629 = vadd.xlane.f32.xlu0 %v628
  %v630 = vpop.xlane.xlu0 %629
  %v631 = vmul.f32 %v409, 0.03125
  %v632 = vmul.f32 %v412, 0.03125
  %v633 = vmul.f32 %v415, 0.03125
  %v634 = vmul.f32 %v418, 0.03125
  %v635 = vmul.f32 %v421, 0.03125
  %v636 = vmul.f32 %v424, 0.03125
  %v637 = vmul.f32 %v427, 0.03125
  %v638 = vmul.f32 %v430, 0.03125
  %v639 = vmul.f32 %v433, 0.03125
  %v640 = vmul.f32 %v436, 0.03125
  %v641 = vmul.f32 %v439, 0.03125
  %v642 = vmul.f32 %v442, 0.03125
  %v643 = vmul.f32 %v445, 0.03125
  %v644 = vmul.f32 %v448, 0.03125
  %v645 = vmul.f32 %v451, 0.03125
  %v646 = vmul.f32 %v454, 0.03125
  %v647 = vmul.f32 %v457, 0.03125
  %v648 = vmul.f32 %v460, 0.03125
  %v649 = vmul.f32 %v463, 0.03125
  %v650 = vmul.f32 %v466, 0.03125
  %v651 = vmul.f32 %v469, 0.03125
  %v652 = vmul.f32 %v472, 0.03125
  %v653 = vmul.f32 %v475, 0.03125
  %v654 = vmul.f32 %v478, 0.03125
  %v655 = vmul.f32 %v481, 0.03125
  %v656 = vmul.f32 %v484, 0.03125
  %v657 = vmul.f32 %v487, 0.03125
  %v658 = vmul.f32 %v490, 0.03125
  %v659 = vmul.f32 %v493, 0.03125
  %v660 = vmul.f32 %v496, 0.03125
  %v661 = vmul.f32 %v499, 0.03125
  %v662 = vmul.f32 %v502, 0.03125
  %v663 = vmul.f32 %v537, 0.03125
  %v664 = vmul.f32 %v540, 0.03125
  %v665 = vmul.f32 %v543, 0.03125
  %v666 = vmul.f32 %v546, 0.03125
  %v667 = vmul.f32 %v549, 0.03125
  %v668 = vmul.f32 %v552, 0.03125
  %v669 = vmul.f32 %v555, 0.03125
  %v670 = vmul.f32 %v558, 0.03125
  %v671 = vmul.f32 %v561, 0.03125
  %v672 = vmul.f32 %v564, 0.03125
  %v673 = vmul.f32 %v567, 0.03125
  %v674 = vmul.f32 %v570, 0.03125
  %v675 = vmul.f32 %v573, 0.03125
  %v676 = vmul.f32 %v576, 0.03125
  %v677 = vmul.f32 %v579, 0.03125
  %v678 = vmul.f32 %v582, 0.03125
  %v679 = vmul.f32 %v585, 0.03125
  %v680 = vmul.f32 %v588, 0.03125
  %v681 = vmul.f32 %v591, 0.03125
  %v682 = vmul.f32 %v594, 0.03125
  %v683 = vmul.f32 %v597, 0.03125
  %v684 = vmul.f32 %v600, 0.03125
  %v685 = vmul.f32 %v603, 0.03125
  %v686 = vmul.f32 %v606, 0.03125
  %v687 = vmul.f32 %v609, 0.03125
  %v688 = vmul.f32 %v612, 0.03125
  %v689 = vmul.f32 %v615, 0.03125
  %v690 = vmul.f32 %v618, 0.03125
  %v691 = vmul.f32 %v621, 0.03125
  %v692 = vmul.f32 %v624, 0.03125
  %v693 = vmul.f32 %v627, 0.03125
  %v694 = vmul.f32 %v630, 0.03125
  %v695 = vmul.f32 %v631, %v631
  %v696 = vmul.f32 %v632, %v632
  %v697 = vmul.f32 %v633, %v633
  %v698 = vmul.f32 %v634, %v634
  %v699 = vmul.f32 %v635, %v635
  %v700 = vmul.f32 %v636, %v636
  %v701 = vmul.f32 %v637, %v637
  %v702 = vmul.f32 %v638, %v638
  %v703 = vmul.f32 %v639, %v639
  %v704 = vmul.f32 %v640, %v640
  %v705 = vmul.f32 %v641, %v641
  %v706 = vmul.f32 %v642, %v642
  %v707 = vmul.f32 %v643, %v643
  %v708 = vmul.f32 %v644, %v644
  %v709 = vmul.f32 %v645, %v645
  %v710 = vmul.f32 %v646, %v646
  %v711 = vmul.f32 %v647, %v647
  %v712 = vmul.f32 %v648, %v648
  %v713 = vmul.f32 %v649, %v649
  %v714 = vmul.f32 %v650, %v650
  %v715 = vmul.f32 %v651, %v651
  %v716 = vmul.f32 %v652, %v652
  %v717 = vmul.f32 %v653, %v653
  %v718 = vmul.f32 %v654, %v654
  %v719 = vmul.f32 %v655, %v655
  %v720 = vmul.f32 %v656, %v656
  %v721 = vmul.f32 %v657, %v657
  %v722 = vmul.f32 %v658, %v658
  %v723 = vmul.f32 %v659, %v659
  %v724 = vmul.f32 %v660, %v660
  %v725 = vmul.f32 %v661, %v661
  %v726 = vmul.f32 %v662, %v662
  %v727 = vsub.f32 %v663, %v695
  %v728 = vsub.f32 %v664, %v696
  %v729 = vsub.f32 %v665, %v697
  %v730 = vsub.f32 %v666, %v698
  %v731 = vsub.f32 %v667, %v699
  %v732 = vsub.f32 %v668, %v700
  %v733 = vsub.f32 %v669, %v701
  %v734 = vsub.f32 %v670, %v702
  %v735 = vsub.f32 %v671, %v703
  %v736 = vsub.f32 %v672, %v704
  %v737 = vsub.f32 %v673, %v705
  %v738 = vsub.f32 %v674, %v706
  %v739 = vsub.f32 %v675, %v707
  %v740 = vsub.f32 %v676, %v708
  %v741 = vsub.f32 %v677, %v709
  %v742 = vsub.f32 %v678, %v710
  %v743 = vsub.f32 %v679, %v711
  %v744 = vsub.f32 %v680, %v712
  %v745 = vsub.f32 %v681, %v713
  %v746 = vsub.f32 %v682, %v714
  %v747 = vsub.f32 %v683, %v715
  %v748 = vsub.f32 %v684, %v716
  %v749 = vsub.f32 %v685, %v717
  %v750 = vsub.f32 %v686, %v718
  %v751 = vsub.f32 %v687, %v719
  %v752 = vsub.f32 %v688, %v720
  %v753 = vsub.f32 %v689, %v721
  %v754 = vsub.f32 %v690, %v722
  %v755 = vsub.f32 %v691, %v723
  %v756 = vsub.f32 %v692, %v724
  %v757 = vsub.f32 %v693, %v725
  %v758 = vsub.f32 %v694, %v726
  %v759 = vadd.f32 %v727, 1e-05
  %v760 = vadd.f32 %v728, 1e-05
  %v761 = vadd.f32 %v729, 1e-05
  %v762 = vadd.f32 %v730, 1e-05
  %v763 = vadd.f32 %v731, 1e-05
  %v764 = vadd.f32 %v732, 1e-05
  %v765 = vadd.f32 %v733, 1e-05
  %v766 = vadd.f32 %v734, 1e-05
  %v767 = vadd.f32 %v735, 1e-05
  %v768 = vadd.f32 %v736, 1e-05
  %v769 = vadd.f32 %v737, 1e-05
  %v770 = vadd.f32 %v738, 1e-05
  %v771 = vadd.f32 %v739, 1e-05
  %v772 = vadd.f32 %v740, 1e-05
  %v773 = vadd.f32 %v741, 1e-05
  %v774 = vadd.f32 %v742, 1e-05
  %v775 = vadd.f32 %v743, 1e-05
  %v776 = vadd.f32 %v744, 1e-05
  %v777 = vadd.f32 %v745, 1e-05
  %v778 = vadd.f32 %v746, 1e-05
  %v779 = vadd.f32 %v747, 1e-05
  %v780 = vadd.f32 %v748, 1e-05
  %v781 = vadd.f32 %v749, 1e-05
  %v782 = vadd.f32 %v750, 1e-05
  %v783 = vadd.f32 %v751, 1e-05
  %v784 = vadd.f32 %v752, 1e-05
  %v785 = vadd.f32 %v753, 1e-05
  %v786 = vadd.f32 %v754, 1e-05
  %v787 = vadd.f32 %v755, 1e-05
  %v788 = vadd.f32 %v756, 1e-05
  %v789 = vadd.f32 %v757, 1e-05
  %v790 = vadd.f32 %v758, 1e-05
  %v791 = vrsqrt.pop %v759
  %v792 = vrsqrt.pop %v760
  %v793 = vrsqrt.pop %v761
  %v794 = vrsqrt.pop %v762
  %v795 = vrsqrt.pop %v763
  %v796 = vrsqrt.pop %v764
  %v797 = vrsqrt.pop %v765
  %v798 = vrsqrt.pop %v766
  %v799 = vrsqrt.pop %v767
  %v800 = vrsqrt.pop %v768
  %v801 = vrsqrt.pop %v769
  %v802 = vrsqrt.pop %v770
  %v803 = vrsqrt.pop %v771
  %v804 = vrsqrt.pop %v772
  %v805 = vrsqrt.pop %v773
  %v806 = vrsqrt.pop %v774
  %v807 = vrsqrt.pop %v775
  %v808 = vrsqrt.pop %v776
  %v809 = vrsqrt.pop %v777
  %v810 = vrsqrt.pop %v778
  %v811 = vrsqrt.pop %v779
  %v812 = vrsqrt.pop %v780
  %v813 = vrsqrt.pop %v781
  %v814 = vrsqrt.pop %v782
  %v815 = vrsqrt.pop %v783
  %v816 = vrsqrt.pop %v784
  %v817 = vrsqrt.pop %v785
  %v818 = vrsqrt.pop %v786
  %v819 = vrsqrt.pop %v787
  %v820 = vrsqrt.pop %v788
  %v821 = vrsqrt.pop %v789
  %v822 = vrsqrt.pop %v790
  %v823 = vmul.f32 %v41, %v791
  %v824 = vmul.f32 %v42, %v792
  %v825 = vmul.f32 %v43, %v793
  %v826 = vmul.f32 %v44, %v794
  %v827 = vmul.f32 %v45, %v795
  %v828 = vmul.f32 %v46, %v796
  %v829 = vmul.f32 %v47, %v797
  %v830 = vmul.f32 %v48, %v798
  %v831 = vmul.f32 %v49, %v799
  %v832 = vmul.f32 %v50, %v800
  %v833 = vmul.f32 %v51, %v801
  %v834 = vmul.f32 %v52, %v802
  %v835 = vmul.f32 %v53, %v803
  %v836 = vmul.f32 %v54, %v804
  %v837 = vmul.f32 %v55, %v805
  %v838 = vmul.f32 %v56, %v806
  %v839 = vmul.f32 %v57, %v807
  %v840 = vmul.f32 %v58, %v808
  %v841 = vmul.f32 %v59, %v809
  %v842 = vmul.f32 %v60, %v810
  %v843 = vmul.f32 %v61, %v811
  %v844 = vmul.f32 %v62, %v812
  %v845 = vmul.f32 %v63, %v813
  %v846 = vmul.f32 %v64, %v814
  %v847 = vmul.f32 %v65, %v815
  %v848 = vmul.f32 %v66, %v816
  %v849 = vmul.f32 %v67, %v817
  %v850 = vmul.f32 %v68, %v818
  %v851 = vmul.f32 %v69, %v819
  %v852 = vmul.f32 %v70, %v820
  %v853 = vmul.f32 %v71, %v821
  %v854 = vmul.f32 %v72, %v822
  %v855 = vsub.f32 %v248, %v631
  %v856 = vsub.f32 %v253, %v632
  %v857 = vsub.f32 %v258, %v633
  %v858 = vsub.f32 %v263, %v634
  %v859 = vsub.f32 %v268, %v635
  %v860 = vsub.f32 %v273, %v636
  %v861 = vsub.f32 %v278, %v637
  %v862 = vsub.f32 %v283, %v638
  %v863 = vsub.f32 %v288, %v639
  %v864 = vsub.f32 %v293, %v640
  %v865 = vsub.f32 %v298, %v641
  %v866 = vsub.f32 %v303, %v642
  %v867 = vsub.f32 %v308, %v643
  %v868 = vsub.f32 %v313, %v644
  %v869 = vsub.f32 %v318, %v645
  %v870 = vsub.f32 %v323, %v646
  %v871 = vsub.f32 %v328, %v647
  %v872 = vsub.f32 %v333, %v648
  %v873 = vsub.f32 %v338, %v649
  %v874 = vsub.f32 %v343, %v650
  %v875 = vsub.f32 %v348, %v651
  %v876 = vsub.f32 %v353, %v652
  %v877 = vsub.f32 %v358, %v653
  %v878 = vsub.f32 %v363, %v654
  %v879 = vsub.f32 %v368, %v655
  %v880 = vsub.f32 %v373, %v656
  %v881 = vsub.f32 %v378, %v657
  %v882 = vsub.f32 %v383, %v658
  %v883 = vsub.f32 %v388, %v659
  %v884 = vsub.f32 %v393, %v660
  %v885 = vsub.f32 %v398, %v661
  %v886 = vsub.f32 %v403, %v662
  %888 = vset.pattern.permute.xlu0 0
  %889 = vperm.xlu0 %888, %v823
  %v890 = vpop.permute.xlu0 %889
  %893 = vset.pattern.permute.xlu0 0
  %894 = vperm.xlu0 %893, %v824
  %v895 = vpop.permute.xlu0 %894
  %898 = vset.pattern.permute.xlu0 0
  %899 = vperm.xlu0 %898, %v825
  %v900 = vpop.permute.xlu0 %899
  %903 = vset.pattern.permute.xlu0 0
  %904 = vperm.xlu0 %903, %v826
  %v905 = vpop.permute.xlu0 %904
  %908 = vset.pattern.permute.xlu0 0
  %909 = vperm.xlu0 %908, %v827
  %v910 = vpop.permute.xlu0 %909
  %913 = vset.pattern.permute.xlu0 0
  %914 = vperm.xlu0 %913, %v828
  %v915 = vpop.permute.xlu0 %914
  %918 = vset.pattern.permute.xlu0 0
  %919 = vperm.xlu0 %918, %v829
  %v920 = vpop.permute.xlu0 %919
  %923 = vset.pattern.permute.xlu0 0
  %924 = vperm.xlu0 %923, %v830
  %v925 = vpop.permute.xlu0 %924
  %928 = vset.pattern.permute.xlu0 0
  %929 = vperm.xlu0 %928, %v831
  %v930 = vpop.permute.xlu0 %929
  %933 = vset.pattern.permute.xlu0 0
  %934 = vperm.xlu0 %933, %v832
  %v935 = vpop.permute.xlu0 %934
  %938 = vset.pattern.permute.xlu0 0
  %939 = vperm.xlu0 %938, %v833
  %v940 = vpop.permute.xlu0 %939
  %943 = vset.pattern.permute.xlu0 0
  %944 = vperm.xlu0 %943, %v834
  %v945 = vpop.permute.xlu0 %944
  %948 = vset.pattern.permute.xlu0 0
  %949 = vperm.xlu0 %948, %v835
  %v950 = vpop.permute.xlu0 %949
  %953 = vset.pattern.permute.xlu0 0
  %954 = vperm.xlu0 %953, %v836
  %v955 = vpop.permute.xlu0 %954
  %958 = vset.pattern.permute.xlu0 0
  %959 = vperm.xlu0 %958, %v837
  %v960 = vpop.permute.xlu0 %959
  %963 = vset.pattern.permute.xlu0 0
  %964 = vperm.xlu0 %963, %v838
  %v965 = vpop.permute.xlu0 %964
  %968 = vset.pattern.permute.xlu0 0
  %969 = vperm.xlu0 %968, %v839
  %v970 = vpop.permute.xlu0 %969
  %973 = vset.pattern.permute.xlu0 0
  %974 = vperm.xlu0 %973, %v840
  %v975 = vpop.permute.xlu0 %974
  %978 = vset.pattern.permute.xlu0 0
  %979 = vperm.xlu0 %978, %v841
  %v980 = vpop.permute.xlu0 %979
  %983 = vset.pattern.permute.xlu0 0
  %984 = vperm.xlu0 %983, %v842
  %v985 = vpop.permute.xlu0 %984
  %988 = vset.pattern.permute.xlu0 0
  %989 = vperm.xlu0 %988, %v843
  %v990 = vpop.permute.xlu0 %989
  %993 = vset.pattern.permute.xlu0 0
  %994 = vperm.xlu0 %993, %v844
  %v995 = vpop.permute.xlu0 %994
  %998 = vset.pattern.permute.xlu0 0
  %999 = vperm.xlu0 %998, %v845
  %v1000 = vpop.permute.xlu0 %999
  %1003 = vset.pattern.permute.xlu0 0
  %1004 = vperm.xlu0 %1003, %v846
  %v1005 = vpop.permute.xlu0 %1004
  %1008 = vset.pattern.permute.xlu0 0
  %1009 = vperm.xlu0 %1008, %v847
  %v1010 = vpop.permute.xlu0 %1009
  %1013 = vset.pattern.permute.xlu0 0
  %1014 = vperm.xlu0 %1013, %v848
  %v1015 = vpop.permute.xlu0 %1014
  %1018 = vset.pattern.permute.xlu0 0
  %1019 = vperm.xlu0 %1018, %v849
  %v1020 = vpop.permute.xlu0 %1019
  %1023 = vset.pattern.permute.xlu0 0
  %1024 = vperm.xlu0 %1023, %v850
  %v1025 = vpop.permute.xlu0 %1024
  %1028 = vset.pattern.permute.xlu0 0
  %1029 = vperm.xlu0 %1028, %v851
  %v1030 = vpop.permute.xlu0 %1029
  %1033 = vset.pattern.permute.xlu0 0
  %1034 = vperm.xlu0 %1033, %v852
  %v1035 = vpop.permute.xlu0 %1034
  %1038 = vset.pattern.permute.xlu0 0
  %1039 = vperm.xlu0 %1038, %v853
  %v1040 = vpop.permute.xlu0 %1039
  %1043 = vset.pattern.permute.xlu0 0
  %1044 = vperm.xlu0 %1043, %v854
  %v1045 = vpop.permute.xlu0 %1044
  %v1047 = vmul.f32 %v855, %v890
  %v1048 = vmul.f32 %v856, %v895
  %v1049 = vmul.f32 %v857, %v900
  %v1050 = vmul.f32 %v858, %v905
  %v1051 = vmul.f32 %v859, %v910
  %v1052 = vmul.f32 %v860, %v915
  %v1053 = vmul.f32 %v861, %v920
  %v1054 = vmul.f32 %v862, %v925
  %v1055 = vmul.f32 %v863, %v930
  %v1056 = vmul.f32 %v864, %v935
  %v1057 = vmul.f32 %v865, %v940
  %v1058 = vmul.f32 %v866, %v945
  %v1059 = vmul.f32 %v867, %v950
  %v1060 = vmul.f32 %v868, %v955
  %v1061 = vmul.f32 %v869, %v960
  %v1062 = vmul.f32 %v870, %v965
  %v1063 = vmul.f32 %v871, %v970
  %v1064 = vmul.f32 %v872, %v975
  %v1065 = vmul.f32 %v873, %v980
  %v1066 = vmul.f32 %v874, %v985
  %v1067 = vmul.f32 %v875, %v990
  %v1068 = vmul.f32 %v876, %v995
  %v1069 = vmul.f32 %v877, %v1000
  %v1070 = vmul.f32 %v878, %v1005
  %v1071 = vmul.f32 %v879, %v1010
  %v1072 = vmul.f32 %v880, %v1015
  %v1073 = vmul.f32 %v881, %v1020
  %v1074 = vmul.f32 %v882, %v1025
  %v1075 = vmul.f32 %v883, %v1030
  %v1076 = vmul.f32 %v884, %v1035
  %v1077 = vmul.f32 %v885, %v1040
  %v1078 = vmul.f32 %v886, %v1045
  %1080 = vset.pattern.permute.xlu0 1
  %1081 = vperm.xlu0 %1080, %v41
  %v1082 = vpop.permute.xlu0 %1081
  %1085 = vset.pattern.permute.xlu0 1
  %1086 = vperm.xlu0 %1085, %v42
  %v1087 = vpop.permute.xlu0 %1086
  %1090 = vset.pattern.permute.xlu0 1
  %1091 = vperm.xlu0 %1090, %v43
  %v1092 = vpop.permute.xlu0 %1091
  %1095 = vset.pattern.permute.xlu0 1
  %1096 = vperm.xlu0 %1095, %v44
  %v1097 = vpop.permute.xlu0 %1096
  %1100 = vset.pattern.permute.xlu0 1
  %1101 = vperm.xlu0 %1100, %v45
  %v1102 = vpop.permute.xlu0 %1101
  %1105 = vset.pattern.permute.xlu0 1
  %1106 = vperm.xlu0 %1105, %v46
  %v1107 = vpop.permute.xlu0 %1106
  %1110 = vset.pattern.permute.xlu0 1
  %1111 = vperm.xlu0 %1110, %v47
  %v1112 = vpop.permute.xlu0 %1111
  %1115 = vset.pattern.permute.xlu0 1
  %1116 = vperm.xlu0 %1115, %v48
  %v1117 = vpop.permute.xlu0 %1116
  %1120 = vset.pattern.permute.xlu0 1
  %1121 = vperm.xlu0 %1120, %v49
  %v1122 = vpop.permute.xlu0 %1121
  %1125 = vset.pattern.permute.xlu0 1
  %1126 = vperm.xlu0 %1125, %v50
  %v1127 = vpop.permute.xlu0 %1126
  %1130 = vset.pattern.permute.xlu0 1
  %1131 = vperm.xlu0 %1130, %v51
  %v1132 = vpop.permute.xlu0 %1131
  %1135 = vset.pattern.permute.xlu0 1
  %1136 = vperm.xlu0 %1135, %v52
  %v1137 = vpop.permute.xlu0 %1136
  %1140 = vset.pattern.permute.xlu0 1
  %1141 = vperm.xlu0 %1140, %v53
  %v1142 = vpop.permute.xlu0 %1141
  %1145 = vset.pattern.permute.xlu0 1
  %1146 = vperm.xlu0 %1145, %v54
  %v1147 = vpop.permute.xlu0 %1146
  %1150 = vset.pattern.permute.xlu0 1
  %1151 = vperm.xlu0 %1150, %v55
  %v1152 = vpop.permute.xlu0 %1151
  %1155 = vset.pattern.permute.xlu0 1
  %1156 = vperm.xlu0 %1155, %v56
  %v1157 = vpop.permute.xlu0 %1156
  %1160 = vset.pattern.permute.xlu0 1
  %1161 = vperm.xlu0 %1160, %v57
  %v1162 = vpop.permute.xlu0 %1161
  %1165 = vset.pattern.permute.xlu0 1
  %1166 = vperm.xlu0 %1165, %v58
  %v1167 = vpop.permute.xlu0 %1166
  %1170 = vset.pattern.permute.xlu0 1
  %1171 = vperm.xlu0 %1170, %v59
  %v1172 = vpop.permute.xlu0 %1171
  %1175 = vset.pattern.permute.xlu0 1
  %1176 = vperm.xlu0 %1175, %v60
  %v1177 = vpop.permute.xlu0 %1176
  %1180 = vset.pattern.permute.xlu0 1
  %1181 = vperm.xlu0 %1180, %v61
  %v1182 = vpop.permute.xlu0 %1181
  %1185 = vset.pattern.permute.xlu0 1
  %1186 = vperm.xlu0 %1185, %v62
  %v1187 = vpop.permute.xlu0 %1186
  %1190 = vset.pattern.permute.xlu0 1
  %1191 = vperm.xlu0 %1190, %v63
  %v1192 = vpop.permute.xlu0 %1191
  %1195 = vset.pattern.permute.xlu0 1
  %1196 = vperm.xlu0 %1195, %v64
  %v1197 = vpop.permute.xlu0 %1196
  %1200 = vset.pattern.permute.xlu0 1
  %1201 = vperm.xlu0 %1200, %v65
  %v1202 = vpop.permute.xlu0 %1201
  %1205 = vset.pattern.permute.xlu0 1
  %1206 = vperm.xlu0 %1205, %v66
  %v1207 = vpop.permute.xlu0 %1206
  %1210 = vset.pattern.permute.xlu0 1
  %1211 = vperm.xlu0 %1210, %v67
  %v1212 = vpop.permute.xlu0 %1211
  %1215 = vset.pattern.permute.xlu0 1
  %1216 = vperm.xlu0 %1215, %v68
  %v1217 = vpop.permute.xlu0 %1216
  %1220 = vset.pattern.permute.xlu0 1
  %1221 = vperm.xlu0 %1220, %v69
  %v1222 = vpop.permute.xlu0 %1221
  %1225 = vset.pattern.permute.xlu0 1
  %1226 = vperm.xlu0 %1225, %v70
  %v1227 = vpop.permute.xlu0 %1226
  %1230 = vset.pattern.permute.xlu0 1
  %1231 = vperm.xlu0 %1230, %v71
  %v1232 = vpop.permute.xlu0 %1231
  %1235 = vset.pattern.permute.xlu0 1
  %1236 = vperm.xlu0 %1235, %v72
  %v1237 = vpop.permute.xlu0 %1236
  %v1239 = vadd.f32 %v1047, %v1082
  %v1240 = vadd.f32 %v1048, %v1087
  %v1241 = vadd.f32 %v1049, %v1092
  %v1242 = vadd.f32 %v1050, %v1097
  %v1243 = vadd.f32 %v1051, %v1102
  %v1244 = vadd.f32 %v1052, %v1107
  %v1245 = vadd.f32 %v1053, %v1112
  %v1246 = vadd.f32 %v1054, %v1117
  %v1247 = vadd.f32 %v1055, %v1122
  %v1248 = vadd.f32 %v1056, %v1127
  %v1249 = vadd.f32 %v1057, %v1132
  %v1250 = vadd.f32 %v1058, %v1137
  %v1251 = vadd.f32 %v1059, %v1142
  %v1252 = vadd.f32 %v1060, %v1147
  %v1253 = vadd.f32 %v1061, %v1152
  %v1254 = vadd.f32 %v1062, %v1157
  %v1255 = vadd.f32 %v1063, %v1162
  %v1256 = vadd.f32 %v1064, %v1167
  %v1257 = vadd.f32 %v1065, %v1172
  %v1258 = vadd.f32 %v1066, %v1177
  %v1259 = vadd.f32 %v1067, %v1182
  %v1260 = vadd.f32 %v1068, %v1187
  %v1261 = vadd.f32 %v1069, %v1192
  %v1262 = vadd.f32 %v1070, %v1197
  %v1263 = vadd.f32 %v1071, %v1202
  %v1264 = vadd.f32 %v1072, %v1207
  %v1265 = vadd.f32 %v1073, %v1212
  %v1266 = vadd.f32 %v1074, %v1217
  %v1267 = vadd.f32 %v1075, %v1222
  %v1268 = vadd.f32 %v1076, %v1227
  %v1269 = vadd.f32 %v1077, %v1232
  %v1270 = vadd.f32 %v1078, %v1237
  %v1271 = vmax.f32 %v1239, 0.0
  %v1272 = vmax.f32 %v1240, 0.0
  %v1273 = vmax.f32 %v1241, 0.0
  %v1274 = vmax.f32 %v1242, 0.0
  %v1275 = vmax.f32 %v1243, 0.0
  %v1276 = vmax.f32 %v1244, 0.0
  %v1277 = vmax.f32 %v1245, 0.0
  %v1278 = vmax.f32 %v1246, 0.0
  %v1279 = vmax.f32 %v1247, 0.0
  %v1280 = vmax.f32 %v1248, 0.0
  %v1281 = vmax.f32 %v1249, 0.0
  %v1282 = vmax.f32 %v1250, 0.0
  %v1283 = vmax.f32 %v1251, 0.0
  %v1284 = vmax.f32 %v1252, 0.0
  %v1285 = vmax.f32 %v1253, 0.0
  %v1286 = vmax.f32 %v1254, 0.0
  %v1287 = vmax.f32 %v1255, 0.0
  %v1288 = vmax.f32 %v1256, 0.0
  %v1289 = vmax.f32 %v1257, 0.0
  %v1290 = vmax.f32 %v1258, 0.0
  %v1291 = vmax.f32 %v1259, 0.0
  %v1292 = vmax.f32 %v1260, 0.0
  %v1293 = vmax.f32 %v1261, 0.0
  %v1294 = vmax.f32 %v1262, 0.0
  %v1295 = vmax.f32 %v1263, 0.0
  %v1296 = vmax.f32 %v1264, 0.0
  %v1297 = vmax.f32 %v1265, 0.0
  %v1298 = vmax.f32 %v1266, 0.0
  %v1299 = vmax.f32 %v1267, 0.0
  %v1300 = vmax.f32 %v1268, 0.0
  %v1301 = vmax.f32 %v1269, 0.0
  %v1302 = vmax.f32 %v1270, 0.0
  %v1303 = vld [vmem:[%s2] sm:$0xff]
  %v1304 = vld [vmem:[%s2 + $0x8] sm:$0xff]
  %v1305 = vld [vmem:[%s2 + $0x10] sm:$0xff]
  %v1306 = vld [vmem:[%s2 + $0x18] sm:$0xff]
  %v1307 = vld [vmem:[%s2 + $0x20] sm:$0xff]
  %v1308 = vld [vmem:[%s2 + $0x28] sm:$0xff]
  %v1309 = vld [vmem:[%s2 + $0x30] sm:$0xff]
  %v1310 = vld [vmem:[%s2 + $0x38] sm:$0xff]
  %v1311 = vld [vmem:[%s2 + $0x40] sm:$0xff]
  %v1312 = vld [vmem:[%s2 + $0x48] sm:$0xff]
  %v1313 = vld [vmem:[%s2 + $0x50] sm:$0xff]
  %v1314 = vld [vmem:[%s2 + $0x58] sm:$0xff]
  %v1315 = vld [vmem:[%s2 + $0x60] sm:$0xff]
  %v1316 = vld [vmem:[%s2 + $0x68] sm:$0xff]
  %v1317 = vld [vmem:[%s2 + $0x70] sm:$0xff]
  %v1318 = vld [vmem:[%s2 + $0x78] sm:$0xff]
  %v1319 = vld [vmem:[%s2 + $0x80] sm:$0xff]
  %v1320 = vld [vmem:[%s2 + $0x88] sm:$0xff]
  %v1321 = vld [vmem:[%s2 + $0x90] sm:$0xff]
  %v1322 = vld [vmem:[%s2 + $0x98] sm:$0xff]
  %v1323 = vld [vmem:[%s2 + $0xa0] sm:$0xff]
  %v1324 = vld [vmem:[%s2 + $0xa8] sm:$0xff]
  %v1325 = vld [vmem:[%s2 + $0xb0] sm:$0xff]
  %v1326 = vld [vmem:[%s2 + $0xb8] sm:$0xff]
  %v1327 = vld [vmem:[%s2 + $0xc0] sm:$0xff]
  %v1328 = vld [vmem:[%s2 + $0xc8] sm:$0xff]
  %v1329 = vld [vmem:[%s2 + $0xd0] sm:$0xff]
  %v1330 = vld [vmem:[%s2 + $0xd8] sm:$0xff]
  %v1331 = vld [vmem:[%s2 + $0xe0] sm:$0xff]
  %v1332 = vld [vmem:[%s2 + $0xe8] sm:$0xff]
  %v1333 = vld [vmem:[%s2 + $0xf0] sm:$0xff]
  %v1334 = vld [vmem:[%s2 + $0xf8] sm:$0xff]
  %v1335 = vld [vmem:[%s2 + $0x100] sm:$0xff]
  %v1336 = vld [vmem:[%s2 + $0x108] sm:$0xff]
  %v1337 = vld [vmem:[%s2 + $0x110] sm:$0xff]
  %v1338 = vld [vmem:[%s2 + $0x118] sm:$0xff]
  %v1339 = vld [vmem:[%s2 + $0x120] sm:$0xff]
  %v1340 = vld [vmem:[%s2 + $0x128] sm:$0xff]
  %v1341 = vld [vmem:[%s2 + $0x130] sm:$0xff]
  %v1342 = vld [vmem:[%s2 + $0x138] sm:$0xff]
  %v1343 = vld [vmem:[%s2 + $0x140] sm:$0xff]
  %v1344 = vld [vmem:[%s2 + $0x148] sm:$0xff]
  %v1345 = vld [vmem:[%s2 + $0x150] sm:$0xff]
  %v1346 = vld [vmem:[%s2 + $0x158] sm:$0xff]
  %v1347 = vld [vmem:[%s2 + $0x160] sm:$0xff]
  %v1348 = vld [vmem:[%s2 + $0x168] sm:$0xff]
  %v1349 = vld [vmem:[%s2 + $0x170] sm:$0xff]
  %v1350 = vld [vmem:[%s2 + $0x178] sm:$0xff]
  %v1351 = vld [vmem:[%s2 + $0x180] sm:$0xff]
  %v1352 = vld [vmem:[%s2 + $0x188] sm:$0xff]
  %v1353 = vld [vmem:[%s2 + $0x190] sm:$0xff]
  %v1354 = vld [vmem:[%s2 + $0x198] sm:$0xff]
  %v1355 = vld [vmem:[%s2 + $0x1a0] sm:$0xff]
  %v1356 = vld [vmem:[%s2 + $0x1a8] sm:$0xff]
  %v1357 = vld [vmem:[%s2 + $0x1b0] sm:$0xff]
  %v1358 = vld [vmem:[%s2 + $0x1b8] sm:$0xff]
  %v1359 = vld [vmem:[%s2 + $0x1c0] sm:$0xff]
  %v1360 = vld [vmem:[%s2 + $0x1c8] sm:$0xff]
  %v1361 = vld [vmem:[%s2 + $0x1d0] sm:$0xff]
  %v1362 = vld [vmem:[%s2 + $0x1d8] sm:$0xff]
  %v1363 = vld [vmem:[%s2 + $0x1e0] sm:$0xff]
  %v1364 = vld [vmem:[%s2 + $0x1e8] sm:$0xff]
  %v1365 = vld [vmem:[%s2 + $0x1f0] sm:$0xff]
  %v1366 = vld [vmem:[%s2 + $0x1f8] sm:$0xff]
  %v1367 = vld [vmem:[%s2 + $0x200] sm:$0xff]
  %v1368 = vld [vmem:[%s2 + $0x208] sm:$0xff]
  %v1369 = vld [vmem:[%s2 + $0x210] sm:$0xff]
  %v1370 = vld [vmem:[%s2 + $0x218] sm:$0xff]
  %v1371 = vld [vmem:[%s2 + $0x220] sm:$0xff]
  %v1372 = vld [vmem:[%s2 + $0x228] sm:$0xff]
  %v1373 = vld [vmem:[%s2 + $0x230] sm:$0xff]
  %v1374 = vld [vmem:[%s2 + $0x238] sm:$0xff]
  %v1375 = vld [vmem:[%s2 + $0x240] sm:$0xff]
  %v1376 = vld [vmem:[%s2 + $0x248] sm:$0xff]
  %v1377 = vld [vmem:[%s2 + $0x250] sm:$0xff]
  %v1378 = vld [vmem:[%s2 + $0x258] sm:$0xff]
  %v1379 = vld [vmem:[%s2 + $0x260] sm:$0xff]
  %v1380 = vld [vmem:[%s2 + $0x268] sm:$0xff]
  %v1381 = vld [vmem:[%s2 + $0x270] sm:$0xff]
  %v1382 = vld [vmem:[%s2 + $0x278] sm:$0xff]
  %v1383 = vld [vmem:[%s2 + $0x280] sm:$0xff]
  %v1384 = vld [vmem:[%s2 + $0x288] sm:$0xff]
  %v1385 = vld [vmem:[%s2 + $0x290] sm:$0xff]
  %v1386 = vld [vmem:[%s2 + $0x298] sm:$0xff]
  %v1387 = vld [vmem:[%s2 + $0x2a0] sm:$0xff]
  %v1388 = vld [vmem:[%s2 + $0x2a8] sm:$0xff]
  %v1389 = vld [vmem:[%s2 + $0x2b0] sm:$0xff]
  %v1390 = vld [vmem:[%s2 + $0x2b8] sm:$0xff]
  %v1391 = vld [vmem:[%s2 + $0x2c0] sm:$0xff]
  %v1392 = vld [vmem:[%s2 + $0x2c8] sm:$0xff]
  %v1393 = vld [vmem:[%s2 + $0x2d0] sm:$0xff]
  %v1394 = vld [vmem:[%s2 + $0x2d8] sm:$0xff]
  %v1395 = vld [vmem:[%s2 + $0x2e0] sm:$0xff]
  %v1396 = vld [vmem:[%s2 + $0x2e8] sm:$0xff]
  %v1397 = vld [vmem:[%s2 + $0x2f0] sm:$0xff]
  %v1398 = vld [vmem:[%s2 + $0x2f8] sm:$0xff]
  %v1399 = vld [vmem:[%s2 + $0x300] sm:$0xff]
  %v1400 = vld [vmem:[%s2 + $0x308] sm:$0xff]
  %v1401 = vld [vmem:[%s2 + $0x310] sm:$0xff]
  %v1402 = vld [vmem:[%s2 + $0x318] sm:$0xff]
  %v1403 = vld [vmem:[%s2 + $0x320] sm:$0xff]
  %v1404 = vld [vmem:[%s2 + $0x328] sm:$0xff]
  %v1405 = vld [vmem:[%s2 + $0x330] sm:$0xff]
  %v1406 = vld [vmem:[%s2 + $0x338] sm:$0xff]
  %v1407 = vld [vmem:[%s2 + $0x340] sm:$0xff]
  %v1408 = vld [vmem:[%s2 + $0x348] sm:$0xff]
  %v1409 = vld [vmem:[%s2 + $0x350] sm:$0xff]
  %v1410 = vld [vmem:[%s2 + $0x358] sm:$0xff]
  %v1411 = vld [vmem:[%s2 + $0x360] sm:$0xff]
  %v1412 = vld [vmem:[%s2 + $0x368] sm:$0xff]
  %v1413 = vld [vmem:[%s2 + $0x370] sm:$0xff]
  %v1414 = vld [vmem:[%s2 + $0x378] sm:$0xff]
  %v1415 = vld [vmem:[%s2 + $0x380] sm:$0xff]
  %v1416 = vld [vmem:[%s2 + $0x388] sm:$0xff]
  %v1417 = vld [vmem:[%s2 + $0x390] sm:$0xff]
  %v1418 = vld [vmem:[%s2 + $0x398] sm:$0xff]
  %v1419 = vld [vmem:[%s2 + $0x3a0] sm:$0xff]
  %v1420 = vld [vmem:[%s2 + $0x3a8] sm:$0xff]
  %v1421 = vld [vmem:[%s2 + $0x3b0] sm:$0xff]
  %v1422 = vld [vmem:[%s2 + $0x3b8] sm:$0xff]
  %v1423 = vld [vmem:[%s2 + $0x3c0] sm:$0xff]
  %v1424 = vld [vmem:[%s2 + $0x3c8] sm:$0xff]
  %v1425 = vld [vmem:[%s2 + $0x3d0] sm:$0xff]
  %v1426 = vld [vmem:[%s2 + $0x3d8] sm:$0xff]
  %v1427 = vld [vmem:[%s2 + $0x3e0] sm:$0xff]
  %v1428 = vld [vmem:[%s2 + $0x3e8] sm:$0xff]
  %v1429 = vld [vmem:[%s2 + $0x3f0] sm:$0xff]
  %v1430 = vld [vmem:[%s2 + $0x3f8] sm:$0xff]
  %v1431 = vld [vmem:[%s2 + $0x400] sm:$0xff]
  %v1432 = vld [vmem:[%s2 + $0x408] sm:$0xff]
  %v1433 = vld [vmem:[%s2 + $0x410] sm:$0xff]
  %v1434 = vld [vmem:[%s2 + $0x418] sm:$0xff]
  %v1435 = vld [vmem:[%s2 + $0x420] sm:$0xff]
  %v1436 = vld [vmem:[%s2 + $0x428] sm:$0xff]
  %v1437 = vld [vmem:[%s2 + $0x430] sm:$0xff]
  %v1438 = vld [vmem:[%s2 + $0x438] sm:$0xff]
  %v1439 = vld [vmem:[%s2 + $0x440] sm:$0xff]
  %v1440 = vld [vmem:[%s2 + $0x448] sm:$0xff]
  %v1441 = vld [vmem:[%s2 + $0x450] sm:$0xff]
  %v1442 = vld [vmem:[%s2 + $0x458] sm:$0xff]
  %v1443 = vld [vmem:[%s2 + $0x460] sm:$0xff]
  %v1444 = vld [vmem:[%s2 + $0x468] sm:$0xff]
  %v1445 = vld [vmem:[%s2 + $0x470] sm:$0xff]
  %v1446 = vld [vmem:[%s2 + $0x478] sm:$0xff]
  %v1447 = vld [vmem:[%s2 + $0x480] sm:$0xff]
  %v1448 = vld [vmem:[%s2 + $0x488] sm:$0xff]
  %v1449 = vld [vmem:[%s2 + $0x490] sm:$0xff]
  %v1450 = vld [vmem:[%s2 + $0x498] sm:$0xff]
  %v1451 = vld [vmem:[%s2 + $0x4a0] sm:$0xff]
  %v1452 = vld [vmem:[%s2 + $0x4a8] sm:$0xff]
  %v1453 = vld [vmem:[%s2 + $0x4b0] sm:$0xff]
  %v1454 = vld [vmem:[%s2 + $0x4b8] sm:$0xff]
  %v1455 = vld [vmem:[%s2 + $0x4c0] sm:$0xff]
  %v1456 = vld [vmem:[%s2 + $0x4c8] sm:$0xff]
  %v1457 = vld [vmem:[%s2 + $0x4d0] sm:$0xff]
  %v1458 = vld [vmem:[%s2 + $0x4d8] sm:$0xff]
  %v1459 = vld [vmem:[%s2 + $0x4e0] sm:$0xff]
  %v1460 = vld [vmem:[%s2 + $0x4e8] sm:$0xff]
  %v1461 = vld [vmem:[%s2 + $0x4f0] sm:$0xff]
  %v1462 = vld [vmem:[%s2 + $0x4f8] sm:$0xff]
  %v1463 = vld [vmem:[%s2 + $0x500] sm:$0xff]
  %v1464 = vld [vmem:[%s2 + $0x508] sm:$0xff]
  %v1465 = vld [vmem:[%s2 + $0x510] sm:$0xff]
  %v1466 = vld [vmem:[%s2 + $0x518] sm:$0xff]
  %v1467 = vld [vmem:[%s2 + $0x520] sm:$0xff]
  %v1468 = vld [vmem:[%s2 + $0x528] sm:$0xff]
  %v1469 = vld [vmem:[%s2 + $0x530] sm:$0xff]
  %v1470 = vld [vmem:[%s2 + $0x538] sm:$0xff]
  %v1471 = vld [vmem:[%s2 + $0x540] sm:$0xff]
  %v1472 = vld [vmem:[%s2 + $0x548] sm:$0xff]
  %v1473 = vld [vmem:[%s2 + $0x550] sm:$0xff]
  %v1474 = vld [vmem:[%s2 + $0x558] sm:$0xff]
  %v1475 = vld [vmem:[%s2 + $0x560] sm:$0xff]
  %v1476 = vld [vmem:[%s2 + $0x568] sm:$0xff]
  %v1477 = vld [vmem:[%s2 + $0x570] sm:$0xff]
  %v1478 = vld [vmem:[%s2 + $0x578] sm:$0xff]
  %v1479 = vld [vmem:[%s2 + $0x580] sm:$0xff]
  %v1480 = vld [vmem:[%s2 + $0x588] sm:$0xff]
  %v1481 = vld [vmem:[%s2 + $0x590] sm:$0xff]
  %v1482 = vld [vmem:[%s2 + $0x598] sm:$0xff]
  %v1483 = vld [vmem:[%s2 + $0x5a0] sm:$0xff]
  %v1484 = vld [vmem:[%s2 + $0x5a8] sm:$0xff]
  %v1485 = vld [vmem:[%s2 + $0x5b0] sm:$0xff]
  %v1486 = vld [vmem:[%s2 + $0x5b8] sm:$0xff]
  %v1487 = vld [vmem:[%s2 + $0x5c0] sm:$0xff]
  %v1488 = vld [vmem:[%s2 + $0x5c8] sm:$0xff]
  %v1489 = vld [vmem:[%s2 + $0x5d0] sm:$0xff]
  %v1490 = vld [vmem:[%s2 + $0x5d8] sm:$0xff]
  %v1491 = vld [vmem:[%s2 + $0x5e0] sm:$0xff]
  %v1492 = vld [vmem:[%s2 + $0x5e8] sm:$0xff]
  %v1493 = vld [vmem:[%s2 + $0x5f0] sm:$0xff]
  %v1494 = vld [vmem:[%s2 + $0x5f8] sm:$0xff]
  %v1495 = vld [vmem:[%s2 + $0x600] sm:$0xff]
  %v1496 = vld [vmem:[%s2 + $0x608] sm:$0xff]
  %v1497 = vld [vmem:[%s2 + $0x610] sm:$0xff]
  %v1498 = vld [vmem:[%s2 + $0x618] sm:$0xff]
  %v1499 = vld [vmem:[%s2 + $0x620] sm:$0xff]
  %v1500 = vld [vmem:[%s2 + $0x628] sm:$0xff]
  %v1501 = vld [vmem:[%s2 + $0x630] sm:$0xff]
  %v1502 = vld [vmem:[%s2 + $0x638] sm:$0xff]
  %v1503 = vld [vmem:[%s2 + $0x640] sm:$0xff]
  %v1504 = vld [vmem:[%s2 + $0x648] sm:$0xff]
  %v1505 = vld [vmem:[%s2 + $0x650] sm:$0xff]
  %v1506 = vld [vmem:[%s2 + $0x658] sm:$0xff]
  %v1507 = vld [vmem:[%s2 + $0x660] sm:$0xff]
  %v1508 = vld [vmem:[%s2 + $0x668] sm:$0xff]
  %v1509 = vld [vmem:[%s2 + $0x670] sm:$0xff]
  %v1510 = vld [vmem:[%s2 + $0x678] sm:$0xff]
  %v1511 = vld [vmem:[%s2 + $0x680] sm:$0xff]
  %v1512 = vld [vmem:[%s2 + $0x688] sm:$0xff]
  %v1513 = vld [vmem:[%s2 + $0x690] sm:$0xff]
  %v1514 = vld [vmem:[%s2 + $0x698] sm:$0xff]
  %v1515 = vld [vmem:[%s2 + $0x6a0] sm:$0xff]
  %v1516 = vld [vmem:[%s2 + $0x6a8] sm:$0xff]
  %v1517 = vld [vmem:[%s2 + $0x6b0] sm:$0xff]
  %v1518 = vld [vmem:[%s2 + $0x6b8] sm:$0xff]
  %v1519 = vld [vmem:[%s2 + $0x6c0] sm:$0xff]
  %v1520 = vld [vmem:[%s2 + $0x6c8] sm:$0xff]
  %v1521 = vld [vmem:[%s2 + $0x6d0] sm:$0xff]
  %v1522 = vld [vmem:[%s2 + $0x6d8] sm:$0xff]
  %v1523 = vld [vmem:[%s2 + $0x6e0] sm:$0xff]
  %v1524 = vld [vmem:[%s2 + $0x6e8] sm:$0xff]
  %v1525 = vld [vmem:[%s2 + $0x6f0] sm:$0xff]
  %v1526 = vld [vmem:[%s2 + $0x6f8] sm:$0xff]
  %v1527 = vld [vmem:[%s2 + $0x700] sm:$0xff]
  %v1528 = vld [vmem:[%s2 + $0x708] sm:$0xff]
  %v1529 = vld [vmem:[%s2 + $0x710] sm:$0xff]
  %v1530 = vld [vmem:[%s2 + $0x718] sm:$0xff]
  %v1531 = vld [vmem:[%s2 + $0x720] sm:$0xff]
  %v1532 = vld [vmem:[%s2 + $0x728] sm:$0xff]
  %v1533 = vld [vmem:[%s2 + $0x730] sm:$0xff]
  %v1534 = vld [vmem:[%s2 + $0x738] sm:$0xff]
  %v1535 = vld [vmem:[%s2 + $0x740] sm:$0xff]
  %v1536 = vld [vmem:[%s2 + $0x748] sm:$0xff]
  %v1537 = vld [vmem:[%s2 + $0x750] sm:$0xff]
  %v1538 = vld [vmem:[%s2 + $0x758] sm:$0xff]
  %v1539 = vld [vmem:[%s2 + $0x760] sm:$0xff]
  %v1540 = vld [vmem:[%s2 + $0x768] sm:$0xff]
  %v1541 = vld [vmem:[%s2 + $0x770] sm:$0xff]
  %v1542 = vld [vmem:[%s2 + $0x778] sm:$0xff]
  %v1543 = vld [vmem:[%s2 + $0x780] sm:$0xff]
  %v1544 = vld [vmem:[%s2 + $0x788] sm:$0xff]
  %v1545 = vld [vmem:[%s2 + $0x790] sm:$0xff]
  %v1546 = vld [vmem:[%s2 + $0x798] sm:$0xff]
  %v1547 = vld [vmem:[%s2 + $0x7a0] sm:$0xff]
  %v1548 = vld [vmem:[%s2 + $0x7a8] sm:$0xff]
  %v1549 = vld [vmem:[%s2 + $0x7b0] sm:$0xff]
  %v1550 = vld [vmem:[%s2 + $0x7b8] sm:$0xff]
  %v1551 = vld [vmem:[%s2 + $0x7c0] sm:$0xff]
  %v1552 = vld [vmem:[%s2 + $0x7c8] sm:$0xff]
  %v1553 = vld [vmem:[%s2 + $0x7d0] sm:$0xff]
  %v1554 = vld [vmem:[%s2 + $0x7d8] sm:$0xff]
  %v1555 = vld [vmem:[%s2 + $0x7e0] sm:$0xff]
  %v1556 = vld [vmem:[%s2 + $0x7e8] sm:$0xff]
  %v1557 = vld [vmem:[%s2 + $0x7f0] sm:$0xff]
  %v1558 = vld [vmem:[%s2 + $0x7f8] sm:$0xff]
  %v1559 = vld [vmem:[%s2 + $0x800] sm:$0xff]
  %v1560 = vld [vmem:[%s2 + $0x808] sm:$0xff]
  %v1561 = vld [vmem:[%s2 + $0x810] sm:$0xff]
  %v1562 = vld [vmem:[%s2 + $0x818] sm:$0xff]
  %v1563 = vld [vmem:[%s2 + $0x820] sm:$0xff]
  %v1564 = vld [vmem:[%s2 + $0x828] sm:$0xff]
  %v1565 = vld [vmem:[%s2 + $0x830] sm:$0xff]
  %v1566 = vld [vmem:[%s2 + $0x838] sm:$0xff]
  %v1567 = vld [vmem:[%s2 + $0x840] sm:$0xff]
  %v1568 = vld [vmem:[%s2 + $0x848] sm:$0xff]
  %v1569 = vld [vmem:[%s2 + $0x850] sm:$0xff]
  %v1570 = vld [vmem:[%s2 + $0x858] sm:$0xff]
  %v1571 = vld [vmem:[%s2 + $0x860] sm:$0xff]
  %v1572 = vld [vmem:[%s2 + $0x868] sm:$0xff]
  %v1573 = vld [vmem:[%s2 + $0x870] sm:$0xff]
  %v1574 = vld [vmem:[%s2 + $0x878] sm:$0xff]
  %v1575 = vld [vmem:[%s2 + $0x880] sm:$0xff]
  %v1576 = vld [vmem:[%s2 + $0x888] sm:$0xff]
  %v1577 = vld [vmem:[%s2 + $0x890] sm:$0xff]
  %v1578 = vld [vmem:[%s2 + $0x898] sm:$0xff]
  %v1579 = vld [vmem:[%s2 + $0x8a0] sm:$0xff]
  %v1580 = vld [vmem:[%s2 + $0x8a8] sm:$0xff]
  %v1581 = vld [vmem:[%s2 + $0x8b0] sm:$0xff]
  %v1582 = vld [vmem:[%s2 + $0x8b8] sm:$0xff]
  %v1583 = vld [vmem:[%s2 + $0x8c0] sm:$0xff]
  %v1584 = vld [vmem:[%s2 + $0x8c8] sm:$0xff]
  %v1585 = vld [vmem:[%s2 + $0x8d0] sm:$0xff]
  %v1586 = vld [vmem:[%s2 + $0x8d8] sm:$0xff]
  %v1587 = vld [vmem:[%s2 + $0x8e0] sm:$0xff]
  %v1588 = vld [vmem:[%s2 + $0x8e8] sm:$0xff]
  %v1589 = vld [vmem:[%s2 + $0x8f0] sm:$0xff]
  %v1590 = vld [vmem:[%s2 + $0x8f8] sm:$0xff]
  %v1591 = vld [vmem:[%s2 + $0x900] sm:$0xff]
  %v1592 = vld [vmem:[%s2 + $0x908] sm:$0xff]
  %v1593 = vld [vmem:[%s2 + $0x910] sm:$0xff]
  %v1594 = vld [vmem:[%s2 + $0x918] sm:$0xff]
  %v1595 = vld [vmem:[%s2 + $0x920] sm:$0xff]
  %v1596 = vld [vmem:[%s2 + $0x928] sm:$0xff]
  %v1597 = vld [vmem:[%s2 + $0x930] sm:$0xff]
  %v1598 = vld [vmem:[%s2 + $0x938] sm:$0xff]
  %v1599 = vld [vmem:[%s2 + $0x940] sm:$0xff]
  %v1600 = vld [vmem:[%s2 + $0x948] sm:$0xff]
  %v1601 = vld [vmem:[%s2 + $0x950] sm:$0xff]
  %v1602 = vld [vmem:[%s2 + $0x958] sm:$0xff]
  %v1603 = vld [vmem:[%s2 + $0x960] sm:$0xff]
  %v1604 = vld [vmem:[%s2 + $0x968] sm:$0xff]
  %v1605 = vld [vmem:[%s2 + $0x970] sm:$0xff]
  %v1606 = vld [vmem:[%s2 + $0x978] sm:$0xff]
  %v1607 = vld [vmem:[%s2 + $0x980] sm:$0xff]
  %v1608 = vld [vmem:[%s2 + $0x988] sm:$0xff]
  %v1609 = vld [vmem:[%s2 + $0x990] sm:$0xff]
  %v1610 = vld [vmem:[%s2 + $0x998] sm:$0xff]
  %v1611 = vld [vmem:[%s2 + $0x9a0] sm:$0xff]
  %v1612 = vld [vmem:[%s2 + $0x9a8] sm:$0xff]
  %v1613 = vld [vmem:[%s2 + $0x9b0] sm:$0xff]
  %v1614 = vld [vmem:[%s2 + $0x9b8] sm:$0xff]
  %v1615 = vld [vmem:[%s2 + $0x9c0] sm:$0xff]
  %v1616 = vld [vmem:[%s2 + $0x9c8] sm:$0xff]
  %v1617 = vld [vmem:[%s2 + $0x9d0] sm:$0xff]
  %v1618 = vld [vmem:[%s2 + $0x9d8] sm:$0xff]
  %v1619 = vld [vmem:[%s2 + $0x9e0] sm:$0xff]
  %v1620 = vld [vmem:[%s2 + $0x9e8] sm:$0xff]
  %v1621 = vld [vmem:[%s2 + $0x9f0] sm:$0xff]
  %v1622 = vld [vmem:[%s2 + $0x9f8] sm:$0xff]
  %v1623 = vld [vmem:[%s2 + $0xa00] sm:$0xff]
  %v1624 = vld [vmem:[%s2 + $0xa08] sm:$0xff]
  %v1625 = vld [vmem:[%s2 + $0xa10] sm:$0xff]
  %v1626 = vld [vmem:[%s2 + $0xa18] sm:$0xff]
  %v1627 = vld [vmem:[%s2 + $0xa20] sm:$0xff]
  %v1628 = vld [vmem:[%s2 + $0xa28] sm:$0xff]
  %v1629 = vld [vmem:[%s2 + $0xa30] sm:$0xff]
  %v1630 = vld [vmem:[%s2 + $0xa38] sm:$0xff]
  %v1631 = vld [vmem:[%s2 + $0xa40] sm:$0xff]
  %v1632 = vld [vmem:[%s2 + $0xa48] sm:$0xff]
  %v1633 = vld [vmem:[%s2 + $0xa50] sm:$0xff]
  %v1634 = vld [vmem:[%s2 + $0xa58] sm:$0xff]
  %v1635 = vld [vmem:[%s2 + $0xa60] sm:$0xff]
  %v1636 = vld [vmem:[%s2 + $0xa68] sm:$0xff]
  %v1637 = vld [vmem:[%s2 + $0xa70] sm:$0xff]
  %v1638 = vld [vmem:[%s2 + $0xa78] sm:$0xff]
  %v1639 = vld [vmem:[%s2 + $0xa80] sm:$0xff]
  %v1640 = vld [vmem:[%s2 + $0xa88] sm:$0xff]
  %v1641 = vld [vmem:[%s2 + $0xa90] sm:$0xff]
  %v1642 = vld [vmem:[%s2 + $0xa98] sm:$0xff]
  %v1643 = vld [vmem:[%s2 + $0xaa0] sm:$0xff]
  %v1644 = vld [vmem:[%s2 + $0xaa8] sm:$0xff]
  %v1645 = vld [vmem:[%s2 + $0xab0] sm:$0xff]
  %v1646 = vld [vmem:[%s2 + $0xab8] sm:$0xff]
  %v1647 = vld [vmem:[%s2 + $0xac0] sm:$0xff]
  %v1648 = vld [vmem:[%s2 + $0xac8] sm:$0xff]
  %v1649 = vld [vmem:[%s2 + $0xad0] sm:$0xff]
  %v1650 = vld [vmem:[%s2 + $0xad8] sm:$0xff]
  %v1651 = vld [vmem:[%s2 + $0xae0] sm:$0xff]
  %v1652 = vld [vmem:[%s2 + $0xae8] sm:$0xff]
  %v1653 = vld [vmem:[%s2 + $0xaf0] sm:$0xff]
  %v1654 = vld [vmem:[%s2 + $0xaf8] sm:$0xff]
  %v1655 = vld [vmem:[%s2 + $0xb00] sm:$0xff]
  %v1656 = vld [vmem:[%s2 + $0xb08] sm:$0xff]
  %v1657 = vld [vmem:[%s2 + $0xb10] sm:$0xff]
  %v1658 = vld [vmem:[%s2 + $0xb18] sm:$0xff]
  %v1659 = vld [vmem:[%s2 + $0xb20] sm:$0xff]
  %v1660 = vld [vmem:[%s2 + $0xb28] sm:$0xff]
  %v1661 = vld [vmem:[%s2 + $0xb30] sm:$0xff]
  %v1662 = vld [vmem:[%s2 + $0xb38] sm:$0xff]
  %v1663 = vld [vmem:[%s2 + $0xb40] sm:$0xff]
  %v1664 = vld [vmem:[%s2 + $0xb48] sm:$0xff]
  %v1665 = vld [vmem:[%s2 + $0xb50] sm:$0xff]
  %v1666 = vld [vmem:[%s2 + $0xb58] sm:$0xff]
  %v1667 = vld [vmem:[%s2 + $0xb60] sm:$0xff]
  %v1668 = vld [vmem:[%s2 + $0xb68] sm:$0xff]
  %v1669 = vld [vmem:[%s2 + $0xb70] sm:$0xff]
  %v1670 = vld [vmem:[%s2 + $0xb78] sm:$0xff]
  %v1671 = vld [vmem:[%s2 + $0xb80] sm:$0xff]
  %v1672 = vld [vmem:[%s2 + $0xb88] sm:$0xff]
  %v1673 = vld [vmem:[%s2 + $0xb90] sm:$0xff]
  %v1674 = vld [vmem:[%s2 + $0xb98] sm:$0xff]
  %v1675 = vld [vmem:[%s2 + $0xba0] sm:$0xff]
  %v1676 = vld [vmem:[%s2 + $0xba8] sm:$0xff]
  %v1677 = vld [vmem:[%s2 + $0xbb0] sm:$0xff]
  %v1678 = vld [vmem:[%s2 + $0xbb8] sm:$0xff]
  %v1679 = vld [vmem:[%s2 + $0xbc0] sm:$0xff]
  %v1680 = vld [vmem:[%s2 + $0xbc8] sm:$0xff]
  %v1681 = vld [vmem:[%s2 + $0xbd0] sm:$0xff]
  %v1682 = vld [vmem:[%s2 + $0xbd8] sm:$0xff]
  %v1683 = vld [vmem:[%s2 + $0xbe0] sm:$0xff]
  %v1684 = vld [vmem:[%s2 + $0xbe8] sm:$0xff]
  %v1685 = vld [vmem:[%s2 + $0xbf0] sm:$0xff]
  %v1686 = vld [vmem:[%s2 + $0xbf8] sm:$0xff]
  %v1687 = vld [vmem:[%s2 + $0xc00] sm:$0xff]
  %v1688 = vld [vmem:[%s2 + $0xc08] sm:$0xff]
  %v1689 = vld [vmem:[%s2 + $0xc10] sm:$0xff]
  %v1690 = vld [vmem:[%s2 + $0xc18] sm:$0xff]
  %v1691 = vld [vmem:[%s2 + $0xc20] sm:$0xff]
  %v1692 = vld [vmem:[%s2 + $0xc28] sm:$0xff]
  %v1693 = vld [vmem:[%s2 + $0xc30] sm:$0xff]
  %v1694 = vld [vmem:[%s2 + $0xc38] sm:$0xff]
  %v1695 = vld [vmem:[%s2 + $0xc40] sm:$0xff]
  %v1696 = vld [vmem:[%s2 + $0xc48] sm:$0xff]
  %v1697 = vld [vmem:[%s2 + $0xc50] sm:$0xff]
  %v1698 = vld [vmem:[%s2 + $0xc58] sm:$0xff]
  %v1699 = vld [vmem:[%s2 + $0xc60] sm:$0xff]
  %v1700 = vld [vmem:[%s2 + $0xc68] sm:$0xff]
  %v1701 = vld [vmem:[%s2 + $0xc70] sm:$0xff]
  %v1702 = vld [vmem:[%s2 + $0xc78] sm:$0xff]
  %v1703 = vld [vmem:[%s2 + $0xc80] sm:$0xff]
  %v1704 = vld [vmem:[%s2 + $0xc88] sm:$0xff]
  %v1705 = vld [vmem:[%s2 + $0xc90] sm:$0xff]
  %v1706 = vld [vmem:[%s2 + $0xc98] sm:$0xff]
  %v1707 = vld [vmem:[%s2 + $0xca0] sm:$0xff]
  %v1708 = vld [vmem:[%s2 + $0xca8] sm:$0xff]
  %v1709 = vld [vmem:[%s2 + $0xcb0] sm:$0xff]
  %v1710 = vld [vmem:[%s2 + $0xcb8] sm:$0xff]
  %v1711 = vld [vmem:[%s2 + $0xcc0] sm:$0xff]
  %v1712 = vld [vmem:[%s2 + $0xcc8] sm:$0xff]
  %v1713 = vld [vmem:[%s2 + $0xcd0] sm:$0xff]
  %v1714 = vld [vmem:[%s2 + $0xcd8] sm:$0xff]
  %v1715 = vld [vmem:[%s2 + $0xce0] sm:$0xff]
  %v1716 = vld [vmem:[%s2 + $0xce8] sm:$0xff]
  %v1717 = vld [vmem:[%s2 + $0xcf0] sm:$0xff]
  %v1718 = vld [vmem:[%s2 + $0xcf8] sm:$0xff]
  %v1719 = vld [vmem:[%s2 + $0xd00] sm:$0xff]
  %v1720 = vld [vmem:[%s2 + $0xd08] sm:$0xff]
  %v1721 = vld [vmem:[%s2 + $0xd10] sm:$0xff]
  %v1722 = vld [vmem:[%s2 + $0xd18] sm:$0xff]
  %v1723 = vld [vmem:[%s2 + $0xd20] sm:$0xff]
  %v1724 = vld [vmem:[%s2 + $0xd28] sm:$0xff]
  %v1725 = vld [vmem:[%s2 + $0xd30] sm:$0xff]
  %v1726 = vld [vmem:[%s2 + $0xd38] sm:$0xff]
  %v1727 = vld [vmem:[%s2 + $0xd40] sm:$0xff]
  %v1728 = vld [vmem:[%s2 + $0xd48] sm:$0xff]
  %v1729 = vld [vmem:[%s2 + $0xd50] sm:$0xff]
  %v1730 = vld [vmem:[%s2 + $0xd58] sm:$0xff]
  %v1731 = vld [vmem:[%s2 + $0xd60] sm:$0xff]
  %v1732 = vld [vmem:[%s2 + $0xd68] sm:$0xff]
  %v1733 = vld [vmem:[%s2 + $0xd70] sm:$0xff]
  %v1734 = vld [vmem:[%s2 + $0xd78] sm:$0xff]
  %v1735 = vld [vmem:[%s2 + $0xd80] sm:$0xff]
  %v1736 = vld [vmem:[%s2 + $0xd88] sm:$0xff]
  %v1737 = vld [vmem:[%s2 + $0xd90] sm:$0xff]
  %v1738 = vld [vmem:[%s2 + $0xd98] sm:$0xff]
  %v1739 = vld [vmem:[%s2 + $0xda0] sm:$0xff]
  %v1740 = vld [vmem:[%s2 + $0xda8] sm:$0xff]
  %v1741 = vld [vmem:[%s2 + $0xdb0] sm:$0xff]
  %v1742 = vld [vmem:[%s2 + $0xdb8] sm:$0xff]
  %v1743 = vld [vmem:[%s2 + $0xdc0] sm:$0xff]
  %v1744 = vld [vmem:[%s2 + $0xdc8] sm:$0xff]
  %v1745 = vld [vmem:[%s2 + $0xdd0] sm:$0xff]
  %v1746 = vld [vmem:[%s2 + $0xdd8] sm:$0xff]
  %v1747 = vld [vmem:[%s2 + $0xde0] sm:$0xff]
  %v1748 = vld [vmem:[%s2 + $0xde8] sm:$0xff]
  %v1749 = vld [vmem:[%s2 + $0xdf0] sm:$0xff]
  %v1750 = vld [vmem:[%s2 + $0xdf8] sm:$0xff]
  %v1751 = vld [vmem:[%s2 + $0xe00] sm:$0xff]
  %v1752 = vld [vmem:[%s2 + $0xe08] sm:$0xff]
  %v1753 = vld [vmem:[%s2 + $0xe10] sm:$0xff]
  %v1754 = vld [vmem:[%s2 + $0xe18] sm:$0xff]
  %v1755 = vld [vmem:[%s2 + $0xe20] sm:$0xff]
  %v1756 = vld [vmem:[%s2 + $0xe28] sm:$0xff]
  %v1757 = vld [vmem:[%s2 + $0xe30] sm:$0xff]
  %v1758 = vld [vmem:[%s2 + $0xe38] sm:$0xff]
  %v1759 = vld [vmem:[%s2 + $0xe40] sm:$0xff]
  %v1760 = vld [vmem:[%s2 + $0xe48] sm:$0xff]
  %v1761 = vld [vmem:[%s2 + $0xe50] sm:$0xff]
  %v1762 = vld [vmem:[%s2 + $0xe58] sm:$0xff]
  %v1763 = vld [vmem:[%s2 + $0xe60] sm:$0xff]
  %v1764 = vld [vmem:[%s2 + $0xe68] sm:$0xff]
  %v1765 = vld [vmem:[%s2 + $0xe70] sm:$0xff]
  %v1766 = vld [vmem:[%s2 + $0xe78] sm:$0xff]
  %v1767 = vld [vmem:[%s2 + $0xe80] sm:$0xff]
  %v1768 = vld [vmem:[%s2 + $0xe88] sm:$0xff]
  %v1769 = vld [vmem:[%s2 + $0xe90] sm:$0xff]
  %v1770 = vld [vmem:[%s2 + $0xe98] sm:$0xff]
  %v1771 = vld [vmem:[%s2 + $0xea0] sm:$0xff]
  %v1772 = vld [vmem:[%s2 + $0xea8] sm:$0xff]
  %v1773 = vld [vmem:[%s2 + $0xeb0] sm:$0xff]
  %v1774 = vld [vmem:[%s2 + $0xeb8] sm:$0xff]
  %v1775 = vld [vmem:[%s2 + $0xec0] sm:$0xff]
  %v1776 = vld [vmem:[%s2 + $0xec8] sm:$0xff]
  %v1777 = vld [vmem:[%s2 + $0xed0] sm:$0xff]
  %v1778 = vld [vmem:[%s2 + $0xed8] sm:$0xff]
  %v1779 = vld [vmem:[%s2 + $0xee0] sm:$0xff]
  %v1780 = vld [vmem:[%s2 + $0xee8] sm:$0xff]
  %v1781 = vld [vmem:[%s2 + $0xef0] sm:$0xff]
  %v1782 = vld [vmem:[%s2 + $0xef8] sm:$0xff]
  %v1783 = vld [vmem:[%s2 + $0xf00] sm:$0xff]
  %v1784 = vld [vmem:[%s2 + $0xf08] sm:$0xff]
  %v1785 = vld [vmem:[%s2 + $0xf10] sm:$0xff]
  %v1786 = vld [vmem:[%s2 + $0xf18] sm:$0xff]
  %v1787 = vld [vmem:[%s2 + $0xf20] sm:$0xff]
  %v1788 = vld [vmem:[%s2 + $0xf28] sm:$0xff]
  %v1789 = vld [vmem:[%s2 + $0xf30] sm:$0xff]
  %v1790 = vld [vmem:[%s2 + $0xf38] sm:$0xff]
  %v1791 = vld [vmem:[%s2 + $0xf40] sm:$0xff]
  %v1792 = vld [vmem:[%s2 + $0xf48] sm:$0xff]
  %v1793 = vld [vmem:[%s2 + $0xf50] sm:$0xff]
  %v1794 = vld [vmem:[%s2 + $0xf58] sm:$0xff]
  %v1795 = vld [vmem:[%s2 + $0xf60] sm:$0xff]
  %v1796 = vld [vmem:[%s2 + $0xf68] sm:$0xff]
  %v1797 = vld [vmem:[%s2 + $0xf70] sm:$0xff]
  %v1798 = vld [vmem:[%s2 + $0xf78] sm:$0xff]
  %v1799 = vld [vmem:[%s2 + $0xf80] sm:$0xff]
  %v1800 = vld [vmem:[%s2 + $0xf88] sm:$0xff]
  %v1801 = vld [vmem:[%s2 + $0xf90] sm:$0xff]
  %v1802 = vld [vmem:[%s2 + $0xf98] sm:$0xff]
  %v1803 = vld [vmem:[%s2 + $0xfa0] sm:$0xff]
  %v1804 = vld [vmem:[%s2 + $0xfa8] sm:$0xff]
  %v1805 = vld [vmem:[%s2 + $0xfb0] sm:$0xff]
  %v1806 = vld [vmem:[%s2 + $0xfb8] sm:$0xff]
  %v1807 = vld [vmem:[%s2 + $0xfc0] sm:$0xff]
  %v1808 = vld [vmem:[%s2 + $0xfc8] sm:$0xff]
  %v1809 = vld [vmem:[%s2 + $0xfd0] sm:$0xff]
  %v1810 = vld [vmem:[%s2 + $0xfd8] sm:$0xff]
  %v1811 = vld [vmem:[%s2 + $0xfe0] sm:$0xff]
  %v1812 = vld [vmem:[%s2 + $0xfe8] sm:$0xff]
  %v1813 = vld [vmem:[%s2 + $0xff0] sm:$0xff]
  %v1814 = vld [vmem:[%s2 + $0xff8] sm:$0xff]
  %1815 = vmatprep.subr.mxu0 0.0
  %1816 = vmatpush1.msra.mxu0 %v1271
  %1817 = vmatprep.subr.mxu0 0.0
  %1818 = vmatpush1.msra.mxu0 %v1272
  %1819 = vmatprep.subr.mxu0 0.0
  %1820 = vmatpush1.msra.mxu0 %v1273
  %1821 = vmatprep.subr.mxu0 0.0
  %1822 = vmatpush1.msra.mxu0 %v1274
  %1823 = vmatprep.subr.mxu0 0.0
  %1824 = vmatpush1.msra.mxu0 %v1275
  %1825 = vmatprep.subr.mxu0 0.0
  %1826 = vmatpush1.msra.mxu0 %v1276
  %1827 = vmatprep.subr.mxu0 0.0
  %1828 = vmatpush1.msra.mxu0 %v1277
  %1829 = vmatprep.subr.mxu0 0.0
  %1830 = vmatpush1.msra.mxu0 %v1278
  %1831 = vmatprep.subr.mxu0 0.0
  %1832 = vmatpush1.msra.mxu0 %v1279
  %1833 = vmatprep.subr.mxu0 0.0
  %1834 = vmatpush1.msra.mxu0 %v1280
  %1835 = vmatprep.subr.mxu0 0.0
  %1836 = vmatpush1.msra.mxu0 %v1281
  %1837 = vmatprep.subr.mxu0 0.0
  %1838 = vmatpush1.msra.mxu0 %v1282
  %1839 = vmatprep.subr.mxu0 0.0
  %1840 = vmatpush1.msra.mxu0 %v1283
  %1841 = vmatprep.subr.mxu0 0.0
  %1842 = vmatpush1.msra.mxu0 %v1284
  %1843 = vmatprep.subr.mxu0 0.0
  %1844 = vmatpush1.msra.mxu0 %v1285
  %1845 = vmatprep.subr.mxu0 0.0
  %1846 = vmatpush1.msra.mxu0 %v1286
  %1847 = vmatprep.subr.mxu0 0.0
  %1848 = vmatpush1.msra.mxu0 %v1287
  %1849 = vmatprep.subr.mxu0 0.0
  %1850 = vmatpush1.msra.mxu0 %v1288
  %1851 = vmatprep.subr.mxu0 0.0
  %1852 = vmatpush1.msra.mxu0 %v1289
  %1853 = vmatprep.subr.mxu0 0.0
  %1854 = vmatpush1.msra.mxu0 %v1290
  %1855 = vmatprep.subr.mxu0 0.0
  %1856 = vmatpush1.msra.mxu0 %v1291
  %1857 = vmatprep.subr.mxu0 0.0
  %1858 = vmatpush1.msra.mxu0 %v1292
  %1859 = vmatprep.subr.mxu0 0.0
  %1860 = vmatpush1.msra.mxu0 %v1293
  %1861 = vmatprep.subr.mxu0 0.0
  %1862 = vmatpush1.msra.mxu0 %v1294
  %1863 = vmatprep.subr.mxu0 0.0
  %1864 = vmatpush1.msra.mxu0 %v1295
  %1865 = vmatprep.subr.mxu0 0.0
  %1866 = vmatpush1.msra.mxu0 %v1296
  %1867 = vmatprep.subr.mxu0 0.0
  %1868 = vmatpush1.msra.mxu0 %v1297
  %1869 = vmatprep.subr.mxu0 0.0
  %1870 = vmatpush1.msra.mxu0 %v1298
  %1871 = vmatprep.subr.mxu0 0.0
  %1872 = vmatpush1.msra.mxu0 %v1299
  %1873 = vmatprep.subr.mxu0 0.0
  %1874 = vmatpush1.msra.mxu0 %v1300
  %1875 = vmatprep.subr.mxu0 0.0
  %1876 = vmatpush1.msra.mxu0 %v1301
  %1877 = vmatprep.subr.mxu0 0.0
  %1878 = vmatpush1.msra.mxu0 %v1302
  %1879 = vmatprep.mubr.f32.mxu0 %v1304
  %1880 = vmatmul.mubr.f32.gmra.mrb[0].mxu0 %v1303
  %v1881 = vpop.f32.mrb[0].mxu0
  %v1882 = vadd.f32 0.0, %v1881
  %v1883 = vpop.f32.mrb[0].mxu0
  %1884 = vmatprep.mubr.f32.mxu0 %v1306
  %1885 = vmatmul.mubr.f32.gmra.mrb[0].mxu0 %v1305
  %v1886 = vpop.f32.mrb[0].mxu0
  %v1887 = vadd.f32 0.0, %v1886
  %v1888 = vpop.f32.mrb[0].mxu0
  %1889 = vmatprep.mubr.f32.mxu0 %v1308
  %1890 = vmatmul.mubr.f32.gmra.mrb[0].mxu0 %v1307
  %v1891 = vpop.f32.mrb[0].mxu0
  %v1892 = vadd.f32 0.0, %v1891
  %v1893 = vpop.f32.mrb[0].mxu0
  %1894 = vmatprep.mubr.f32.mxu0 %v1310
  %1895 = vmatmul.mubr.f32.gmra.mrb[0].mxu0 %v1309
  %v1896 = vpop.f32.mrb[0].mxu0
  %v1897 = vadd.f32 0.0, %v1896
  %v1898 = vpop.f32.mrb[0].mxu0
  %1899 = vmatprep.mubr.f32.mxu0 %v1312
  %1900 = vmatmul.mubr.f32.gmra.mrb[0].mxu0 %v1311
  %v1901 = vpop.f32.mrb[0].mxu0
  %v1902 = vadd.f32 0.0, %v1901
  %v1903 = vpop.f32.mrb[0].mxu0
  %1904 = vmatprep.mubr.f32.mxu0 %v1314
  %1905 = vmatmul.mubr.f32.gmra.mrb[0].mxu0 %v1313
  %v1906 = vpop.f32.mrb[0].mxu0
  %v1907 = vadd.f32 0.0, %v1906
  %v1908 = vpop.f32.mrb[0].mxu0
  %1909 = vmatprep.mubr.f32.mxu0 %v1316
  %1910 = vmatmul.mubr.f32.gmra.mrb[0].mxu0 %v1315
  %v1911 = vpop.f32.mrb[0].mxu0
  %v1912 = vadd.f32 0.0, %v1911
  %v1913 = vpop.f32.mrb[0].mxu0
  %1914 = vmatprep.mubr.f32.mxu0 %v1318
  %1915 = vmatmul.mubr.f32.gmra.mrb[0].mxu0 %v1317
  %v1916 = vpop.f32.mrb[0].mxu0
  %v1917 = vadd.f32 0.0, %v1916
  %v1918 = vpop.f32.mrb[0].mxu0
  %1919 = vmatprep.mubr.f32.mxu0 %v1320
  %1920 = vmatmul.mubr.f32.gmra.mrb[0].mxu0 %v1319
  %v1921 = vpop.f32.mrb[0].mxu0
  %v1922 = vadd.f32 0.0, %v1921
  %v1923 = vpop.f32.mrb[0].mxu0
  %1924 = vmatprep.mubr.f32.mxu0 %v1322
  %1925 = vmatmul.mubr.f32.gmra.mrb[0].mxu0 %v1321
  %v1926 = vpop.f32.mrb[0].mxu0
  %v1927 = vadd.f32 0.0, %v1926
  %v1928 = vpop.f32.mrb[0].mxu0
  %1929 = vmatprep.mubr.f32.mxu0 %v1324
  %1930 = vmatmul.mubr.f32.gmra.mrb[0].mxu0 %v1323
  %v1931 = vpop.f32.mrb[0].mxu0
  %v1932 = vadd.f32 0.0, %v1931
  %v1933 = vpop.f32.mrb[0].mxu0
  %1934 = vmatprep.mubr.f32.mxu0 %v1326
  %1935 = vmatmul.mubr.f32.gmra.mrb[0].mxu0 %v1325
  %v1936 = vpop.f32.mrb[0].mxu0
  %v1937 = vadd.f32 0.0, %v1936
  %v1938 = vpop.f32.mrb[0].mxu0
  %1939 = vmatprep.mubr.f32.mxu0 %v1328
  %1940 = vmatmul.mubr.f32.gmra.mrb[0].mxu0 %v1327
  %v1941 = vpop.f32.mrb[0].mxu0
  %v1942 = vadd.f32 0.0, %v1941
  %v1943 = vpop.f32.mrb[0].mxu0
  %1944 = vmatprep.mubr.f32.mxu0 %v1330
  %1945 = vmatmul.mubr.f32.gmra.mrb[0].mxu0 %v1329
  %v1946 = vpop.f32.mrb[0].mxu0
  %v1947 = vadd.f32 0.0, %v1946
  %v1948 = vpop.f32.mrb[0].mxu0
  %1949 = vmatprep.mubr.f32.mxu0 %v1332
  %1950 = vmatmul.mubr.f32.gmra.mrb[0].mxu0 %v1331
  %v1951 = vpop.f32.mrb[0].mxu0
  %v1952 = vadd.f32 0.0, %v1951
  %v1953 = vpop.f32.mrb[0].mxu0
  %1954 = vmatprep.mubr.f32.mxu0 %v1334
  %1955 = vmatmul.mubr.f32.gmra.mrb[0].mxu0 %v1333
  %v1956 = vpop.f32.mrb[0].mxu0
  %v1957 = vadd.f32 0.0, %v1956
  %v1958 = vpop.f32.mrb[0].mxu0
  %1959 = vmatprep.mubr.f32.mxu0 %v1336
  %1960 = vmatmul.mubr.f32.gmra.mrb[0].mxu0 %v1335
  %v1961 = vpop.f32.mrb[0].mxu0
  %v1962 = vadd.f32 0.0, %v1961
  %v1963 = vpop.f32.mrb[0].mxu0
  %1964 = vmatprep.mubr.f32.mxu0 %v1338
  %1965 = vmatmul.mubr.f32.gmra.mrb[0].mxu0 %v1337
  %v1966 = vpop.f32.mrb[0].mxu0
  %v1967 = vadd.f32 0.0, %v1966
  %v1968 = vpop.f32.mrb[0].mxu0
  %1969 = vmatprep.mubr.f32.mxu0 %v1340
  %1970 = vmatmul.mubr.f32.gmra.mrb[0].mxu0 %v1339
  %v1971 = vpop.f32.mrb[0].mxu0
  %v1972 = vadd.f32 0.0, %v1971
  %v1973 = vpop.f32.mrb[0].mxu0
  %1974 = vmatprep.mubr.f32.mxu0 %v1342
  %1975 = vmatmul.mubr.f32.gmra.mrb[0].mxu0 %v1341
  %v1976 = vpop.f32.mrb[0].mxu0
  %v1977 = vadd.f32 0.0, %v1976
  %v1978 = vpop.f32.mrb[0].mxu0
  %1979 = vmatprep.mubr.f32.mxu0 %v1344
  %1980 = vmatmul.mubr.f32.gmra.mrb[0].mxu0 %v1343
  %v1981 = vpop.f32.mrb[0].mxu0
  %v1982 = vadd.f32 0.0, %v1981
  %v1983 = vpop.f32.mrb[0].mxu0
  %1984 = vmatprep.mubr.f32.mxu0 %v1346
  %1985 = vmatmul.mubr.f32.gmra.mrb[0].mxu0 %v1345
  %v1986 = vpop.f32.mrb[0].mxu0
  %v1987 = vadd.f32 0.0, %v1986
  %v1988 = vpop.f32.mrb[0].mxu0
  %1989 = vmatprep.mubr.f32.mxu0 %v1348
  %1990 = vmatmul.mubr.f32.gmra.mrb[0].mxu0 %v1347
  %v1991 = vpop.f32.mrb[0].mxu0
  %v1992 = vadd.f32 0.0, %v1991
  %v1993 = vpop.f32.mrb[0].mxu0
  %1994 = vmatprep.mubr.f32.mxu0 %v1350
  %1995 = vmatmul.mubr.f32.gmra.mrb[0].mxu0 %v1349
  %v1996 = vpop.f32.mrb[0].mxu0
  %v1997 = vadd.f32 0.0, %v1996
  %v1998 = vpop.f32.mrb[0].mxu0
  %1999 = vmatprep.mubr.f32.mxu0 %v1352
  %2000 = vmatmul.mubr.f32.gmra.mrb[0].mxu0 %v1351
  %v2001 = vpop.f32.mrb[0].mxu0
  %v2002 = vadd.f32 0.0, %v2001
  %v2003 = vpop.f32.mrb[0].mxu0
  %2004 = vmatprep.mubr.f32.mxu0 %v1354
  %2005 = vmatmul.mubr.f32.gmra.mrb[0].mxu0 %v1353
  %v2006 = vpop.f32.mrb[0].mxu0
  %v2007 = vadd.f32 0.0, %v2006
  %v2008 = vpop.f32.mrb[0].mxu0
  %2009 = vmatprep.mubr.f32.mxu0 %v1356
  %2010 = vmatmul.mubr.f32.gmra.mrb[0].mxu0 %v1355
  %v2011 = vpop.f32.mrb[0].mxu0
  %v2012 = vadd.f32 0.0, %v2011
  %v2013 = vpop.f32.mrb[0].mxu0
  %2014 = vmatprep.mubr.f32.mxu0 %v1358
  %2015 = vmatmul.mubr.f32.gmra.mrb[0].mxu0 %v1357
  %v2016 = vpop.f32.mrb[0].mxu0
  %v2017 = vadd.f32 0.0, %v2016
  %v2018 = vpop.f32.mrb[0].mxu0
  %2019 = vmatprep.mubr.f32.mxu0 %v1360
  %2020 = vmatmul.mubr.f32.gmra.mrb[0].mxu0 %v1359
  %v2021 = vpop.f32.mrb[0].mxu0
  %v2022 = vadd.f32 0.0, %v2021
  %v2023 = vpop.f32.mrb[0].mxu0
  %2024 = vmatprep.mubr.f32.mxu0 %v1362
  %2025 = vmatmul.mubr.f32.gmra.mrb[0].mxu0 %v1361
  %v2026 = vpop.f32.mrb[0].mxu0
  %v2027 = vadd.f32 0.0, %v2026
  %v2028 = vpop.f32.mrb[0].mxu0
  %2029 = vmatprep.mubr.f32.mxu0 %v1364
  %2030 = vmatmul.mubr.f32.gmra.mrb[0].mxu0 %v1363
  %v2031 = vpop.f32.mrb[0].mxu0
  %v2032 = vadd.f32 0.0, %v2031
  %v2033 = vpop.f32.mrb[0].mxu0
  %2034 = vmatprep.mubr.f32.mxu0 %v1366
  %2035 = vmatmul.mubr.f32.gmra.mrb[0].mxu0 %v1365
  %v2036 = vpop.f32.mrb[0].mxu0
  %v2037 = vadd.f32 0.0, %v2036
  %v2038 = vpop.f32.mrb[0].mxu0
  %2039 = vmatprep.mubr.f32.mxu0 %v1368
  %2040 = vmatmul.mubr.f32.gmra.mrb[0].mxu0 %v1367
  %v2041 = vpop.f32.mrb[0].mxu0
  %v2042 = vadd.f32 0.0, %v2041
  %v2043 = vpop.f32.mrb[0].mxu0
  %2044 = vmatprep.mubr.f32.mxu0 %v1370
  %2045 = vmatmul.mubr.f32.gmra.mrb[0].mxu0 %v1369
  %v2046 = vpop.f32.mrb[0].mxu0
  %v2047 = vadd.f32 0.0, %v2046
  %v2048 = vpop.f32.mrb[0].mxu0
  %2049 = vmatprep.mubr.f32.mxu0 %v1372
  %2050 = vmatmul.mubr.f32.gmra.mrb[0].mxu0 %v1371
  %v2051 = vpop.f32.mrb[0].mxu0
  %v2052 = vadd.f32 0.0, %v2051
  %v2053 = vpop.f32.mrb[0].mxu0
  %2054 = vmatprep.mubr.f32.mxu0 %v1374
  %2055 = vmatmul.mubr.f32.gmra.mrb[0].mxu0 %v1373
  %v2056 = vpop.f32.mrb[0].mxu0
  %v2057 = vadd.f32 0.0, %v2056
  %v2058 = vpop.f32.mrb[0].mxu0
  %2059 = vmatprep.mubr.f32.mxu0 %v1376
  %2060 = vmatmul.mubr.f32.gmra.mrb[0].mxu0 %v1375
  %v2061 = vpop.f32.mrb[0].mxu0
  %v2062 = vadd.f32 0.0, %v2061
  %v2063 = vpop.f32.mrb[0].mxu0
  %2064 = vmatprep.mubr.f32.mxu0 %v1378
  %2065 = vmatmul.mubr.f32.gmra.mrb[0].mxu0 %v1377
  %v2066 = vpop.f32.mrb[0].mxu0
  %v2067 = vadd.f32 0.0, %v2066
  %v2068 = vpop.f32.mrb[0].mxu0
  %2069 = vmatprep.mubr.f32.mxu0 %v1380
  %2070 = vmatmul.mubr.f32.gmra.mrb[0].mxu0 %v1379
  %v2071 = vpop.f32.mrb[0].mxu0
  %v2072 = vadd.f32 0.0, %v2071
  %v2073 = vpop.f32.mrb[0].mxu0
  %2074 = vmatprep.mubr.f32.mxu0 %v1382
  %2075 = vmatmul.mubr.f32.gmra.mrb[0].mxu0 %v1381
  %v2076 = vpop.f32.mrb[0].mxu0
  %v2077 = vadd.f32 0.0, %v2076
  %v2078 = vpop.f32.mrb[0].mxu0
  %2079 = vmatprep.mubr.f32.mxu0 %v1384
  %2080 = vmatmul.mubr.f32.gmra.mrb[0].mxu0 %v1383
  %v2081 = vpop.f32.mrb[0].mxu0
  %v2082 = vadd.f32 0.0, %v2081
  %v2083 = vpop.f32.mrb[0].mxu0
  %2084 = vmatprep.mubr.f32.mxu0 %v1386
  %2085 = vmatmul.mubr.f32.gmra.mrb[0].mxu0 %v1385
  %v2086 = vpop.f32.mrb[0].mxu0
  %v2087 = vadd.f32 0.0, %v2086
  %v2088 = vpop.f32.mrb[0].mxu0
  %2089 = vmatprep.mubr.f32.mxu0 %v1388
  %2090 = vmatmul.mubr.f32.gmra.mrb[0].mxu0 %v1387
  %v2091 = vpop.f32.mrb[0].mxu0
  %v2092 = vadd.f32 0.0, %v2091
  %v2093 = vpop.f32.mrb[0].mxu0
  %2094 = vmatprep.mubr.f32.mxu0 %v1390
  %2095 = vmatmul.mubr.f32.gmra.mrb[0].mxu0 %v1389
  %v2096 = vpop.f32.mrb[0].mxu0
  %v2097 = vadd.f32 0.0, %v2096
  %v2098 = vpop.f32.mrb[0].mxu0
  %2099 = vmatprep.mubr.f32.mxu0 %v1392
  %2100 = vmatmul.mubr.f32.gmra.mrb[0].mxu0 %v1391
  %v2101 = vpop.f32.mrb[0].mxu0
  %v2102 = vadd.f32 0.0, %v2101
  %v2103 = vpop.f32.mrb[0].mxu0
  %2104 = vmatprep.mubr.f32.mxu0 %v1394
  %2105 = vmatmul.mubr.f32.gmra.mrb[0].mxu0 %v1393
  %v2106 = vpop.f32.mrb[0].mxu0
  %v2107 = vadd.f32 0.0, %v2106
  %v2108 = vpop.f32.mrb[0].mxu0
  %2109 = vmatprep.mubr.f32.mxu0 %v1396
  %2110 = vmatmul.mubr.f32.gmra.mrb[0].mxu0 %v1395
  %v2111 = vpop.f32.mrb[0].mxu0
  %v2112 = vadd.f32 0.0, %v2111
  %v2113 = vpop.f32.mrb[0].mxu0
  %2114 = vmatprep.mubr.f32.mxu0 %v1398
  %2115 = vmatmul.mubr.f32.gmra.mrb[0].mxu0 %v1397
  %v2116 = vpop.f32.mrb[0].mxu0
  %v2117 = vadd.f32 0.0, %v2116
  %v2118 = vpop.f32.mrb[0].mxu0
  %2119 = vmatprep.mubr.f32.mxu0 %v1400
  %2120 = vmatmul.mubr.f32.gmra.mrb[0].mxu0 %v1399
  %v2121 = vpop.f32.mrb[0].mxu0
  %v2122 = vadd.f32 0.0, %v2121
  %v2123 = vpop.f32.mrb[0].mxu0
  %2124 = vmatprep.mubr.f32.mxu0 %v1402
  %2125 = vmatmul.mubr.f32.gmra.mrb[0].mxu0 %v1401
  %v2126 = vpop.f32.mrb[0].mxu0
  %v2127 = vadd.f32 0.0, %v2126
  %v2128 = vpop.f32.mrb[0].mxu0
  %2129 = vmatprep.mubr.f32.mxu0 %v1404
  %2130 = vmatmul.mubr.f32.gmra.mrb[0].mxu0 %v1403
  %v2131 = vpop.f32.mrb[0].mxu0
  %v2132 = vadd.f32 0.0, %v2131
  %v2133 = vpop.f32.mrb[0].mxu0
  %2134 = vmatprep.mubr.f32.mxu0 %v1406
  %2135 = vmatmul.mubr.f32.gmra.mrb[0].mxu0 %v1405
  %v2136 = vpop.f32.mrb[0].mxu0
  %v2137 = vadd.f32 0.0, %v2136
  %v2138 = vpop.f32.mrb[0].mxu0
  %2139 = vmatprep.mubr.f32.mxu0 %v1408
  %2140 = vmatmul.mubr.f32.gmra.mrb[0].mxu0 %v1407
  %v2141 = vpop.f32.mrb[0].mxu0
  %v2142 = vadd.f32 0.0, %v2141
  %v2143 = vpop.f32.mrb[0].mxu0
  %2144 = vmatprep.mubr.f32.mxu0 %v1410
  %2145 = vmatmul.mubr.f32.gmra.mrb[0].mxu0 %v1409
  %v2146 = vpop.f32.mrb[0].mxu0
  %v2147 = vadd.f32 0.0, %v2146
  %v2148 = vpop.f32.mrb[0].mxu0
  %2149 = vmatprep.mubr.f32.mxu0 %v1412
  %2150 = vmatmul.mubr.f32.gmra.mrb[0].mxu0 %v1411
  %v2151 = vpop.f32.mrb[0].mxu0
  %v2152 = vadd.f32 0.0, %v2151
  %v2153 = vpop.f32.mrb[0].mxu0
  %2154 = vmatprep.mubr.f32.mxu0 %v1414
  %2155 = vmatmul.mubr.f32.gmra.mrb[0].mxu0 %v1413
  %v2156 = vpop.f32.mrb[0].mxu0
  %v2157 = vadd.f32 0.0, %v2156
  %v2158 = vpop.f32.mrb[0].mxu0
  %2159 = vmatprep.mubr.f32.mxu0 %v1416
  %2160 = vmatmul.mubr.f32.gmra.mrb[0].mxu0 %v1415
  %v2161 = vpop.f32.mrb[0].mxu0
  %v2162 = vadd.f32 0.0, %v2161
  %v2163 = vpop.f32.mrb[0].mxu0
  %2164 = vmatprep.mubr.f32.mxu0 %v1418
  %2165 = vmatmul.mubr.f32.gmra.mrb[0].mxu0 %v1417
  %v2166 = vpop.f32.mrb[0].mxu0
  %v2167 = vadd.f32 0.0, %v2166
  %v2168 = vpop.f32.mrb[0].mxu0
  %2169 = vmatprep.mubr.f32.mxu0 %v1420
  %2170 = vmatmul.mubr.f32.gmra.mrb[0].mxu0 %v1419
  %v2171 = vpop.f32.mrb[0].mxu0
  %v2172 = vadd.f32 0.0, %v2171
  %v2173 = vpop.f32.mrb[0].mxu0
  %2174 = vmatprep.mubr.f32.mxu0 %v1422
  %2175 = vmatmul.mubr.f32.gmra.mrb[0].mxu0 %v1421
  %v2176 = vpop.f32.mrb[0].mxu0
  %v2177 = vadd.f32 0.0, %v2176
  %v2178 = vpop.f32.mrb[0].mxu0
  %2179 = vmatprep.mubr.f32.mxu0 %v1424
  %2180 = vmatmul.mubr.f32.gmra.mrb[0].mxu0 %v1423
  %v2181 = vpop.f32.mrb[0].mxu0
  %v2182 = vadd.f32 0.0, %v2181
  %v2183 = vpop.f32.mrb[0].mxu0
  %2184 = vmatprep.mubr.f32.mxu0 %v1426
  %2185 = vmatmul.mubr.f32.gmra.mrb[0].mxu0 %v1425
  %v2186 = vpop.f32.mrb[0].mxu0
  %v2187 = vadd.f32 0.0, %v2186
  %v2188 = vpop.f32.mrb[0].mxu0
  %2189 = vmatprep.mubr.f32.mxu0 %v1428
  %2190 = vmatmul.mubr.f32.gmra.mrb[0].mxu0 %v1427
  %v2191 = vpop.f32.mrb[0].mxu0
  %v2192 = vadd.f32 0.0, %v2191
  %v2193 = vpop.f32.mrb[0].mxu0
  %2194 = vmatprep.mubr.f32.mxu0 %v1430
  %2195 = vmatmul.mubr.f32.gmra.mrb[0].mxu0 %v1429
  %v2196 = vpop.f32.mrb[0].mxu0
  %v2197 = vadd.f32 0.0, %v2196
  %v2198 = vpop.f32.mrb[0].mxu0
  %2199 = vmatprep.mubr.f32.mxu0 %v1432
  %2200 = vmatmul.mubr.f32.gmra.mrb[0].mxu0 %v1431
  %v2201 = vpop.f32.mrb[0].mxu0
  %v2202 = vadd.f32 0.0, %v2201
  %v2203 = vpop.f32.mrb[0].mxu0
  %2204 = vmatprep.mubr.f32.mxu0 %v1434
  %2205 = vmatmul.mubr.f32.gmra.mrb[0].mxu0 %v1433
  %v2206 = vpop.f32.mrb[0].mxu0
  %v2207 = vadd.f32 0.0, %v2206
  %v2208 = vpop.f32.mrb[0].mxu0
  %2209 = vmatprep.mubr.f32.mxu0 %v1436
  %2210 = vmatmul.mubr.f32.gmra.mrb[0].mxu0 %v1435
  %v2211 = vpop.f32.mrb[0].mxu0
  %v2212 = vadd.f32 0.0, %v2211
  %v2213 = vpop.f32.mrb[0].mxu0
  %2214 = vmatprep.mubr.f32.mxu0 %v1438
  %2215 = vmatmul.mubr.f32.gmra.mrb[0].mxu0 %v1437
  %v2216 = vpop.f32.mrb[0].mxu0
  %v2217 = vadd.f32 0.0, %v2216
  %v2218 = vpop.f32.mrb[0].mxu0
  %2219 = vmatprep.mubr.f32.mxu0 %v1440
  %2220 = vmatmul.mubr.f32.gmra.mrb[0].mxu0 %v1439
  %v2221 = vpop.f32.mrb[0].mxu0
  %v2222 = vadd.f32 0.0, %v2221
  %v2223 = vpop.f32.mrb[0].mxu0
  %2224 = vmatprep.mubr.f32.mxu0 %v1442
  %2225 = vmatmul.mubr.f32.gmra.mrb[0].mxu0 %v1441
  %v2226 = vpop.f32.mrb[0].mxu0
  %v2227 = vadd.f32 0.0, %v2226
  %v2228 = vpop.f32.mrb[0].mxu0
  %2229 = vmatprep.mubr.f32.mxu0 %v1444
  %2230 = vmatmul.mubr.f32.gmra.mrb[0].mxu0 %v1443
  %v2231 = vpop.f32.mrb[0].mxu0
  %v2232 = vadd.f32 0.0, %v2231
  %v2233 = vpop.f32.mrb[0].mxu0
  %2234 = vmatprep.mubr.f32.mxu0 %v1446
  %2235 = vmatmul.mubr.f32.gmra.mrb[0].mxu0 %v1445
  %v2236 = vpop.f32.mrb[0].mxu0
  %v2237 = vadd.f32 0.0, %v2236
  %v2238 = vpop.f32.mrb[0].mxu0
  %2239 = vmatprep.mubr.f32.mxu0 %v1448
  %2240 = vmatmul.mubr.f32.gmra.mrb[0].mxu0 %v1447
  %v2241 = vpop.f32.mrb[0].mxu0
  %v2242 = vadd.f32 0.0, %v2241
  %v2243 = vpop.f32.mrb[0].mxu0
  %2244 = vmatprep.mubr.f32.mxu0 %v1450
  %2245 = vmatmul.mubr.f32.gmra.mrb[0].mxu0 %v1449
  %v2246 = vpop.f32.mrb[0].mxu0
  %v2247 = vadd.f32 0.0, %v2246
  %v2248 = vpop.f32.mrb[0].mxu0
  %2249 = vmatprep.mubr.f32.mxu0 %v1452
  %2250 = vmatmul.mubr.f32.gmra.mrb[0].mxu0 %v1451
  %v2251 = vpop.f32.mrb[0].mxu0
  %v2252 = vadd.f32 0.0, %v2251
  %v2253 = vpop.f32.mrb[0].mxu0
  %2254 = vmatprep.mubr.f32.mxu0 %v1454
  %2255 = vmatmul.mubr.f32.gmra.mrb[0].mxu0 %v1453
  %v2256 = vpop.f32.mrb[0].mxu0
  %v2257 = vadd.f32 0.0, %v2256
  %v2258 = vpop.f32.mrb[0].mxu0
  %2259 = vmatprep.mubr.f32.mxu0 %v1456
  %2260 = vmatmul.mubr.f32.gmra.mrb[0].mxu0 %v1455
  %v2261 = vpop.f32.mrb[0].mxu0
  %v2262 = vadd.f32 0.0, %v2261
  %v2263 = vpop.f32.mrb[0].mxu0
  %2264 = vmatprep.mubr.f32.mxu0 %v1458
  %2265 = vmatmul.mubr.f32.gmra.mrb[0].mxu0 %v1457
  %v2266 = vpop.f32.mrb[0].mxu0
  %v2267 = vadd.f32 0.0, %v2266
  %v2268 = vpop.f32.mrb[0].mxu0
  %2269 = vmatprep.mubr.f32.mxu0 %v1460
  %2270 = vmatmul.mubr.f32.gmra.mrb[0].mxu0 %v1459
  %v2271 = vpop.f32.mrb[0].mxu0
  %v2272 = vadd.f32 0.0, %v2271
  %v2273 = vpop.f32.mrb[0].mxu0
  %2274 = vmatprep.mubr.f32.mxu0 %v1462
  %2275 = vmatmul.mubr.f32.gmra.mrb[0].mxu0 %v1461
  %v2276 = vpop.f32.mrb[0].mxu0
  %v2277 = vadd.f32 0.0, %v2276
  %v2278 = vpop.f32.mrb[0].mxu0
  %2279 = vmatprep.mubr.f32.mxu0 %v1464
  %2280 = vmatmul.mubr.f32.gmra.mrb[0].mxu0 %v1463
  %v2281 = vpop.f32.mrb[0].mxu0
  %v2282 = vadd.f32 0.0, %v2281
  %v2283 = vpop.f32.mrb[0].mxu0
  %2284 = vmatprep.mubr.f32.mxu0 %v1466
  %2285 = vmatmul.mubr.f32.gmra.mrb[0].mxu0 %v1465
  %v2286 = vpop.f32.mrb[0].mxu0
  %v2287 = vadd.f32 0.0, %v2286
  %v2288 = vpop.f32.mrb[0].mxu0
  %2289 = vmatprep.mubr.f32.mxu0 %v1468
  %2290 = vmatmul.mubr.f32.gmra.mrb[0].mxu0 %v1467
  %v2291 = vpop.f32.mrb[0].mxu0
  %v2292 = vadd.f32 0.0, %v2291
  %v2293 = vpop.f32.mrb[0].mxu0
  %2294 = vmatprep.mubr.f32.mxu0 %v1470
  %2295 = vmatmul.mubr.f32.gmra.mrb[0].mxu0 %v1469
  %v2296 = vpop.f32.mrb[0].mxu0
  %v2297 = vadd.f32 0.0, %v2296
  %v2298 = vpop.f32.mrb[0].mxu0
  %2299 = vmatprep.mubr.f32.mxu0 %v1472
  %2300 = vmatmul.mubr.f32.gmra.mrb[0].mxu0 %v1471
  %v2301 = vpop.f32.mrb[0].mxu0
  %v2302 = vadd.f32 0.0, %v2301
  %v2303 = vpop.f32.mrb[0].mxu0
  %2304 = vmatprep.mubr.f32.mxu0 %v1474
  %2305 = vmatmul.mubr.f32.gmra.mrb[0].mxu0 %v1473
  %v2306 = vpop.f32.mrb[0].mxu0
  %v2307 = vadd.f32 0.0, %v2306
  %v2308 = vpop.f32.mrb[0].mxu0
  %2309 = vmatprep.mubr.f32.mxu0 %v1476
  %2310 = vmatmul.mubr.f32.gmra.mrb[0].mxu0 %v1475
  %v2311 = vpop.f32.mrb[0].mxu0
  %v2312 = vadd.f32 0.0, %v2311
  %v2313 = vpop.f32.mrb[0].mxu0
  %2314 = vmatprep.mubr.f32.mxu0 %v1478
  %2315 = vmatmul.mubr.f32.gmra.mrb[0].mxu0 %v1477
  %v2316 = vpop.f32.mrb[0].mxu0
  %v2317 = vadd.f32 0.0, %v2316
  %v2318 = vpop.f32.mrb[0].mxu0
  %2319 = vmatprep.mubr.f32.mxu0 %v1480
  %2320 = vmatmul.mubr.f32.gmra.mrb[0].mxu0 %v1479
  %v2321 = vpop.f32.mrb[0].mxu0
  %v2322 = vadd.f32 0.0, %v2321
  %v2323 = vpop.f32.mrb[0].mxu0
  %2324 = vmatprep.mubr.f32.mxu0 %v1482
  %2325 = vmatmul.mubr.f32.gmra.mrb[0].mxu0 %v1481
  %v2326 = vpop.f32.mrb[0].mxu0
  %v2327 = vadd.f32 0.0, %v2326
  %v2328 = vpop.f32.mrb[0].mxu0
  %2329 = vmatprep.mubr.f32.mxu0 %v1484
  %2330 = vmatmul.mubr.f32.gmra.mrb[0].mxu0 %v1483
  %v2331 = vpop.f32.mrb[0].mxu0
  %v2332 = vadd.f32 0.0, %v2331
  %v2333 = vpop.f32.mrb[0].mxu0
  %2334 = vmatprep.mubr.f32.mxu0 %v1486
  %2335 = vmatmul.mubr.f32.gmra.mrb[0].mxu0 %v1485
  %v2336 = vpop.f32.mrb[0].mxu0
  %v2337 = vadd.f32 0.0, %v2336
  %v2338 = vpop.f32.mrb[0].mxu0
  %2339 = vmatprep.mubr.f32.mxu0 %v1488
  %2340 = vmatmul.mubr.f32.gmra.mrb[0].mxu0 %v1487
  %v2341 = vpop.f32.mrb[0].mxu0
  %v2342 = vadd.f32 0.0, %v2341
  %v2343 = vpop.f32.mrb[0].mxu0
  %2344 = vmatprep.mubr.f32.mxu0 %v1490
  %2345 = vmatmul.mubr.f32.gmra.mrb[0].mxu0 %v1489
  %v2346 = vpop.f32.mrb[0].mxu0
  %v2347 = vadd.f32 0.0, %v2346
  %v2348 = vpop.f32.mrb[0].mxu0
  %2349 = vmatprep.mubr.f32.mxu0 %v1492
  %2350 = vmatmul.mubr.f32.gmra.mrb[0].mxu0 %v1491
  %v2351 = vpop.f32.mrb[0].mxu0
  %v2352 = vadd.f32 0.0, %v2351
  %v2353 = vpop.f32.mrb[0].mxu0
  %2354 = vmatprep.mubr.f32.mxu0 %v1494
  %2355 = vmatmul.mubr.f32.gmra.mrb[0].mxu0 %v1493
  %v2356 = vpop.f32.mrb[0].mxu0
  %v2357 = vadd.f32 0.0, %v2356
  %v2358 = vpop.f32.mrb[0].mxu0
  %2359 = vmatprep.mubr.f32.mxu0 %v1496
  %2360 = vmatmul.mubr.f32.gmra.mrb[0].mxu0 %v1495
  %v2361 = vpop.f32.mrb[0].mxu0
  %v2362 = vadd.f32 0.0, %v2361
  %v2363 = vpop.f32.mrb[0].mxu0
  %2364 = vmatprep.mubr.f32.mxu0 %v1498
  %2365 = vmatmul.mubr.f32.gmra.mrb[0].mxu0 %v1497
  %v2366 = vpop.f32.mrb[0].mxu0
  %v2367 = vadd.f32 0.0, %v2366
  %v2368 = vpop.f32.mrb[0].mxu0
  %2369 = vmatprep.mubr.f32.mxu0 %v1500
  %2370 = vmatmul.mubr.f32.gmra.mrb[0].mxu0 %v1499
  %v2371 = vpop.f32.mrb[0].mxu0
  %v2372 = vadd.f32 0.0, %v2371
  %v2373 = vpop.f32.mrb[0].mxu0
  %2374 = vmatprep.mubr.f32.mxu0 %v1502
  %2375 = vmatmul.mubr.f32.gmra.mrb[0].mxu0 %v1501
  %v2376 = vpop.f32.mrb[0].mxu0
  %v2377 = vadd.f32 0.0, %v2376
  %v2378 = vpop.f32.mrb[0].mxu0
  %2379 = vmatprep.mubr.f32.mxu0 %v1504
  %2380 = vmatmul.mubr.f32.gmra.mrb[0].mxu0 %v1503
  %v2381 = vpop.f32.mrb[0].mxu0
  %v2382 = vadd.f32 0.0, %v2381
  %v2383 = vpop.f32.mrb[0].mxu0
  %2384 = vmatprep.mubr.f32.mxu0 %v1506
  %2385 = vmatmul.mubr.f32.gmra.mrb[0].mxu0 %v1505
  %v2386 = vpop.f32.mrb[0].mxu0
  %v2387 = vadd.f32 0.0, %v2386
  %v2388 = vpop.f32.mrb[0].mxu0
  %2389 = vmatprep.mubr.f32.mxu0 %v1508
  %2390 = vmatmul.mubr.f32.gmra.mrb[0].mxu0 %v1507
  %v2391 = vpop.f32.mrb[0].mxu0
  %v2392 = vadd.f32 0.0, %v2391
  %v2393 = vpop.f32.mrb[0].mxu0
  %2394 = vmatprep.mubr.f32.mxu0 %v1510
  %2395 = vmatmul.mubr.f32.gmra.mrb[0].mxu0 %v1509
  %v2396 = vpop.f32.mrb[0].mxu0
  %v2397 = vadd.f32 0.0, %v2396
  %v2398 = vpop.f32.mrb[0].mxu0
  %2399 = vmatprep.mubr.f32.mxu0 %v1512
  %2400 = vmatmul.mubr.f32.gmra.mrb[0].mxu0 %v1511
  %v2401 = vpop.f32.mrb[0].mxu0
  %v2402 = vadd.f32 0.0, %v2401
  %v2403 = vpop.f32.mrb[0].mxu0
  %2404 = vmatprep.mubr.f32.mxu0 %v1514
  %2405 = vmatmul.mubr.f32.gmra.mrb[0].mxu0 %v1513
  %v2406 = vpop.f32.mrb[0].mxu0
  %v2407 = vadd.f32 0.0, %v2406
  %v2408 = vpop.f32.mrb[0].mxu0
  %2409 = vmatprep.mubr.f32.mxu0 %v1516
  %2410 = vmatmul.mubr.f32.gmra.mrb[0].mxu0 %v1515
  %v2411 = vpop.f32.mrb[0].mxu0
  %v2412 = vadd.f32 0.0, %v2411
  %v2413 = vpop.f32.mrb[0].mxu0
  %2414 = vmatprep.mubr.f32.mxu0 %v1518
  %2415 = vmatmul.mubr.f32.gmra.mrb[0].mxu0 %v1517
  %v2416 = vpop.f32.mrb[0].mxu0
  %v2417 = vadd.f32 0.0, %v2416
  %v2418 = vpop.f32.mrb[0].mxu0
  %2419 = vmatprep.mubr.f32.mxu0 %v1520
  %2420 = vmatmul.mubr.f32.gmra.mrb[0].mxu0 %v1519
  %v2421 = vpop.f32.mrb[0].mxu0
  %v2422 = vadd.f32 0.0, %v2421
  %v2423 = vpop.f32.mrb[0].mxu0
  %2424 = vmatprep.mubr.f32.mxu0 %v1522
  %2425 = vmatmul.mubr.f32.gmra.mrb[0].mxu0 %v1521
  %v2426 = vpop.f32.mrb[0].mxu0
  %v2427 = vadd.f32 0.0, %v2426
  %v2428 = vpop.f32.mrb[0].mxu0
  %2429 = vmatprep.mubr.f32.mxu0 %v1524
  %2430 = vmatmul.mubr.f32.gmra.mrb[0].mxu0 %v1523
  %v2431 = vpop.f32.mrb[0].mxu0
  %v2432 = vadd.f32 0.0, %v2431
  %v2433 = vpop.f32.mrb[0].mxu0
  %2434 = vmatprep.mubr.f32.mxu0 %v1526
  %2435 = vmatmul.mubr.f32.gmra.mrb[0].mxu0 %v1525
  %v2436 = vpop.f32.mrb[0].mxu0
  %v2437 = vadd.f32 0.0, %v2436
  %v2438 = vpop.f32.mrb[0].mxu0
  %2439 = vmatprep.mubr.f32.mxu0 %v1528
  %2440 = vmatmul.mubr.f32.gmra.mrb[0].mxu0 %v1527
  %v2441 = vpop.f32.mrb[0].mxu0
  %v2442 = vadd.f32 0.0, %v2441
  %v2443 = vpop.f32.mrb[0].mxu0
  %2444 = vmatprep.mubr.f32.mxu0 %v1530
  %2445 = vmatmul.mubr.f32.gmra.mrb[0].mxu0 %v1529
  %v2446 = vpop.f32.mrb[0].mxu0
  %v2447 = vadd.f32 0.0, %v2446
  %v2448 = vpop.f32.mrb[0].mxu0
  %2449 = vmatprep.mubr.f32.mxu0 %v1532
  %2450 = vmatmul.mubr.f32.gmra.mrb[0].mxu0 %v1531
  %v2451 = vpop.f32.mrb[0].mxu0
  %v2452 = vadd.f32 0.0, %v2451
  %v2453 = vpop.f32.mrb[0].mxu0
  %2454 = vmatprep.mubr.f32.mxu0 %v1534
  %2455 = vmatmul.mubr.f32.gmra.mrb[0].mxu0 %v1533
  %v2456 = vpop.f32.mrb[0].mxu0
  %v2457 = vadd.f32 0.0, %v2456
  %v2458 = vpop.f32.mrb[0].mxu0
  %2459 = vmatprep.mubr.f32.mxu0 %v1536
  %2460 = vmatmul.mubr.f32.gmra.mrb[0].mxu0 %v1535
  %v2461 = vpop.f32.mrb[0].mxu0
  %v2462 = vadd.f32 0.0, %v2461
  %v2463 = vpop.f32.mrb[0].mxu0
  %2464 = vmatprep.mubr.f32.mxu0 %v1538
  %2465 = vmatmul.mubr.f32.gmra.mrb[0].mxu0 %v1537
  %v2466 = vpop.f32.mrb[0].mxu0
  %v2467 = vadd.f32 0.0, %v2466
  %v2468 = vpop.f32.mrb[0].mxu0
  %2469 = vmatprep.mubr.f32.mxu0 %v1540
  %2470 = vmatmul.mubr.f32.gmra.mrb[0].mxu0 %v1539
  %v2471 = vpop.f32.mrb[0].mxu0
  %v2472 = vadd.f32 0.0, %v2471
  %v2473 = vpop.f32.mrb[0].mxu0
  %2474 = vmatprep.mubr.f32.mxu0 %v1542
  %2475 = vmatmul.mubr.f32.gmra.mrb[0].mxu0 %v1541
  %v2476 = vpop.f32.mrb[0].mxu0
  %v2477 = vadd.f32 0.0, %v2476
  %v2478 = vpop.f32.mrb[0].mxu0
  %2479 = vmatprep.mubr.f32.mxu0 %v1544
  %2480 = vmatmul.mubr.f32.gmra.mrb[0].mxu0 %v1543
  %v2481 = vpop.f32.mrb[0].mxu0
  %v2482 = vadd.f32 0.0, %v2481
  %v2483 = vpop.f32.mrb[0].mxu0
  %2484 = vmatprep.mubr.f32.mxu0 %v1546
  %2485 = vmatmul.mubr.f32.gmra.mrb[0].mxu0 %v1545
  %v2486 = vpop.f32.mrb[0].mxu0
  %v2487 = vadd.f32 0.0, %v2486
  %v2488 = vpop.f32.mrb[0].mxu0
  %2489 = vmatprep.mubr.f32.mxu0 %v1548
  %2490 = vmatmul.mubr.f32.gmra.mrb[0].mxu0 %v1547
  %v2491 = vpop.f32.mrb[0].mxu0
  %v2492 = vadd.f32 0.0, %v2491
  %v2493 = vpop.f32.mrb[0].mxu0
  %2494 = vmatprep.mubr.f32.mxu0 %v1550
  %2495 = vmatmul.mubr.f32.gmra.mrb[0].mxu0 %v1549
  %v2496 = vpop.f32.mrb[0].mxu0
  %v2497 = vadd.f32 0.0, %v2496
  %v2498 = vpop.f32.mrb[0].mxu0
  %2499 = vmatprep.mubr.f32.mxu0 %v1552
  %2500 = vmatmul.mubr.f32.gmra.mrb[0].mxu0 %v1551
  %v2501 = vpop.f32.mrb[0].mxu0
  %v2502 = vadd.f32 0.0, %v2501
  %v2503 = vpop.f32.mrb[0].mxu0
  %2504 = vmatprep.mubr.f32.mxu0 %v1554
  %2505 = vmatmul.mubr.f32.gmra.mrb[0].mxu0 %v1553
  %v2506 = vpop.f32.mrb[0].mxu0
  %v2507 = vadd.f32 0.0, %v2506
  %v2508 = vpop.f32.mrb[0].mxu0
  %2509 = vmatprep.mubr.f32.mxu0 %v1556
  %2510 = vmatmul.mubr.f32.gmra.mrb[0].mxu0 %v1555
  %v2511 = vpop.f32.mrb[0].mxu0
  %v2512 = vadd.f32 0.0, %v2511
  %v2513 = vpop.f32.mrb[0].mxu0
  %2514 = vmatprep.mubr.f32.mxu0 %v1558
  %2515 = vmatmul.mubr.f32.gmra.mrb[0].mxu0 %v1557
  %v2516 = vpop.f32.mrb[0].mxu0
  %v2517 = vadd.f32 0.0, %v2516
  %v2518 = vpop.f32.mrb[0].mxu0
  %2519 = vmatprep.mubr.f32.mxu0 %v1560
  %2520 = vmatmul.mubr.f32.gmra.mrb[0].mxu0 %v1559
  %v2521 = vpop.f32.mrb[0].mxu0
  %v2522 = vadd.f32 0.0, %v2521
  %v2523 = vpop.f32.mrb[0].mxu0
  %2524 = vmatprep.mubr.f32.mxu0 %v1562
  %2525 = vmatmul.mubr.f32.gmra.mrb[0].mxu0 %v1561
  %v2526 = vpop.f32.mrb[0].mxu0
  %v2527 = vadd.f32 0.0, %v2526
  %v2528 = vpop.f32.mrb[0].mxu0
  %2529 = vmatprep.mubr.f32.mxu0 %v1564
  %2530 = vmatmul.mubr.f32.gmra.mrb[0].mxu0 %v1563
  %v2531 = vpop.f32.mrb[0].mxu0
  %v2532 = vadd.f32 0.0, %v2531
  %v2533 = vpop.f32.mrb[0].mxu0
  %2534 = vmatprep.mubr.f32.mxu0 %v1566
  %2535 = vmatmul.mubr.f32.gmra.mrb[0].mxu0 %v1565
  %v2536 = vpop.f32.mrb[0].mxu0
  %v2537 = vadd.f32 0.0, %v2536
  %v2538 = vpop.f32.mrb[0].mxu0
  %2539 = vmatprep.mubr.f32.mxu0 %v1568
  %2540 = vmatmul.mubr.f32.gmra.mrb[0].mxu0 %v1567
  %v2541 = vpop.f32.mrb[0].mxu0
  %v2542 = vadd.f32 0.0, %v2541
  %v2543 = vpop.f32.mrb[0].mxu0
  %2544 = vmatprep.mubr.f32.mxu0 %v1570
  %2545 = vmatmul.mubr.f32.gmra.mrb[0].mxu0 %v1569
  %v2546 = vpop.f32.mrb[0].mxu0
  %v2547 = vadd.f32 0.0, %v2546
  %v2548 = vpop.f32.mrb[0].mxu0
  %2549 = vmatprep.mubr.f32.mxu0 %v1572
  %2550 = vmatmul.mubr.f32.gmra.mrb[0].mxu0 %v1571
  %v2551 = vpop.f32.mrb[0].mxu0
  %v2552 = vadd.f32 0.0, %v2551
  %v2553 = vpop.f32.mrb[0].mxu0
  %2554 = vmatprep.mubr.f32.mxu0 %v1574
  %2555 = vmatmul.mubr.f32.gmra.mrb[0].mxu0 %v1573
  %v2556 = vpop.f32.mrb[0].mxu0
  %v2557 = vadd.f32 0.0, %v2556
  %v2558 = vpop.f32.mrb[0].mxu0
  %2559 = vmatprep.mubr.f32.mxu0 %v1576
  %2560 = vmatmul.mubr.f32.gmra.mrb[0].mxu0 %v1575
  %v2561 = vpop.f32.mrb[0].mxu0
  %v2562 = vadd.f32 0.0, %v2561
  %v2563 = vpop.f32.mrb[0].mxu0
  %2564 = vmatprep.mubr.f32.mxu0 %v1578
  %2565 = vmatmul.mubr.f32.gmra.mrb[0].mxu0 %v1577
  %v2566 = vpop.f32.mrb[0].mxu0
  %v2567 = vadd.f32 0.0, %v2566
  %v2568 = vpop.f32.mrb[0].mxu0
  %2569 = vmatprep.mubr.f32.mxu0 %v1580
  %2570 = vmatmul.mubr.f32.gmra.mrb[0].mxu0 %v1579
  %v2571 = vpop.f32.mrb[0].mxu0
  %v2572 = vadd.f32 0.0, %v2571
  %v2573 = vpop.f32.mrb[0].mxu0
  %2574 = vmatprep.mubr.f32.mxu0 %v1582
  %2575 = vmatmul.mubr.f32.gmra.mrb[0].mxu0 %v1581
  %v2576 = vpop.f32.mrb[0].mxu0
  %v2577 = vadd.f32 0.0, %v2576
  %v2578 = vpop.f32.mrb[0].mxu0
  %2579 = vmatprep.mubr.f32.mxu0 %v1584
  %2580 = vmatmul.mubr.f32.gmra.mrb[0].mxu0 %v1583
  %v2581 = vpop.f32.mrb[0].mxu0
  %v2582 = vadd.f32 0.0, %v2581
  %v2583 = vpop.f32.mrb[0].mxu0
  %2584 = vmatprep.mubr.f32.mxu0 %v1586
  %2585 = vmatmul.mubr.f32.gmra.mrb[0].mxu0 %v1585
  %v2586 = vpop.f32.mrb[0].mxu0
  %v2587 = vadd.f32 0.0, %v2586
  %v2588 = vpop.f32.mrb[0].mxu0
  %2589 = vmatprep.mubr.f32.mxu0 %v1588
  %2590 = vmatmul.mubr.f32.gmra.mrb[0].mxu0 %v1587
  %v2591 = vpop.f32.mrb[0].mxu0
  %v2592 = vadd.f32 0.0, %v2591
  %v2593 = vpop.f32.mrb[0].mxu0
  %2594 = vmatprep.mubr.f32.mxu0 %v1590
  %2595 = vmatmul.mubr.f32.gmra.mrb[0].mxu0 %v1589
  %v2596 = vpop.f32.mrb[0].mxu0
  %v2597 = vadd.f32 0.0, %v2596
  %v2598 = vpop.f32.mrb[0].mxu0
  %2599 = vmatprep.mubr.f32.mxu0 %v1592
  %2600 = vmatmul.mubr.f32.gmra.mrb[0].mxu0 %v1591
  %v2601 = vpop.f32.mrb[0].mxu0
  %v2602 = vadd.f32 0.0, %v2601
  %v2603 = vpop.f32.mrb[0].mxu0
  %2604 = vmatprep.mubr.f32.mxu0 %v1594
  %2605 = vmatmul.mubr.f32.gmra.mrb[0].mxu0 %v1593
  %v2606 = vpop.f32.mrb[0].mxu0
  %v2607 = vadd.f32 0.0, %v2606
  %v2608 = vpop.f32.mrb[0].mxu0
  %2609 = vmatprep.mubr.f32.mxu0 %v1596
  %2610 = vmatmul.mubr.f32.gmra.mrb[0].mxu0 %v1595
  %v2611 = vpop.f32.mrb[0].mxu0
  %v2612 = vadd.f32 0.0, %v2611
  %v2613 = vpop.f32.mrb[0].mxu0
  %2614 = vmatprep.mubr.f32.mxu0 %v1598
  %2615 = vmatmul.mubr.f32.gmra.mrb[0].mxu0 %v1597
  %v2616 = vpop.f32.mrb[0].mxu0
  %v2617 = vadd.f32 0.0, %v2616
  %v2618 = vpop.f32.mrb[0].mxu0
  %2619 = vmatprep.mubr.f32.mxu0 %v1600
  %2620 = vmatmul.mubr.f32.gmra.mrb[0].mxu0 %v1599
  %v2621 = vpop.f32.mrb[0].mxu0
  %v2622 = vadd.f32 0.0, %v2621
  %v2623 = vpop.f32.mrb[0].mxu0
  %2624 = vmatprep.mubr.f32.mxu0 %v1602
  %2625 = vmatmul.mubr.f32.gmra.mrb[0].mxu0 %v1601
  %v2626 = vpop.f32.mrb[0].mxu0
  %v2627 = vadd.f32 0.0, %v2626
  %v2628 = vpop.f32.mrb[0].mxu0
  %2629 = vmatprep.mubr.f32.mxu0 %v1604
  %2630 = vmatmul.mubr.f32.gmra.mrb[0].mxu0 %v1603
  %v2631 = vpop.f32.mrb[0].mxu0
  %v2632 = vadd.f32 0.0, %v2631
  %v2633 = vpop.f32.mrb[0].mxu0
  %2634 = vmatprep.mubr.f32.mxu0 %v1606
  %2635 = vmatmul.mubr.f32.gmra.mrb[0].mxu0 %v1605
  %v2636 = vpop.f32.mrb[0].mxu0
  %v2637 = vadd.f32 0.0, %v2636
  %v2638 = vpop.f32.mrb[0].mxu0
  %2639 = vmatprep.mubr.f32.mxu0 %v1608
  %2640 = vmatmul.mubr.f32.gmra.mrb[0].mxu0 %v1607
  %v2641 = vpop.f32.mrb[0].mxu0
  %v2642 = vadd.f32 0.0, %v2641
  %v2643 = vpop.f32.mrb[0].mxu0
  %2644 = vmatprep.mubr.f32.mxu0 %v1610
  %2645 = vmatmul.mubr.f32.gmra.mrb[0].mxu0 %v1609
  %v2646 = vpop.f32.mrb[0].mxu0
  %v2647 = vadd.f32 0.0, %v2646
  %v2648 = vpop.f32.mrb[0].mxu0
  %2649 = vmatprep.mubr.f32.mxu0 %v1612
  %2650 = vmatmul.mubr.f32.gmra.mrb[0].mxu0 %v1611
  %v2651 = vpop.f32.mrb[0].mxu0
  %v2652 = vadd.f32 0.0, %v2651
  %v2653 = vpop.f32.mrb[0].mxu0
  %2654 = vmatprep.mubr.f32.mxu0 %v1614
  %2655 = vmatmul.mubr.f32.gmra.mrb[0].mxu0 %v1613
  %v2656 = vpop.f32.mrb[0].mxu0
  %v2657 = vadd.f32 0.0, %v2656
  %v2658 = vpop.f32.mrb[0].mxu0
  %2659 = vmatprep.mubr.f32.mxu0 %v1616
  %2660 = vmatmul.mubr.f32.gmra.mrb[0].mxu0 %v1615
  %v2661 = vpop.f32.mrb[0].mxu0
  %v2662 = vadd.f32 0.0, %v2661
  %v2663 = vpop.f32.mrb[0].mxu0
  %2664 = vmatprep.mubr.f32.mxu0 %v1618
  %2665 = vmatmul.mubr.f32.gmra.mrb[0].mxu0 %v1617
  %v2666 = vpop.f32.mrb[0].mxu0
  %v2667 = vadd.f32 0.0, %v2666
  %v2668 = vpop.f32.mrb[0].mxu0
  %2669 = vmatprep.mubr.f32.mxu0 %v1620
  %2670 = vmatmul.mubr.f32.gmra.mrb[0].mxu0 %v1619
  %v2671 = vpop.f32.mrb[0].mxu0
  %v2672 = vadd.f32 0.0, %v2671
  %v2673 = vpop.f32.mrb[0].mxu0
  %2674 = vmatprep.mubr.f32.mxu0 %v1622
  %2675 = vmatmul.mubr.f32.gmra.mrb[0].mxu0 %v1621
  %v2676 = vpop.f32.mrb[0].mxu0
  %v2677 = vadd.f32 0.0, %v2676
  %v2678 = vpop.f32.mrb[0].mxu0
  %2679 = vmatprep.mubr.f32.mxu0 %v1624
  %2680 = vmatmul.mubr.f32.gmra.mrb[0].mxu0 %v1623
  %v2681 = vpop.f32.mrb[0].mxu0
  %v2682 = vadd.f32 0.0, %v2681
  %v2683 = vpop.f32.mrb[0].mxu0
  %2684 = vmatprep.mubr.f32.mxu0 %v1626
  %2685 = vmatmul.mubr.f32.gmra.mrb[0].mxu0 %v1625
  %v2686 = vpop.f32.mrb[0].mxu0
  %v2687 = vadd.f32 0.0, %v2686
  %v2688 = vpop.f32.mrb[0].mxu0
  %2689 = vmatprep.mubr.f32.mxu0 %v1628
  %2690 = vmatmul.mubr.f32.gmra.mrb[0].mxu0 %v1627
  %v2691 = vpop.f32.mrb[0].mxu0
  %v2692 = vadd.f32 0.0, %v2691
  %v2693 = vpop.f32.mrb[0].mxu0
  %2694 = vmatprep.mubr.f32.mxu0 %v1630
  %2695 = vmatmul.mubr.f32.gmra.mrb[0].mxu0 %v1629
  %v2696 = vpop.f32.mrb[0].mxu0
  %v2697 = vadd.f32 0.0, %v2696
  %v2698 = vpop.f32.mrb[0].mxu0
  %2699 = vmatprep.mubr.f32.mxu0 %v1632
  %2700 = vmatmul.mubr.f32.gmra.mrb[0].mxu0 %v1631
  %v2701 = vpop.f32.mrb[0].mxu0
  %v2702 = vadd.f32 0.0, %v2701
  %v2703 = vpop.f32.mrb[0].mxu0
  %2704 = vmatprep.mubr.f32.mxu0 %v1634
  %2705 = vmatmul.mubr.f32.gmra.mrb[0].mxu0 %v1633
  %v2706 = vpop.f32.mrb[0].mxu0
  %v2707 = vadd.f32 0.0, %v2706
  %v2708 = vpop.f32.mrb[0].mxu0
  %2709 = vmatprep.mubr.f32.mxu0 %v1636
  %2710 = vmatmul.mubr.f32.gmra.mrb[0].mxu0 %v1635
  %v2711 = vpop.f32.mrb[0].mxu0
  %v2712 = vadd.f32 0.0, %v2711
  %v2713 = vpop.f32.mrb[0].mxu0
  %2714 = vmatprep.mubr.f32.mxu0 %v1638
  %2715 = vmatmul.mubr.f32.gmra.mrb[0].mxu0 %v1637
  %v2716 = vpop.f32.mrb[0].mxu0
  %v2717 = vadd.f32 0.0, %v2716
  %v2718 = vpop.f32.mrb[0].mxu0
  %2719 = vmatprep.mubr.f32.mxu0 %v1640
  %2720 = vmatmul.mubr.f32.gmra.mrb[0].mxu0 %v1639
  %v2721 = vpop.f32.mrb[0].mxu0
  %v2722 = vadd.f32 0.0, %v2721
  %v2723 = vpop.f32.mrb[0].mxu0
  %2724 = vmatprep.mubr.f32.mxu0 %v1642
  %2725 = vmatmul.mubr.f32.gmra.mrb[0].mxu0 %v1641
  %v2726 = vpop.f32.mrb[0].mxu0
  %v2727 = vadd.f32 0.0, %v2726
  %v2728 = vpop.f32.mrb[0].mxu0
  %2729 = vmatprep.mubr.f32.mxu0 %v1644
  %2730 = vmatmul.mubr.f32.gmra.mrb[0].mxu0 %v1643
  %v2731 = vpop.f32.mrb[0].mxu0
  %v2732 = vadd.f32 0.0, %v2731
  %v2733 = vpop.f32.mrb[0].mxu0
  %2734 = vmatprep.mubr.f32.mxu0 %v1646
  %2735 = vmatmul.mubr.f32.gmra.mrb[0].mxu0 %v1645
  %v2736 = vpop.f32.mrb[0].mxu0
  %v2737 = vadd.f32 0.0, %v2736
  %v2738 = vpop.f32.mrb[0].mxu0
  %2739 = vmatprep.mubr.f32.mxu0 %v1648
  %2740 = vmatmul.mubr.f32.gmra.mrb[0].mxu0 %v1647
  %v2741 = vpop.f32.mrb[0].mxu0
  %v2742 = vadd.f32 0.0, %v2741
  %v2743 = vpop.f32.mrb[0].mxu0
  %2744 = vmatprep.mubr.f32.mxu0 %v1650
  %2745 = vmatmul.mubr.f32.gmra.mrb[0].mxu0 %v1649
  %v2746 = vpop.f32.mrb[0].mxu0
  %v2747 = vadd.f32 0.0, %v2746
  %v2748 = vpop.f32.mrb[0].mxu0
  %2749 = vmatprep.mubr.f32.mxu0 %v1652
  %2750 = vmatmul.mubr.f32.gmra.mrb[0].mxu0 %v1651
  %v2751 = vpop.f32.mrb[0].mxu0
  %v2752 = vadd.f32 0.0, %v2751
  %v2753 = vpop.f32.mrb[0].mxu0
  %2754 = vmatprep.mubr.f32.mxu0 %v1654
  %2755 = vmatmul.mubr.f32.gmra.mrb[0].mxu0 %v1653
  %v2756 = vpop.f32.mrb[0].mxu0
  %v2757 = vadd.f32 0.0, %v2756
  %v2758 = vpop.f32.mrb[0].mxu0
  %2759 = vmatprep.mubr.f32.mxu0 %v1656
  %2760 = vmatmul.mubr.f32.gmra.mrb[0].mxu0 %v1655
  %v2761 = vpop.f32.mrb[0].mxu0
  %v2762 = vadd.f32 0.0, %v2761
  %v2763 = vpop.f32.mrb[0].mxu0
  %2764 = vmatprep.mubr.f32.mxu0 %v1658
  %2765 = vmatmul.mubr.f32.gmra.mrb[0].mxu0 %v1657
  %v2766 = vpop.f32.mrb[0].mxu0
  %v2767 = vadd.f32 0.0, %v2766
  %v2768 = vpop.f32.mrb[0].mxu0
  %2769 = vmatprep.mubr.f32.mxu0 %v1660
  %2770 = vmatmul.mubr.f32.gmra.mrb[0].mxu0 %v1659
  %v2771 = vpop.f32.mrb[0].mxu0
  %v2772 = vadd.f32 0.0, %v2771
  %v2773 = vpop.f32.mrb[0].mxu0
  %2774 = vmatprep.mubr.f32.mxu0 %v1662
  %2775 = vmatmul.mubr.f32.gmra.mrb[0].mxu0 %v1661
  %v2776 = vpop.f32.mrb[0].mxu0
  %v2777 = vadd.f32 0.0, %v2776
  %v2778 = vpop.f32.mrb[0].mxu0
  %2779 = vmatprep.mubr.f32.mxu0 %v1664
  %2780 = vmatmul.mubr.f32.gmra.mrb[0].mxu0 %v1663
  %v2781 = vpop.f32.mrb[0].mxu0
  %v2782 = vadd.f32 0.0, %v2781
  %v2783 = vpop.f32.mrb[0].mxu0
  %2784 = vmatprep.mubr.f32.mxu0 %v1666
  %2785 = vmatmul.mubr.f32.gmra.mrb[0].mxu0 %v1665
  %v2786 = vpop.f32.mrb[0].mxu0
  %v2787 = vadd.f32 0.0, %v2786
  %v2788 = vpop.f32.mrb[0].mxu0
  %2789 = vmatprep.mubr.f32.mxu0 %v1668
  %2790 = vmatmul.mubr.f32.gmra.mrb[0].mxu0 %v1667
  %v2791 = vpop.f32.mrb[0].mxu0
  %v2792 = vadd.f32 0.0, %v2791
  %v2793 = vpop.f32.mrb[0].mxu0
  %2794 = vmatprep.mubr.f32.mxu0 %v1670
  %2795 = vmatmul.mubr.f32.gmra.mrb[0].mxu0 %v1669
  %v2796 = vpop.f32.mrb[0].mxu0
  %v2797 = vadd.f32 0.0, %v2796
  %v2798 = vpop.f32.mrb[0].mxu0
  %2799 = vmatprep.mubr.f32.mxu0 %v1672
  %2800 = vmatmul.mubr.f32.gmra.mrb[0].mxu0 %v1671
  %v2801 = vpop.f32.mrb[0].mxu0
  %v2802 = vadd.f32 0.0, %v2801
  %v2803 = vpop.f32.mrb[0].mxu0
  %2804 = vmatprep.mubr.f32.mxu0 %v1674
  %2805 = vmatmul.mubr.f32.gmra.mrb[0].mxu0 %v1673
  %v2806 = vpop.f32.mrb[0].mxu0
  %v2807 = vadd.f32 0.0, %v2806
  %v2808 = vpop.f32.mrb[0].mxu0
  %2809 = vmatprep.mubr.f32.mxu0 %v1676
  %2810 = vmatmul.mubr.f32.gmra.mrb[0].mxu0 %v1675
  %v2811 = vpop.f32.mrb[0].mxu0
  %v2812 = vadd.f32 0.0, %v2811
  %v2813 = vpop.f32.mrb[0].mxu0
  %2814 = vmatprep.mubr.f32.mxu0 %v1678
  %2815 = vmatmul.mubr.f32.gmra.mrb[0].mxu0 %v1677
  %v2816 = vpop.f32.mrb[0].mxu0
  %v2817 = vadd.f32 0.0, %v2816
  %v2818 = vpop.f32.mrb[0].mxu0
  %2819 = vmatprep.mubr.f32.mxu0 %v1680
  %2820 = vmatmul.mubr.f32.gmra.mrb[0].mxu0 %v1679
  %v2821 = vpop.f32.mrb[0].mxu0
  %v2822 = vadd.f32 0.0, %v2821
  %v2823 = vpop.f32.mrb[0].mxu0
  %2824 = vmatprep.mubr.f32.mxu0 %v1682
  %2825 = vmatmul.mubr.f32.gmra.mrb[0].mxu0 %v1681
  %v2826 = vpop.f32.mrb[0].mxu0
  %v2827 = vadd.f32 0.0, %v2826
  %v2828 = vpop.f32.mrb[0].mxu0
  %2829 = vmatprep.mubr.f32.mxu0 %v1684
  %2830 = vmatmul.mubr.f32.gmra.mrb[0].mxu0 %v1683
  %v2831 = vpop.f32.mrb[0].mxu0
  %v2832 = vadd.f32 0.0, %v2831
  %v2833 = vpop.f32.mrb[0].mxu0
  %2834 = vmatprep.mubr.f32.mxu0 %v1686
  %2835 = vmatmul.mubr.f32.gmra.mrb[0].mxu0 %v1685
  %v2836 = vpop.f32.mrb[0].mxu0
  %v2837 = vadd.f32 0.0, %v2836
  %v2838 = vpop.f32.mrb[0].mxu0
  %2839 = vmatprep.mubr.f32.mxu0 %v1688
  %2840 = vmatmul.mubr.f32.gmra.mrb[0].mxu0 %v1687
  %v2841 = vpop.f32.mrb[0].mxu0
  %v2842 = vadd.f32 0.0, %v2841
  %v2843 = vpop.f32.mrb[0].mxu0
  %2844 = vmatprep.mubr.f32.mxu0 %v1690
  %2845 = vmatmul.mubr.f32.gmra.mrb[0].mxu0 %v1689
  %v2846 = vpop.f32.mrb[0].mxu0
  %v2847 = vadd.f32 0.0, %v2846
  %v2848 = vpop.f32.mrb[0].mxu0
  %2849 = vmatprep.mubr.f32.mxu0 %v1692
  %2850 = vmatmul.mubr.f32.gmra.mrb[0].mxu0 %v1691
  %v2851 = vpop.f32.mrb[0].mxu0
  %v2852 = vadd.f32 0.0, %v2851
  %v2853 = vpop.f32.mrb[0].mxu0
  %2854 = vmatprep.mubr.f32.mxu0 %v1694
  %2855 = vmatmul.mubr.f32.gmra.mrb[0].mxu0 %v1693
  %v2856 = vpop.f32.mrb[0].mxu0
  %v2857 = vadd.f32 0.0, %v2856
  %v2858 = vpop.f32.mrb[0].mxu0
  %2859 = vmatprep.mubr.f32.mxu0 %v1696
  %2860 = vmatmul.mubr.f32.gmra.mrb[0].mxu0 %v1695
  %v2861 = vpop.f32.mrb[0].mxu0
  %v2862 = vadd.f32 0.0, %v2861
  %v2863 = vpop.f32.mrb[0].mxu0
  %2864 = vmatprep.mubr.f32.mxu0 %v1698
  %2865 = vmatmul.mubr.f32.gmra.mrb[0].mxu0 %v1697
  %v2866 = vpop.f32.mrb[0].mxu0
  %v2867 = vadd.f32 0.0, %v2866
  %v2868 = vpop.f32.mrb[0].mxu0
  %2869 = vmatprep.mubr.f32.mxu0 %v1700
  %2870 = vmatmul.mubr.f32.gmra.mrb[0].mxu0 %v1699
  %v2871 = vpop.f32.mrb[0].mxu0
  %v2872 = vadd.f32 0.0, %v2871
  %v2873 = vpop.f32.mrb[0].mxu0
  %2874 = vmatprep.mubr.f32.mxu0 %v1702
  %2875 = vmatmul.mubr.f32.gmra.mrb[0].mxu0 %v1701
  %v2876 = vpop.f32.mrb[0].mxu0
  %v2877 = vadd.f32 0.0, %v2876
  %v2878 = vpop.f32.mrb[0].mxu0
  %2879 = vmatprep.mubr.f32.mxu0 %v1704
  %2880 = vmatmul.mubr.f32.gmra.mrb[0].mxu0 %v1703
  %v2881 = vpop.f32.mrb[0].mxu0
  %v2882 = vadd.f32 0.0, %v2881
  %v2883 = vpop.f32.mrb[0].mxu0
  %2884 = vmatprep.mubr.f32.mxu0 %v1706
  %2885 = vmatmul.mubr.f32.gmra.mrb[0].mxu0 %v1705
  %v2886 = vpop.f32.mrb[0].mxu0
  %v2887 = vadd.f32 0.0, %v2886
  %v2888 = vpop.f32.mrb[0].mxu0
  %2889 = vmatprep.mubr.f32.mxu0 %v1708
  %2890 = vmatmul.mubr.f32.gmra.mrb[0].mxu0 %v1707
  %v2891 = vpop.f32.mrb[0].mxu0
  %v2892 = vadd.f32 0.0, %v2891
  %v2893 = vpop.f32.mrb[0].mxu0
  %2894 = vmatprep.mubr.f32.mxu0 %v1710
  %2895 = vmatmul.mubr.f32.gmra.mrb[0].mxu0 %v1709
  %v2896 = vpop.f32.mrb[0].mxu0
  %v2897 = vadd.f32 0.0, %v2896
  %v2898 = vpop.f32.mrb[0].mxu0
  %2899 = vmatprep.mubr.f32.mxu0 %v1712
  %2900 = vmatmul.mubr.f32.gmra.mrb[0].mxu0 %v1711
  %v2901 = vpop.f32.mrb[0].mxu0
  %v2902 = vadd.f32 0.0, %v2901
  %v2903 = vpop.f32.mrb[0].mxu0
  %2904 = vmatprep.mubr.f32.mxu0 %v1714
  %2905 = vmatmul.mubr.f32.gmra.mrb[0].mxu0 %v1713
  %v2906 = vpop.f32.mrb[0].mxu0
  %v2907 = vadd.f32 0.0, %v2906
  %v2908 = vpop.f32.mrb[0].mxu0
  %2909 = vmatprep.mubr.f32.mxu0 %v1716
  %2910 = vmatmul.mubr.f32.gmra.mrb[0].mxu0 %v1715
  %v2911 = vpop.f32.mrb[0].mxu0
  %v2912 = vadd.f32 0.0, %v2911
  %v2913 = vpop.f32.mrb[0].mxu0
  %2914 = vmatprep.mubr.f32.mxu0 %v1718
  %2915 = vmatmul.mubr.f32.gmra.mrb[0].mxu0 %v1717
  %v2916 = vpop.f32.mrb[0].mxu0
  %v2917 = vadd.f32 0.0, %v2916
  %v2918 = vpop.f32.mrb[0].mxu0
  %2919 = vmatprep.mubr.f32.mxu0 %v1720
  %2920 = vmatmul.mubr.f32.gmra.mrb[0].mxu0 %v1719
  %v2921 = vpop.f32.mrb[0].mxu0
  %v2922 = vadd.f32 0.0, %v2921
  %v2923 = vpop.f32.mrb[0].mxu0
  %2924 = vmatprep.mubr.f32.mxu0 %v1722
  %2925 = vmatmul.mubr.f32.gmra.mrb[0].mxu0 %v1721
  %v2926 = vpop.f32.mrb[0].mxu0
  %v2927 = vadd.f32 0.0, %v2926
  %v2928 = vpop.f32.mrb[0].mxu0
  %2929 = vmatprep.mubr.f32.mxu0 %v1724
  %2930 = vmatmul.mubr.f32.gmra.mrb[0].mxu0 %v1723
  %v2931 = vpop.f32.mrb[0].mxu0
  %v2932 = vadd.f32 0.0, %v2931
  %v2933 = vpop.f32.mrb[0].mxu0
  %2934 = vmatprep.mubr.f32.mxu0 %v1726
  %2935 = vmatmul.mubr.f32.gmra.mrb[0].mxu0 %v1725
  %v2936 = vpop.f32.mrb[0].mxu0
  %v2937 = vadd.f32 0.0, %v2936
  %v2938 = vpop.f32.mrb[0].mxu0
  %2939 = vmatprep.mubr.f32.mxu0 %v1728
  %2940 = vmatmul.mubr.f32.gmra.mrb[0].mxu0 %v1727
  %v2941 = vpop.f32.mrb[0].mxu0
  %v2942 = vadd.f32 0.0, %v2941
  %v2943 = vpop.f32.mrb[0].mxu0
  %2944 = vmatprep.mubr.f32.mxu0 %v1730
  %2945 = vmatmul.mubr.f32.gmra.mrb[0].mxu0 %v1729
  %v2946 = vpop.f32.mrb[0].mxu0
  %v2947 = vadd.f32 0.0, %v2946
  %v2948 = vpop.f32.mrb[0].mxu0
  %2949 = vmatprep.mubr.f32.mxu0 %v1732
  %2950 = vmatmul.mubr.f32.gmra.mrb[0].mxu0 %v1731
  %v2951 = vpop.f32.mrb[0].mxu0
  %v2952 = vadd.f32 0.0, %v2951
  %v2953 = vpop.f32.mrb[0].mxu0
  %2954 = vmatprep.mubr.f32.mxu0 %v1734
  %2955 = vmatmul.mubr.f32.gmra.mrb[0].mxu0 %v1733
  %v2956 = vpop.f32.mrb[0].mxu0
  %v2957 = vadd.f32 0.0, %v2956
  %v2958 = vpop.f32.mrb[0].mxu0
  %2959 = vmatprep.mubr.f32.mxu0 %v1736
  %2960 = vmatmul.mubr.f32.gmra.mrb[0].mxu0 %v1735
  %v2961 = vpop.f32.mrb[0].mxu0
  %v2962 = vadd.f32 0.0, %v2961
  %v2963 = vpop.f32.mrb[0].mxu0
  %2964 = vmatprep.mubr.f32.mxu0 %v1738
  %2965 = vmatmul.mubr.f32.gmra.mrb[0].mxu0 %v1737
  %v2966 = vpop.f32.mrb[0].mxu0
  %v2967 = vadd.f32 0.0, %v2966
  %v2968 = vpop.f32.mrb[0].mxu0
  %2969 = vmatprep.mubr.f32.mxu0 %v1740
  %2970 = vmatmul.mubr.f32.gmra.mrb[0].mxu0 %v1739
  %v2971 = vpop.f32.mrb[0].mxu0
  %v2972 = vadd.f32 0.0, %v2971
  %v2973 = vpop.f32.mrb[0].mxu0
  %2974 = vmatprep.mubr.f32.mxu0 %v1742
  %2975 = vmatmul.mubr.f32.gmra.mrb[0].mxu0 %v1741
  %v2976 = vpop.f32.mrb[0].mxu0
  %v2977 = vadd.f32 0.0, %v2976
  %v2978 = vpop.f32.mrb[0].mxu0
  %2979 = vmatprep.mubr.f32.mxu0 %v1744
  %2980 = vmatmul.mubr.f32.gmra.mrb[0].mxu0 %v1743
  %v2981 = vpop.f32.mrb[0].mxu0
  %v2982 = vadd.f32 0.0, %v2981
  %v2983 = vpop.f32.mrb[0].mxu0
  %2984 = vmatprep.mubr.f32.mxu0 %v1746
  %2985 = vmatmul.mubr.f32.gmra.mrb[0].mxu0 %v1745
  %v2986 = vpop.f32.mrb[0].mxu0
  %v2987 = vadd.f32 0.0, %v2986
  %v2988 = vpop.f32.mrb[0].mxu0
  %2989 = vmatprep.mubr.f32.mxu0 %v1748
  %2990 = vmatmul.mubr.f32.gmra.mrb[0].mxu0 %v1747
  %v2991 = vpop.f32.mrb[0].mxu0
  %v2992 = vadd.f32 0.0, %v2991
  %v2993 = vpop.f32.mrb[0].mxu0
  %2994 = vmatprep.mubr.f32.mxu0 %v1750
  %2995 = vmatmul.mubr.f32.gmra.mrb[0].mxu0 %v1749
  %v2996 = vpop.f32.mrb[0].mxu0
  %v2997 = vadd.f32 0.0, %v2996
  %v2998 = vpop.f32.mrb[0].mxu0
  %2999 = vmatprep.mubr.f32.mxu0 %v1752
  %3000 = vmatmul.mubr.f32.gmra.mrb[0].mxu0 %v1751
  %v3001 = vpop.f32.mrb[0].mxu0
  %v3002 = vadd.f32 0.0, %v3001
  %v3003 = vpop.f32.mrb[0].mxu0
  %3004 = vmatprep.mubr.f32.mxu0 %v1754
  %3005 = vmatmul.mubr.f32.gmra.mrb[0].mxu0 %v1753
  %v3006 = vpop.f32.mrb[0].mxu0
  %v3007 = vadd.f32 0.0, %v3006
  %v3008 = vpop.f32.mrb[0].mxu0
  %3009 = vmatprep.mubr.f32.mxu0 %v1756
  %3010 = vmatmul.mubr.f32.gmra.mrb[0].mxu0 %v1755
  %v3011 = vpop.f32.mrb[0].mxu0
  %v3012 = vadd.f32 0.0, %v3011
  %v3013 = vpop.f32.mrb[0].mxu0
  %3014 = vmatprep.mubr.f32.mxu0 %v1758
  %3015 = vmatmul.mubr.f32.gmra.mrb[0].mxu0 %v1757
  %v3016 = vpop.f32.mrb[0].mxu0
  %v3017 = vadd.f32 0.0, %v3016
  %v3018 = vpop.f32.mrb[0].mxu0
  %3019 = vmatprep.mubr.f32.mxu0 %v1760
  %3020 = vmatmul.mubr.f32.gmra.mrb[0].mxu0 %v1759
  %v3021 = vpop.f32.mrb[0].mxu0
  %v3022 = vadd.f32 0.0, %v3021
  %v3023 = vpop.f32.mrb[0].mxu0
  %3024 = vmatprep.mubr.f32.mxu0 %v1762
  %3025 = vmatmul.mubr.f32.gmra.mrb[0].mxu0 %v1761
  %v3026 = vpop.f32.mrb[0].mxu0
  %v3027 = vadd.f32 0.0, %v3026
  %v3028 = vpop.f32.mrb[0].mxu0
  %3029 = vmatprep.mubr.f32.mxu0 %v1764
  %3030 = vmatmul.mubr.f32.gmra.mrb[0].mxu0 %v1763
  %v3031 = vpop.f32.mrb[0].mxu0
  %v3032 = vadd.f32 0.0, %v3031
  %v3033 = vpop.f32.mrb[0].mxu0
  %3034 = vmatprep.mubr.f32.mxu0 %v1766
  %3035 = vmatmul.mubr.f32.gmra.mrb[0].mxu0 %v1765
  %v3036 = vpop.f32.mrb[0].mxu0
  %v3037 = vadd.f32 0.0, %v3036
  %v3038 = vpop.f32.mrb[0].mxu0
  %3039 = vmatprep.mubr.f32.mxu0 %v1768
  %3040 = vmatmul.mubr.f32.gmra.mrb[0].mxu0 %v1767
  %v3041 = vpop.f32.mrb[0].mxu0
  %v3042 = vadd.f32 0.0, %v3041
  %v3043 = vpop.f32.mrb[0].mxu0
  %3044 = vmatprep.mubr.f32.mxu0 %v1770
  %3045 = vmatmul.mubr.f32.gmra.mrb[0].mxu0 %v1769
  %v3046 = vpop.f32.mrb[0].mxu0
  %v3047 = vadd.f32 0.0, %v3046
  %v3048 = vpop.f32.mrb[0].mxu0
  %3049 = vmatprep.mubr.f32.mxu0 %v1772
  %3050 = vmatmul.mubr.f32.gmra.mrb[0].mxu0 %v1771
  %v3051 = vpop.f32.mrb[0].mxu0
  %v3052 = vadd.f32 0.0, %v3051
  %v3053 = vpop.f32.mrb[0].mxu0
  %3054 = vmatprep.mubr.f32.mxu0 %v1774
  %3055 = vmatmul.mubr.f32.gmra.mrb[0].mxu0 %v1773
  %v3056 = vpop.f32.mrb[0].mxu0
  %v3057 = vadd.f32 0.0, %v3056
  %v3058 = vpop.f32.mrb[0].mxu0
  %3059 = vmatprep.mubr.f32.mxu0 %v1776
  %3060 = vmatmul.mubr.f32.gmra.mrb[0].mxu0 %v1775
  %v3061 = vpop.f32.mrb[0].mxu0
  %v3062 = vadd.f32 0.0, %v3061
  %v3063 = vpop.f32.mrb[0].mxu0
  %3064 = vmatprep.mubr.f32.mxu0 %v1778
  %3065 = vmatmul.mubr.f32.gmra.mrb[0].mxu0 %v1777
  %v3066 = vpop.f32.mrb[0].mxu0
  %v3067 = vadd.f32 0.0, %v3066
  %v3068 = vpop.f32.mrb[0].mxu0
  %3069 = vmatprep.mubr.f32.mxu0 %v1780
  %3070 = vmatmul.mubr.f32.gmra.mrb[0].mxu0 %v1779
  %v3071 = vpop.f32.mrb[0].mxu0
  %v3072 = vadd.f32 0.0, %v3071
  %v3073 = vpop.f32.mrb[0].mxu0
  %3074 = vmatprep.mubr.f32.mxu0 %v1782
  %3075 = vmatmul.mubr.f32.gmra.mrb[0].mxu0 %v1781
  %v3076 = vpop.f32.mrb[0].mxu0
  %v3077 = vadd.f32 0.0, %v3076
  %v3078 = vpop.f32.mrb[0].mxu0
  %3079 = vmatprep.mubr.f32.mxu0 %v1784
  %3080 = vmatmul.mubr.f32.gmra.mrb[0].mxu0 %v1783
  %v3081 = vpop.f32.mrb[0].mxu0
  %v3082 = vadd.f32 0.0, %v3081
  %v3083 = vpop.f32.mrb[0].mxu0
  %3084 = vmatprep.mubr.f32.mxu0 %v1786
  %3085 = vmatmul.mubr.f32.gmra.mrb[0].mxu0 %v1785
  %v3086 = vpop.f32.mrb[0].mxu0
  %v3087 = vadd.f32 0.0, %v3086
  %v3088 = vpop.f32.mrb[0].mxu0
  %3089 = vmatprep.mubr.f32.mxu0 %v1788
  %3090 = vmatmul.mubr.f32.gmra.mrb[0].mxu0 %v1787
  %v3091 = vpop.f32.mrb[0].mxu0
  %v3092 = vadd.f32 0.0, %v3091
  %v3093 = vpop.f32.mrb[0].mxu0
  %3094 = vmatprep.mubr.f32.mxu0 %v1790
  %3095 = vmatmul.mubr.f32.gmra.mrb[0].mxu0 %v1789
  %v3096 = vpop.f32.mrb[0].mxu0
  %v3097 = vadd.f32 0.0, %v3096
  %v3098 = vpop.f32.mrb[0].mxu0
  %3099 = vmatprep.mubr.f32.mxu0 %v1792
  %3100 = vmatmul.mubr.f32.gmra.mrb[0].mxu0 %v1791
  %v3101 = vpop.f32.mrb[0].mxu0
  %v3102 = vadd.f32 0.0, %v3101
  %v3103 = vpop.f32.mrb[0].mxu0
  %3104 = vmatprep.mubr.f32.mxu0 %v1794
  %3105 = vmatmul.mubr.f32.gmra.mrb[0].mxu0 %v1793
  %v3106 = vpop.f32.mrb[0].mxu0
  %v3107 = vadd.f32 0.0, %v3106
  %v3108 = vpop.f32.mrb[0].mxu0
  %3109 = vmatprep.mubr.f32.mxu0 %v1796
  %3110 = vmatmul.mubr.f32.gmra.mrb[0].mxu0 %v1795
  %v3111 = vpop.f32.mrb[0].mxu0
  %v3112 = vadd.f32 0.0, %v3111
  %v3113 = vpop.f32.mrb[0].mxu0
  %3114 = vmatprep.mubr.f32.mxu0 %v1798
  %3115 = vmatmul.mubr.f32.gmra.mrb[0].mxu0 %v1797
  %v3116 = vpop.f32.mrb[0].mxu0
  %v3117 = vadd.f32 0.0, %v3116
  %v3118 = vpop.f32.mrb[0].mxu0
  %3119 = vmatprep.mubr.f32.mxu0 %v1800
  %3120 = vmatmul.mubr.f32.gmra.mrb[0].mxu0 %v1799
  %v3121 = vpop.f32.mrb[0].mxu0
  %v3122 = vadd.f32 0.0, %v3121
  %v3123 = vpop.f32.mrb[0].mxu0
  %3124 = vmatprep.mubr.f32.mxu0 %v1802
  %3125 = vmatmul.mubr.f32.gmra.mrb[0].mxu0 %v1801
  %v3126 = vpop.f32.mrb[0].mxu0
  %v3127 = vadd.f32 0.0, %v3126
  %v3128 = vpop.f32.mrb[0].mxu0
  %3129 = vmatprep.mubr.f32.mxu0 %v1804
  %3130 = vmatmul.mubr.f32.gmra.mrb[0].mxu0 %v1803
  %v3131 = vpop.f32.mrb[0].mxu0
  %v3132 = vadd.f32 0.0, %v3131
  %v3133 = vpop.f32.mrb[0].mxu0
  %3134 = vmatprep.mubr.f32.mxu0 %v1806
  %3135 = vmatmul.mubr.f32.gmra.mrb[0].mxu0 %v1805
  %v3136 = vpop.f32.mrb[0].mxu0
  %v3137 = vadd.f32 0.0, %v3136
  %v3138 = vpop.f32.mrb[0].mxu0
  %3139 = vmatprep.mubr.f32.mxu0 %v1808
  %3140 = vmatmul.mubr.f32.gmra.mrb[0].mxu0 %v1807
  %v3141 = vpop.f32.mrb[0].mxu0
  %v3142 = vadd.f32 0.0, %v3141
  %v3143 = vpop.f32.mrb[0].mxu0
  %3144 = vmatprep.mubr.f32.mxu0 %v1810
  %3145 = vmatmul.mubr.f32.gmra.mrb[0].mxu0 %v1809
  %v3146 = vpop.f32.mrb[0].mxu0
  %v3147 = vadd.f32 0.0, %v3146
  %v3148 = vpop.f32.mrb[0].mxu0
  %3149 = vmatprep.mubr.f32.mxu0 %v1812
  %3150 = vmatmul.mubr.f32.gmra.mrb[0].mxu0 %v1811
  %v3151 = vpop.f32.mrb[0].mxu0
  %v3152 = vadd.f32 0.0, %v3151
  %v3153 = vpop.f32.mrb[0].mxu0
  %3154 = vmatprep.mubr.f32.mxu0 %v1814
  %3155 = vmatmul.mubr.f32.gmra.mrb[0].mxu0 %v1813
  %v3156 = vpop.f32.mrb[0].mxu0
  %v3157 = vadd.f32 0.0, %v3156
  %v3158 = vpop.f32.mrb[0].mxu0
  %3159 = vdwg.mxu0
  %3176 = vrot.lane.b32.xlu0 %v2442, 97
  %v3177 = vpop.permute.xlu0 %3176
  %3178 = vrot.lane.b32.xlu0 %v2447, 97
  %v3179 = vpop.permute.xlu0 %3178
  %3180 = vrot.lane.b32.xlu0 %v2452, 97
  %v3181 = vpop.permute.xlu0 %3180
  %3182 = vrot.lane.b32.xlu0 %v2457, 97
  %v3183 = vpop.permute.xlu0 %3182
  %3184 = vrot.lane.b32.xlu0 %v2462, 97
  %v3185 = vpop.permute.xlu0 %3184
  %3186 = vrot.lane.b32.xlu0 %v2467, 97
  %v3187 = vpop.permute.xlu0 %3186
  %3188 = vrot.lane.b32.xlu0 %v2472, 97
  %v3189 = vpop.permute.xlu0 %3188
  %3190 = vrot.lane.b32.xlu0 %v2477, 97
  %v3191 = vpop.permute.xlu0 %3190
  %3192 = vrot.lane.b32.xlu0 %v2482, 97
  %v3193 = vpop.permute.xlu0 %3192
  %3194 = vrot.lane.b32.xlu0 %v2487, 97
  %v3195 = vpop.permute.xlu0 %3194
  %3196 = vrot.lane.b32.xlu0 %v2492, 97
  %v3197 = vpop.permute.xlu0 %3196
  %3198 = vrot.lane.b32.xlu0 %v2497, 97
  %v3199 = vpop.permute.xlu0 %3198
  %3200 = vrot.lane.b32.xlu0 %v2502, 97
  %v3201 = vpop.permute.xlu0 %3200
  %3202 = vrot.lane.b32.xlu0 %v2507, 97
  %v3203 = vpop.permute.xlu0 %3202
  %3204 = vrot.lane.b32.xlu0 %v2512, 97
  %v3205 = vpop.permute.xlu0 %3204
  %3206 = vrot.lane.b32.xlu0 %v2517, 97
  %v3207 = vpop.permute.xlu0 %3206
  %3224 = vrot.lane.b32.xlu0 %v2442, 1
  %v3225 = vpop.permute.xlu0 %3224
  %3226 = vrot.lane.b32.xlu0 %v2447, 1
  %v3227 = vpop.permute.xlu0 %3226
  %3228 = vrot.lane.b32.xlu0 %v2452, 1
  %v3229 = vpop.permute.xlu0 %3228
  %3230 = vrot.lane.b32.xlu0 %v2457, 1
  %v3231 = vpop.permute.xlu0 %3230
  %3232 = vrot.lane.b32.xlu0 %v2462, 1
  %v3233 = vpop.permute.xlu0 %3232
  %3234 = vrot.lane.b32.xlu0 %v2467, 1
  %v3235 = vpop.permute.xlu0 %3234
  %3236 = vrot.lane.b32.xlu0 %v2472, 1
  %v3237 = vpop.permute.xlu0 %3236
  %3238 = vrot.lane.b32.xlu0 %v2477, 1
  %v3239 = vpop.permute.xlu0 %3238
  %3240 = vrot.lane.b32.xlu0 %v2482, 1
  %v3241 = vpop.permute.xlu0 %3240
  %3242 = vrot.lane.b32.xlu0 %v2487, 1
  %v3243 = vpop.permute.xlu0 %3242
  %3244 = vrot.lane.b32.xlu0 %v2492, 1
  %v3245 = vpop.permute.xlu0 %3244
  %3246 = vrot.lane.b32.xlu0 %v2497, 1
  %v3247 = vpop.permute.xlu0 %3246
  %3248 = vrot.lane.b32.xlu0 %v2502, 1
  %v3249 = vpop.permute.xlu0 %3248
  %3250 = vrot.lane.b32.xlu0 %v2507, 1
  %v3251 = vpop.permute.xlu0 %3250
  %3252 = vrot.lane.b32.xlu0 %v2512, 1
  %v3253 = vpop.permute.xlu0 %3252
  %3254 = vrot.lane.b32.xlu0 %v2517, 1
  %v3255 = vpop.permute.xlu0 %3254
  %vm3272 = vcmask 7168
  %v3273 = vsel %vm3272, %v3177, %v3225
  %v3274 = vsel %vm3272, %v3179, %v3227
  %v3275 = vsel %vm3272, %v3181, %v3229
  %v3276 = vsel %vm3272, %v3183, %v3231
  %v3277 = vsel %vm3272, %v3185, %v3233
  %v3278 = vsel %vm3272, %v3187, %v3235
  %v3279 = vsel %vm3272, %v3189, %v3237
  %v3280 = vsel %vm3272, %v3191, %v3239
  %v3281 = vsel %vm3272, %v3193, %v3241
  %v3282 = vsel %vm3272, %v3195, %v3243
  %v3283 = vsel %vm3272, %v3197, %v3245
  %v3284 = vsel %vm3272, %v3199, %v3247
  %v3285 = vsel %vm3272, %v3201, %v3249
  %v3286 = vsel %vm3272, %v3203, %v3251
  %v3287 = vsel %vm3272, %v3205, %v3253
  %v3288 = vsel %vm3272, %v3207, %v3255
  %v3289 = vlaneseq
  %v3290 = vshrl.u32 %v3289, 7
  %v3291 = vsub.s32 3, %v3290
  %v3292 = vrot.slane %v73, %v3291
  %v3293 = vmul.f32 %v3273, %v3292
  %v3294 = vmul.f32 %v3274, %v3292
  %v3295 = vmul.f32 %v3275, %v3292
  %v3296 = vmul.f32 %v3276, %v3292
  %v3297 = vmul.f32 %v3277, %v3292
  %v3298 = vmul.f32 %v3278, %v3292
  %v3299 = vmul.f32 %v3279, %v3292
  %v3300 = vmul.f32 %v3280, %v3292
  %v3301 = vmul.f32 %v3281, %v3292
  %v3302 = vmul.f32 %v3282, %v3292
  %v3303 = vmul.f32 %v3283, %v3292
  %v3304 = vmul.f32 %v3284, %v3292
  %v3305 = vmul.f32 %v3285, %v3292
  %v3306 = vmul.f32 %v3286, %v3292
  %v3307 = vmul.f32 %v3287, %v3292
  %v3308 = vmul.f32 %v3288, %v3292
  %v3309 = vadd.f32 %v2282, %v3293
  %v3310 = vadd.f32 %v2287, %v3294
  %v3311 = vadd.f32 %v2292, %v3295
  %v3312 = vadd.f32 %v2297, %v3296
  %v3313 = vadd.f32 %v2302, %v3297
  %v3314 = vadd.f32 %v2307, %v3298
  %v3315 = vadd.f32 %v2312, %v3299
  %v3316 = vadd.f32 %v2317, %v3300
  %v3317 = vadd.f32 %v2322, %v3301
  %v3318 = vadd.f32 %v2327, %v3302
  %v3319 = vadd.f32 %v2332, %v3303
  %v3320 = vadd.f32 %v2337, %v3304
  %v3321 = vadd.f32 %v2342, %v3305
  %v3322 = vadd.f32 %v2347, %v3306
  %v3323 = vadd.f32 %v2352, %v3307
  %v3324 = vadd.f32 %v2357, %v3308
  %3341 = vrot.lane.b32.xlu0 %v2922, 100
  %v3342 = vpop.permute.xlu0 %3341
  %3343 = vrot.lane.b32.xlu0 %v2927, 100
  %v3344 = vpop.permute.xlu0 %3343
  %3345 = vrot.lane.b32.xlu0 %v2932, 100
  %v3346 = vpop.permute.xlu0 %3345
  %3347 = vrot.lane.b32.xlu0 %v2937, 100
  %v3348 = vpop.permute.xlu0 %3347
  %3349 = vrot.lane.b32.xlu0 %v2942, 100
  %v3350 = vpop.permute.xlu0 %3349
  %3351 = vrot.lane.b32.xlu0 %v2947, 100
  %v3352 = vpop.permute.xlu0 %3351
  %3353 = vrot.lane.b32.xlu0 %v2952, 100
  %v3354 = vpop.permute.xlu0 %3353
  %3355 = vrot.lane.b32.xlu0 %v2957, 100
  %v3356 = vpop.permute.xlu0 %3355
  %3357 = vrot.lane.b32.xlu0 %v2962, 100
  %v3358 = vpop.permute.xlu0 %3357
  %3359 = vrot.lane.b32.xlu0 %v2967, 100
  %v3360 = vpop.permute.xlu0 %3359
  %3361 = vrot.lane.b32.xlu0 %v2972, 100
  %v3362 = vpop.permute.xlu0 %3361
  %3363 = vrot.lane.b32.xlu0 %v2977, 100
  %v3364 = vpop.permute.xlu0 %3363
  %3365 = vrot.lane.b32.xlu0 %v2982, 100
  %v3366 = vpop.permute.xlu0 %3365
  %3367 = vrot.lane.b32.xlu0 %v2987, 100
  %v3368 = vpop.permute.xlu0 %3367
  %3369 = vrot.lane.b32.xlu0 %v2992, 100
  %v3370 = vpop.permute.xlu0 %3369
  %3371 = vrot.lane.b32.xlu0 %v2997, 100
  %v3372 = vpop.permute.xlu0 %3371
  %3389 = vrot.lane.b32.xlu0 %v2922, 4
  %v3390 = vpop.permute.xlu0 %3389
  %3391 = vrot.lane.b32.xlu0 %v2927, 4
  %v3392 = vpop.permute.xlu0 %3391
  %3393 = vrot.lane.b32.xlu0 %v2932, 4
  %v3394 = vpop.permute.xlu0 %3393
  %3395 = vrot.lane.b32.xlu0 %v2937, 4
  %v3396 = vpop.permute.xlu0 %3395
  %3397 = vrot.lane.b32.xlu0 %v2942, 4
  %v3398 = vpop.permute.xlu0 %3397
  %3399 = vrot.lane.b32.xlu0 %v2947, 4
  %v3400 = vpop.permute.xlu0 %3399
  %3401 = vrot.lane.b32.xlu0 %v2952, 4
  %v3402 = vpop.permute.xlu0 %3401
  %3403 = vrot.lane.b32.xlu0 %v2957, 4
  %v3404 = vpop.permute.xlu0 %3403
  %3405 = vrot.lane.b32.xlu0 %v2962, 4
  %v3406 = vpop.permute.xlu0 %3405
  %3407 = vrot.lane.b32.xlu0 %v2967, 4
  %v3408 = vpop.permute.xlu0 %3407
  %3409 = vrot.lane.b32.xlu0 %v2972, 4
  %v3410 = vpop.permute.xlu0 %3409
  %3411 = vrot.lane.b32.xlu0 %v2977, 4
  %v3412 = vpop.permute.xlu0 %3411
  %3413 = vrot.lane.b32.xlu0 %v2982, 4
  %v3414 = vpop.permute.xlu0 %3413
  %3415 = vrot.lane.b32.xlu0 %v2987, 4
  %v3416 = vpop.permute.xlu0 %3415
  %3417 = vrot.lane.b32.xlu0 %v2992, 4
  %v3418 = vpop.permute.xlu0 %3417
  %3419 = vrot.lane.b32.xlu0 %v2997, 4
  %v3420 = vpop.permute.xlu0 %3419
  %vm3437 = vcmask 31744
  %v3438 = vsel %vm3437, %v3342, %v3390
  %v3439 = vsel %vm3437, %v3344, %v3392
  %v3440 = vsel %vm3437, %v3346, %v3394
  %v3441 = vsel %vm3437, %v3348, %v3396
  %v3442 = vsel %vm3437, %v3350, %v3398
  %v3443 = vsel %vm3437, %v3352, %v3400
  %v3444 = vsel %vm3437, %v3354, %v3402
  %v3445 = vsel %vm3437, %v3356, %v3404
  %v3446 = vsel %vm3437, %v3358, %v3406
  %v3447 = vsel %vm3437, %v3360, %v3408
  %v3448 = vsel %vm3437, %v3362, %v3410
  %v3449 = vsel %vm3437, %v3364, %v3412
  %v3450 = vsel %vm3437, %v3366, %v3414
  %v3451 = vsel %vm3437, %v3368, %v3416
  %v3452 = vsel %vm3437, %v3370, %v3418
  %v3453 = vsel %vm3437, %v3372, %v3420
  %v3454 = vlaneseq
  %v3455 = vshrl.u32 %v3454, 7
  %v3456 = vsub.s32 1, %v3455
  %v3457 = vrot.slane %v73, %v3456
  %v3458 = vmul.f32 %v3438, %v3457
  %v3459 = vmul.f32 %v3439, %v3457
  %v3460 = vmul.f32 %v3440, %v3457
  %v3461 = vmul.f32 %v3441, %v3457
  %v3462 = vmul.f32 %v3442, %v3457
  %v3463 = vmul.f32 %v3443, %v3457
  %v3464 = vmul.f32 %v3444, %v3457
  %v3465 = vmul.f32 %v3445, %v3457
  %v3466 = vmul.f32 %v3446, %v3457
  %v3467 = vmul.f32 %v3447, %v3457
  %v3468 = vmul.f32 %v3448, %v3457
  %v3469 = vmul.f32 %v3449, %v3457
  %v3470 = vmul.f32 %v3450, %v3457
  %v3471 = vmul.f32 %v3451, %v3457
  %v3472 = vmul.f32 %v3452, %v3457
  %v3473 = vmul.f32 %v3453, %v3457
  %v3474 = vadd.f32 %v3309, %v3458
  %v3475 = vadd.f32 %v3310, %v3459
  %v3476 = vadd.f32 %v3311, %v3460
  %v3477 = vadd.f32 %v3312, %v3461
  %v3478 = vadd.f32 %v3313, %v3462
  %v3479 = vadd.f32 %v3314, %v3463
  %v3480 = vadd.f32 %v3315, %v3464
  %v3481 = vadd.f32 %v3316, %v3465
  %v3482 = vadd.f32 %v3317, %v3466
  %v3483 = vadd.f32 %v3318, %v3467
  %v3484 = vadd.f32 %v3319, %v3468
  %v3485 = vadd.f32 %v3320, %v3469
  %v3486 = vadd.f32 %v3321, %v3470
  %v3487 = vadd.f32 %v3322, %v3471
  %v3488 = vadd.f32 %v3323, %v3472
  %v3489 = vadd.f32 %v3324, %v3473
  %3506 = vrot.lane.b32.xlu0 %v3082, 101
  %v3507 = vpop.permute.xlu0 %3506
  %3508 = vrot.lane.b32.xlu0 %v3087, 101
  %v3509 = vpop.permute.xlu0 %3508
  %3510 = vrot.lane.b32.xlu0 %v3092, 101
  %v3511 = vpop.permute.xlu0 %3510
  %3512 = vrot.lane.b32.xlu0 %v3097, 101
  %v3513 = vpop.permute.xlu0 %3512
  %3514 = vrot.lane.b32.xlu0 %v3102, 101
  %v3515 = vpop.permute.xlu0 %3514
  %3516 = vrot.lane.b32.xlu0 %v3107, 101
  %v3517 = vpop.permute.xlu0 %3516
  %3518 = vrot.lane.b32.xlu0 %v3112, 101
  %v3519 = vpop.permute.xlu0 %3518
  %3520 = vrot.lane.b32.xlu0 %v3117, 101
  %v3521 = vpop.permute.xlu0 %3520
  %3522 = vrot.lane.b32.xlu0 %v3122, 101
  %v3523 = vpop.permute.xlu0 %3522
  %3524 = vrot.lane.b32.xlu0 %v3127, 101
  %v3525 = vpop.permute.xlu0 %3524
  %3526 = vrot.lane.b32.xlu0 %v3132, 101
  %v3527 = vpop.permute.xlu0 %3526
  %3528 = vrot.lane.b32.xlu0 %v3137, 101
  %v3529 = vpop.permute.xlu0 %3528
  %3530 = vrot.lane.b32.xlu0 %v3142, 101
  %v3531 = vpop.permute.xlu0 %3530
  %3532 = vrot.lane.b32.xlu0 %v3147, 101
  %v3533 = vpop.permute.xlu0 %3532
  %3534 = vrot.lane.b32.xlu0 %v3152, 101
  %v3535 = vpop.permute.xlu0 %3534
  %3536 = vrot.lane.b32.xlu0 %v3157, 101
  %v3537 = vpop.permute.xlu0 %3536
  %3554 = vrot.lane.b32.xlu0 %v3082, 5
  %v3555 = vpop.permute.xlu0 %3554
  %3556 = vrot.lane.b32.xlu0 %v3087, 5
  %v3557 = vpop.permute.xlu0 %3556
  %3558 = vrot.lane.b32.xlu0 %v3092, 5
  %v3559 = vpop.permute.xlu0 %3558
  %3560 = vrot.lane.b32.xlu0 %v3097, 5
  %v3561 = vpop.permute.xlu0 %3560
  %3562 = vrot.lane.b32.xlu0 %v3102, 5
  %v3563 = vpop.permute.xlu0 %3562
  %3564 = vrot.lane.b32.xlu0 %v3107, 5
  %v3565 = vpop.permute.xlu0 %3564
  %3566 = vrot.lane.b32.xlu0 %v3112, 5
  %v3567 = vpop.permute.xlu0 %3566
  %3568 = vrot.lane.b32.xlu0 %v3117, 5
  %v3569 = vpop.permute.xlu0 %3568
  %3570 = vrot.lane.b32.xlu0 %v3122, 5
  %v3571 = vpop.permute.xlu0 %3570
  %3572 = vrot.lane.b32.xlu0 %v3127, 5
  %v3573 = vpop.permute.xlu0 %3572
  %3574 = vrot.lane.b32.xlu0 %v3132, 5
  %v3575 = vpop.permute.xlu0 %3574
  %3576 = vrot.lane.b32.xlu0 %v3137, 5
  %v3577 = vpop.permute.xlu0 %3576
  %3578 = vrot.lane.b32.xlu0 %v3142, 5
  %v3579 = vpop.permute.xlu0 %3578
  %3580 = vrot.lane.b32.xlu0 %v3147, 5
  %v3581 = vpop.permute.xlu0 %3580
  %3582 = vrot.lane.b32.xlu0 %v3152, 5
  %v3583 = vpop.permute.xlu0 %3582
  %3584 = vrot.lane.b32.xlu0 %v3157, 5
  %v3585 = vpop.permute.xlu0 %3584
  %vm3602 = vcmask 39936
  %v3603 = vsel %vm3602, %v3507, %v3555
  %v3604 = vsel %vm3602, %v3509, %v3557
  %v3605 = vsel %vm3602, %v3511, %v3559
  %v3606 = vsel %vm3602, %v3513, %v3561
  %v3607 = vsel %vm3602, %v3515, %v3563
  %v3608 = vsel %vm3602, %v3517, %v3565
  %v3609 = vsel %vm3602, %v3519, %v3567
  %v3610 = vsel %vm3602, %v3521, %v3569
  %v3611 = vsel %vm3602, %v3523, %v3571
  %v3612 = vsel %vm3602, %v3525, %v3573
  %v3613 = vsel %vm3602, %v3527, %v3575
  %v3614 = vsel %vm3602, %v3529, %v3577
  %v3615 = vsel %vm3602, %v3531, %v3579
  %v3616 = vsel %vm3602, %v3533, %v3581
  %v3617 = vsel %vm3602, %v3535, %v3583
  %v3618 = vsel %vm3602, %v3537, %v3585
  %v3619 = vlaneseq
  %v3620 = vshrl.u32 %v3619, 7
  %v3621 = vsub.s32 0, %v3620
  %v3622 = vrot.slane %v73, %v3621
  %v3623 = vmul.f32 %v3603, %v3622
  %v3624 = vmul.f32 %v3604, %v3622
  %v3625 = vmul.f32 %v3605, %v3622
  %v3626 = vmul.f32 %v3606, %v3622
  %v3627 = vmul.f32 %v3607, %v3622
  %v3628 = vmul.f32 %v3608, %v3622
  %v3629 = vmul.f32 %v3609, %v3622
  %v3630 = vmul.f32 %v3610, %v3622
  %v3631 = vmul.f32 %v3611, %v3622
  %v3632 = vmul.f32 %v3612, %v3622
  %v3633 = vmul.f32 %v3613, %v3622
  %v3634 = vmul.f32 %v3614, %v3622
  %v3635 = vmul.f32 %v3615, %v3622
  %v3636 = vmul.f32 %v3616, %v3622
  %v3637 = vmul.f32 %v3617, %v3622
  %v3638 = vmul.f32 %v3618, %v3622
  %v3639 = vadd.f32 %v3474, %v3623
  %v3640 = vadd.f32 %v3475, %v3624
  %v3641 = vadd.f32 %v3476, %v3625
  %v3642 = vadd.f32 %v3477, %v3626
  %v3643 = vadd.f32 %v3478, %v3627
  %v3644 = vadd.f32 %v3479, %v3628
  %v3645 = vadd.f32 %v3480, %v3629
  %v3646 = vadd.f32 %v3481, %v3630
  %v3647 = vadd.f32 %v3482, %v3631
  %v3648 = vadd.f32 %v3483, %v3632
  %v3649 = vadd.f32 %v3484, %v3633
  %v3650 = vadd.f32 %v3485, %v3634
  %v3651 = vadd.f32 %v3486, %v3635
  %v3652 = vadd.f32 %v3487, %v3636
  %v3653 = vadd.f32 %v3488, %v3637
  %v3654 = vadd.f32 %v3489, %v3638
  %3671 = vrot.lane.b32.xlu0 %v2202, 127
  %v3672 = vpop.permute.xlu0 %3671
  %3673 = vrot.lane.b32.xlu0 %v2207, 127
  %v3674 = vpop.permute.xlu0 %3673
  %3675 = vrot.lane.b32.xlu0 %v2212, 127
  %v3676 = vpop.permute.xlu0 %3675
  %3677 = vrot.lane.b32.xlu0 %v2217, 127
  %v3678 = vpop.permute.xlu0 %3677
  %3679 = vrot.lane.b32.xlu0 %v2222, 127
  %v3680 = vpop.permute.xlu0 %3679
  %3681 = vrot.lane.b32.xlu0 %v2227, 127
  %v3682 = vpop.permute.xlu0 %3681
  %3683 = vrot.lane.b32.xlu0 %v2232, 127
  %v3684 = vpop.permute.xlu0 %3683
  %3685 = vrot.lane.b32.xlu0 %v2237, 127
  %v3686 = vpop.permute.xlu0 %3685
  %3687 = vrot.lane.b32.xlu0 %v2242, 127
  %v3688 = vpop.permute.xlu0 %3687
  %3689 = vrot.lane.b32.xlu0 %v2247, 127
  %v3690 = vpop.permute.xlu0 %3689
  %3691 = vrot.lane.b32.xlu0 %v2252, 127
  %v3692 = vpop.permute.xlu0 %3691
  %3693 = vrot.lane.b32.xlu0 %v2257, 127
  %v3694 = vpop.permute.xlu0 %3693
  %3695 = vrot.lane.b32.xlu0 %v2262, 127
  %v3696 = vpop.permute.xlu0 %3695
  %3697 = vrot.lane.b32.xlu0 %v2267, 127
  %v3698 = vpop.permute.xlu0 %3697
  %3699 = vrot.lane.b32.xlu0 %v2272, 127
  %v3700 = vpop.permute.xlu0 %3699
  %3701 = vrot.lane.b32.xlu0 %v2277, 127
  %v3702 = vpop.permute.xlu0 %3701
  %3719 = vrot.lane.b32.xlu0 %v2202, 31
  %v3720 = vpop.permute.xlu0 %3719
  %3721 = vrot.lane.b32.xlu0 %v2207, 31
  %v3722 = vpop.permute.xlu0 %3721
  %3723 = vrot.lane.b32.xlu0 %v2212, 31
  %v3724 = vpop.permute.xlu0 %3723
  %3725 = vrot.lane.b32.xlu0 %v2217, 31
  %v3726 = vpop.permute.xlu0 %3725
  %3727 = vrot.lane.b32.xlu0 %v2222, 31
  %v3728 = vpop.permute.xlu0 %3727
  %3729 = vrot.lane.b32.xlu0 %v2227, 31
  %v3730 = vpop.permute.xlu0 %3729
  %3731 = vrot.lane.b32.xlu0 %v2232, 31
  %v3732 = vpop.permute.xlu0 %3731
  %3733 = vrot.lane.b32.xlu0 %v2237, 31
  %v3734 = vpop.permute.xlu0 %3733
  %3735 = vrot.lane.b32.xlu0 %v2242, 31
  %v3736 = vpop.permute.xlu0 %3735
  %3737 = vrot.lane.b32.xlu0 %v2247, 31
  %v3738 = vpop.permute.xlu0 %3737
  %3739 = vrot.lane.b32.xlu0 %v2252, 31
  %v3740 = vpop.permute.xlu0 %3739
  %3741 = vrot.lane.b32.xlu0 %v2257, 31
  %v3742 = vpop.permute.xlu0 %3741
  %3743 = vrot.lane.b32.xlu0 %v2262, 31
  %v3744 = vpop.permute.xlu0 %3743
  %3745 = vrot.lane.b32.xlu0 %v2267, 31
  %v3746 = vpop.permute.xlu0 %3745
  %3747 = vrot.lane.b32.xlu0 %v2272, 31
  %v3748 = vpop.permute.xlu0 %3747
  %3749 = vrot.lane.b32.xlu0 %v2277, 31
  %v3750 = vpop.permute.xlu0 %3749
  %vm3767 = vcmask 252928
  %v3768 = vsel %vm3767, %v3672, %v3720
  %v3769 = vsel %vm3767, %v3674, %v3722
  %v3770 = vsel %vm3767, %v3676, %v3724
  %v3771 = vsel %vm3767, %v3678, %v3726
  %v3772 = vsel %vm3767, %v3680, %v3728
  %v3773 = vsel %vm3767, %v3682, %v3730
  %v3774 = vsel %vm3767, %v3684, %v3732
  %v3775 = vsel %vm3767, %v3686, %v3734
  %v3776 = vsel %vm3767, %v3688, %v3736
  %v3777 = vsel %vm3767, %v3690, %v3738
  %v3778 = vsel %vm3767, %v3692, %v3740
  %v3779 = vsel %vm3767, %v3694, %v3742
  %v3780 = vsel %vm3767, %v3696, %v3744
  %v3781 = vsel %vm3767, %v3698, %v3746
  %v3782 = vsel %vm3767, %v3700, %v3748
  %v3783 = vsel %vm3767, %v3702, %v3750
  %v3784 = vlaneseq
  %v3785 = vshrl.u32 %v3784, 7
  %v3786 = vsub.s32 5, %v3785
  %v3787 = vrot.slane %v73, %v3786
  %v3788 = vmul.f32 %v3768, %v3787
  %v3789 = vmul.f32 %v3769, %v3787
  %v3790 = vmul.f32 %v3770, %v3787
  %v3791 = vmul.f32 %v3771, %v3787
  %v3792 = vmul.f32 %v3772, %v3787
  %v3793 = vmul.f32 %v3773, %v3787
  %v3794 = vmul.f32 %v3774, %v3787
  %v3795 = vmul.f32 %v3775, %v3787
  %v3796 = vmul.f32 %v3776, %v3787
  %v3797 = vmul.f32 %v3777, %v3787
  %v3798 = vmul.f32 %v3778, %v3787
  %v3799 = vmul.f32 %v3779, %v3787
  %v3800 = vmul.f32 %v3780, %v3787
  %v3801 = vmul.f32 %v3781, %v3787
  %v3802 = vmul.f32 %v3782, %v3787
  %v3803 = vmul.f32 %v3783, %v3787
  %v3804 = vadd.f32 %v2362, %v3788
  %v3805 = vadd.f32 %v2367, %v3789
  %v3806 = vadd.f32 %v2372, %v3790
  %v3807 = vadd.f32 %v2377, %v3791
  %v3808 = vadd.f32 %v2382, %v3792
  %v3809 = vadd.f32 %v2387, %v3793
  %v3810 = vadd.f32 %v2392, %v3794
  %v3811 = vadd.f32 %v2397, %v3795
  %v3812 = vadd.f32 %v2402, %v3796
  %v3813 = vadd.f32 %v2407, %v3797
  %v3814 = vadd.f32 %v2412, %v3798
  %v3815 = vadd.f32 %v2417, %v3799
  %v3816 = vadd.f32 %v2422, %v3800
  %v3817 = vadd.f32 %v2427, %v3801
  %v3818 = vadd.f32 %v2432, %v3802
  %v3819 = vadd.f32 %v2437, %v3803
  %3836 = vrot.lane.b32.xlu0 %v3002, 100
  %v3837 = vpop.permute.xlu0 %3836
  %3838 = vrot.lane.b32.xlu0 %v3007, 100
  %v3839 = vpop.permute.xlu0 %3838
  %3840 = vrot.lane.b32.xlu0 %v3012, 100
  %v3841 = vpop.permute.xlu0 %3840
  %3842 = vrot.lane.b32.xlu0 %v3017, 100
  %v3843 = vpop.permute.xlu0 %3842
  %3844 = vrot.lane.b32.xlu0 %v3022, 100
  %v3845 = vpop.permute.xlu0 %3844
  %3846 = vrot.lane.b32.xlu0 %v3027, 100
  %v3847 = vpop.permute.xlu0 %3846
  %3848 = vrot.lane.b32.xlu0 %v3032, 100
  %v3849 = vpop.permute.xlu0 %3848
  %3850 = vrot.lane.b32.xlu0 %v3037, 100
  %v3851 = vpop.permute.xlu0 %3850
  %3852 = vrot.lane.b32.xlu0 %v3042, 100
  %v3853 = vpop.permute.xlu0 %3852
  %3854 = vrot.lane.b32.xlu0 %v3047, 100
  %v3855 = vpop.permute.xlu0 %3854
  %3856 = vrot.lane.b32.xlu0 %v3052, 100
  %v3857 = vpop.permute.xlu0 %3856
  %3858 = vrot.lane.b32.xlu0 %v3057, 100
  %v3859 = vpop.permute.xlu0 %3858
  %3860 = vrot.lane.b32.xlu0 %v3062, 100
  %v3861 = vpop.permute.xlu0 %3860
  %3862 = vrot.lane.b32.xlu0 %v3067, 100
  %v3863 = vpop.permute.xlu0 %3862
  %3864 = vrot.lane.b32.xlu0 %v3072, 100
  %v3865 = vpop.permute.xlu0 %3864
  %3866 = vrot.lane.b32.xlu0 %v3077, 100
  %v3867 = vpop.permute.xlu0 %3866
  %3884 = vrot.lane.b32.xlu0 %v3002, 4
  %v3885 = vpop.permute.xlu0 %3884
  %3886 = vrot.lane.b32.xlu0 %v3007, 4
  %v3887 = vpop.permute.xlu0 %3886
  %3888 = vrot.lane.b32.xlu0 %v3012, 4
  %v3889 = vpop.permute.xlu0 %3888
  %3890 = vrot.lane.b32.xlu0 %v3017, 4
  %v3891 = vpop.permute.xlu0 %3890
  %3892 = vrot.lane.b32.xlu0 %v3022, 4
  %v3893 = vpop.permute.xlu0 %3892
  %3894 = vrot.lane.b32.xlu0 %v3027, 4
  %v3895 = vpop.permute.xlu0 %3894
  %3896 = vrot.lane.b32.xlu0 %v3032, 4
  %v3897 = vpop.permute.xlu0 %3896
  %3898 = vrot.lane.b32.xlu0 %v3037, 4
  %v3899 = vpop.permute.xlu0 %3898
  %3900 = vrot.lane.b32.xlu0 %v3042, 4
  %v3901 = vpop.permute.xlu0 %3900
  %3902 = vrot.lane.b32.xlu0 %v3047, 4
  %v3903 = vpop.permute.xlu0 %3902
  %3904 = vrot.lane.b32.xlu0 %v3052, 4
  %v3905 = vpop.permute.xlu0 %3904
  %3906 = vrot.lane.b32.xlu0 %v3057, 4
  %v3907 = vpop.permute.xlu0 %3906
  %3908 = vrot.lane.b32.xlu0 %v3062, 4
  %v3909 = vpop.permute.xlu0 %3908
  %3910 = vrot.lane.b32.xlu0 %v3067, 4
  %v3911 = vpop.permute.xlu0 %3910
  %3912 = vrot.lane.b32.xlu0 %v3072, 4
  %v3913 = vpop.permute.xlu0 %3912
  %3914 = vrot.lane.b32.xlu0 %v3077, 4
  %v3915 = vpop.permute.xlu0 %3914
  %v3932 = vsel %vm3437, %v3837, %v3885
  %v3933 = vsel %vm3437, %v3839, %v3887
  %v3934 = vsel %vm3437, %v3841, %v3889
  %v3935 = vsel %vm3437, %v3843, %v3891
  %v3936 = vsel %vm3437, %v3845, %v3893
  %v3937 = vsel %vm3437, %v3847, %v3895
  %v3938 = vsel %vm3437, %v3849, %v3897
  %v3939 = vsel %vm3437, %v3851, %v3899
  %v3940 = vsel %vm3437, %v3853, %v3901
  %v3941 = vsel %vm3437, %v3855, %v3903
  %v3942 = vsel %vm3437, %v3857, %v3905
  %v3943 = vsel %vm3437, %v3859, %v3907
  %v3944 = vsel %vm3437, %v3861, %v3909
  %v3945 = vsel %vm3437, %v3863, %v3911
  %v3946 = vsel %vm3437, %v3865, %v3913
  %v3947 = vsel %vm3437, %v3867, %v3915
  %v3948 = vmul.f32 %v3932, %v3457
  %v3949 = vmul.f32 %v3933, %v3457
  %v3950 = vmul.f32 %v3934, %v3457
  %v3951 = vmul.f32 %v3935, %v3457
  %v3952 = vmul.f32 %v3936, %v3457
  %v3953 = vmul.f32 %v3937, %v3457
  %v3954 = vmul.f32 %v3938, %v3457
  %v3955 = vmul.f32 %v3939, %v3457
  %v3956 = vmul.f32 %v3940, %v3457
  %v3957 = vmul.f32 %v3941, %v3457
  %v3958 = vmul.f32 %v3942, %v3457
  %v3959 = vmul.f32 %v3943, %v3457
  %v3960 = vmul.f32 %v3944, %v3457
  %v3961 = vmul.f32 %v3945, %v3457
  %v3962 = vmul.f32 %v3946, %v3457
  %v3963 = vmul.f32 %v3947, %v3457
  %v3964 = vadd.f32 %v3804, %v3948
  %v3965 = vadd.f32 %v3805, %v3949
  %v3966 = vadd.f32 %v3806, %v3950
  %v3967 = vadd.f32 %v3807, %v3951
  %v3968 = vadd.f32 %v3808, %v3952
  %v3969 = vadd.f32 %v3809, %v3953
  %v3970 = vadd.f32 %v3810, %v3954
  %v3971 = vadd.f32 %v3811, %v3955
  %v3972 = vadd.f32 %v3812, %v3956
  %v3973 = vadd.f32 %v3813, %v3957
  %v3974 = vadd.f32 %v3814, %v3958
  %v3975 = vadd.f32 %v3815, %v3959
  %v3976 = vadd.f32 %v3816, %v3960
  %v3977 = vadd.f32 %v3817, %v3961
  %v3978 = vadd.f32 %v3818, %v3962
  %v3979 = vadd.f32 %v3819, %v3963
  %3996 = vrot.lane.b32.xlu0 %v2842, 99
  %v3997 = vpop.permute.xlu0 %3996
  %3998 = vrot.lane.b32.xlu0 %v2847, 99
  %v3999 = vpop.permute.xlu0 %3998
  %4000 = vrot.lane.b32.xlu0 %v2852, 99
  %v4001 = vpop.permute.xlu0 %4000
  %4002 = vrot.lane.b32.xlu0 %v2857, 99
  %v4003 = vpop.permute.xlu0 %4002
  %4004 = vrot.lane.b32.xlu0 %v2862, 99
  %v4005 = vpop.permute.xlu0 %4004
  %4006 = vrot.lane.b32.xlu0 %v2867, 99
  %v4007 = vpop.permute.xlu0 %4006
  %4008 = vrot.lane.b32.xlu0 %v2872, 99
  %v4009 = vpop.permute.xlu0 %4008
  %4010 = vrot.lane.b32.xlu0 %v2877, 99
  %v4011 = vpop.permute.xlu0 %4010
  %4012 = vrot.lane.b32.xlu0 %v2882, 99
  %v4013 = vpop.permute.xlu0 %4012
  %4014 = vrot.lane.b32.xlu0 %v2887, 99
  %v4015 = vpop.permute.xlu0 %4014
  %4016 = vrot.lane.b32.xlu0 %v2892, 99
  %v4017 = vpop.permute.xlu0 %4016
  %4018 = vrot.lane.b32.xlu0 %v2897, 99
  %v4019 = vpop.permute.xlu0 %4018
  %4020 = vrot.lane.b32.xlu0 %v2902, 99
  %v4021 = vpop.permute.xlu0 %4020
  %4022 = vrot.lane.b32.xlu0 %v2907, 99
  %v4023 = vpop.permute.xlu0 %4022
  %4024 = vrot.lane.b32.xlu0 %v2912, 99
  %v4025 = vpop.permute.xlu0 %4024
  %4026 = vrot.lane.b32.xlu0 %v2917, 99
  %v4027 = vpop.permute.xlu0 %4026
  %4044 = vrot.lane.b32.xlu0 %v2842, 3
  %v4045 = vpop.permute.xlu0 %4044
  %4046 = vrot.lane.b32.xlu0 %v2847, 3
  %v4047 = vpop.permute.xlu0 %4046
  %4048 = vrot.lane.b32.xlu0 %v2852, 3
  %v4049 = vpop.permute.xlu0 %4048
  %4050 = vrot.lane.b32.xlu0 %v2857, 3
  %v4051 = vpop.permute.xlu0 %4050
  %4052 = vrot.lane.b32.xlu0 %v2862, 3
  %v4053 = vpop.permute.xlu0 %4052
  %4054 = vrot.lane.b32.xlu0 %v2867, 3
  %v4055 = vpop.permute.xlu0 %4054
  %4056 = vrot.lane.b32.xlu0 %v2872, 3
  %v4057 = vpop.permute.xlu0 %4056
  %4058 = vrot.lane.b32.xlu0 %v2877, 3
  %v4059 = vpop.permute.xlu0 %4058
  %4060 = vrot.lane.b32.xlu0 %v2882, 3
  %v4061 = vpop.permute.xlu0 %4060
  %4062 = vrot.lane.b32.xlu0 %v2887, 3
  %v4063 = vpop.permute.xlu0 %4062
  %4064 = vrot.lane.b32.xlu0 %v2892, 3
  %v4065 = vpop.permute.xlu0 %4064
  %4066 = vrot.lane.b32.xlu0 %v2897, 3
  %v4067 = vpop.permute.xlu0 %4066
  %4068 = vrot.lane.b32.xlu0 %v2902, 3
  %v4069 = vpop.permute.xlu0 %4068
  %4070 = vrot.lane.b32.xlu0 %v2907, 3
  %v4071 = vpop.permute.xlu0 %4070
  %4072 = vrot.lane.b32.xlu0 %v2912, 3
  %v4073 = vpop.permute.xlu0 %4072
  %4074 = vrot.lane.b32.xlu0 %v2917, 3
  %v4075 = vpop.permute.xlu0 %4074
  %vm4092 = vcmask 23552
  %v4093 = vsel %vm4092, %v3997, %v4045
  %v4094 = vsel %vm4092, %v3999, %v4047
  %v4095 = vsel %vm4092, %v4001, %v4049
  %v4096 = vsel %vm4092, %v4003, %v4051
  %v4097 = vsel %vm4092, %v4005, %v4053
  %v4098 = vsel %vm4092, %v4007, %v4055
  %v4099 = vsel %vm4092, %v4009, %v4057
  %v4100 = vsel %vm4092, %v4011, %v4059
  %v4101 = vsel %vm4092, %v4013, %v4061
  %v4102 = vsel %vm4092, %v4015, %v4063
  %v4103 = vsel %vm4092, %v4017, %v4065
  %v4104 = vsel %vm4092, %v4019, %v4067
  %v4105 = vsel %vm4092, %v4021, %v4069
  %v4106 = vsel %vm4092, %v4023, %v4071
  %v4107 = vsel %vm4092, %v4025, %v4073
  %v4108 = vsel %vm4092, %v4027, %v4075
  %v4109 = vlaneseq
  %v4110 = vshrl.u32 %v4109, 7
  %v4111 = vsub.s32 2, %v4110
  %v4112 = vrot.slane %v73, %v4111
  %v4113 = vmul.f32 %v4093, %v4112
  %v4114 = vmul.f32 %v4094, %v4112
  %v4115 = vmul.f32 %v4095, %v4112
  %v4116 = vmul.f32 %v4096, %v4112
  %v4117 = vmul.f32 %v4097, %v4112
  %v4118 = vmul.f32 %v4098, %v4112
  %v4119 = vmul.f32 %v4099, %v4112
  %v4120 = vmul.f32 %v4100, %v4112
  %v4121 = vmul.f32 %v4101, %v4112
  %v4122 = vmul.f32 %v4102, %v4112
  %v4123 = vmul.f32 %v4103, %v4112
  %v4124 = vmul.f32 %v4104, %v4112
  %v4125 = vmul.f32 %v4105, %v4112
  %v4126 = vmul.f32 %v4106, %v4112
  %v4127 = vmul.f32 %v4107, %v4112
  %v4128 = vmul.f32 %v4108, %v4112
  %v4129 = vadd.f32 %v3964, %v4113
  %v4130 = vadd.f32 %v3965, %v4114
  %v4131 = vadd.f32 %v3966, %v4115
  %v4132 = vadd.f32 %v3967, %v4116
  %v4133 = vadd.f32 %v3968, %v4117
  %v4134 = vadd.f32 %v3969, %v4118
  %v4135 = vadd.f32 %v3970, %v4119
  %v4136 = vadd.f32 %v3971, %v4120
  %v4137 = vadd.f32 %v3972, %v4121
  %v4138 = vadd.f32 %v3973, %v4122
  %v4139 = vadd.f32 %v3974, %v4123
  %v4140 = vadd.f32 %v3975, %v4124
  %v4141 = vadd.f32 %v3976, %v4125
  %v4142 = vadd.f32 %v3977, %v4126
  %v4143 = vadd.f32 %v3978, %v4127
  %v4144 = vadd.f32 %v3979, %v4128
  %4161 = vrot.lane.b32.xlu0 %v2762, 97
  %v4162 = vpop.permute.xlu0 %4161
  %4163 = vrot.lane.b32.xlu0 %v2767, 97
  %v4164 = vpop.permute.xlu0 %4163
  %4165 = vrot.lane.b32.xlu0 %v2772, 97
  %v4166 = vpop.permute.xlu0 %4165
  %4167 = vrot.lane.b32.xlu0 %v2777, 97
  %v4168 = vpop.permute.xlu0 %4167
  %4169 = vrot.lane.b32.xlu0 %v2782, 97
  %v4170 = vpop.permute.xlu0 %4169
  %4171 = vrot.lane.b32.xlu0 %v2787, 97
  %v4172 = vpop.permute.xlu0 %4171
  %4173 = vrot.lane.b32.xlu0 %v2792, 97
  %v4174 = vpop.permute.xlu0 %4173
  %4175 = vrot.lane.b32.xlu0 %v2797, 97
  %v4176 = vpop.permute.xlu0 %4175
  %4177 = vrot.lane.b32.xlu0 %v2802, 97
  %v4178 = vpop.permute.xlu0 %4177
  %4179 = vrot.lane.b32.xlu0 %v2807, 97
  %v4180 = vpop.permute.xlu0 %4179
  %4181 = vrot.lane.b32.xlu0 %v2812, 97
  %v4182 = vpop.permute.xlu0 %4181
  %4183 = vrot.lane.b32.xlu0 %v2817, 97
  %v4184 = vpop.permute.xlu0 %4183
  %4185 = vrot.lane.b32.xlu0 %v2822, 97
  %v4186 = vpop.permute.xlu0 %4185
  %4187 = vrot.lane.b32.xlu0 %v2827, 97
  %v4188 = vpop.permute.xlu0 %4187
  %4189 = vrot.lane.b32.xlu0 %v2832, 97
  %v4190 = vpop.permute.xlu0 %4189
  %4191 = vrot.lane.b32.xlu0 %v2837, 97
  %v4192 = vpop.permute.xlu0 %4191
  %4209 = vrot.lane.b32.xlu0 %v2762, 1
  %v4210 = vpop.permute.xlu0 %4209
  %4211 = vrot.lane.b32.xlu0 %v2767, 1
  %v4212 = vpop.permute.xlu0 %4211
  %4213 = vrot.lane.b32.xlu0 %v2772, 1
  %v4214 = vpop.permute.xlu0 %4213
  %4215 = vrot.lane.b32.xlu0 %v2777, 1
  %v4216 = vpop.permute.xlu0 %4215
  %4217 = vrot.lane.b32.xlu0 %v2782, 1
  %v4218 = vpop.permute.xlu0 %4217
  %4219 = vrot.lane.b32.xlu0 %v2787, 1
  %v4220 = vpop.permute.xlu0 %4219
  %4221 = vrot.lane.b32.xlu0 %v2792, 1
  %v4222 = vpop.permute.xlu0 %4221
  %4223 = vrot.lane.b32.xlu0 %v2797, 1
  %v4224 = vpop.permute.xlu0 %4223
  %4225 = vrot.lane.b32.xlu0 %v2802, 1
  %v4226 = vpop.permute.xlu0 %4225
  %4227 = vrot.lane.b32.xlu0 %v2807, 1
  %v4228 = vpop.permute.xlu0 %4227
  %4229 = vrot.lane.b32.xlu0 %v2812, 1
  %v4230 = vpop.permute.xlu0 %4229
  %4231 = vrot.lane.b32.xlu0 %v2817, 1
  %v4232 = vpop.permute.xlu0 %4231
  %4233 = vrot.lane.b32.xlu0 %v2822, 1
  %v4234 = vpop.permute.xlu0 %4233
  %4235 = vrot.lane.b32.xlu0 %v2827, 1
  %v4236 = vpop.permute.xlu0 %4235
  %4237 = vrot.lane.b32.xlu0 %v2832, 1
  %v4238 = vpop.permute.xlu0 %4237
  %4239 = vrot.lane.b32.xlu0 %v2837, 1
  %v4240 = vpop.permute.xlu0 %4239
  %v4257 = vsel %vm3272, %v4162, %v4210
  %v4258 = vsel %vm3272, %v4164, %v4212
  %v4259 = vsel %vm3272, %v4166, %v4214
  %v4260 = vsel %vm3272, %v4168, %v4216
  %v4261 = vsel %vm3272, %v4170, %v4218
  %v4262 = vsel %vm3272, %v4172, %v4220
  %v4263 = vsel %vm3272, %v4174, %v4222
  %v4264 = vsel %vm3272, %v4176, %v4224
  %v4265 = vsel %vm3272, %v4178, %v4226
  %v4266 = vsel %vm3272, %v4180, %v4228
  %v4267 = vsel %vm3272, %v4182, %v4230
  %v4268 = vsel %vm3272, %v4184, %v4232
  %v4269 = vsel %vm3272, %v4186, %v4234
  %v4270 = vsel %vm3272, %v4188, %v4236
  %v4271 = vsel %vm3272, %v4190, %v4238
  %v4272 = vsel %vm3272, %v4192, %v4240
  %v4273 = vmul.f32 %v4257, %v3292
  %v4274 = vmul.f32 %v4258, %v3292
  %v4275 = vmul.f32 %v4259, %v3292
  %v4276 = vmul.f32 %v4260, %v3292
  %v4277 = vmul.f32 %v4261, %v3292
  %v4278 = vmul.f32 %v4262, %v3292
  %v4279 = vmul.f32 %v4263, %v3292
  %v4280 = vmul.f32 %v4264, %v3292
  %v4281 = vmul.f32 %v4265, %v3292
  %v4282 = vmul.f32 %v4266, %v3292
  %v4283 = vmul.f32 %v4267, %v3292
  %v4284 = vmul.f32 %v4268, %v3292
  %v4285 = vmul.f32 %v4269, %v3292
  %v4286 = vmul.f32 %v4270, %v3292
  %v4287 = vmul.f32 %v4271, %v3292
  %v4288 = vmul.f32 %v4272, %v3292
  %v4289 = vadd.f32 %v2602, %v4273
  %v4290 = vadd.f32 %v2607, %v4274
  %v4291 = vadd.f32 %v2612, %v4275
  %v4292 = vadd.f32 %v2617, %v4276
  %v4293 = vadd.f32 %v2622, %v4277
  %v4294 = vadd.f32 %v2627, %v4278
  %v4295 = vadd.f32 %v2632, %v4279
  %v4296 = vadd.f32 %v2637, %v4280
  %v4297 = vadd.f32 %v2642, %v4281
  %v4298 = vadd.f32 %v2647, %v4282
  %v4299 = vadd.f32 %v2652, %v4283
  %v4300 = vadd.f32 %v2657, %v4284
  %v4301 = vadd.f32 %v2662, %v4285
  %v4302 = vadd.f32 %v2667, %v4286
  %v4303 = vadd.f32 %v2672, %v4287
  %v4304 = vadd.f32 %v2677, %v4288
  %4321 = vrot.lane.b32.xlu0 %v1962, 124
  %v4322 = vpop.permute.xlu0 %4321
  %4323 = vrot.lane.b32.xlu0 %v1967, 124
  %v4324 = vpop.permute.xlu0 %4323
  %4325 = vrot.lane.b32.xlu0 %v1972, 124
  %v4326 = vpop.permute.xlu0 %4325
  %4327 = vrot.lane.b32.xlu0 %v1977, 124
  %v4328 = vpop.permute.xlu0 %4327
  %4329 = vrot.lane.b32.xlu0 %v1982, 124
  %v4330 = vpop.permute.xlu0 %4329
  %4331 = vrot.lane.b32.xlu0 %v1987, 124
  %v4332 = vpop.permute.xlu0 %4331
  %4333 = vrot.lane.b32.xlu0 %v1992, 124
  %v4334 = vpop.permute.xlu0 %4333
  %4335 = vrot.lane.b32.xlu0 %v1997, 124
  %v4336 = vpop.permute.xlu0 %4335
  %4337 = vrot.lane.b32.xlu0 %v2002, 124
  %v4338 = vpop.permute.xlu0 %4337
  %4339 = vrot.lane.b32.xlu0 %v2007, 124
  %v4340 = vpop.permute.xlu0 %4339
  %4341 = vrot.lane.b32.xlu0 %v2012, 124
  %v4342 = vpop.permute.xlu0 %4341
  %4343 = vrot.lane.b32.xlu0 %v2017, 124
  %v4344 = vpop.permute.xlu0 %4343
  %4345 = vrot.lane.b32.xlu0 %v2022, 124
  %v4346 = vpop.permute.xlu0 %4345
  %4347 = vrot.lane.b32.xlu0 %v2027, 124
  %v4348 = vpop.permute.xlu0 %4347
  %4349 = vrot.lane.b32.xlu0 %v2032, 124
  %v4350 = vpop.permute.xlu0 %4349
  %4351 = vrot.lane.b32.xlu0 %v2037, 124
  %v4352 = vpop.permute.xlu0 %4351
  %4369 = vrot.lane.b32.xlu0 %v1962, 28
  %v4370 = vpop.permute.xlu0 %4369
  %4371 = vrot.lane.b32.xlu0 %v1967, 28
  %v4372 = vpop.permute.xlu0 %4371
  %4373 = vrot.lane.b32.xlu0 %v1972, 28
  %v4374 = vpop.permute.xlu0 %4373
  %4375 = vrot.lane.b32.xlu0 %v1977, 28
  %v4376 = vpop.permute.xlu0 %4375
  %4377 = vrot.lane.b32.xlu0 %v1982, 28
  %v4378 = vpop.permute.xlu0 %4377
  %4379 = vrot.lane.b32.xlu0 %v1987, 28
  %v4380 = vpop.permute.xlu0 %4379
  %4381 = vrot.lane.b32.xlu0 %v1992, 28
  %v4382 = vpop.permute.xlu0 %4381
  %4383 = vrot.lane.b32.xlu0 %v1997, 28
  %v4384 = vpop.permute.xlu0 %4383
  %4385 = vrot.lane.b32.xlu0 %v2002, 28
  %v4386 = vpop.permute.xlu0 %4385
  %4387 = vrot.lane.b32.xlu0 %v2007, 28
  %v4388 = vpop.permute.xlu0 %4387
  %4389 = vrot.lane.b32.xlu0 %v2012, 28
  %v4390 = vpop.permute.xlu0 %4389
  %4391 = vrot.lane.b32.xlu0 %v2017, 28
  %v4392 = vpop.permute.xlu0 %4391
  %4393 = vrot.lane.b32.xlu0 %v2022, 28
  %v4394 = vpop.permute.xlu0 %4393
  %4395 = vrot.lane.b32.xlu0 %v2027, 28
  %v4396 = vpop.permute.xlu0 %4395
  %4397 = vrot.lane.b32.xlu0 %v2032, 28
  %v4398 = vpop.permute.xlu0 %4397
  %4399 = vrot.lane.b32.xlu0 %v2037, 28
  %v4400 = vpop.permute.xlu0 %4399
  %vm4417 = vcmask 228352
  %v4418 = vsel %vm4417, %v4322, %v4370
  %v4419 = vsel %vm4417, %v4324, %v4372
  %v4420 = vsel %vm4417, %v4326, %v4374
  %v4421 = vsel %vm4417, %v4328, %v4376
  %v4422 = vsel %vm4417, %v4330, %v4378
  %v4423 = vsel %vm4417, %v4332, %v4380
  %v4424 = vsel %vm4417, %v4334, %v4382
  %v4425 = vsel %vm4417, %v4336, %v4384
  %v4426 = vsel %vm4417, %v4338, %v4386
  %v4427 = vsel %vm4417, %v4340, %v4388
  %v4428 = vsel %vm4417, %v4342, %v4390
  %v4429 = vsel %vm4417, %v4344, %v4392
  %v4430 = vsel %vm4417, %v4346, %v4394
  %v4431 = vsel %vm4417, %v4348, %v4396
  %v4432 = vsel %vm4417, %v4350, %v4398
  %v4433 = vsel %vm4417, %v4352, %v4400
  %v4434 = vlaneseq
  %v4435 = vshrl.u32 %v4434, 7
  %v4436 = vsub.s32 7, %v4435
  %v4437 = vrot.slane %v73, %v4436
  %v4438 = vmul.f32 %v4418, %v4437
  %v4439 = vmul.f32 %v4419, %v4437
  %v4440 = vmul.f32 %v4420, %v4437
  %v4441 = vmul.f32 %v4421, %v4437
  %v4442 = vmul.f32 %v4422, %v4437
  %v4443 = vmul.f32 %v4423, %v4437
  %v4444 = vmul.f32 %v4424, %v4437
  %v4445 = vmul.f32 %v4425, %v4437
  %v4446 = vmul.f32 %v4426, %v4437
  %v4447 = vmul.f32 %v4427, %v4437
  %v4448 = vmul.f32 %v4428, %v4437
  %v4449 = vmul.f32 %v4429, %v4437
  %v4450 = vmul.f32 %v4430, %v4437
  %v4451 = vmul.f32 %v4431, %v4437
  %v4452 = vmul.f32 %v4432, %v4437
  %v4453 = vmul.f32 %v4433, %v4437
  %v4454 = vadd.f32 %v4289, %v4438
  %v4455 = vadd.f32 %v4290, %v4439
  %v4456 = vadd.f32 %v4291, %v4440
  %v4457 = vadd.f32 %v4292, %v4441
  %v4458 = vadd.f32 %v4293, %v4442
  %v4459 = vadd.f32 %v4294, %v4443
  %v4460 = vadd.f32 %v4295, %v4444
  %v4461 = vadd.f32 %v4296, %v4445
  %v4462 = vadd.f32 %v4297, %v4446
  %v4463 = vadd.f32 %v4298, %v4447
  %v4464 = vadd.f32 %v4299, %v4448
  %v4465 = vadd.f32 %v4300, %v4449
  %v4466 = vadd.f32 %v4301, %v4450
  %v4467 = vadd.f32 %v4302, %v4451
  %v4468 = vadd.f32 %v4303, %v4452
  %v4469 = vadd.f32 %v4304, %v4453
  %4486 = vrot.lane.b32.xlu0 %v2122, 125
  %v4487 = vpop.permute.xlu0 %4486
  %4488 = vrot.lane.b32.xlu0 %v2127, 125
  %v4489 = vpop.permute.xlu0 %4488
  %4490 = vrot.lane.b32.xlu0 %v2132, 125
  %v4491 = vpop.permute.xlu0 %4490
  %4492 = vrot.lane.b32.xlu0 %v2137, 125
  %v4493 = vpop.permute.xlu0 %4492
  %4494 = vrot.lane.b32.xlu0 %v2142, 125
  %v4495 = vpop.permute.xlu0 %4494
  %4496 = vrot.lane.b32.xlu0 %v2147, 125
  %v4497 = vpop.permute.xlu0 %4496
  %4498 = vrot.lane.b32.xlu0 %v2152, 125
  %v4499 = vpop.permute.xlu0 %4498
  %4500 = vrot.lane.b32.xlu0 %v2157, 125
  %v4501 = vpop.permute.xlu0 %4500
  %4502 = vrot.lane.b32.xlu0 %v2162, 125
  %v4503 = vpop.permute.xlu0 %4502
  %4504 = vrot.lane.b32.xlu0 %v2167, 125
  %v4505 = vpop.permute.xlu0 %4504
  %4506 = vrot.lane.b32.xlu0 %v2172, 125
  %v4507 = vpop.permute.xlu0 %4506
  %4508 = vrot.lane.b32.xlu0 %v2177, 125
  %v4509 = vpop.permute.xlu0 %4508
  %4510 = vrot.lane.b32.xlu0 %v2182, 125
  %v4511 = vpop.permute.xlu0 %4510
  %4512 = vrot.lane.b32.xlu0 %v2187, 125
  %v4513 = vpop.permute.xlu0 %4512
  %4514 = vrot.lane.b32.xlu0 %v2192, 125
  %v4515 = vpop.permute.xlu0 %4514
  %4516 = vrot.lane.b32.xlu0 %v2197, 125
  %v4517 = vpop.permute.xlu0 %4516
  %4534 = vrot.lane.b32.xlu0 %v2122, 29
  %v4535 = vpop.permute.xlu0 %4534
  %4536 = vrot.lane.b32.xlu0 %v2127, 29
  %v4537 = vpop.permute.xlu0 %4536
  %4538 = vrot.lane.b32.xlu0 %v2132, 29
  %v4539 = vpop.permute.xlu0 %4538
  %4540 = vrot.lane.b32.xlu0 %v2137, 29
  %v4541 = vpop.permute.xlu0 %4540
  %4542 = vrot.lane.b32.xlu0 %v2142, 29
  %v4543 = vpop.permute.xlu0 %4542
  %4544 = vrot.lane.b32.xlu0 %v2147, 29
  %v4545 = vpop.permute.xlu0 %4544
  %4546 = vrot.lane.b32.xlu0 %v2152, 29
  %v4547 = vpop.permute.xlu0 %4546
  %4548 = vrot.lane.b32.xlu0 %v2157, 29
  %v4549 = vpop.permute.xlu0 %4548
  %4550 = vrot.lane.b32.xlu0 %v2162, 29
  %v4551 = vpop.permute.xlu0 %4550
  %4552 = vrot.lane.b32.xlu0 %v2167, 29
  %v4553 = vpop.permute.xlu0 %4552
  %4554 = vrot.lane.b32.xlu0 %v2172, 29
  %v4555 = vpop.permute.xlu0 %4554
  %4556 = vrot.lane.b32.xlu0 %v2177, 29
  %v4557 = vpop.permute.xlu0 %4556
  %4558 = vrot.lane.b32.xlu0 %v2182, 29
  %v4559 = vpop.permute.xlu0 %4558
  %4560 = vrot.lane.b32.xlu0 %v2187, 29
  %v4561 = vpop.permute.xlu0 %4560
  %4562 = vrot.lane.b32.xlu0 %v2192, 29
  %v4563 = vpop.permute.xlu0 %4562
  %4564 = vrot.lane.b32.xlu0 %v2197, 29
  %v4565 = vpop.permute.xlu0 %4564
  %vm4582 = vcmask 236544
  %v4583 = vsel %vm4582, %v4487, %v4535
  %v4584 = vsel %vm4582, %v4489, %v4537
  %v4585 = vsel %vm4582, %v4491, %v4539
  %v4586 = vsel %vm4582, %v4493, %v4541
  %v4587 = vsel %vm4582, %v4495, %v4543
  %v4588 = vsel %vm4582, %v4497, %v4545
  %v4589 = vsel %vm4582, %v4499, %v4547
  %v4590 = vsel %vm4582, %v4501, %v4549
  %v4591 = vsel %vm4582, %v4503, %v4551
  %v4592 = vsel %vm4582, %v4505, %v4553
  %v4593 = vsel %vm4582, %v4507, %v4555
  %v4594 = vsel %vm4582, %v4509, %v4557
  %v4595 = vsel %vm4582, %v4511, %v4559
  %v4596 = vsel %vm4582, %v4513, %v4561
  %v4597 = vsel %vm4582, %v4515, %v4563
  %v4598 = vsel %vm4582, %v4517, %v4565
  %v4599 = vlaneseq
  %v4600 = vshrl.u32 %v4599, 7
  %v4601 = vsub.s32 6, %v4600
  %v4602 = vrot.slane %v73, %v4601
  %v4603 = vmul.f32 %v4583, %v4602
  %v4604 = vmul.f32 %v4584, %v4602
  %v4605 = vmul.f32 %v4585, %v4602
  %v4606 = vmul.f32 %v4586, %v4602
  %v4607 = vmul.f32 %v4587, %v4602
  %v4608 = vmul.f32 %v4588, %v4602
  %v4609 = vmul.f32 %v4589, %v4602
  %v4610 = vmul.f32 %v4590, %v4602
  %v4611 = vmul.f32 %v4591, %v4602
  %v4612 = vmul.f32 %v4592, %v4602
  %v4613 = vmul.f32 %v4593, %v4602
  %v4614 = vmul.f32 %v4594, %v4602
  %v4615 = vmul.f32 %v4595, %v4602
  %v4616 = vmul.f32 %v4596, %v4602
  %v4617 = vmul.f32 %v4597, %v4602
  %v4618 = vmul.f32 %v4598, %v4602
  %v4619 = vadd.f32 %v4454, %v4603
  %v4620 = vadd.f32 %v4455, %v4604
  %v4621 = vadd.f32 %v4456, %v4605
  %v4622 = vadd.f32 %v4457, %v4606
  %v4623 = vadd.f32 %v4458, %v4607
  %v4624 = vadd.f32 %v4459, %v4608
  %v4625 = vadd.f32 %v4460, %v4609
  %v4626 = vadd.f32 %v4461, %v4610
  %v4627 = vadd.f32 %v4462, %v4611
  %v4628 = vadd.f32 %v4463, %v4612
  %v4629 = vadd.f32 %v4464, %v4613
  %v4630 = vadd.f32 %v4465, %v4614
  %v4631 = vadd.f32 %v4466, %v4615
  %v4632 = vadd.f32 %v4467, %v4616
  %v4633 = vadd.f32 %v4468, %v4617
  %v4634 = vadd.f32 %v4469, %v4618
  %4651 = vrot.lane.b32.xlu0 %v2522, 127
  %v4652 = vpop.permute.xlu0 %4651
  %4653 = vrot.lane.b32.xlu0 %v2527, 127
  %v4654 = vpop.permute.xlu0 %4653
  %4655 = vrot.lane.b32.xlu0 %v2532, 127
  %v4656 = vpop.permute.xlu0 %4655
  %4657 = vrot.lane.b32.xlu0 %v2537, 127
  %v4658 = vpop.permute.xlu0 %4657
  %4659 = vrot.lane.b32.xlu0 %v2542, 127
  %v4660 = vpop.permute.xlu0 %4659
  %4661 = vrot.lane.b32.xlu0 %v2547, 127
  %v4662 = vpop.permute.xlu0 %4661
  %4663 = vrot.lane.b32.xlu0 %v2552, 127
  %v4664 = vpop.permute.xlu0 %4663
  %4665 = vrot.lane.b32.xlu0 %v2557, 127
  %v4666 = vpop.permute.xlu0 %4665
  %4667 = vrot.lane.b32.xlu0 %v2562, 127
  %v4668 = vpop.permute.xlu0 %4667
  %4669 = vrot.lane.b32.xlu0 %v2567, 127
  %v4670 = vpop.permute.xlu0 %4669
  %4671 = vrot.lane.b32.xlu0 %v2572, 127
  %v4672 = vpop.permute.xlu0 %4671
  %4673 = vrot.lane.b32.xlu0 %v2577, 127
  %v4674 = vpop.permute.xlu0 %4673
  %4675 = vrot.lane.b32.xlu0 %v2582, 127
  %v4676 = vpop.permute.xlu0 %4675
  %4677 = vrot.lane.b32.xlu0 %v2587, 127
  %v4678 = vpop.permute.xlu0 %4677
  %4679 = vrot.lane.b32.xlu0 %v2592, 127
  %v4680 = vpop.permute.xlu0 %4679
  %4681 = vrot.lane.b32.xlu0 %v2597, 127
  %v4682 = vpop.permute.xlu0 %4681
  %4699 = vrot.lane.b32.xlu0 %v2522, 31
  %v4700 = vpop.permute.xlu0 %4699
  %4701 = vrot.lane.b32.xlu0 %v2527, 31
  %v4702 = vpop.permute.xlu0 %4701
  %4703 = vrot.lane.b32.xlu0 %v2532, 31
  %v4704 = vpop.permute.xlu0 %4703
  %4705 = vrot.lane.b32.xlu0 %v2537, 31
  %v4706 = vpop.permute.xlu0 %4705
  %4707 = vrot.lane.b32.xlu0 %v2542, 31
  %v4708 = vpop.permute.xlu0 %4707
  %4709 = vrot.lane.b32.xlu0 %v2547, 31
  %v4710 = vpop.permute.xlu0 %4709
  %4711 = vrot.lane.b32.xlu0 %v2552, 31
  %v4712 = vpop.permute.xlu0 %4711
  %4713 = vrot.lane.b32.xlu0 %v2557, 31
  %v4714 = vpop.permute.xlu0 %4713
  %4715 = vrot.lane.b32.xlu0 %v2562, 31
  %v4716 = vpop.permute.xlu0 %4715
  %4717 = vrot.lane.b32.xlu0 %v2567, 31
  %v4718 = vpop.permute.xlu0 %4717
  %4719 = vrot.lane.b32.xlu0 %v2572, 31
  %v4720 = vpop.permute.xlu0 %4719
  %4721 = vrot.lane.b32.xlu0 %v2577, 31
  %v4722 = vpop.permute.xlu0 %4721
  %4723 = vrot.lane.b32.xlu0 %v2582, 31
  %v4724 = vpop.permute.xlu0 %4723
  %4725 = vrot.lane.b32.xlu0 %v2587, 31
  %v4726 = vpop.permute.xlu0 %4725
  %4727 = vrot.lane.b32.xlu0 %v2592, 31
  %v4728 = vpop.permute.xlu0 %4727
  %4729 = vrot.lane.b32.xlu0 %v2597, 31
  %v4730 = vpop.permute.xlu0 %4729
  %v4747 = vsel %vm3767, %v4652, %v4700
  %v4748 = vsel %vm3767, %v4654, %v4702
  %v4749 = vsel %vm3767, %v4656, %v4704
  %v4750 = vsel %vm3767, %v4658, %v4706
  %v4751 = vsel %vm3767, %v4660, %v4708
  %v4752 = vsel %vm3767, %v4662, %v4710
  %v4753 = vsel %vm3767, %v4664, %v4712
  %v4754 = vsel %vm3767, %v4666, %v4714
  %v4755 = vsel %vm3767, %v4668, %v4716
  %v4756 = vsel %vm3767, %v4670, %v4718
  %v4757 = vsel %vm3767, %v4672, %v4720
  %v4758 = vsel %vm3767, %v4674, %v4722
  %v4759 = vsel %vm3767, %v4676, %v4724
  %v4760 = vsel %vm3767, %v4678, %v4726
  %v4761 = vsel %vm3767, %v4680, %v4728
  %v4762 = vsel %vm3767, %v4682, %v4730
  %v4763 = vmul.f32 %v4747, %v3787
  %v4764 = vmul.f32 %v4748, %v3787
  %v4765 = vmul.f32 %v4749, %v3787
  %v4766 = vmul.f32 %v4750, %v3787
  %v4767 = vmul.f32 %v4751, %v3787
  %v4768 = vmul.f32 %v4752, %v3787
  %v4769 = vmul.f32 %v4753, %v3787
  %v4770 = vmul.f32 %v4754, %v3787
  %v4771 = vmul.f32 %v4755, %v3787
  %v4772 = vmul.f32 %v4756, %v3787
  %v4773 = vmul.f32 %v4757, %v3787
  %v4774 = vmul.f32 %v4758, %v3787
  %v4775 = vmul.f32 %v4759, %v3787
  %v4776 = vmul.f32 %v4760, %v3787
  %v4777 = vmul.f32 %v4761, %v3787
  %v4778 = vmul.f32 %v4762, %v3787
  %v4779 = vadd.f32 %v2682, %v4763
  %v4780 = vadd.f32 %v2687, %v4764
  %v4781 = vadd.f32 %v2692, %v4765
  %v4782 = vadd.f32 %v2697, %v4766
  %v4783 = vadd.f32 %v2702, %v4767
  %v4784 = vadd.f32 %v2707, %v4768
  %v4785 = vadd.f32 %v2712, %v4769
  %v4786 = vadd.f32 %v2717, %v4770
  %v4787 = vadd.f32 %v2722, %v4771
  %v4788 = vadd.f32 %v2727, %v4772
  %v4789 = vadd.f32 %v2732, %v4773
  %v4790 = vadd.f32 %v2737, %v4774
  %v4791 = vadd.f32 %v2742, %v4775
  %v4792 = vadd.f32 %v2747, %v4776
  %v4793 = vadd.f32 %v2752, %v4777
  %v4794 = vadd.f32 %v2757, %v4778
  %4811 = vrot.lane.b32.xlu0 %v2042, 124
  %v4812 = vpop.permute.xlu0 %4811
  %4813 = vrot.lane.b32.xlu0 %v2047, 124
  %v4814 = vpop.permute.xlu0 %4813
  %4815 = vrot.lane.b32.xlu0 %v2052, 124
  %v4816 = vpop.permute.xlu0 %4815
  %4817 = vrot.lane.b32.xlu0 %v2057, 124
  %v4818 = vpop.permute.xlu0 %4817
  %4819 = vrot.lane.b32.xlu0 %v2062, 124
  %v4820 = vpop.permute.xlu0 %4819
  %4821 = vrot.lane.b32.xlu0 %v2067, 124
  %v4822 = vpop.permute.xlu0 %4821
  %4823 = vrot.lane.b32.xlu0 %v2072, 124
  %v4824 = vpop.permute.xlu0 %4823
  %4825 = vrot.lane.b32.xlu0 %v2077, 124
  %v4826 = vpop.permute.xlu0 %4825
  %4827 = vrot.lane.b32.xlu0 %v2082, 124
  %v4828 = vpop.permute.xlu0 %4827
  %4829 = vrot.lane.b32.xlu0 %v2087, 124
  %v4830 = vpop.permute.xlu0 %4829
  %4831 = vrot.lane.b32.xlu0 %v2092, 124
  %v4832 = vpop.permute.xlu0 %4831
  %4833 = vrot.lane.b32.xlu0 %v2097, 124
  %v4834 = vpop.permute.xlu0 %4833
  %4835 = vrot.lane.b32.xlu0 %v2102, 124
  %v4836 = vpop.permute.xlu0 %4835
  %4837 = vrot.lane.b32.xlu0 %v2107, 124
  %v4838 = vpop.permute.xlu0 %4837
  %4839 = vrot.lane.b32.xlu0 %v2112, 124
  %v4840 = vpop.permute.xlu0 %4839
  %4841 = vrot.lane.b32.xlu0 %v2117, 124
  %v4842 = vpop.permute.xlu0 %4841
  %4859 = vrot.lane.b32.xlu0 %v2042, 28
  %v4860 = vpop.permute.xlu0 %4859
  %4861 = vrot.lane.b32.xlu0 %v2047, 28
  %v4862 = vpop.permute.xlu0 %4861
  %4863 = vrot.lane.b32.xlu0 %v2052, 28
  %v4864 = vpop.permute.xlu0 %4863
  %4865 = vrot.lane.b32.xlu0 %v2057, 28
  %v4866 = vpop.permute.xlu0 %4865
  %4867 = vrot.lane.b32.xlu0 %v2062, 28
  %v4868 = vpop.permute.xlu0 %4867
  %4869 = vrot.lane.b32.xlu0 %v2067, 28
  %v4870 = vpop.permute.xlu0 %4869
  %4871 = vrot.lane.b32.xlu0 %v2072, 28
  %v4872 = vpop.permute.xlu0 %4871
  %4873 = vrot.lane.b32.xlu0 %v2077, 28
  %v4874 = vpop.permute.xlu0 %4873
  %4875 = vrot.lane.b32.xlu0 %v2082, 28
  %v4876 = vpop.permute.xlu0 %4875
  %4877 = vrot.lane.b32.xlu0 %v2087, 28
  %v4878 = vpop.permute.xlu0 %4877
  %4879 = vrot.lane.b32.xlu0 %v2092, 28
  %v4880 = vpop.permute.xlu0 %4879
  %4881 = vrot.lane.b32.xlu0 %v2097, 28
  %v4882 = vpop.permute.xlu0 %4881
  %4883 = vrot.lane.b32.xlu0 %v2102, 28
  %v4884 = vpop.permute.xlu0 %4883
  %4885 = vrot.lane.b32.xlu0 %v2107, 28
  %v4886 = vpop.permute.xlu0 %4885
  %4887 = vrot.lane.b32.xlu0 %v2112, 28
  %v4888 = vpop.permute.xlu0 %4887
  %4889 = vrot.lane.b32.xlu0 %v2117, 28
  %v4890 = vpop.permute.xlu0 %4889
  %v4907 = vsel %vm4417, %v4812, %v4860
  %v4908 = vsel %vm4417, %v4814, %v4862
  %v4909 = vsel %vm4417, %v4816, %v4864
  %v4910 = vsel %vm4417, %v4818, %v4866
  %v4911 = vsel %vm4417, %v4820, %v4868
  %v4912 = vsel %vm4417, %v4822, %v4870
  %v4913 = vsel %vm4417, %v4824, %v4872
  %v4914 = vsel %vm4417, %v4826, %v4874
  %v4915 = vsel %vm4417, %v4828, %v4876
  %v4916 = vsel %vm4417, %v4830, %v4878
  %v4917 = vsel %vm4417, %v4832, %v4880
  %v4918 = vsel %vm4417, %v4834, %v4882
  %v4919 = vsel %vm4417, %v4836, %v4884
  %v4920 = vsel %vm4417, %v4838, %v4886
  %v4921 = vsel %vm4417, %v4840, %v4888
  %v4922 = vsel %vm4417, %v4842, %v4890
  %v4923 = vmul.f32 %v4907, %v4437
  %v4924 = vmul.f32 %v4908, %v4437
  %v4925 = vmul.f32 %v4909, %v4437
  %v4926 = vmul.f32 %v4910, %v4437
  %v4927 = vmul.f32 %v4911, %v4437
  %v4928 = vmul.f32 %v4912, %v4437
  %v4929 = vmul.f32 %v4913, %v4437
  %v4930 = vmul.f32 %v4914, %v4437
  %v4931 = vmul.f32 %v4915, %v4437
  %v4932 = vmul.f32 %v4916, %v4437
  %v4933 = vmul.f32 %v4917, %v4437
  %v4934 = vmul.f32 %v4918, %v4437
  %v4935 = vmul.f32 %v4919, %v4437
  %v4936 = vmul.f32 %v4920, %v4437
  %v4937 = vmul.f32 %v4921, %v4437
  %v4938 = vmul.f32 %v4922, %v4437
  %v4939 = vadd.f32 %v4779, %v4923
  %v4940 = vadd.f32 %v4780, %v4924
  %v4941 = vadd.f32 %v4781, %v4925
  %v4942 = vadd.f32 %v4782, %v4926
  %v4943 = vadd.f32 %v4783, %v4927
  %v4944 = vadd.f32 %v4784, %v4928
  %v4945 = vadd.f32 %v4785, %v4929
  %v4946 = vadd.f32 %v4786, %v4930
  %v4947 = vadd.f32 %v4787, %v4931
  %v4948 = vadd.f32 %v4788, %v4932
  %v4949 = vadd.f32 %v4789, %v4933
  %v4950 = vadd.f32 %v4790, %v4934
  %v4951 = vadd.f32 %v4791, %v4935
  %v4952 = vadd.f32 %v4792, %v4936
  %v4953 = vadd.f32 %v4793, %v4937
  %v4954 = vadd.f32 %v4794, %v4938
  %4971 = vrot.lane.b32.xlu0 %v1882, 123
  %v4972 = vpop.permute.xlu0 %4971
  %4973 = vrot.lane.b32.xlu0 %v1887, 123
  %v4974 = vpop.permute.xlu0 %4973
  %4975 = vrot.lane.b32.xlu0 %v1892, 123
  %v4976 = vpop.permute.xlu0 %4975
  %4977 = vrot.lane.b32.xlu0 %v1897, 123
  %v4978 = vpop.permute.xlu0 %4977
  %4979 = vrot.lane.b32.xlu0 %v1902, 123
  %v4980 = vpop.permute.xlu0 %4979
  %4981 = vrot.lane.b32.xlu0 %v1907, 123
  %v4982 = vpop.permute.xlu0 %4981
  %4983 = vrot.lane.b32.xlu0 %v1912, 123
  %v4984 = vpop.permute.xlu0 %4983
  %4985 = vrot.lane.b32.xlu0 %v1917, 123
  %v4986 = vpop.permute.xlu0 %4985
  %4987 = vrot.lane.b32.xlu0 %v1922, 123
  %v4988 = vpop.permute.xlu0 %4987
  %4989 = vrot.lane.b32.xlu0 %v1927, 123
  %v4990 = vpop.permute.xlu0 %4989
  %4991 = vrot.lane.b32.xlu0 %v1932, 123
  %v4992 = vpop.permute.xlu0 %4991
  %4993 = vrot.lane.b32.xlu0 %v1937, 123
  %v4994 = vpop.permute.xlu0 %4993
  %4995 = vrot.lane.b32.xlu0 %v1942, 123
  %v4996 = vpop.permute.xlu0 %4995
  %4997 = vrot.lane.b32.xlu0 %v1947, 123
  %v4998 = vpop.permute.xlu0 %4997
  %4999 = vrot.lane.b32.xlu0 %v1952, 123
  %v5000 = vpop.permute.xlu0 %4999
  %5001 = vrot.lane.b32.xlu0 %v1957, 123
  %v5002 = vpop.permute.xlu0 %5001
  %5019 = vrot.lane.b32.xlu0 %v1882, 27
  %v5020 = vpop.permute.xlu0 %5019
  %5021 = vrot.lane.b32.xlu0 %v1887, 27
  %v5022 = vpop.permute.xlu0 %5021
  %5023 = vrot.lane.b32.xlu0 %v1892, 27
  %v5024 = vpop.permute.xlu0 %5023
  %5025 = vrot.lane.b32.xlu0 %v1897, 27
  %v5026 = vpop.permute.xlu0 %5025
  %5027 = vrot.lane.b32.xlu0 %v1902, 27
  %v5028 = vpop.permute.xlu0 %5027
  %5029 = vrot.lane.b32.xlu0 %v1907, 27
  %v5030 = vpop.permute.xlu0 %5029
  %5031 = vrot.lane.b32.xlu0 %v1912, 27
  %v5032 = vpop.permute.xlu0 %5031
  %5033 = vrot.lane.b32.xlu0 %v1917, 27
  %v5034 = vpop.permute.xlu0 %5033
  %5035 = vrot.lane.b32.xlu0 %v1922, 27
  %v5036 = vpop.permute.xlu0 %5035
  %5037 = vrot.lane.b32.xlu0 %v1927, 27
  %v5038 = vpop.permute.xlu0 %5037
  %5039 = vrot.lane.b32.xlu0 %v1932, 27
  %v5040 = vpop.permute.xlu0 %5039
  %5041 = vrot.lane.b32.xlu0 %v1937, 27
  %v5042 = vpop.permute.xlu0 %5041
  %5043 = vrot.lane.b32.xlu0 %v1942, 27
  %v5044 = vpop.permute.xlu0 %5043
  %5045 = vrot.lane.b32.xlu0 %v1947, 27
  %v5046 = vpop.permute.xlu0 %5045
  %5047 = vrot.lane.b32.xlu0 %v1952, 27
  %v5048 = vpop.permute.xlu0 %5047
  %5049 = vrot.lane.b32.xlu0 %v1957, 27
  %v5050 = vpop.permute.xlu0 %5049
  %vm5067 = vcmask 220160
  %v5068 = vsel %vm5067, %v4972, %v5020
  %v5069 = vsel %vm5067, %v4974, %v5022
  %v5070 = vsel %vm5067, %v4976, %v5024
  %v5071 = vsel %vm5067, %v4978, %v5026
  %v5072 = vsel %vm5067, %v4980, %v5028
  %v5073 = vsel %vm5067, %v4982, %v5030
  %v5074 = vsel %vm5067, %v4984, %v5032
  %v5075 = vsel %vm5067, %v4986, %v5034
  %v5076 = vsel %vm5067, %v4988, %v5036
  %v5077 = vsel %vm5067, %v4990, %v5038
  %v5078 = vsel %vm5067, %v4992, %v5040
  %v5079 = vsel %vm5067, %v4994, %v5042
  %v5080 = vsel %vm5067, %v4996, %v5044
  %v5081 = vsel %vm5067, %v4998, %v5046
  %v5082 = vsel %vm5067, %v5000, %v5048
  %v5083 = vsel %vm5067, %v5002, %v5050
  %v5084 = vlaneseq
  %v5085 = vshrl.u32 %v5084, 7
  %v5086 = vsub.s32 0, %v5085
  %v5087 = vrot.slane %v74, %v5086
  %v5088 = vmul.f32 %v5068, %v5087
  %v5089 = vmul.f32 %v5069, %v5087
  %v5090 = vmul.f32 %v5070, %v5087
  %v5091 = vmul.f32 %v5071, %v5087
  %v5092 = vmul.f32 %v5072, %v5087
  %v5093 = vmul.f32 %v5073, %v5087
  %v5094 = vmul.f32 %v5074, %v5087
  %v5095 = vmul.f32 %v5075, %v5087
  %v5096 = vmul.f32 %v5076, %v5087
  %v5097 = vmul.f32 %v5077, %v5087
  %v5098 = vmul.f32 %v5078, %v5087
  %v5099 = vmul.f32 %v5079, %v5087
  %v5100 = vmul.f32 %v5080, %v5087
  %v5101 = vmul.f32 %v5081, %v5087
  %v5102 = vmul.f32 %v5082, %v5087
  %v5103 = vmul.f32 %v5083, %v5087
  %v5104 = vadd.f32 %v4939, %v5088
  %v5105 = vadd.f32 %v4940, %v5089
  %v5106 = vadd.f32 %v4941, %v5090
  %v5107 = vadd.f32 %v4942, %v5091
  %v5108 = vadd.f32 %v4943, %v5092
  %v5109 = vadd.f32 %v4944, %v5093
  %v5110 = vadd.f32 %v4945, %v5094
  %v5111 = vadd.f32 %v4946, %v5095
  %v5112 = vadd.f32 %v4947, %v5096
  %v5113 = vadd.f32 %v4948, %v5097
  %v5114 = vadd.f32 %v4949, %v5098
  %v5115 = vadd.f32 %v4950, %v5099
  %v5116 = vadd.f32 %v4951, %v5100
  %v5117 = vadd.f32 %v4952, %v5101
  %v5118 = vadd.f32 %v4953, %v5102
  %v5119 = vadd.f32 %v4954, %v5103
  %v5120 = vld [vmem:[%s7] sm:$0xff]
  %v5121 = vld [vmem:[%s7 + $0x8] sm:$0xff]
  %v5122 = vld [vmem:[%s7 + $0x10] sm:$0xff]
  %v5123 = vld [vmem:[%s7 + $0x18] sm:$0xff]
  %v5124 = vld [vmem:[%s7 + $0x20] sm:$0xff]
  %v5125 = vld [vmem:[%s7 + $0x28] sm:$0xff]
  %v5126 = vld [vmem:[%s7 + $0x30] sm:$0xff]
  %v5127 = vld [vmem:[%s7 + $0x38] sm:$0xff]
  %5144 = vrot.lane.b32.xlu0 %v4129, 16
  %v5145 = vpop.permute.xlu0 %5144
  %5146 = vrot.lane.b32.xlu0 %v4130, 16
  %v5147 = vpop.permute.xlu0 %5146
  %5148 = vrot.lane.b32.xlu0 %v4131, 16
  %v5149 = vpop.permute.xlu0 %5148
  %5150 = vrot.lane.b32.xlu0 %v4132, 16
  %v5151 = vpop.permute.xlu0 %5150
  %5152 = vrot.lane.b32.xlu0 %v4133, 16
  %v5153 = vpop.permute.xlu0 %5152
  %5154 = vrot.lane.b32.xlu0 %v4134, 16
  %v5155 = vpop.permute.xlu0 %5154
  %5156 = vrot.lane.b32.xlu0 %v4135, 16
  %v5157 = vpop.permute.xlu0 %5156
  %5158 = vrot.lane.b32.xlu0 %v4136, 16
  %v5159 = vpop.permute.xlu0 %5158
  %5160 = vrot.lane.b32.xlu0 %v4137, 16
  %v5161 = vpop.permute.xlu0 %5160
  %5162 = vrot.lane.b32.xlu0 %v4138, 16
  %v5163 = vpop.permute.xlu0 %5162
  %5164 = vrot.lane.b32.xlu0 %v4139, 16
  %v5165 = vpop.permute.xlu0 %5164
  %5166 = vrot.lane.b32.xlu0 %v4140, 16
  %v5167 = vpop.permute.xlu0 %5166
  %5168 = vrot.lane.b32.xlu0 %v4141, 16
  %v5169 = vpop.permute.xlu0 %5168
  %5170 = vrot.lane.b32.xlu0 %v4142, 16
  %v5171 = vpop.permute.xlu0 %5170
  %5172 = vrot.lane.b32.xlu0 %v4143, 16
  %v5173 = vpop.permute.xlu0 %5172
  %5174 = vrot.lane.b32.xlu0 %v4144, 16
  %v5175 = vpop.permute.xlu0 %5174
  %5208 = vrot.lane.b32.xlu0 %v4619, 32
  %v5209 = vpop.permute.xlu0 %5208
  %5210 = vrot.lane.b32.xlu0 %v4620, 32
  %v5211 = vpop.permute.xlu0 %5210
  %5212 = vrot.lane.b32.xlu0 %v4621, 32
  %v5213 = vpop.permute.xlu0 %5212
  %5214 = vrot.lane.b32.xlu0 %v4622, 32
  %v5215 = vpop.permute.xlu0 %5214
  %5216 = vrot.lane.b32.xlu0 %v4623, 32
  %v5217 = vpop.permute.xlu0 %5216
  %5218 = vrot.lane.b32.xlu0 %v4624, 32
  %v5219 = vpop.permute.xlu0 %5218
  %5220 = vrot.lane.b32.xlu0 %v4625, 32
  %v5221 = vpop.permute.xlu0 %5220
  %5222 = vrot.lane.b32.xlu0 %v4626, 32
  %v5223 = vpop.permute.xlu0 %5222
  %5224 = vrot.lane.b32.xlu0 %v4627, 32
  %v5225 = vpop.permute.xlu0 %5224
  %5226 = vrot.lane.b32.xlu0 %v4628, 32
  %v5227 = vpop.permute.xlu0 %5226
  %5228 = vrot.lane.b32.xlu0 %v4629, 32
  %v5229 = vpop.permute.xlu0 %5228
  %5230 = vrot.lane.b32.xlu0 %v4630, 32
  %v5231 = vpop.permute.xlu0 %5230
  %5232 = vrot.lane.b32.xlu0 %v4631, 32
  %v5233 = vpop.permute.xlu0 %5232
  %5234 = vrot.lane.b32.xlu0 %v4632, 32
  %v5235 = vpop.permute.xlu0 %5234
  %5236 = vrot.lane.b32.xlu0 %v4633, 32
  %v5237 = vpop.permute.xlu0 %5236
  %5238 = vrot.lane.b32.xlu0 %v4634, 32
  %v5239 = vpop.permute.xlu0 %5238
  %5272 = vrot.lane.b32.xlu0 %v5104, 48
  %v5273 = vpop.permute.xlu0 %5272
  %5274 = vrot.lane.b32.xlu0 %v5105, 48
  %v5275 = vpop.permute.xlu0 %5274
  %5276 = vrot.lane.b32.xlu0 %v5106, 48
  %v5277 = vpop.permute.xlu0 %5276
  %5278 = vrot.lane.b32.xlu0 %v5107, 48
  %v5279 = vpop.permute.xlu0 %5278
  %5280 = vrot.lane.b32.xlu0 %v5108, 48
  %v5281 = vpop.permute.xlu0 %5280
  %5282 = vrot.lane.b32.xlu0 %v5109, 48
  %v5283 = vpop.permute.xlu0 %5282
  %5284 = vrot.lane.b32.xlu0 %v5110, 48
  %v5285 = vpop.permute.xlu0 %5284
  %5286 = vrot.lane.b32.xlu0 %v5111, 48
  %v5287 = vpop.permute.xlu0 %5286
  %5288 = vrot.lane.b32.xlu0 %v5112, 48
  %v5289 = vpop.permute.xlu0 %5288
  %5290 = vrot.lane.b32.xlu0 %v5113, 48
  %v5291 = vpop.permute.xlu0 %5290
  %5292 = vrot.lane.b32.xlu0 %v5114, 48
  %v5293 = vpop.permute.xlu0 %5292
  %5294 = vrot.lane.b32.xlu0 %v5115, 48
  %v5295 = vpop.permute.xlu0 %5294
  %5296 = vrot.lane.b32.xlu0 %v5116, 48
  %v5297 = vpop.permute.xlu0 %5296
  %5298 = vrot.lane.b32.xlu0 %v5117, 48
  %v5299 = vpop.permute.xlu0 %5298
  %5300 = vrot.lane.b32.xlu0 %v5118, 48
  %v5301 = vpop.permute.xlu0 %5300
  %5302 = vrot.lane.b32.xlu0 %v5119, 48
  %v5303 = vpop.permute.xlu0 %5302
  %vm5320 = vcmask 130048
  %v5321 = vsel %vm5320, %v3639, %v5145
  %v5322 = vsel %vm5320, %v3640, %v5147
  %v5323 = vsel %vm5320, %v3641, %v5149
  %v5324 = vsel %vm5320, %v3642, %v5151
  %v5325 = vsel %vm5320, %v3643, %v5153
  %v5326 = vsel %vm5320, %v3644, %v5155
  %v5327 = vsel %vm5320, %v3645, %v5157
  %v5328 = vsel %vm5320, %v3646, %v5159
  %v5329 = vsel %vm5320, %v3647, %v5161
  %v5330 = vsel %vm5320, %v3648, %v5163
  %v5331 = vsel %vm5320, %v3649, %v5165
  %v5332 = vsel %vm5320, %v3650, %v5167
  %v5333 = vsel %vm5320, %v3651, %v5169
  %v5334 = vsel %vm5320, %v3652, %v5171
  %v5335 = vsel %vm5320, %v3653, %v5173
  %v5336 = vsel %vm5320, %v3654, %v5175
  %v5337 = vsel %vm406, %v5321, %v5209
  %v5338 = vsel %vm406, %v5322, %v5211
  %v5339 = vsel %vm406, %v5323, %v5213
  %v5340 = vsel %vm406, %v5324, %v5215
  %v5341 = vsel %vm406, %v5325, %v5217
  %v5342 = vsel %vm406, %v5326, %v5219
  %v5343 = vsel %vm406, %v5327, %v5221
  %v5344 = vsel %vm406, %v5328, %v5223
  %v5345 = vsel %vm406, %v5329, %v5225
  %v5346 = vsel %vm406, %v5330, %v5227
  %v5347 = vsel %vm406, %v5331, %v5229
  %v5348 = vsel %vm406, %v5332, %v5231
  %v5349 = vsel %vm406, %v5333, %v5233
  %v5350 = vsel %vm406, %v5334, %v5235
  %v5351 = vsel %vm406, %v5335, %v5237
  %v5352 = vsel %vm406, %v5336, %v5239
  %vm5353 = vcmask 392192
  %v5354 = vsel %vm5353, %v5337, %v5273
  %v5355 = vsel %vm5353, %v5338, %v5275
  %v5356 = vsel %vm5353, %v5339, %v5277
  %v5357 = vsel %vm5353, %v5340, %v5279
  %v5358 = vsel %vm5353, %v5341, %v5281
  %v5359 = vsel %vm5353, %v5342, %v5283
  %v5360 = vsel %vm5353, %v5343, %v5285
  %v5361 = vsel %vm5353, %v5344, %v5287
  %v5362 = vsel %vm5353, %v5345, %v5289
  %v5363 = vsel %vm5353, %v5346, %v5291
  %v5364 = vsel %vm5353, %v5347, %v5293
  %v5365 = vsel %vm5353, %v5348, %v5295
  %v5366 = vsel %vm5353, %v5349, %v5297
  %v5367 = vsel %vm5353, %v5350, %v5299
  %v5368 = vsel %vm5353, %v5351, %v5301
  %v5369 = vsel %vm5353, %v5352, %v5303
  %vm5370 = vcmask 523264
  %v5372 = vsel %vm5370, %v5354, 0
  %v5375 = vsel %vm5370, %v5355, 0
  %v5378 = vsel %vm5370, %v5356, 0
  %v5381 = vsel %vm5370, %v5357, 0
  %v5384 = vsel %vm5370, %v5358, 0
  %v5387 = vsel %vm5370, %v5359, 0
  %v5390 = vsel %vm5370, %v5360, 0
  %v5393 = vsel %vm5370, %v5361, 0
  %v5396 = vsel %vm5370, %v5362, 0
  %v5399 = vsel %vm5370, %v5363, 0
  %v5402 = vsel %vm5370, %v5364, 0
  %v5405 = vsel %vm5370, %v5365, 0
  %v5408 = vsel %vm5370, %v5366, 0
  %v5411 = vsel %vm5370, %v5367, 0
  %v5414 = vsel %vm5370, %v5368, 0
  %v5417 = vsel %vm5370, %v5369, 0
  %5419 = vmatprep.subr.mxu0 0.0
  %5420 = vmatpush1.msra.mxu0 %v5120
  %5421 = vmatprep.subr.mxu0 0.0
  %5422 = vmatpush1.msra.mxu0 %v5121
  %5423 = vmatprep.subr.mxu0 0.0
  %5424 = vmatpush1.msra.mxu0 %v5122
  %5425 = vmatprep.subr.mxu0 0.0
  %5426 = vmatpush1.msra.mxu0 %v5123
  %5427 = vmatprep.subr.mxu0 0.0
  %5428 = vmatpush1.msra.mxu0 %v5124
  %5429 = vmatprep.subr.mxu0 0.0
  %5430 = vmatpush1.msra.mxu0 %v5125
  %5431 = vmatprep.subr.mxu0 0.0
  %5432 = vmatpush1.msra.mxu0 %v5126
  %5433 = vmatprep.subr.mxu0 0.0
  %5434 = vmatpush1.msra.mxu0 %v5127
  %5435 = vmatprep.subr.mxu0 0.0
  %5436 = vmatpush1.msra.mxu0 0.0
  %5437 = vmatprep.subr.mxu0 0.0
  %5438 = vmatpush1.msra.mxu0 0.0
  %5439 = vmatprep.subr.mxu0 0.0
  %5440 = vmatpush1.msra.mxu0 0.0
  %5441 = vmatprep.subr.mxu0 0.0
  %5442 = vmatpush1.msra.mxu0 0.0
  %5443 = vmatprep.subr.mxu0 0.0
  %5444 = vmatpush1.msra.mxu0 0.0
  %5445 = vmatprep.subr.mxu0 0.0
  %5446 = vmatpush1.msra.mxu0 0.0
  %5447 = vmatprep.subr.mxu0 0.0
  %5448 = vmatpush1.msra.mxu0 0.0
  %5449 = vmatprep.subr.mxu0 0.0
  %5450 = vmatpush1.msra.mxu0 0.0
  %5451 = vmatprep.subr.mxu0 0.0
  %5452 = vmatpush1.msra.mxu0 0.0
  %5453 = vmatprep.subr.mxu0 0.0
  %5454 = vmatpush1.msra.mxu0 0.0
  %5455 = vmatprep.subr.mxu0 0.0
  %5456 = vmatpush1.msra.mxu0 0.0
  %5457 = vmatprep.subr.mxu0 0.0
  %5458 = vmatpush1.msra.mxu0 0.0
  %5459 = vmatprep.subr.mxu0 0.0
  %5460 = vmatpush1.msra.mxu0 0.0
  %5461 = vmatprep.subr.mxu0 0.0
  %5462 = vmatpush1.msra.mxu0 0.0
  %5463 = vmatprep.subr.mxu0 0.0
  %5464 = vmatpush1.msra.mxu0 0.0
  %5465 = vmatprep.subr.mxu0 0.0
  %5466 = vmatpush1.msra.mxu0 0.0
  %5467 = vmatprep.subr.mxu0 0.0
  %5468 = vmatpush1.msra.mxu0 0.0
  %5469 = vmatprep.subr.mxu0 0.0
  %5470 = vmatpush1.msra.mxu0 0.0
  %5471 = vmatprep.subr.mxu0 0.0
  %5472 = vmatpush1.msra.mxu0 0.0
  %5473 = vmatprep.subr.mxu0 0.0
  %5474 = vmatpush1.msra.mxu0 0.0
  %5475 = vmatprep.subr.mxu0 0.0
  %5476 = vmatpush1.msra.mxu0 0.0
  %5477 = vmatprep.subr.mxu0 0.0
  %5478 = vmatpush1.msra.mxu0 0.0
  %5479 = vmatprep.subr.mxu0 0.0
  %5480 = vmatpush1.msra.mxu0 0.0
  %5481 = vmatprep.subr.mxu0 0.0
  %5482 = vmatpush1.msra.mxu0 0.0
  %5483 = vmatprep.mubr.f32.mxu0 0.0
  %5484 = vmatmul.mubr.f32.gmra.mrb[0].mxu0 %v5372
  %v5485 = vpop.f32.mrb[0].mxu0
  %v5486 = vadd.f32 0.0, %v5485
  %v5487 = vpop.f32.mrb[0].mxu0
  %5488 = vmatprep.mubr.f32.mxu0 0.0
  %5489 = vmatmul.mubr.f32.gmra.mrb[0].mxu0 %v5375
  %v5490 = vpop.f32.mrb[0].mxu0
  %v5491 = vadd.f32 0.0, %v5490
  %v5492 = vpop.f32.mrb[0].mxu0
  %5493 = vmatprep.mubr.f32.mxu0 0.0
  %5494 = vmatmul.mubr.f32.gmra.mrb[0].mxu0 %v5378
  %v5495 = vpop.f32.mrb[0].mxu0
  %v5496 = vadd.f32 0.0, %v5495
  %v5497 = vpop.f32.mrb[0].mxu0
  %5498 = vmatprep.mubr.f32.mxu0 0.0
  %5499 = vmatmul.mubr.f32.gmra.mrb[0].mxu0 %v5381
  %v5500 = vpop.f32.mrb[0].mxu0
  %v5501 = vadd.f32 0.0, %v5500
  %v5502 = vpop.f32.mrb[0].mxu0
  %5503 = vmatprep.mubr.f32.mxu0 0.0
  %5504 = vmatmul.mubr.f32.gmra.mrb[0].mxu0 %v5384
  %v5505 = vpop.f32.mrb[0].mxu0
  %v5506 = vadd.f32 0.0, %v5505
  %v5507 = vpop.f32.mrb[0].mxu0
  %5508 = vmatprep.mubr.f32.mxu0 0.0
  %5509 = vmatmul.mubr.f32.gmra.mrb[0].mxu0 %v5387
  %v5510 = vpop.f32.mrb[0].mxu0
  %v5511 = vadd.f32 0.0, %v5510
  %v5512 = vpop.f32.mrb[0].mxu0
  %5513 = vmatprep.mubr.f32.mxu0 0.0
  %5514 = vmatmul.mubr.f32.gmra.mrb[0].mxu0 %v5390
  %v5515 = vpop.f32.mrb[0].mxu0
  %v5516 = vadd.f32 0.0, %v5515
  %v5517 = vpop.f32.mrb[0].mxu0
  %5518 = vmatprep.mubr.f32.mxu0 0.0
  %5519 = vmatmul.mubr.f32.gmra.mrb[0].mxu0 %v5393
  %v5520 = vpop.f32.mrb[0].mxu0
  %v5521 = vadd.f32 0.0, %v5520
  %v5522 = vpop.f32.mrb[0].mxu0
  %5523 = vmatprep.mubr.f32.mxu0 0.0
  %5524 = vmatmul.mubr.f32.gmra.mrb[0].mxu0 %v5396
  %v5525 = vpop.f32.mrb[0].mxu0
  %v5526 = vadd.f32 0.0, %v5525
  %v5527 = vpop.f32.mrb[0].mxu0
  %5528 = vmatprep.mubr.f32.mxu0 0.0
  %5529 = vmatmul.mubr.f32.gmra.mrb[0].mxu0 %v5399
  %v5530 = vpop.f32.mrb[0].mxu0
  %v5531 = vadd.f32 0.0, %v5530
  %v5532 = vpop.f32.mrb[0].mxu0
  %5533 = vmatprep.mubr.f32.mxu0 0.0
  %5534 = vmatmul.mubr.f32.gmra.mrb[0].mxu0 %v5402
  %v5535 = vpop.f32.mrb[0].mxu0
  %v5536 = vadd.f32 0.0, %v5535
  %v5537 = vpop.f32.mrb[0].mxu0
  %5538 = vmatprep.mubr.f32.mxu0 0.0
  %5539 = vmatmul.mubr.f32.gmra.mrb[0].mxu0 %v5405
  %v5540 = vpop.f32.mrb[0].mxu0
  %v5541 = vadd.f32 0.0, %v5540
  %v5542 = vpop.f32.mrb[0].mxu0
  %5543 = vmatprep.mubr.f32.mxu0 0.0
  %5544 = vmatmul.mubr.f32.gmra.mrb[0].mxu0 %v5408
  %v5545 = vpop.f32.mrb[0].mxu0
  %v5546 = vadd.f32 0.0, %v5545
  %v5547 = vpop.f32.mrb[0].mxu0
  %5548 = vmatprep.mubr.f32.mxu0 0.0
  %5549 = vmatmul.mubr.f32.gmra.mrb[0].mxu0 %v5411
  %v5550 = vpop.f32.mrb[0].mxu0
  %v5551 = vadd.f32 0.0, %v5550
  %v5552 = vpop.f32.mrb[0].mxu0
  %5553 = vmatprep.mubr.f32.mxu0 0.0
  %5554 = vmatmul.mubr.f32.gmra.mrb[0].mxu0 %v5414
  %v5555 = vpop.f32.mrb[0].mxu0
  %v5556 = vadd.f32 0.0, %v5555
  %v5557 = vpop.f32.mrb[0].mxu0
  %5558 = vmatprep.mubr.f32.mxu0 0.0
  %5559 = vmatmul.mubr.f32.gmra.mrb[0].mxu0 %v5417
  %v5560 = vpop.f32.mrb[0].mxu0
  %v5561 = vadd.f32 0.0, %v5560
  %v5562 = vpop.f32.mrb[0].mxu0
  %5563 = vdwg.mxu0
  %5580 = vrot.lane.b32.xlu0 %v3639, 112
  %v5581 = vpop.permute.xlu0 %5580
  %5582 = vrot.lane.b32.xlu0 %v3640, 112
  %v5583 = vpop.permute.xlu0 %5582
  %5584 = vrot.lane.b32.xlu0 %v3641, 112
  %v5585 = vpop.permute.xlu0 %5584
  %5586 = vrot.lane.b32.xlu0 %v3642, 112
  %v5587 = vpop.permute.xlu0 %5586
  %5588 = vrot.lane.b32.xlu0 %v3643, 112
  %v5589 = vpop.permute.xlu0 %5588
  %5590 = vrot.lane.b32.xlu0 %v3644, 112
  %v5591 = vpop.permute.xlu0 %5590
  %5592 = vrot.lane.b32.xlu0 %v3645, 112
  %v5593 = vpop.permute.xlu0 %5592
  %5594 = vrot.lane.b32.xlu0 %v3646, 112
  %v5595 = vpop.permute.xlu0 %5594
  %5596 = vrot.lane.b32.xlu0 %v3647, 112
  %v5597 = vpop.permute.xlu0 %5596
  %5598 = vrot.lane.b32.xlu0 %v3648, 112
  %v5599 = vpop.permute.xlu0 %5598
  %5600 = vrot.lane.b32.xlu0 %v3649, 112
  %v5601 = vpop.permute.xlu0 %5600
  %5602 = vrot.lane.b32.xlu0 %v3650, 112
  %v5603 = vpop.permute.xlu0 %5602
  %5604 = vrot.lane.b32.xlu0 %v3651, 112
  %v5605 = vpop.permute.xlu0 %5604
  %5606 = vrot.lane.b32.xlu0 %v3652, 112
  %v5607 = vpop.permute.xlu0 %5606
  %5608 = vrot.lane.b32.xlu0 %v3653, 112
  %v5609 = vpop.permute.xlu0 %5608
  %5610 = vrot.lane.b32.xlu0 %v3654, 112
  %v5611 = vpop.permute.xlu0 %5610
  %5628 = vrot.lane.b32.xlu0 %v4619, 16
  %v5629 = vpop.permute.xlu0 %5628
  %5630 = vrot.lane.b32.xlu0 %v4620, 16
  %v5631 = vpop.permute.xlu0 %5630
  %5632 = vrot.lane.b32.xlu0 %v4621, 16
  %v5633 = vpop.permute.xlu0 %5632
  %5634 = vrot.lane.b32.xlu0 %v4622, 16
  %v5635 = vpop.permute.xlu0 %5634
  %5636 = vrot.lane.b32.xlu0 %v4623, 16
  %v5637 = vpop.permute.xlu0 %5636
  %5638 = vrot.lane.b32.xlu0 %v4624, 16
  %v5639 = vpop.permute.xlu0 %5638
  %5640 = vrot.lane.b32.xlu0 %v4625, 16
  %v5641 = vpop.permute.xlu0 %5640
  %5642 = vrot.lane.b32.xlu0 %v4626, 16
  %v5643 = vpop.permute.xlu0 %5642
  %5644 = vrot.lane.b32.xlu0 %v4627, 16
  %v5645 = vpop.permute.xlu0 %5644
  %5646 = vrot.lane.b32.xlu0 %v4628, 16
  %v5647 = vpop.permute.xlu0 %5646
  %5648 = vrot.lane.b32.xlu0 %v4629, 16
  %v5649 = vpop.permute.xlu0 %5648
  %5650 = vrot.lane.b32.xlu0 %v4630, 16
  %v5651 = vpop.permute.xlu0 %5650
  %5652 = vrot.lane.b32.xlu0 %v4631, 16
  %v5653 = vpop.permute.xlu0 %5652
  %5654 = vrot.lane.b32.xlu0 %v4632, 16
  %v5655 = vpop.permute.xlu0 %5654
  %5656 = vrot.lane.b32.xlu0 %v4633, 16
  %v5657 = vpop.permute.xlu0 %5656
  %5658 = vrot.lane.b32.xlu0 %v4634, 16
  %v5659 = vpop.permute.xlu0 %5658
  %5676 = vrot.lane.b32.xlu0 %v5104, 32
  %v5677 = vpop.permute.xlu0 %5676
  %5678 = vrot.lane.b32.xlu0 %v5105, 32
  %v5679 = vpop.permute.xlu0 %5678
  %5680 = vrot.lane.b32.xlu0 %v5106, 32
  %v5681 = vpop.permute.xlu0 %5680
  %5682 = vrot.lane.b32.xlu0 %v5107, 32
  %v5683 = vpop.permute.xlu0 %5682
  %5684 = vrot.lane.b32.xlu0 %v5108, 32
  %v5685 = vpop.permute.xlu0 %5684
  %5686 = vrot.lane.b32.xlu0 %v5109, 32
  %v5687 = vpop.permute.xlu0 %5686
  %5688 = vrot.lane.b32.xlu0 %v5110, 32
  %v5689 = vpop.permute.xlu0 %5688
  %5690 = vrot.lane.b32.xlu0 %v5111, 32
  %v5691 = vpop.permute.xlu0 %5690
  %5692 = vrot.lane.b32.xlu0 %v5112, 32
  %v5693 = vpop.permute.xlu0 %5692
  %5694 = vrot.lane.b32.xlu0 %v5113, 32
  %v5695 = vpop.permute.xlu0 %5694
  %5696 = vrot.lane.b32.xlu0 %v5114, 32
  %v5697 = vpop.permute.xlu0 %5696
  %5698 = vrot.lane.b32.xlu0 %v5115, 32
  %v5699 = vpop.permute.xlu0 %5698
  %5700 = vrot.lane.b32.xlu0 %v5116, 32
  %v5701 = vpop.permute.xlu0 %5700
  %5702 = vrot.lane.b32.xlu0 %v5117, 32
  %v5703 = vpop.permute.xlu0 %5702
  %5704 = vrot.lane.b32.xlu0 %v5118, 32
  %v5705 = vpop.permute.xlu0 %5704
  %5706 = vrot.lane.b32.xlu0 %v5119, 32
  %v5707 = vpop.permute.xlu0 %5706
  %v5724 = vsel %vm5320, %v5581, %v4129
  %v5725 = vsel %vm5320, %v5583, %v4130
  %v5726 = vsel %vm5320, %v5585, %v4131
  %v5727 = vsel %vm5320, %v5587, %v4132
  %v5728 = vsel %vm5320, %v5589, %v4133
  %v5729 = vsel %vm5320, %v5591, %v4134
  %v5730 = vsel %vm5320, %v5593, %v4135
  %v5731 = vsel %vm5320, %v5595, %v4136
  %v5732 = vsel %vm5320, %v5597, %v4137
  %v5733 = vsel %vm5320, %v5599, %v4138
  %v5734 = vsel %vm5320, %v5601, %v4139
  %v5735 = vsel %vm5320, %v5603, %v4140
  %v5736 = vsel %vm5320, %v5605, %v4141
  %v5737 = vsel %vm5320, %v5607, %v4142
  %v5738 = vsel %vm5320, %v5609, %v4143
  %v5739 = vsel %vm5320, %v5611, %v4144
  %v5740 = vsel %vm406, %v5724, %v5629
  %v5741 = vsel %vm406, %v5725, %v5631
  %v5742 = vsel %vm406, %v5726, %v5633
  %v5743 = vsel %vm406, %v5727, %v5635
  %v5744 = vsel %vm406, %v5728, %v5637
  %v5745 = vsel %vm406, %v5729, %v5639
  %v5746 = vsel %vm406, %v5730, %v5641
  %v5747 = vsel %vm406, %v5731, %v5643
  %v5748 = vsel %vm406, %v5732, %v5645
  %v5749 = vsel %vm406, %v5733, %v5647
  %v5750 = vsel %vm406, %v5734, %v5649
  %v5751 = vsel %vm406, %v5735, %v5651
  %v5752 = vsel %vm406, %v5736, %v5653
  %v5753 = vsel %vm406, %v5737, %v5655
  %v5754 = vsel %vm406, %v5738, %v5657
  %v5755 = vsel %vm406, %v5739, %v5659
  %v5756 = vsel %vm5353, %v5740, %v5677
  %v5757 = vsel %vm5353, %v5741, %v5679
  %v5758 = vsel %vm5353, %v5742, %v5681
  %v5759 = vsel %vm5353, %v5743, %v5683
  %v5760 = vsel %vm5353, %v5744, %v5685
  %v5761 = vsel %vm5353, %v5745, %v5687
  %v5762 = vsel %vm5353, %v5746, %v5689
  %v5763 = vsel %vm5353, %v5747, %v5691
  %v5764 = vsel %vm5353, %v5748, %v5693
  %v5765 = vsel %vm5353, %v5749, %v5695
  %v5766 = vsel %vm5353, %v5750, %v5697
  %v5767 = vsel %vm5353, %v5751, %v5699
  %v5768 = vsel %vm5353, %v5752, %v5701
  %v5769 = vsel %vm5353, %v5753, %v5703
  %v5770 = vsel %vm5353, %v5754, %v5705
  %v5771 = vsel %vm5353, %v5755, %v5707
  %v5773 = vsel %vm5370, %v5756, 0
  %v5776 = vsel %vm5370, %v5757, 0
  %v5779 = vsel %vm5370, %v5758, 0
  %v5782 = vsel %vm5370, %v5759, 0
  %v5785 = vsel %vm5370, %v5760, 0
  %v5788 = vsel %vm5370, %v5761, 0
  %v5791 = vsel %vm5370, %v5762, 0
  %v5794 = vsel %vm5370, %v5763, 0
  %v5797 = vsel %vm5370, %v5764, 0
  %v5800 = vsel %vm5370, %v5765, 0
  %v5803 = vsel %vm5370, %v5766, 0
  %v5806 = vsel %vm5370, %v5767, 0
  %v5809 = vsel %vm5370, %v5768, 0
  %v5812 = vsel %vm5370, %v5769, 0
  %v5815 = vsel %vm5370, %v5770, 0
  %v5818 = vsel %vm5370, %v5771, 0
  %5820 = vmatprep.subr.mxu0 0.0
  %5821 = vmatpush1.msra.mxu0 %v5120
  %5822 = vmatprep.subr.mxu0 0.0
  %5823 = vmatpush1.msra.mxu0 %v5121
  %5824 = vmatprep.subr.mxu0 0.0
  %5825 = vmatpush1.msra.mxu0 %v5122
  %5826 = vmatprep.subr.mxu0 0.0
  %5827 = vmatpush1.msra.mxu0 %v5123
  %5828 = vmatprep.subr.mxu0 0.0
  %5829 = vmatpush1.msra.mxu0 %v5124
  %5830 = vmatprep.subr.mxu0 0.0
  %5831 = vmatpush1.msra.mxu0 %v5125
  %5832 = vmatprep.subr.mxu0 0.0
  %5833 = vmatpush1.msra.mxu0 %v5126
  %5834 = vmatprep.subr.mxu0 0.0
  %5835 = vmatpush1.msra.mxu0 %v5127
  %5836 = vmatprep.subr.mxu0 0.0
  %5837 = vmatpush1.msra.mxu0 0.0
  %5838 = vmatprep.subr.mxu0 0.0
  %5839 = vmatpush1.msra.mxu0 0.0
  %5840 = vmatprep.subr.mxu0 0.0
  %5841 = vmatpush1.msra.mxu0 0.0
  %5842 = vmatprep.subr.mxu0 0.0
  %5843 = vmatpush1.msra.mxu0 0.0
  %5844 = vmatprep.subr.mxu0 0.0
  %5845 = vmatpush1.msra.mxu0 0.0
  %5846 = vmatprep.subr.mxu0 0.0
  %5847 = vmatpush1.msra.mxu0 0.0
  %5848 = vmatprep.subr.mxu0 0.0
  %5849 = vmatpush1.msra.mxu0 0.0
  %5850 = vmatprep.subr.mxu0 0.0
  %5851 = vmatpush1.msra.mxu0 0.0
  %5852 = vmatprep.subr.mxu0 0.0
  %5853 = vmatpush1.msra.mxu0 0.0
  %5854 = vmatprep.subr.mxu0 0.0
  %5855 = vmatpush1.msra.mxu0 0.0
  %5856 = vmatprep.subr.mxu0 0.0
  %5857 = vmatpush1.msra.mxu0 0.0
  %5858 = vmatprep.subr.mxu0 0.0
  %5859 = vmatpush1.msra.mxu0 0.0
  %5860 = vmatprep.subr.mxu0 0.0
  %5861 = vmatpush1.msra.mxu0 0.0
  %5862 = vmatprep.subr.mxu0 0.0
  %5863 = vmatpush1.msra.mxu0 0.0
  %5864 = vmatprep.subr.mxu0 0.0
  %5865 = vmatpush1.msra.mxu0 0.0
  %5866 = vmatprep.subr.mxu0 0.0
  %5867 = vmatpush1.msra.mxu0 0.0
  %5868 = vmatprep.subr.mxu0 0.0
  %5869 = vmatpush1.msra.mxu0 0.0
  %5870 = vmatprep.subr.mxu0 0.0
  %5871 = vmatpush1.msra.mxu0 0.0
  %5872 = vmatprep.subr.mxu0 0.0
  %5873 = vmatpush1.msra.mxu0 0.0
  %5874 = vmatprep.subr.mxu0 0.0
  %5875 = vmatpush1.msra.mxu0 0.0
  %5876 = vmatprep.subr.mxu0 0.0
  %5877 = vmatpush1.msra.mxu0 0.0
  %5878 = vmatprep.subr.mxu0 0.0
  %5879 = vmatpush1.msra.mxu0 0.0
  %5880 = vmatprep.subr.mxu0 0.0
  %5881 = vmatpush1.msra.mxu0 0.0
  %5882 = vmatprep.subr.mxu0 0.0
  %5883 = vmatpush1.msra.mxu0 0.0
  %5884 = vmatprep.mubr.f32.mxu0 0.0
  %5885 = vmatmul.mubr.f32.gmra.mrb[0].mxu0 %v5773
  %v5886 = vpop.f32.mrb[0].mxu0
  %v5887 = vadd.f32 0.0, %v5886
  %v5888 = vpop.f32.mrb[0].mxu0
  %5889 = vmatprep.mubr.f32.mxu0 0.0
  %5890 = vmatmul.mubr.f32.gmra.mrb[0].mxu0 %v5776
  %v5891 = vpop.f32.mrb[0].mxu0
  %v5892 = vadd.f32 0.0, %v5891
  %v5893 = vpop.f32.mrb[0].mxu0
  %5894 = vmatprep.mubr.f32.mxu0 0.0
  %5895 = vmatmul.mubr.f32.gmra.mrb[0].mxu0 %v5779
  %v5896 = vpop.f32.mrb[0].mxu0
  %v5897 = vadd.f32 0.0, %v5896
  %v5898 = vpop.f32.mrb[0].mxu0
  %5899 = vmatprep.mubr.f32.mxu0 0.0
  %5900 = vmatmul.mubr.f32.gmra.mrb[0].mxu0 %v5782
  %v5901 = vpop.f32.mrb[0].mxu0
  %v5902 = vadd.f32 0.0, %v5901
  %v5903 = vpop.f32.mrb[0].mxu0
  %5904 = vmatprep.mubr.f32.mxu0 0.0
  %5905 = vmatmul.mubr.f32.gmra.mrb[0].mxu0 %v5785
  %v5906 = vpop.f32.mrb[0].mxu0
  %v5907 = vadd.f32 0.0, %v5906
  %v5908 = vpop.f32.mrb[0].mxu0
  %5909 = vmatprep.mubr.f32.mxu0 0.0
  %5910 = vmatmul.mubr.f32.gmra.mrb[0].mxu0 %v5788
  %v5911 = vpop.f32.mrb[0].mxu0
  %v5912 = vadd.f32 0.0, %v5911
  %v5913 = vpop.f32.mrb[0].mxu0
  %5914 = vmatprep.mubr.f32.mxu0 0.0
  %5915 = vmatmul.mubr.f32.gmra.mrb[0].mxu0 %v5791
  %v5916 = vpop.f32.mrb[0].mxu0
  %v5917 = vadd.f32 0.0, %v5916
  %v5918 = vpop.f32.mrb[0].mxu0
  %5919 = vmatprep.mubr.f32.mxu0 0.0
  %5920 = vmatmul.mubr.f32.gmra.mrb[0].mxu0 %v5794
  %v5921 = vpop.f32.mrb[0].mxu0
  %v5922 = vadd.f32 0.0, %v5921
  %v5923 = vpop.f32.mrb[0].mxu0
  %5924 = vmatprep.mubr.f32.mxu0 0.0
  %5925 = vmatmul.mubr.f32.gmra.mrb[0].mxu0 %v5797
  %v5926 = vpop.f32.mrb[0].mxu0
  %v5927 = vadd.f32 0.0, %v5926
  %v5928 = vpop.f32.mrb[0].mxu0
  %5929 = vmatprep.mubr.f32.mxu0 0.0
  %5930 = vmatmul.mubr.f32.gmra.mrb[0].mxu0 %v5800
  %v5931 = vpop.f32.mrb[0].mxu0
  %v5932 = vadd.f32 0.0, %v5931
  %v5933 = vpop.f32.mrb[0].mxu0
  %5934 = vmatprep.mubr.f32.mxu0 0.0
  %5935 = vmatmul.mubr.f32.gmra.mrb[0].mxu0 %v5803
  %v5936 = vpop.f32.mrb[0].mxu0
  %v5937 = vadd.f32 0.0, %v5936
  %v5938 = vpop.f32.mrb[0].mxu0
  %5939 = vmatprep.mubr.f32.mxu0 0.0
  %5940 = vmatmul.mubr.f32.gmra.mrb[0].mxu0 %v5806
  %v5941 = vpop.f32.mrb[0].mxu0
  %v5942 = vadd.f32 0.0, %v5941
  %v5943 = vpop.f32.mrb[0].mxu0
  %5944 = vmatprep.mubr.f32.mxu0 0.0
  %5945 = vmatmul.mubr.f32.gmra.mrb[0].mxu0 %v5809
  %v5946 = vpop.f32.mrb[0].mxu0
  %v5947 = vadd.f32 0.0, %v5946
  %v5948 = vpop.f32.mrb[0].mxu0
  %5949 = vmatprep.mubr.f32.mxu0 0.0
  %5950 = vmatmul.mubr.f32.gmra.mrb[0].mxu0 %v5812
  %v5951 = vpop.f32.mrb[0].mxu0
  %v5952 = vadd.f32 0.0, %v5951
  %v5953 = vpop.f32.mrb[0].mxu0
  %5954 = vmatprep.mubr.f32.mxu0 0.0
  %5955 = vmatmul.mubr.f32.gmra.mrb[0].mxu0 %v5815
  %v5956 = vpop.f32.mrb[0].mxu0
  %v5957 = vadd.f32 0.0, %v5956
  %v5958 = vpop.f32.mrb[0].mxu0
  %5959 = vmatprep.mubr.f32.mxu0 0.0
  %5960 = vmatmul.mubr.f32.gmra.mrb[0].mxu0 %v5818
  %v5961 = vpop.f32.mrb[0].mxu0
  %v5962 = vadd.f32 0.0, %v5961
  %v5963 = vpop.f32.mrb[0].mxu0
  %5964 = vdwg.mxu0
  %5981 = vrot.lane.b32.xlu0 %v5887, 64
  %v5982 = vpop.permute.xlu0 %5981
  %5983 = vrot.lane.b32.xlu0 %v5892, 64
  %v5984 = vpop.permute.xlu0 %5983
  %5985 = vrot.lane.b32.xlu0 %v5897, 64
  %v5986 = vpop.permute.xlu0 %5985
  %5987 = vrot.lane.b32.xlu0 %v5902, 64
  %v5988 = vpop.permute.xlu0 %5987
  %5989 = vrot.lane.b32.xlu0 %v5907, 64
  %v5990 = vpop.permute.xlu0 %5989
  %5991 = vrot.lane.b32.xlu0 %v5912, 64
  %v5992 = vpop.permute.xlu0 %5991
  %5993 = vrot.lane.b32.xlu0 %v5917, 64
  %v5994 = vpop.permute.xlu0 %5993
  %5995 = vrot.lane.b32.xlu0 %v5922, 64
  %v5996 = vpop.permute.xlu0 %5995
  %5997 = vrot.lane.b32.xlu0 %v5927, 64
  %v5998 = vpop.permute.xlu0 %5997
  %5999 = vrot.lane.b32.xlu0 %v5932, 64
  %v6000 = vpop.permute.xlu0 %5999
  %6001 = vrot.lane.b32.xlu0 %v5937, 64
  %v6002 = vpop.permute.xlu0 %6001
  %6003 = vrot.lane.b32.xlu0 %v5942, 64
  %v6004 = vpop.permute.xlu0 %6003
  %6005 = vrot.lane.b32.xlu0 %v5947, 64
  %v6006 = vpop.permute.xlu0 %6005
  %6007 = vrot.lane.b32.xlu0 %v5952, 64
  %v6008 = vpop.permute.xlu0 %6007
  %6009 = vrot.lane.b32.xlu0 %v5957, 64
  %v6010 = vpop.permute.xlu0 %6009
  %6011 = vrot.lane.b32.xlu0 %v5962, 64
  %v6012 = vpop.permute.xlu0 %6011
  %v6029 = vsel %vm5370, %v5486, %v5982
  %v6030 = vsel %vm5370, %v5491, %v5984
  %v6031 = vsel %vm5370, %v5496, %v5986
  %v6032 = vsel %vm5370, %v5501, %v5988
  %v6033 = vsel %vm5370, %v5506, %v5990
  %v6034 = vsel %vm5370, %v5511, %v5992
  %v6035 = vsel %vm5370, %v5516, %v5994
  %v6036 = vsel %vm5370, %v5521, %v5996
  %v6037 = vsel %vm5370, %v5526, %v5998
  %v6038 = vsel %vm5370, %v5531, %v6000
  %v6039 = vsel %vm5370, %v5536, %v6002
  %v6040 = vsel %vm5370, %v5541, %v6004
  %v6041 = vsel %vm5370, %v5546, %v6006
  %v6042 = vsel %vm5370, %v5551, %v6008
  %v6043 = vsel %vm5370, %v5556, %v6010
  %v6044 = vsel %vm5370, %v5561, %v6012
  %6045 = vadd.xlane.f32.xlu0 %v6029
  %v6046 = vpop.xlane.xlu0 %6045
  %6047 = vadd.xlane.f32.xlu0 %v6030
  %v6048 = vpop.xlane.xlu0 %6047
  %6049 = vadd.xlane.f32.xlu0 %v6031
  %v6050 = vpop.xlane.xlu0 %6049
  %6051 = vadd.xlane.f32.xlu0 %v6032
  %v6052 = vpop.xlane.xlu0 %6051
  %6053 = vadd.xlane.f32.xlu0 %v6033
  %v6054 = vpop.xlane.xlu0 %6053
  %6055 = vadd.xlane.f32.xlu0 %v6034
  %v6056 = vpop.xlane.xlu0 %6055
  %6057 = vadd.xlane.f32.xlu0 %v6035
  %v6058 = vpop.xlane.xlu0 %6057
  %6059 = vadd.xlane.f32.xlu0 %v6036
  %v6060 = vpop.xlane.xlu0 %6059
  %6061 = vadd.xlane.f32.xlu0 %v6037
  %v6062 = vpop.xlane.xlu0 %6061
  %6063 = vadd.xlane.f32.xlu0 %v6038
  %v6064 = vpop.xlane.xlu0 %6063
  %6065 = vadd.xlane.f32.xlu0 %v6039
  %v6066 = vpop.xlane.xlu0 %6065
  %6067 = vadd.xlane.f32.xlu0 %v6040
  %v6068 = vpop.xlane.xlu0 %6067
  %6069 = vadd.xlane.f32.xlu0 %v6041
  %v6070 = vpop.xlane.xlu0 %6069
  %6071 = vadd.xlane.f32.xlu0 %v6042
  %v6072 = vpop.xlane.xlu0 %6071
  %6073 = vadd.xlane.f32.xlu0 %v6043
  %v6074 = vpop.xlane.xlu0 %6073
  %6075 = vadd.xlane.f32.xlu0 %v6044
  %v6076 = vpop.xlane.xlu0 %6075
  %v6077 = vmul.f32 %v6029, %v6029
  %v6078 = vmul.f32 %v6030, %v6030
  %v6079 = vmul.f32 %v6031, %v6031
  %v6080 = vmul.f32 %v6032, %v6032
  %v6081 = vmul.f32 %v6033, %v6033
  %v6082 = vmul.f32 %v6034, %v6034
  %v6083 = vmul.f32 %v6035, %v6035
  %v6084 = vmul.f32 %v6036, %v6036
  %v6085 = vmul.f32 %v6037, %v6037
  %v6086 = vmul.f32 %v6038, %v6038
  %v6087 = vmul.f32 %v6039, %v6039
  %v6088 = vmul.f32 %v6040, %v6040
  %v6089 = vmul.f32 %v6041, %v6041
  %v6090 = vmul.f32 %v6042, %v6042
  %v6091 = vmul.f32 %v6043, %v6043
  %v6092 = vmul.f32 %v6044, %v6044
  %6093 = vadd.xlane.f32.xlu0 %v6077
  %v6094 = vpop.xlane.xlu0 %6093
  %6095 = vadd.xlane.f32.xlu0 %v6078
  %v6096 = vpop.xlane.xlu0 %6095
  %6097 = vadd.xlane.f32.xlu0 %v6079
  %v6098 = vpop.xlane.xlu0 %6097
  %6099 = vadd.xlane.f32.xlu0 %v6080
  %v6100 = vpop.xlane.xlu0 %6099
  %6101 = vadd.xlane.f32.xlu0 %v6081
  %v6102 = vpop.xlane.xlu0 %6101
  %6103 = vadd.xlane.f32.xlu0 %v6082
  %v6104 = vpop.xlane.xlu0 %6103
  %6105 = vadd.xlane.f32.xlu0 %v6083
  %v6106 = vpop.xlane.xlu0 %6105
  %6107 = vadd.xlane.f32.xlu0 %v6084
  %v6108 = vpop.xlane.xlu0 %6107
  %6109 = vadd.xlane.f32.xlu0 %v6085
  %v6110 = vpop.xlane.xlu0 %6109
  %6111 = vadd.xlane.f32.xlu0 %v6086
  %v6112 = vpop.xlane.xlu0 %6111
  %6113 = vadd.xlane.f32.xlu0 %v6087
  %v6114 = vpop.xlane.xlu0 %6113
  %6115 = vadd.xlane.f32.xlu0 %v6088
  %v6116 = vpop.xlane.xlu0 %6115
  %6117 = vadd.xlane.f32.xlu0 %v6089
  %v6118 = vpop.xlane.xlu0 %6117
  %6119 = vadd.xlane.f32.xlu0 %v6090
  %v6120 = vpop.xlane.xlu0 %6119
  %6121 = vadd.xlane.f32.xlu0 %v6091
  %v6122 = vpop.xlane.xlu0 %6121
  %6123 = vadd.xlane.f32.xlu0 %v6092
  %v6124 = vpop.xlane.xlu0 %6123
  %v6125 = vmul.f32 %v6046, 0.0078125
  %v6126 = vmul.f32 %v6048, 0.0078125
  %v6127 = vmul.f32 %v6050, 0.0078125
  %v6128 = vmul.f32 %v6052, 0.0078125
  %v6129 = vmul.f32 %v6054, 0.0078125
  %v6130 = vmul.f32 %v6056, 0.0078125
  %v6131 = vmul.f32 %v6058, 0.0078125
  %v6132 = vmul.f32 %v6060, 0.0078125
  %v6133 = vmul.f32 %v6062, 0.0078125
  %v6134 = vmul.f32 %v6064, 0.0078125
  %v6135 = vmul.f32 %v6066, 0.0078125
  %v6136 = vmul.f32 %v6068, 0.0078125
  %v6137 = vmul.f32 %v6070, 0.0078125
  %v6138 = vmul.f32 %v6072, 0.0078125
  %v6139 = vmul.f32 %v6074, 0.0078125
  %v6140 = vmul.f32 %v6076, 0.0078125
  %v6141 = vmul.f32 %v6094, 0.0078125
  %v6142 = vmul.f32 %v6096, 0.0078125
  %v6143 = vmul.f32 %v6098, 0.0078125
  %v6144 = vmul.f32 %v6100, 0.0078125
  %v6145 = vmul.f32 %v6102, 0.0078125
  %v6146 = vmul.f32 %v6104, 0.0078125
  %v6147 = vmul.f32 %v6106, 0.0078125
  %v6148 = vmul.f32 %v6108, 0.0078125
  %v6149 = vmul.f32 %v6110, 0.0078125
  %v6150 = vmul.f32 %v6112, 0.0078125
  %v6151 = vmul.f32 %v6114, 0.0078125
  %v6152 = vmul.f32 %v6116, 0.0078125
  %v6153 = vmul.f32 %v6118, 0.0078125
  %v6154 = vmul.f32 %v6120, 0.0078125
  %v6155 = vmul.f32 %v6122, 0.0078125
  %v6156 = vmul.f32 %v6124, 0.0078125
  %v6157 = vmul.f32 %v6125, %v6125
  %v6158 = vmul.f32 %v6126, %v6126
  %v6159 = vmul.f32 %v6127, %v6127
  %v6160 = vmul.f32 %v6128, %v6128
  %v6161 = vmul.f32 %v6129, %v6129
  %v6162 = vmul.f32 %v6130, %v6130
  %v6163 = vmul.f32 %v6131, %v6131
  %v6164 = vmul.f32 %v6132, %v6132
  %v6165 = vmul.f32 %v6133, %v6133
  %v6166 = vmul.f32 %v6134, %v6134
  %v6167 = vmul.f32 %v6135, %v6135
  %v6168 = vmul.f32 %v6136, %v6136
  %v6169 = vmul.f32 %v6137, %v6137
  %v6170 = vmul.f32 %v6138, %v6138
  %v6171 = vmul.f32 %v6139, %v6139
  %v6172 = vmul.f32 %v6140, %v6140
  %v6173 = vsub.f32 %v6141, %v6157
  %v6174 = vsub.f32 %v6142, %v6158
  %v6175 = vsub.f32 %v6143, %v6159
  %v6176 = vsub.f32 %v6144, %v6160
  %v6177 = vsub.f32 %v6145, %v6161
  %v6178 = vsub.f32 %v6146, %v6162
  %v6179 = vsub.f32 %v6147, %v6163
  %v6180 = vsub.f32 %v6148, %v6164
  %v6181 = vsub.f32 %v6149, %v6165
  %v6182 = vsub.f32 %v6150, %v6166
  %v6183 = vsub.f32 %v6151, %v6167
  %v6184 = vsub.f32 %v6152, %v6168
  %v6185 = vsub.f32 %v6153, %v6169
  %v6186 = vsub.f32 %v6154, %v6170
  %v6187 = vsub.f32 %v6155, %v6171
  %v6188 = vsub.f32 %v6156, %v6172
  %v6189 = vadd.f32 %v6173, 1e-05
  %v6190 = vadd.f32 %v6174, 1e-05
  %v6191 = vadd.f32 %v6175, 1e-05
  %v6192 = vadd.f32 %v6176, 1e-05
  %v6193 = vadd.f32 %v6177, 1e-05
  %v6194 = vadd.f32 %v6178, 1e-05
  %v6195 = vadd.f32 %v6179, 1e-05
  %v6196 = vadd.f32 %v6180, 1e-05
  %v6197 = vadd.f32 %v6181, 1e-05
  %v6198 = vadd.f32 %v6182, 1e-05
  %v6199 = vadd.f32 %v6183, 1e-05
  %v6200 = vadd.f32 %v6184, 1e-05
  %v6201 = vadd.f32 %v6185, 1e-05
  %v6202 = vadd.f32 %v6186, 1e-05
  %v6203 = vadd.f32 %v6187, 1e-05
  %v6204 = vadd.f32 %v6188, 1e-05
  %v6205 = vrsqrt.pop %v6189
  %v6206 = vrsqrt.pop %v6190
  %v6207 = vrsqrt.pop %v6191
  %v6208 = vrsqrt.pop %v6192
  %v6209 = vrsqrt.pop %v6193
  %v6210 = vrsqrt.pop %v6194
  %v6211 = vrsqrt.pop %v6195
  %v6212 = vrsqrt.pop %v6196
  %v6213 = vrsqrt.pop %v6197
  %v6214 = vrsqrt.pop %v6198
  %v6215 = vrsqrt.pop %v6199
  %v6216 = vrsqrt.pop %v6200
  %v6217 = vrsqrt.pop %v6201
  %v6218 = vrsqrt.pop %v6202
  %v6219 = vrsqrt.pop %v6203
  %v6220 = vrsqrt.pop %v6204
  %v6221 = vmul.f32 %v41, %v6205
  %v6222 = vmul.f32 %v42, %v6206
  %v6223 = vmul.f32 %v43, %v6207
  %v6224 = vmul.f32 %v44, %v6208
  %v6225 = vmul.f32 %v45, %v6209
  %v6226 = vmul.f32 %v46, %v6210
  %v6227 = vmul.f32 %v47, %v6211
  %v6228 = vmul.f32 %v48, %v6212
  %v6229 = vmul.f32 %v49, %v6213
  %v6230 = vmul.f32 %v50, %v6214
  %v6231 = vmul.f32 %v51, %v6215
  %v6232 = vmul.f32 %v52, %v6216
  %v6233 = vmul.f32 %v53, %v6217
  %v6234 = vmul.f32 %v54, %v6218
  %v6235 = vmul.f32 %v55, %v6219
  %v6236 = vmul.f32 %v56, %v6220
  %v6237 = vsub.f32 %v6029, %v6125
  %v6238 = vsub.f32 %v6030, %v6126
  %v6239 = vsub.f32 %v6031, %v6127
  %v6240 = vsub.f32 %v6032, %v6128
  %v6241 = vsub.f32 %v6033, %v6129
  %v6242 = vsub.f32 %v6034, %v6130
  %v6243 = vsub.f32 %v6035, %v6131
  %v6244 = vsub.f32 %v6036, %v6132
  %v6245 = vsub.f32 %v6037, %v6133
  %v6246 = vsub.f32 %v6038, %v6134
  %v6247 = vsub.f32 %v6039, %v6135
  %v6248 = vsub.f32 %v6040, %v6136
  %v6249 = vsub.f32 %v6041, %v6137
  %v6250 = vsub.f32 %v6042, %v6138
  %v6251 = vsub.f32 %v6043, %v6139
  %v6252 = vsub.f32 %v6044, %v6140
  %6254 = vset.pattern.permute.xlu0 2
  %6255 = vperm.xlu0 %6254, %v6221
  %v6256 = vpop.permute.xlu0 %6255
  %6259 = vset.pattern.permute.xlu0 2
  %6260 = vperm.xlu0 %6259, %v6222
  %v6261 = vpop.permute.xlu0 %6260
  %6264 = vset.pattern.permute.xlu0 2
  %6265 = vperm.xlu0 %6264, %v6223
  %v6266 = vpop.permute.xlu0 %6265
  %6269 = vset.pattern.permute.xlu0 2
  %6270 = vperm.xlu0 %6269, %v6224
  %v6271 = vpop.permute.xlu0 %6270
  %6274 = vset.pattern.permute.xlu0 2
  %6275 = vperm.xlu0 %6274, %v6225
  %v6276 = vpop.permute.xlu0 %6275
  %6279 = vset.pattern.permute.xlu0 2
  %6280 = vperm.xlu0 %6279, %v6226
  %v6281 = vpop.permute.xlu0 %6280
  %6284 = vset.pattern.permute.xlu0 2
  %6285 = vperm.xlu0 %6284, %v6227
  %v6286 = vpop.permute.xlu0 %6285
  %6289 = vset.pattern.permute.xlu0 2
  %6290 = vperm.xlu0 %6289, %v6228
  %v6291 = vpop.permute.xlu0 %6290
  %6294 = vset.pattern.permute.xlu0 2
  %6295 = vperm.xlu0 %6294, %v6229
  %v6296 = vpop.permute.xlu0 %6295
  %6299 = vset.pattern.permute.xlu0 2
  %6300 = vperm.xlu0 %6299, %v6230
  %v6301 = vpop.permute.xlu0 %6300
  %6304 = vset.pattern.permute.xlu0 2
  %6305 = vperm.xlu0 %6304, %v6231
  %v6306 = vpop.permute.xlu0 %6305
  %6309 = vset.pattern.permute.xlu0 2
  %6310 = vperm.xlu0 %6309, %v6232
  %v6311 = vpop.permute.xlu0 %6310
  %6314 = vset.pattern.permute.xlu0 2
  %6315 = vperm.xlu0 %6314, %v6233
  %v6316 = vpop.permute.xlu0 %6315
  %6319 = vset.pattern.permute.xlu0 2
  %6320 = vperm.xlu0 %6319, %v6234
  %v6321 = vpop.permute.xlu0 %6320
  %6324 = vset.pattern.permute.xlu0 2
  %6325 = vperm.xlu0 %6324, %v6235
  %v6326 = vpop.permute.xlu0 %6325
  %6329 = vset.pattern.permute.xlu0 2
  %6330 = vperm.xlu0 %6329, %v6236
  %v6331 = vpop.permute.xlu0 %6330
  %v6333 = vmul.f32 %v6237, %v6256
  %v6334 = vmul.f32 %v6238, %v6261
  %v6335 = vmul.f32 %v6239, %v6266
  %v6336 = vmul.f32 %v6240, %v6271
  %v6337 = vmul.f32 %v6241, %v6276
  %v6338 = vmul.f32 %v6242, %v6281
  %v6339 = vmul.f32 %v6243, %v6286
  %v6340 = vmul.f32 %v6244, %v6291
  %v6341 = vmul.f32 %v6245, %v6296
  %v6342 = vmul.f32 %v6246, %v6301
  %v6343 = vmul.f32 %v6247, %v6306
  %v6344 = vmul.f32 %v6248, %v6311
  %v6345 = vmul.f32 %v6249, %v6316
  %v6346 = vmul.f32 %v6250, %v6321
  %v6347 = vmul.f32 %v6251, %v6326
  %v6348 = vmul.f32 %v6252, %v6331
  %6349 = vset.pattern.permute.xlu0 3
  %6350 = vperm.xlu0 %6349, %v41
  %v6351 = vpop.permute.xlu0 %6350
  %6353 = vset.pattern.permute.xlu0 3
  %6354 = vperm.xlu0 %6353, %v42
  %v6355 = vpop.permute.xlu0 %6354
  %6357 = vset.pattern.permute.xlu0 3
  %6358 = vperm.xlu0 %6357, %v43
  %v6359 = vpop.permute.xlu0 %6358
  %6361 = vset.pattern.permute.xlu0 3
  %6362 = vperm.xlu0 %6361, %v44
  %v6363 = vpop.permute.xlu0 %6362
  %6365 = vset.pattern.permute.xlu0 3
  %6366 = vperm.xlu0 %6365, %v45
  %v6367 = vpop.permute.xlu0 %6366
  %6369 = vset.pattern.permute.xlu0 3
  %6370 = vperm.xlu0 %6369, %v46
  %v6371 = vpop.permute.xlu0 %6370
  %6373 = vset.pattern.permute.xlu0 3
  %6374 = vperm.xlu0 %6373, %v47
  %v6375 = vpop.permute.xlu0 %6374
  %6377 = vset.pattern.permute.xlu0 3
  %6378 = vperm.xlu0 %6377, %v48
  %v6379 = vpop.permute.xlu0 %6378
  %6381 = vset.pattern.permute.xlu0 3
  %6382 = vperm.xlu0 %6381, %v49
  %v6383 = vpop.permute.xlu0 %6382
  %6385 = vset.pattern.permute.xlu0 3
  %6386 = vperm.xlu0 %6385, %v50
  %v6387 = vpop.permute.xlu0 %6386
  %6389 = vset.pattern.permute.xlu0 3
  %6390 = vperm.xlu0 %6389, %v51
  %v6391 = vpop.permute.xlu0 %6390
  %6393 = vset.pattern.permute.xlu0 3
  %6394 = vperm.xlu0 %6393, %v52
  %v6395 = vpop.permute.xlu0 %6394
  %6397 = vset.pattern.permute.xlu0 3
  %6398 = vperm.xlu0 %6397, %v53
  %v6399 = vpop.permute.xlu0 %6398
  %6401 = vset.pattern.permute.xlu0 3
  %6402 = vperm.xlu0 %6401, %v54
  %v6403 = vpop.permute.xlu0 %6402
  %6405 = vset.pattern.permute.xlu0 3
  %6406 = vperm.xlu0 %6405, %v55
  %v6407 = vpop.permute.xlu0 %6406
  %6409 = vset.pattern.permute.xlu0 3
  %6410 = vperm.xlu0 %6409, %v56
  %v6411 = vpop.permute.xlu0 %6410
  %v6413 = vadd.f32 %v6333, %v6351
  %v6414 = vadd.f32 %v6334, %v6355
  %v6415 = vadd.f32 %v6335, %v6359
  %v6416 = vadd.f32 %v6336, %v6363
  %v6417 = vadd.f32 %v6337, %v6367
  %v6418 = vadd.f32 %v6338, %v6371
  %v6419 = vadd.f32 %v6339, %v6375
  %v6420 = vadd.f32 %v6340, %v6379
  %v6421 = vadd.f32 %v6341, %v6383
  %v6422 = vadd.f32 %v6342, %v6387
  %v6423 = vadd.f32 %v6343, %v6391
  %v6424 = vadd.f32 %v6344, %v6395
  %v6425 = vadd.f32 %v6345, %v6399
  %v6426 = vadd.f32 %v6346, %v6403
  %v6427 = vadd.f32 %v6347, %v6407
  %v6428 = vadd.f32 %v6348, %v6411
  %v6429 = vmax.f32 %v6413, 0.0
  %v6430 = vmax.f32 %v6414, 0.0
  %v6431 = vmax.f32 %v6415, 0.0
  %v6432 = vmax.f32 %v6416, 0.0
  %v6433 = vmax.f32 %v6417, 0.0
  %v6434 = vmax.f32 %v6418, 0.0
  %v6435 = vmax.f32 %v6419, 0.0
  %v6436 = vmax.f32 %v6420, 0.0
  %v6437 = vmax.f32 %v6421, 0.0
  %v6438 = vmax.f32 %v6422, 0.0
  %v6439 = vmax.f32 %v6423, 0.0
  %v6440 = vmax.f32 %v6424, 0.0
  %v6441 = vmax.f32 %v6425, 0.0
  %v6442 = vmax.f32 %v6426, 0.0
  %v6443 = vmax.f32 %v6427, 0.0
  %v6444 = vmax.f32 %v6428, 0.0
  %v6445 = vld [vmem:[%s3] sm:$0xff]
  %v6446 = vld [vmem:[%s3 + $0x8] sm:$0xff]
  %v6447 = vld [vmem:[%s3 + $0x10] sm:$0xff]
  %v6448 = vld [vmem:[%s3 + $0x18] sm:$0xff]
  %v6449 = vld [vmem:[%s3 + $0x20] sm:$0xff]
  %v6450 = vld [vmem:[%s3 + $0x28] sm:$0xff]
  %v6451 = vld [vmem:[%s3 + $0x30] sm:$0xff]
  %v6452 = vld [vmem:[%s3 + $0x38] sm:$0xff]
  %v6453 = vld [vmem:[%s3 + $0x40] sm:$0xff]
  %v6454 = vld [vmem:[%s3 + $0x48] sm:$0xff]
  %v6455 = vld [vmem:[%s3 + $0x50] sm:$0xff]
  %v6456 = vld [vmem:[%s3 + $0x58] sm:$0xff]
  %v6457 = vld [vmem:[%s3 + $0x60] sm:$0xff]
  %v6458 = vld [vmem:[%s3 + $0x68] sm:$0xff]
  %v6459 = vld [vmem:[%s3 + $0x70] sm:$0xff]
  %v6460 = vld [vmem:[%s3 + $0x78] sm:$0xff]
  %v6461 = vld [vmem:[%s3 + $0x80] sm:$0xff]
  %v6462 = vld [vmem:[%s3 + $0x88] sm:$0xff]
  %v6463 = vld [vmem:[%s3 + $0x90] sm:$0xff]
  %v6464 = vld [vmem:[%s3 + $0x98] sm:$0xff]
  %v6465 = vld [vmem:[%s3 + $0xa0] sm:$0xff]
  %v6466 = vld [vmem:[%s3 + $0xa8] sm:$0xff]
  %v6467 = vld [vmem:[%s3 + $0xb0] sm:$0xff]
  %v6468 = vld [vmem:[%s3 + $0xb8] sm:$0xff]
  %v6469 = vld [vmem:[%s3 + $0xc0] sm:$0xff]
  %v6470 = vld [vmem:[%s3 + $0xc8] sm:$0xff]
  %v6471 = vld [vmem:[%s3 + $0xd0] sm:$0xff]
  %v6472 = vld [vmem:[%s3 + $0xd8] sm:$0xff]
  %v6473 = vld [vmem:[%s3 + $0xe0] sm:$0xff]
  %v6474 = vld [vmem:[%s3 + $0xe8] sm:$0xff]
  %v6475 = vld [vmem:[%s3 + $0xf0] sm:$0xff]
  %v6476 = vld [vmem:[%s3 + $0xf8] sm:$0xff]
  %v6477 = vld [vmem:[%s3 + $0x100] sm:$0xff]
  %v6478 = vld [vmem:[%s3 + $0x108] sm:$0xff]
  %v6479 = vld [vmem:[%s3 + $0x110] sm:$0xff]
  %v6480 = vld [vmem:[%s3 + $0x118] sm:$0xff]
  %v6481 = vld [vmem:[%s3 + $0x120] sm:$0xff]
  %v6482 = vld [vmem:[%s3 + $0x128] sm:$0xff]
  %v6483 = vld [vmem:[%s3 + $0x130] sm:$0xff]
  %v6484 = vld [vmem:[%s3 + $0x138] sm:$0xff]
  %v6485 = vld [vmem:[%s3 + $0x140] sm:$0xff]
  %v6486 = vld [vmem:[%s3 + $0x148] sm:$0xff]
  %v6487 = vld [vmem:[%s3 + $0x150] sm:$0xff]
  %v6488 = vld [vmem:[%s3 + $0x158] sm:$0xff]
  %v6489 = vld [vmem:[%s3 + $0x160] sm:$0xff]
  %v6490 = vld [vmem:[%s3 + $0x168] sm:$0xff]
  %v6491 = vld [vmem:[%s3 + $0x170] sm:$0xff]
  %v6492 = vld [vmem:[%s3 + $0x178] sm:$0xff]
  %v6493 = vld [vmem:[%s3 + $0x180] sm:$0xff]
  %v6494 = vld [vmem:[%s3 + $0x188] sm:$0xff]
  %v6495 = vld [vmem:[%s3 + $0x190] sm:$0xff]
  %v6496 = vld [vmem:[%s3 + $0x198] sm:$0xff]
  %v6497 = vld [vmem:[%s3 + $0x1a0] sm:$0xff]
  %v6498 = vld [vmem:[%s3 + $0x1a8] sm:$0xff]
  %v6499 = vld [vmem:[%s3 + $0x1b0] sm:$0xff]
  %v6500 = vld [vmem:[%s3 + $0x1b8] sm:$0xff]
  %v6501 = vld [vmem:[%s3 + $0x1c0] sm:$0xff]
  %v6502 = vld [vmem:[%s3 + $0x1c8] sm:$0xff]
  %v6503 = vld [vmem:[%s3 + $0x1d0] sm:$0xff]
  %v6504 = vld [vmem:[%s3 + $0x1d8] sm:$0xff]
  %v6505 = vld [vmem:[%s3 + $0x1e0] sm:$0xff]
  %v6506 = vld [vmem:[%s3 + $0x1e8] sm:$0xff]
  %v6507 = vld [vmem:[%s3 + $0x1f0] sm:$0xff]
  %v6508 = vld [vmem:[%s3 + $0x1f8] sm:$0xff]
  %v6509 = vld [vmem:[%s3 + $0x200] sm:$0xff]
  %v6510 = vld [vmem:[%s3 + $0x208] sm:$0xff]
  %v6511 = vld [vmem:[%s3 + $0x210] sm:$0xff]
  %v6512 = vld [vmem:[%s3 + $0x218] sm:$0xff]
  %v6513 = vld [vmem:[%s3 + $0x220] sm:$0xff]
  %v6514 = vld [vmem:[%s3 + $0x228] sm:$0xff]
  %v6515 = vld [vmem:[%s3 + $0x230] sm:$0xff]
  %v6516 = vld [vmem:[%s3 + $0x238] sm:$0xff]
  %v6517 = vld [vmem:[%s3 + $0x240] sm:$0xff]
  %v6518 = vld [vmem:[%s3 + $0x248] sm:$0xff]
  %v6519 = vld [vmem:[%s3 + $0x250] sm:$0xff]
  %v6520 = vld [vmem:[%s3 + $0x258] sm:$0xff]
  %v6521 = vld [vmem:[%s3 + $0x260] sm:$0xff]
  %v6522 = vld [vmem:[%s3 + $0x268] sm:$0xff]
  %v6523 = vld [vmem:[%s3 + $0x270] sm:$0xff]
  %v6524 = vld [vmem:[%s3 + $0x278] sm:$0xff]
  %v6525 = vld [vmem:[%s3 + $0x280] sm:$0xff]
  %v6526 = vld [vmem:[%s3 + $0x288] sm:$0xff]
  %v6527 = vld [vmem:[%s3 + $0x290] sm:$0xff]
  %v6528 = vld [vmem:[%s3 + $0x298] sm:$0xff]
  %v6529 = vld [vmem:[%s3 + $0x2a0] sm:$0xff]
  %v6530 = vld [vmem:[%s3 + $0x2a8] sm:$0xff]
  %v6531 = vld [vmem:[%s3 + $0x2b0] sm:$0xff]
  %v6532 = vld [vmem:[%s3 + $0x2b8] sm:$0xff]
  %v6533 = vld [vmem:[%s3 + $0x2c0] sm:$0xff]
  %v6534 = vld [vmem:[%s3 + $0x2c8] sm:$0xff]
  %v6535 = vld [vmem:[%s3 + $0x2d0] sm:$0xff]
  %v6536 = vld [vmem:[%s3 + $0x2d8] sm:$0xff]
  %v6537 = vld [vmem:[%s3 + $0x2e0] sm:$0xff]
  %v6538 = vld [vmem:[%s3 + $0x2e8] sm:$0xff]
  %v6539 = vld [vmem:[%s3 + $0x2f0] sm:$0xff]
  %v6540 = vld [vmem:[%s3 + $0x2f8] sm:$0xff]
  %v6541 = vld [vmem:[%s3 + $0x300] sm:$0xff]
  %v6542 = vld [vmem:[%s3 + $0x308] sm:$0xff]
  %v6543 = vld [vmem:[%s3 + $0x310] sm:$0xff]
  %v6544 = vld [vmem:[%s3 + $0x318] sm:$0xff]
  %v6545 = vld [vmem:[%s3 + $0x320] sm:$0xff]
  %v6546 = vld [vmem:[%s3 + $0x328] sm:$0xff]
  %v6547 = vld [vmem:[%s3 + $0x330] sm:$0xff]
  %v6548 = vld [vmem:[%s3 + $0x338] sm:$0xff]
  %v6549 = vld [vmem:[%s3 + $0x340] sm:$0xff]
  %v6550 = vld [vmem:[%s3 + $0x348] sm:$0xff]
  %v6551 = vld [vmem:[%s3 + $0x350] sm:$0xff]
  %v6552 = vld [vmem:[%s3 + $0x358] sm:$0xff]
  %v6553 = vld [vmem:[%s3 + $0x360] sm:$0xff]
  %v6554 = vld [vmem:[%s3 + $0x368] sm:$0xff]
  %v6555 = vld [vmem:[%s3 + $0x370] sm:$0xff]
  %v6556 = vld [vmem:[%s3 + $0x378] sm:$0xff]
  %v6557 = vld [vmem:[%s3 + $0x380] sm:$0xff]
  %v6558 = vld [vmem:[%s3 + $0x388] sm:$0xff]
  %v6559 = vld [vmem:[%s3 + $0x390] sm:$0xff]
  %v6560 = vld [vmem:[%s3 + $0x398] sm:$0xff]
  %v6561 = vld [vmem:[%s3 + $0x3a0] sm:$0xff]
  %v6562 = vld [vmem:[%s3 + $0x3a8] sm:$0xff]
  %v6563 = vld [vmem:[%s3 + $0x3b0] sm:$0xff]
  %v6564 = vld [vmem:[%s3 + $0x3b8] sm:$0xff]
  %v6565 = vld [vmem:[%s3 + $0x3c0] sm:$0xff]
  %v6566 = vld [vmem:[%s3 + $0x3c8] sm:$0xff]
  %v6567 = vld [vmem:[%s3 + $0x3d0] sm:$0xff]
  %v6568 = vld [vmem:[%s3 + $0x3d8] sm:$0xff]
  %v6569 = vld [vmem:[%s3 + $0x3e0] sm:$0xff]
  %v6570 = vld [vmem:[%s3 + $0x3e8] sm:$0xff]
  %v6571 = vld [vmem:[%s3 + $0x3f0] sm:$0xff]
  %v6572 = vld [vmem:[%s3 + $0x3f8] sm:$0xff]
  %6573 = vmatprep.subr.mxu0 0.0
  %6574 = vmatpush1.msra.mxu0 %v6429
  %6575 = vmatprep.subr.mxu0 0.0
  %6576 = vmatpush1.msra.mxu0 %v6430
  %6577 = vmatprep.subr.mxu0 0.0
  %6578 = vmatpush1.msra.mxu0 %v6431
  %6579 = vmatprep.subr.mxu0 0.0
  %6580 = vmatpush1.msra.mxu0 %v6432
  %6581 = vmatprep.subr.mxu0 0.0
  %6582 = vmatpush1.msra.mxu0 %v6433
  %6583 = vmatprep.subr.mxu0 0.0
  %6584 = vmatpush1.msra.mxu0 %v6434
  %6585 = vmatprep.subr.mxu0 0.0
  %6586 = vmatpush1.msra.mxu0 %v6435
  %6587 = vmatprep.subr.mxu0 0.0
  %6588 = vmatpush1.msra.mxu0 %v6436
  %6589 = vmatprep.subr.mxu0 0.0
  %6590 = vmatpush1.msra.mxu0 %v6437
  %6591 = vmatprep.subr.mxu0 0.0
  %6592 = vmatpush1.msra.mxu0 %v6438
  %6593 = vmatprep.subr.mxu0 0.0
  %6594 = vmatpush1.msra.mxu0 %v6439
  %6595 = vmatprep.subr.mxu0 0.0
  %6596 = vmatpush1.msra.mxu0 %v6440
  %6597 = vmatprep.subr.mxu0 0.0
  %6598 = vmatpush1.msra.mxu0 %v6441
  %6599 = vmatprep.subr.mxu0 0.0
  %6600 = vmatpush1.msra.mxu0 %v6442
  %6601 = vmatprep.subr.mxu0 0.0
  %6602 = vmatpush1.msra.mxu0 %v6443
  %6603 = vmatprep.subr.mxu0 0.0
  %6604 = vmatpush1.msra.mxu0 %v6444
  %6605 = vmatprep.subr.mxu0 0.0
  %6606 = vmatpush1.msra.mxu0 0.0
  %6607 = vmatprep.subr.mxu0 0.0
  %6608 = vmatpush1.msra.mxu0 0.0
  %6609 = vmatprep.subr.mxu0 0.0
  %6610 = vmatpush1.msra.mxu0 0.0
  %6611 = vmatprep.subr.mxu0 0.0
  %6612 = vmatpush1.msra.mxu0 0.0
  %6613 = vmatprep.subr.mxu0 0.0
  %6614 = vmatpush1.msra.mxu0 0.0
  %6615 = vmatprep.subr.mxu0 0.0
  %6616 = vmatpush1.msra.mxu0 0.0
  %6617 = vmatprep.subr.mxu0 0.0
  %6618 = vmatpush1.msra.mxu0 0.0
  %6619 = vmatprep.subr.mxu0 0.0
  %6620 = vmatpush1.msra.mxu0 0.0
  %6621 = vmatprep.subr.mxu0 0.0
  %6622 = vmatpush1.msra.mxu0 0.0
  %6623 = vmatprep.subr.mxu0 0.0
  %6624 = vmatpush1.msra.mxu0 0.0
  %6625 = vmatprep.subr.mxu0 0.0
  %6626 = vmatpush1.msra.mxu0 0.0
  %6627 = vmatprep.subr.mxu0 0.0
  %6628 = vmatpush1.msra.mxu0 0.0
  %6629 = vmatprep.subr.mxu0 0.0
  %6630 = vmatpush1.msra.mxu0 0.0
  %6631 = vmatprep.subr.mxu0 0.0
  %6632 = vmatpush1.msra.mxu0 0.0
  %6633 = vmatprep.subr.mxu0 0.0
  %6634 = vmatpush1.msra.mxu0 0.0
  %6635 = vmatprep.subr.mxu0 0.0
  %6636 = vmatpush1.msra.mxu0 0.0
  %6637 = vmatprep.mubr.f32.mxu0 0.0
  %6638 = vmatmul.mubr.f32.gmra.mrb[0].mxu0 %v6445
  %v6639 = vpop.f32.mrb[0].mxu0
  %v6640 = vadd.f32 0.0, %v6639
  %v6641 = vpop.f32.mrb[0].mxu0
  %6642 = vmatprep.mubr.f32.mxu0 0.0
  %6643 = vmatmul.mubr.f32.gmra.mrb[0].mxu0 %v6446
  %v6644 = vpop.f32.mrb[0].mxu0
  %v6645 = vadd.f32 0.0, %v6644
  %v6646 = vpop.f32.mrb[0].mxu0
  %6647 = vmatprep.mubr.f32.mxu0 0.0
  %6648 = vmatmul.mubr.f32.gmra.mrb[0].mxu0 %v6447
  %v6649 = vpop.f32.mrb[0].mxu0
  %v6650 = vadd.f32 0.0, %v6649
  %v6651 = vpop.f32.mrb[0].mxu0
  %6652 = vmatprep.mubr.f32.mxu0 0.0
  %6653 = vmatmul.mubr.f32.gmra.mrb[0].mxu0 %v6448
  %v6654 = vpop.f32.mrb[0].mxu0
  %v6655 = vadd.f32 0.0, %v6654
  %v6656 = vpop.f32.mrb[0].mxu0
  %6657 = vmatprep.mubr.f32.mxu0 0.0
  %6658 = vmatmul.mubr.f32.gmra.mrb[0].mxu0 %v6449
  %v6659 = vpop.f32.mrb[0].mxu0
  %v6660 = vadd.f32 0.0, %v6659
  %v6661 = vpop.f32.mrb[0].mxu0
  %6662 = vmatprep.mubr.f32.mxu0 0.0
  %6663 = vmatmul.mubr.f32.gmra.mrb[0].mxu0 %v6450
  %v6664 = vpop.f32.mrb[0].mxu0
  %v6665 = vadd.f32 0.0, %v6664
  %v6666 = vpop.f32.mrb[0].mxu0
  %6667 = vmatprep.mubr.f32.mxu0 0.0
  %6668 = vmatmul.mubr.f32.gmra.mrb[0].mxu0 %v6451
  %v6669 = vpop.f32.mrb[0].mxu0
  %v6670 = vadd.f32 0.0, %v6669
  %v6671 = vpop.f32.mrb[0].mxu0
  %6672 = vmatprep.mubr.f32.mxu0 0.0
  %6673 = vmatmul.mubr.f32.gmra.mrb[0].mxu0 %v6452
  %v6674 = vpop.f32.mrb[0].mxu0
  %v6675 = vadd.f32 0.0, %v6674
  %v6676 = vpop.f32.mrb[0].mxu0
  %6677 = vmatprep.mubr.f32.mxu0 0.0
  %6678 = vmatmul.mubr.f32.gmra.mrb[0].mxu0 %v6453
  %v6679 = vpop.f32.mrb[0].mxu0
  %v6680 = vadd.f32 0.0, %v6679
  %v6681 = vpop.f32.mrb[0].mxu0
  %6682 = vmatprep.mubr.f32.mxu0 0.0
  %6683 = vmatmul.mubr.f32.gmra.mrb[0].mxu0 %v6454
  %v6684 = vpop.f32.mrb[0].mxu0
  %v6685 = vadd.f32 0.0, %v6684
  %v6686 = vpop.f32.mrb[0].mxu0
  %6687 = vmatprep.mubr.f32.mxu0 0.0
  %6688 = vmatmul.mubr.f32.gmra.mrb[0].mxu0 %v6455
  %v6689 = vpop.f32.mrb[0].mxu0
  %v6690 = vadd.f32 0.0, %v6689
  %v6691 = vpop.f32.mrb[0].mxu0
  %6692 = vmatprep.mubr.f32.mxu0 0.0
  %6693 = vmatmul.mubr.f32.gmra.mrb[0].mxu0 %v6456
  %v6694 = vpop.f32.mrb[0].mxu0
  %v6695 = vadd.f32 0.0, %v6694
  %v6696 = vpop.f32.mrb[0].mxu0
  %6697 = vmatprep.mubr.f32.mxu0 0.0
  %6698 = vmatmul.mubr.f32.gmra.mrb[0].mxu0 %v6457
  %v6699 = vpop.f32.mrb[0].mxu0
  %v6700 = vadd.f32 0.0, %v6699
  %v6701 = vpop.f32.mrb[0].mxu0
  %6702 = vmatprep.mubr.f32.mxu0 0.0
  %6703 = vmatmul.mubr.f32.gmra.mrb[0].mxu0 %v6458
  %v6704 = vpop.f32.mrb[0].mxu0
  %v6705 = vadd.f32 0.0, %v6704
  %v6706 = vpop.f32.mrb[0].mxu0
  %6707 = vmatprep.mubr.f32.mxu0 0.0
  %6708 = vmatmul.mubr.f32.gmra.mrb[0].mxu0 %v6459
  %v6709 = vpop.f32.mrb[0].mxu0
  %v6710 = vadd.f32 0.0, %v6709
  %v6711 = vpop.f32.mrb[0].mxu0
  %6712 = vmatprep.mubr.f32.mxu0 0.0
  %6713 = vmatmul.mubr.f32.gmra.mrb[0].mxu0 %v6460
  %v6714 = vpop.f32.mrb[0].mxu0
  %v6715 = vadd.f32 0.0, %v6714
  %v6716 = vpop.f32.mrb[0].mxu0
  %6717 = vmatprep.mubr.f32.mxu0 0.0
  %6718 = vmatmul.mubr.f32.gmra.mrb[0].mxu0 %v6461
  %v6719 = vpop.f32.mrb[0].mxu0
  %v6720 = vadd.f32 0.0, %v6719
  %v6721 = vpop.f32.mrb[0].mxu0
  %6722 = vmatprep.mubr.f32.mxu0 0.0
  %6723 = vmatmul.mubr.f32.gmra.mrb[0].mxu0 %v6462
  %v6724 = vpop.f32.mrb[0].mxu0
  %v6725 = vadd.f32 0.0, %v6724
  %v6726 = vpop.f32.mrb[0].mxu0
  %6727 = vmatprep.mubr.f32.mxu0 0.0
  %6728 = vmatmul.mubr.f32.gmra.mrb[0].mxu0 %v6463
  %v6729 = vpop.f32.mrb[0].mxu0
  %v6730 = vadd.f32 0.0, %v6729
  %v6731 = vpop.f32.mrb[0].mxu0
  %6732 = vmatprep.mubr.f32.mxu0 0.0
  %6733 = vmatmul.mubr.f32.gmra.mrb[0].mxu0 %v6464
  %v6734 = vpop.f32.mrb[0].mxu0
  %v6735 = vadd.f32 0.0, %v6734
  %v6736 = vpop.f32.mrb[0].mxu0
  %6737 = vmatprep.mubr.f32.mxu0 0.0
  %6738 = vmatmul.mubr.f32.gmra.mrb[0].mxu0 %v6465
  %v6739 = vpop.f32.mrb[0].mxu0
  %v6740 = vadd.f32 0.0, %v6739
  %v6741 = vpop.f32.mrb[0].mxu0
  %6742 = vmatprep.mubr.f32.mxu0 0.0
  %6743 = vmatmul.mubr.f32.gmra.mrb[0].mxu0 %v6466
  %v6744 = vpop.f32.mrb[0].mxu0
  %v6745 = vadd.f32 0.0, %v6744
  %v6746 = vpop.f32.mrb[0].mxu0
  %6747 = vmatprep.mubr.f32.mxu0 0.0
  %6748 = vmatmul.mubr.f32.gmra.mrb[0].mxu0 %v6467
  %v6749 = vpop.f32.mrb[0].mxu0
  %v6750 = vadd.f32 0.0, %v6749
  %v6751 = vpop.f32.mrb[0].mxu0
  %6752 = vmatprep.mubr.f32.mxu0 0.0
  %6753 = vmatmul.mubr.f32.gmra.mrb[0].mxu0 %v6468
  %v6754 = vpop.f32.mrb[0].mxu0
  %v6755 = vadd.f32 0.0, %v6754
  %v6756 = vpop.f32.mrb[0].mxu0
  %6757 = vmatprep.mubr.f32.mxu0 0.0
  %6758 = vmatmul.mubr.f32.gmra.mrb[0].mxu0 %v6469
  %v6759 = vpop.f32.mrb[0].mxu0
  %v6760 = vadd.f32 0.0, %v6759
  %v6761 = vpop.f32.mrb[0].mxu0
  %6762 = vmatprep.mubr.f32.mxu0 0.0
  %6763 = vmatmul.mubr.f32.gmra.mrb[0].mxu0 %v6470
  %v6764 = vpop.f32.mrb[0].mxu0
  %v6765 = vadd.f32 0.0, %v6764
  %v6766 = vpop.f32.mrb[0].mxu0
  %6767 = vmatprep.mubr.f32.mxu0 0.0
  %6768 = vmatmul.mubr.f32.gmra.mrb[0].mxu0 %v6471
  %v6769 = vpop.f32.mrb[0].mxu0
  %v6770 = vadd.f32 0.0, %v6769
  %v6771 = vpop.f32.mrb[0].mxu0
  %6772 = vmatprep.mubr.f32.mxu0 0.0
  %6773 = vmatmul.mubr.f32.gmra.mrb[0].mxu0 %v6472
  %v6774 = vpop.f32.mrb[0].mxu0
  %v6775 = vadd.f32 0.0, %v6774
  %v6776 = vpop.f32.mrb[0].mxu0
  %6777 = vmatprep.mubr.f32.mxu0 0.0
  %6778 = vmatmul.mubr.f32.gmra.mrb[0].mxu0 %v6473
  %v6779 = vpop.f32.mrb[0].mxu0
  %v6780 = vadd.f32 0.0, %v6779
  %v6781 = vpop.f32.mrb[0].mxu0
  %6782 = vmatprep.mubr.f32.mxu0 0.0
  %6783 = vmatmul.mubr.f32.gmra.mrb[0].mxu0 %v6474
  %v6784 = vpop.f32.mrb[0].mxu0
  %v6785 = vadd.f32 0.0, %v6784
  %v6786 = vpop.f32.mrb[0].mxu0
  %6787 = vmatprep.mubr.f32.mxu0 0.0
  %6788 = vmatmul.mubr.f32.gmra.mrb[0].mxu0 %v6475
  %v6789 = vpop.f32.mrb[0].mxu0
  %v6790 = vadd.f32 0.0, %v6789
  %v6791 = vpop.f32.mrb[0].mxu0
  %6792 = vmatprep.mubr.f32.mxu0 0.0
  %6793 = vmatmul.mubr.f32.gmra.mrb[0].mxu0 %v6476
  %v6794 = vpop.f32.mrb[0].mxu0
  %v6795 = vadd.f32 0.0, %v6794
  %v6796 = vpop.f32.mrb[0].mxu0
  %6797 = vmatprep.mubr.f32.mxu0 0.0
  %6798 = vmatmul.mubr.f32.gmra.mrb[0].mxu0 %v6477
  %v6799 = vpop.f32.mrb[0].mxu0
  %v6800 = vadd.f32 0.0, %v6799
  %v6801 = vpop.f32.mrb[0].mxu0
  %6802 = vmatprep.mubr.f32.mxu0 0.0
  %6803 = vmatmul.mubr.f32.gmra.mrb[0].mxu0 %v6478
  %v6804 = vpop.f32.mrb[0].mxu0
  %v6805 = vadd.f32 0.0, %v6804
  %v6806 = vpop.f32.mrb[0].mxu0
  %6807 = vmatprep.mubr.f32.mxu0 0.0
  %6808 = vmatmul.mubr.f32.gmra.mrb[0].mxu0 %v6479
  %v6809 = vpop.f32.mrb[0].mxu0
  %v6810 = vadd.f32 0.0, %v6809
  %v6811 = vpop.f32.mrb[0].mxu0
  %6812 = vmatprep.mubr.f32.mxu0 0.0
  %6813 = vmatmul.mubr.f32.gmra.mrb[0].mxu0 %v6480
  %v6814 = vpop.f32.mrb[0].mxu0
  %v6815 = vadd.f32 0.0, %v6814
  %v6816 = vpop.f32.mrb[0].mxu0
  %6817 = vmatprep.mubr.f32.mxu0 0.0
  %6818 = vmatmul.mubr.f32.gmra.mrb[0].mxu0 %v6481
  %v6819 = vpop.f32.mrb[0].mxu0
  %v6820 = vadd.f32 0.0, %v6819
  %v6821 = vpop.f32.mrb[0].mxu0
  %6822 = vmatprep.mubr.f32.mxu0 0.0
  %6823 = vmatmul.mubr.f32.gmra.mrb[0].mxu0 %v6482
  %v6824 = vpop.f32.mrb[0].mxu0
  %v6825 = vadd.f32 0.0, %v6824
  %v6826 = vpop.f32.mrb[0].mxu0
  %6827 = vmatprep.mubr.f32.mxu0 0.0
  %6828 = vmatmul.mubr.f32.gmra.mrb[0].mxu0 %v6483
  %v6829 = vpop.f32.mrb[0].mxu0
  %v6830 = vadd.f32 0.0, %v6829
  %v6831 = vpop.f32.mrb[0].mxu0
  %6832 = vmatprep.mubr.f32.mxu0 0.0
  %6833 = vmatmul.mubr.f32.gmra.mrb[0].mxu0 %v6484
  %v6834 = vpop.f32.mrb[0].mxu0
  %v6835 = vadd.f32 0.0, %v6834
  %v6836 = vpop.f32.mrb[0].mxu0
  %6837 = vmatprep.mubr.f32.mxu0 0.0
  %6838 = vmatmul.mubr.f32.gmra.mrb[0].mxu0 %v6485
  %v6839 = vpop.f32.mrb[0].mxu0
  %v6840 = vadd.f32 0.0, %v6839
  %v6841 = vpop.f32.mrb[0].mxu0
  %6842 = vmatprep.mubr.f32.mxu0 0.0
  %6843 = vmatmul.mubr.f32.gmra.mrb[0].mxu0 %v6486
  %v6844 = vpop.f32.mrb[0].mxu0
  %v6845 = vadd.f32 0.0, %v6844
  %v6846 = vpop.f32.mrb[0].mxu0
  %6847 = vmatprep.mubr.f32.mxu0 0.0
  %6848 = vmatmul.mubr.f32.gmra.mrb[0].mxu0 %v6487
  %v6849 = vpop.f32.mrb[0].mxu0
  %v6850 = vadd.f32 0.0, %v6849
  %v6851 = vpop.f32.mrb[0].mxu0
  %6852 = vmatprep.mubr.f32.mxu0 0.0
  %6853 = vmatmul.mubr.f32.gmra.mrb[0].mxu0 %v6488
  %v6854 = vpop.f32.mrb[0].mxu0
  %v6855 = vadd.f32 0.0, %v6854
  %v6856 = vpop.f32.mrb[0].mxu0
  %6857 = vmatprep.mubr.f32.mxu0 0.0
  %6858 = vmatmul.mubr.f32.gmra.mrb[0].mxu0 %v6489
  %v6859 = vpop.f32.mrb[0].mxu0
  %v6860 = vadd.f32 0.0, %v6859
  %v6861 = vpop.f32.mrb[0].mxu0
  %6862 = vmatprep.mubr.f32.mxu0 0.0
  %6863 = vmatmul.mubr.f32.gmra.mrb[0].mxu0 %v6490
  %v6864 = vpop.f32.mrb[0].mxu0
  %v6865 = vadd.f32 0.0, %v6864
  %v6866 = vpop.f32.mrb[0].mxu0
  %6867 = vmatprep.mubr.f32.mxu0 0.0
  %6868 = vmatmul.mubr.f32.gmra.mrb[0].mxu0 %v6491
  %v6869 = vpop.f32.mrb[0].mxu0
  %v6870 = vadd.f32 0.0, %v6869
  %v6871 = vpop.f32.mrb[0].mxu0
  %6872 = vmatprep.mubr.f32.mxu0 0.0
  %6873 = vmatmul.mubr.f32.gmra.mrb[0].mxu0 %v6492
  %v6874 = vpop.f32.mrb[0].mxu0
  %v6875 = vadd.f32 0.0, %v6874
  %v6876 = vpop.f32.mrb[0].mxu0
  %6877 = vmatprep.mubr.f32.mxu0 0.0
  %6878 = vmatmul.mubr.f32.gmra.mrb[0].mxu0 %v6493
  %v6879 = vpop.f32.mrb[0].mxu0
  %v6880 = vadd.f32 0.0, %v6879
  %v6881 = vpop.f32.mrb[0].mxu0
  %6882 = vmatprep.mubr.f32.mxu0 0.0
  %6883 = vmatmul.mubr.f32.gmra.mrb[0].mxu0 %v6494
  %v6884 = vpop.f32.mrb[0].mxu0
  %v6885 = vadd.f32 0.0, %v6884
  %v6886 = vpop.f32.mrb[0].mxu0
  %6887 = vmatprep.mubr.f32.mxu0 0.0
  %6888 = vmatmul.mubr.f32.gmra.mrb[0].mxu0 %v6495
  %v6889 = vpop.f32.mrb[0].mxu0
  %v6890 = vadd.f32 0.0, %v6889
  %v6891 = vpop.f32.mrb[0].mxu0
  %6892 = vmatprep.mubr.f32.mxu0 0.0
  %6893 = vmatmul.mubr.f32.gmra.mrb[0].mxu0 %v6496
  %v6894 = vpop.f32.mrb[0].mxu0
  %v6895 = vadd.f32 0.0, %v6894
  %v6896 = vpop.f32.mrb[0].mxu0
  %6897 = vmatprep.mubr.f32.mxu0 0.0
  %6898 = vmatmul.mubr.f32.gmra.mrb[0].mxu0 %v6497
  %v6899 = vpop.f32.mrb[0].mxu0
  %v6900 = vadd.f32 0.0, %v6899
  %v6901 = vpop.f32.mrb[0].mxu0
  %6902 = vmatprep.mubr.f32.mxu0 0.0
  %6903 = vmatmul.mubr.f32.gmra.mrb[0].mxu0 %v6498
  %v6904 = vpop.f32.mrb[0].mxu0
  %v6905 = vadd.f32 0.0, %v6904
  %v6906 = vpop.f32.mrb[0].mxu0
  %6907 = vmatprep.mubr.f32.mxu0 0.0
  %6908 = vmatmul.mubr.f32.gmra.mrb[0].mxu0 %v6499
  %v6909 = vpop.f32.mrb[0].mxu0
  %v6910 = vadd.f32 0.0, %v6909
  %v6911 = vpop.f32.mrb[0].mxu0
  %6912 = vmatprep.mubr.f32.mxu0 0.0
  %6913 = vmatmul.mubr.f32.gmra.mrb[0].mxu0 %v6500
  %v6914 = vpop.f32.mrb[0].mxu0
  %v6915 = vadd.f32 0.0, %v6914
  %v6916 = vpop.f32.mrb[0].mxu0
  %6917 = vmatprep.mubr.f32.mxu0 0.0
  %6918 = vmatmul.mubr.f32.gmra.mrb[0].mxu0 %v6501
  %v6919 = vpop.f32.mrb[0].mxu0
  %v6920 = vadd.f32 0.0, %v6919
  %v6921 = vpop.f32.mrb[0].mxu0
  %6922 = vmatprep.mubr.f32.mxu0 0.0
  %6923 = vmatmul.mubr.f32.gmra.mrb[0].mxu0 %v6502
  %v6924 = vpop.f32.mrb[0].mxu0
  %v6925 = vadd.f32 0.0, %v6924
  %v6926 = vpop.f32.mrb[0].mxu0
  %6927 = vmatprep.mubr.f32.mxu0 0.0
  %6928 = vmatmul.mubr.f32.gmra.mrb[0].mxu0 %v6503
  %v6929 = vpop.f32.mrb[0].mxu0
  %v6930 = vadd.f32 0.0, %v6929
  %v6931 = vpop.f32.mrb[0].mxu0
  %6932 = vmatprep.mubr.f32.mxu0 0.0
  %6933 = vmatmul.mubr.f32.gmra.mrb[0].mxu0 %v6504
  %v6934 = vpop.f32.mrb[0].mxu0
  %v6935 = vadd.f32 0.0, %v6934
  %v6936 = vpop.f32.mrb[0].mxu0
  %6937 = vmatprep.mubr.f32.mxu0 0.0
  %6938 = vmatmul.mubr.f32.gmra.mrb[0].mxu0 %v6505
  %v6939 = vpop.f32.mrb[0].mxu0
  %v6940 = vadd.f32 0.0, %v6939
  %v6941 = vpop.f32.mrb[0].mxu0
  %6942 = vmatprep.mubr.f32.mxu0 0.0
  %6943 = vmatmul.mubr.f32.gmra.mrb[0].mxu0 %v6506
  %v6944 = vpop.f32.mrb[0].mxu0
  %v6945 = vadd.f32 0.0, %v6944
  %v6946 = vpop.f32.mrb[0].mxu0
  %6947 = vmatprep.mubr.f32.mxu0 0.0
  %6948 = vmatmul.mubr.f32.gmra.mrb[0].mxu0 %v6507
  %v6949 = vpop.f32.mrb[0].mxu0
  %v6950 = vadd.f32 0.0, %v6949
  %v6951 = vpop.f32.mrb[0].mxu0
  %6952 = vmatprep.mubr.f32.mxu0 0.0
  %6953 = vmatmul.mubr.f32.gmra.mrb[0].mxu0 %v6508
  %v6954 = vpop.f32.mrb[0].mxu0
  %v6955 = vadd.f32 0.0, %v6954
  %v6956 = vpop.f32.mrb[0].mxu0
  %6957 = vmatprep.mubr.f32.mxu0 0.0
  %6958 = vmatmul.mubr.f32.gmra.mrb[0].mxu0 %v6509
  %v6959 = vpop.f32.mrb[0].mxu0
  %v6960 = vadd.f32 0.0, %v6959
  %v6961 = vpop.f32.mrb[0].mxu0
  %6962 = vmatprep.mubr.f32.mxu0 0.0
  %6963 = vmatmul.mubr.f32.gmra.mrb[0].mxu0 %v6510
  %v6964 = vpop.f32.mrb[0].mxu0
  %v6965 = vadd.f32 0.0, %v6964
  %v6966 = vpop.f32.mrb[0].mxu0
  %6967 = vmatprep.mubr.f32.mxu0 0.0
  %6968 = vmatmul.mubr.f32.gmra.mrb[0].mxu0 %v6511
  %v6969 = vpop.f32.mrb[0].mxu0
  %v6970 = vadd.f32 0.0, %v6969
  %v6971 = vpop.f32.mrb[0].mxu0
  %6972 = vmatprep.mubr.f32.mxu0 0.0
  %6973 = vmatmul.mubr.f32.gmra.mrb[0].mxu0 %v6512
  %v6974 = vpop.f32.mrb[0].mxu0
  %v6975 = vadd.f32 0.0, %v6974
  %v6976 = vpop.f32.mrb[0].mxu0
  %6977 = vmatprep.mubr.f32.mxu0 0.0
  %6978 = vmatmul.mubr.f32.gmra.mrb[0].mxu0 %v6513
  %v6979 = vpop.f32.mrb[0].mxu0
  %v6980 = vadd.f32 0.0, %v6979
  %v6981 = vpop.f32.mrb[0].mxu0
  %6982 = vmatprep.mubr.f32.mxu0 0.0
  %6983 = vmatmul.mubr.f32.gmra.mrb[0].mxu0 %v6514
  %v6984 = vpop.f32.mrb[0].mxu0
  %v6985 = vadd.f32 0.0, %v6984
  %v6986 = vpop.f32.mrb[0].mxu0
  %6987 = vmatprep.mubr.f32.mxu0 0.0
  %6988 = vmatmul.mubr.f32.gmra.mrb[0].mxu0 %v6515
  %v6989 = vpop.f32.mrb[0].mxu0
  %v6990 = vadd.f32 0.0, %v6989
  %v6991 = vpop.f32.mrb[0].mxu0
  %6992 = vmatprep.mubr.f32.mxu0 0.0
  %6993 = vmatmul.mubr.f32.gmra.mrb[0].mxu0 %v6516
  %v6994 = vpop.f32.mrb[0].mxu0
  %v6995 = vadd.f32 0.0, %v6994
  %v6996 = vpop.f32.mrb[0].mxu0
  %6997 = vmatprep.mubr.f32.mxu0 0.0
  %6998 = vmatmul.mubr.f32.gmra.mrb[0].mxu0 %v6517
  %v6999 = vpop.f32.mrb[0].mxu0
  %v7000 = vadd.f32 0.0, %v6999
  %v7001 = vpop.f32.mrb[0].mxu0
  %7002 = vmatprep.mubr.f32.mxu0 0.0
  %7003 = vmatmul.mubr.f32.gmra.mrb[0].mxu0 %v6518
  %v7004 = vpop.f32.mrb[0].mxu0
  %v7005 = vadd.f32 0.0, %v7004
  %v7006 = vpop.f32.mrb[0].mxu0
  %7007 = vmatprep.mubr.f32.mxu0 0.0
  %7008 = vmatmul.mubr.f32.gmra.mrb[0].mxu0 %v6519
  %v7009 = vpop.f32.mrb[0].mxu0
  %v7010 = vadd.f32 0.0, %v7009
  %v7011 = vpop.f32.mrb[0].mxu0
  %7012 = vmatprep.mubr.f32.mxu0 0.0
  %7013 = vmatmul.mubr.f32.gmra.mrb[0].mxu0 %v6520
  %v7014 = vpop.f32.mrb[0].mxu0
  %v7015 = vadd.f32 0.0, %v7014
  %v7016 = vpop.f32.mrb[0].mxu0
  %7017 = vmatprep.mubr.f32.mxu0 0.0
  %7018 = vmatmul.mubr.f32.gmra.mrb[0].mxu0 %v6521
  %v7019 = vpop.f32.mrb[0].mxu0
  %v7020 = vadd.f32 0.0, %v7019
  %v7021 = vpop.f32.mrb[0].mxu0
  %7022 = vmatprep.mubr.f32.mxu0 0.0
  %7023 = vmatmul.mubr.f32.gmra.mrb[0].mxu0 %v6522
  %v7024 = vpop.f32.mrb[0].mxu0
  %v7025 = vadd.f32 0.0, %v7024
  %v7026 = vpop.f32.mrb[0].mxu0
  %7027 = vmatprep.mubr.f32.mxu0 0.0
  %7028 = vmatmul.mubr.f32.gmra.mrb[0].mxu0 %v6523
  %v7029 = vpop.f32.mrb[0].mxu0
  %v7030 = vadd.f32 0.0, %v7029
  %v7031 = vpop.f32.mrb[0].mxu0
  %7032 = vmatprep.mubr.f32.mxu0 0.0
  %7033 = vmatmul.mubr.f32.gmra.mrb[0].mxu0 %v6524
  %v7034 = vpop.f32.mrb[0].mxu0
  %v7035 = vadd.f32 0.0, %v7034
  %v7036 = vpop.f32.mrb[0].mxu0
  %7037 = vmatprep.mubr.f32.mxu0 0.0
  %7038 = vmatmul.mubr.f32.gmra.mrb[0].mxu0 %v6525
  %v7039 = vpop.f32.mrb[0].mxu0
  %v7040 = vadd.f32 0.0, %v7039
  %v7041 = vpop.f32.mrb[0].mxu0
  %7042 = vmatprep.mubr.f32.mxu0 0.0
  %7043 = vmatmul.mubr.f32.gmra.mrb[0].mxu0 %v6526
  %v7044 = vpop.f32.mrb[0].mxu0
  %v7045 = vadd.f32 0.0, %v7044
  %v7046 = vpop.f32.mrb[0].mxu0
  %7047 = vmatprep.mubr.f32.mxu0 0.0
  %7048 = vmatmul.mubr.f32.gmra.mrb[0].mxu0 %v6527
  %v7049 = vpop.f32.mrb[0].mxu0
  %v7050 = vadd.f32 0.0, %v7049
  %v7051 = vpop.f32.mrb[0].mxu0
  %7052 = vmatprep.mubr.f32.mxu0 0.0
  %7053 = vmatmul.mubr.f32.gmra.mrb[0].mxu0 %v6528
  %v7054 = vpop.f32.mrb[0].mxu0
  %v7055 = vadd.f32 0.0, %v7054
  %v7056 = vpop.f32.mrb[0].mxu0
  %7057 = vmatprep.mubr.f32.mxu0 0.0
  %7058 = vmatmul.mubr.f32.gmra.mrb[0].mxu0 %v6529
  %v7059 = vpop.f32.mrb[0].mxu0
  %v7060 = vadd.f32 0.0, %v7059
  %v7061 = vpop.f32.mrb[0].mxu0
  %7062 = vmatprep.mubr.f32.mxu0 0.0
  %7063 = vmatmul.mubr.f32.gmra.mrb[0].mxu0 %v6530
  %v7064 = vpop.f32.mrb[0].mxu0
  %v7065 = vadd.f32 0.0, %v7064
  %v7066 = vpop.f32.mrb[0].mxu0
  %7067 = vmatprep.mubr.f32.mxu0 0.0
  %7068 = vmatmul.mubr.f32.gmra.mrb[0].mxu0 %v6531
  %v7069 = vpop.f32.mrb[0].mxu0
  %v7070 = vadd.f32 0.0, %v7069
  %v7071 = vpop.f32.mrb[0].mxu0
  %7072 = vmatprep.mubr.f32.mxu0 0.0
  %7073 = vmatmul.mubr.f32.gmra.mrb[0].mxu0 %v6532
  %v7074 = vpop.f32.mrb[0].mxu0
  %v7075 = vadd.f32 0.0, %v7074
  %v7076 = vpop.f32.mrb[0].mxu0
  %7077 = vmatprep.mubr.f32.mxu0 0.0
  %7078 = vmatmul.mubr.f32.gmra.mrb[0].mxu0 %v6533
  %v7079 = vpop.f32.mrb[0].mxu0
  %v7080 = vadd.f32 0.0, %v7079
  %v7081 = vpop.f32.mrb[0].mxu0
  %7082 = vmatprep.mubr.f32.mxu0 0.0
  %7083 = vmatmul.mubr.f32.gmra.mrb[0].mxu0 %v6534
  %v7084 = vpop.f32.mrb[0].mxu0
  %v7085 = vadd.f32 0.0, %v7084
  %v7086 = vpop.f32.mrb[0].mxu0
  %7087 = vmatprep.mubr.f32.mxu0 0.0
  %7088 = vmatmul.mubr.f32.gmra.mrb[0].mxu0 %v6535
  %v7089 = vpop.f32.mrb[0].mxu0
  %v7090 = vadd.f32 0.0, %v7089
  %v7091 = vpop.f32.mrb[0].mxu0
  %7092 = vmatprep.mubr.f32.mxu0 0.0
  %7093 = vmatmul.mubr.f32.gmra.mrb[0].mxu0 %v6536
  %v7094 = vpop.f32.mrb[0].mxu0
  %v7095 = vadd.f32 0.0, %v7094
  %v7096 = vpop.f32.mrb[0].mxu0
  %7097 = vmatprep.mubr.f32.mxu0 0.0
  %7098 = vmatmul.mubr.f32.gmra.mrb[0].mxu0 %v6537
  %v7099 = vpop.f32.mrb[0].mxu0
  %v7100 = vadd.f32 0.0, %v7099
  %v7101 = vpop.f32.mrb[0].mxu0
  %7102 = vmatprep.mubr.f32.mxu0 0.0
  %7103 = vmatmul.mubr.f32.gmra.mrb[0].mxu0 %v6538
  %v7104 = vpop.f32.mrb[0].mxu0
  %v7105 = vadd.f32 0.0, %v7104
  %v7106 = vpop.f32.mrb[0].mxu0
  %7107 = vmatprep.mubr.f32.mxu0 0.0
  %7108 = vmatmul.mubr.f32.gmra.mrb[0].mxu0 %v6539
  %v7109 = vpop.f32.mrb[0].mxu0
  %v7110 = vadd.f32 0.0, %v7109
  %v7111 = vpop.f32.mrb[0].mxu0
  %7112 = vmatprep.mubr.f32.mxu0 0.0
  %7113 = vmatmul.mubr.f32.gmra.mrb[0].mxu0 %v6540
  %v7114 = vpop.f32.mrb[0].mxu0
  %v7115 = vadd.f32 0.0, %v7114
  %v7116 = vpop.f32.mrb[0].mxu0
  %7117 = vmatprep.mubr.f32.mxu0 0.0
  %7118 = vmatmul.mubr.f32.gmra.mrb[0].mxu0 %v6541
  %v7119 = vpop.f32.mrb[0].mxu0
  %v7120 = vadd.f32 0.0, %v7119
  %v7121 = vpop.f32.mrb[0].mxu0
  %7122 = vmatprep.mubr.f32.mxu0 0.0
  %7123 = vmatmul.mubr.f32.gmra.mrb[0].mxu0 %v6542
  %v7124 = vpop.f32.mrb[0].mxu0
  %v7125 = vadd.f32 0.0, %v7124
  %v7126 = vpop.f32.mrb[0].mxu0
  %7127 = vmatprep.mubr.f32.mxu0 0.0
  %7128 = vmatmul.mubr.f32.gmra.mrb[0].mxu0 %v6543
  %v7129 = vpop.f32.mrb[0].mxu0
  %v7130 = vadd.f32 0.0, %v7129
  %v7131 = vpop.f32.mrb[0].mxu0
  %7132 = vmatprep.mubr.f32.mxu0 0.0
  %7133 = vmatmul.mubr.f32.gmra.mrb[0].mxu0 %v6544
  %v7134 = vpop.f32.mrb[0].mxu0
  %v7135 = vadd.f32 0.0, %v7134
  %v7136 = vpop.f32.mrb[0].mxu0
  %7137 = vmatprep.mubr.f32.mxu0 0.0
  %7138 = vmatmul.mubr.f32.gmra.mrb[0].mxu0 %v6545
  %v7139 = vpop.f32.mrb[0].mxu0
  %v7140 = vadd.f32 0.0, %v7139
  %v7141 = vpop.f32.mrb[0].mxu0
  %7142 = vmatprep.mubr.f32.mxu0 0.0
  %7143 = vmatmul.mubr.f32.gmra.mrb[0].mxu0 %v6546
  %v7144 = vpop.f32.mrb[0].mxu0
  %v7145 = vadd.f32 0.0, %v7144
  %v7146 = vpop.f32.mrb[0].mxu0
  %7147 = vmatprep.mubr.f32.mxu0 0.0
  %7148 = vmatmul.mubr.f32.gmra.mrb[0].mxu0 %v6547
  %v7149 = vpop.f32.mrb[0].mxu0
  %v7150 = vadd.f32 0.0, %v7149
  %v7151 = vpop.f32.mrb[0].mxu0
  %7152 = vmatprep.mubr.f32.mxu0 0.0
  %7153 = vmatmul.mubr.f32.gmra.mrb[0].mxu0 %v6548
  %v7154 = vpop.f32.mrb[0].mxu0
  %v7155 = vadd.f32 0.0, %v7154
  %v7156 = vpop.f32.mrb[0].mxu0
  %7157 = vmatprep.mubr.f32.mxu0 0.0
  %7158 = vmatmul.mubr.f32.gmra.mrb[0].mxu0 %v6549
  %v7159 = vpop.f32.mrb[0].mxu0
  %v7160 = vadd.f32 0.0, %v7159
  %v7161 = vpop.f32.mrb[0].mxu0
  %7162 = vmatprep.mubr.f32.mxu0 0.0
  %7163 = vmatmul.mubr.f32.gmra.mrb[0].mxu0 %v6550
  %v7164 = vpop.f32.mrb[0].mxu0
  %v7165 = vadd.f32 0.0, %v7164
  %v7166 = vpop.f32.mrb[0].mxu0
  %7167 = vmatprep.mubr.f32.mxu0 0.0
  %7168 = vmatmul.mubr.f32.gmra.mrb[0].mxu0 %v6551
  %v7169 = vpop.f32.mrb[0].mxu0
  %v7170 = vadd.f32 0.0, %v7169
  %v7171 = vpop.f32.mrb[0].mxu0
  %7172 = vmatprep.mubr.f32.mxu0 0.0
  %7173 = vmatmul.mubr.f32.gmra.mrb[0].mxu0 %v6552
  %v7174 = vpop.f32.mrb[0].mxu0
  %v7175 = vadd.f32 0.0, %v7174
  %v7176 = vpop.f32.mrb[0].mxu0
  %7177 = vmatprep.mubr.f32.mxu0 0.0
  %7178 = vmatmul.mubr.f32.gmra.mrb[0].mxu0 %v6553
  %v7179 = vpop.f32.mrb[0].mxu0
  %v7180 = vadd.f32 0.0, %v7179
  %v7181 = vpop.f32.mrb[0].mxu0
  %7182 = vmatprep.mubr.f32.mxu0 0.0
  %7183 = vmatmul.mubr.f32.gmra.mrb[0].mxu0 %v6554
  %v7184 = vpop.f32.mrb[0].mxu0
  %v7185 = vadd.f32 0.0, %v7184
  %v7186 = vpop.f32.mrb[0].mxu0
  %7187 = vmatprep.mubr.f32.mxu0 0.0
  %7188 = vmatmul.mubr.f32.gmra.mrb[0].mxu0 %v6555
  %v7189 = vpop.f32.mrb[0].mxu0
  %v7190 = vadd.f32 0.0, %v7189
  %v7191 = vpop.f32.mrb[0].mxu0
  %7192 = vmatprep.mubr.f32.mxu0 0.0
  %7193 = vmatmul.mubr.f32.gmra.mrb[0].mxu0 %v6556
  %v7194 = vpop.f32.mrb[0].mxu0
  %v7195 = vadd.f32 0.0, %v7194
  %v7196 = vpop.f32.mrb[0].mxu0
  %7197 = vmatprep.mubr.f32.mxu0 0.0
  %7198 = vmatmul.mubr.f32.gmra.mrb[0].mxu0 %v6557
  %v7199 = vpop.f32.mrb[0].mxu0
  %v7200 = vadd.f32 0.0, %v7199
  %v7201 = vpop.f32.mrb[0].mxu0
  %7202 = vmatprep.mubr.f32.mxu0 0.0
  %7203 = vmatmul.mubr.f32.gmra.mrb[0].mxu0 %v6558
  %v7204 = vpop.f32.mrb[0].mxu0
  %v7205 = vadd.f32 0.0, %v7204
  %v7206 = vpop.f32.mrb[0].mxu0
  %7207 = vmatprep.mubr.f32.mxu0 0.0
  %7208 = vmatmul.mubr.f32.gmra.mrb[0].mxu0 %v6559
  %v7209 = vpop.f32.mrb[0].mxu0
  %v7210 = vadd.f32 0.0, %v7209
  %v7211 = vpop.f32.mrb[0].mxu0
  %7212 = vmatprep.mubr.f32.mxu0 0.0
  %7213 = vmatmul.mubr.f32.gmra.mrb[0].mxu0 %v6560
  %v7214 = vpop.f32.mrb[0].mxu0
  %v7215 = vadd.f32 0.0, %v7214
  %v7216 = vpop.f32.mrb[0].mxu0
  %7217 = vmatprep.mubr.f32.mxu0 0.0
  %7218 = vmatmul.mubr.f32.gmra.mrb[0].mxu0 %v6561
  %v7219 = vpop.f32.mrb[0].mxu0
  %v7220 = vadd.f32 0.0, %v7219
  %v7221 = vpop.f32.mrb[0].mxu0
  %7222 = vmatprep.mubr.f32.mxu0 0.0
  %7223 = vmatmul.mubr.f32.gmra.mrb[0].mxu0 %v6562
  %v7224 = vpop.f32.mrb[0].mxu0
  %v7225 = vadd.f32 0.0, %v7224
  %v7226 = vpop.f32.mrb[0].mxu0
  %7227 = vmatprep.mubr.f32.mxu0 0.0
  %7228 = vmatmul.mubr.f32.gmra.mrb[0].mxu0 %v6563
  %v7229 = vpop.f32.mrb[0].mxu0
  %v7230 = vadd.f32 0.0, %v7229
  %v7231 = vpop.f32.mrb[0].mxu0
  %7232 = vmatprep.mubr.f32.mxu0 0.0
  %7233 = vmatmul.mubr.f32.gmra.mrb[0].mxu0 %v6564
  %v7234 = vpop.f32.mrb[0].mxu0
  %v7235 = vadd.f32 0.0, %v7234
  %v7236 = vpop.f32.mrb[0].mxu0
  %7237 = vmatprep.mubr.f32.mxu0 0.0
  %7238 = vmatmul.mubr.f32.gmra.mrb[0].mxu0 %v6565
  %v7239 = vpop.f32.mrb[0].mxu0
  %v7240 = vadd.f32 0.0, %v7239
  %v7241 = vpop.f32.mrb[0].mxu0
  %7242 = vmatprep.mubr.f32.mxu0 0.0
  %7243 = vmatmul.mubr.f32.gmra.mrb[0].mxu0 %v6566
  %v7244 = vpop.f32.mrb[0].mxu0
  %v7245 = vadd.f32 0.0, %v7244
  %v7246 = vpop.f32.mrb[0].mxu0
  %7247 = vmatprep.mubr.f32.mxu0 0.0
  %7248 = vmatmul.mubr.f32.gmra.mrb[0].mxu0 %v6567
  %v7249 = vpop.f32.mrb[0].mxu0
  %v7250 = vadd.f32 0.0, %v7249
  %v7251 = vpop.f32.mrb[0].mxu0
  %7252 = vmatprep.mubr.f32.mxu0 0.0
  %7253 = vmatmul.mubr.f32.gmra.mrb[0].mxu0 %v6568
  %v7254 = vpop.f32.mrb[0].mxu0
  %v7255 = vadd.f32 0.0, %v7254
  %v7256 = vpop.f32.mrb[0].mxu0
  %7257 = vmatprep.mubr.f32.mxu0 0.0
  %7258 = vmatmul.mubr.f32.gmra.mrb[0].mxu0 %v6569
  %v7259 = vpop.f32.mrb[0].mxu0
  %v7260 = vadd.f32 0.0, %v7259
  %v7261 = vpop.f32.mrb[0].mxu0
  %7262 = vmatprep.mubr.f32.mxu0 0.0
  %7263 = vmatmul.mubr.f32.gmra.mrb[0].mxu0 %v6570
  %v7264 = vpop.f32.mrb[0].mxu0
  %v7265 = vadd.f32 0.0, %v7264
  %v7266 = vpop.f32.mrb[0].mxu0
  %7267 = vmatprep.mubr.f32.mxu0 0.0
  %7268 = vmatmul.mubr.f32.gmra.mrb[0].mxu0 %v6571
  %v7269 = vpop.f32.mrb[0].mxu0
  %v7270 = vadd.f32 0.0, %v7269
  %v7271 = vpop.f32.mrb[0].mxu0
  %7272 = vmatprep.mubr.f32.mxu0 0.0
  %7273 = vmatmul.mubr.f32.gmra.mrb[0].mxu0 %v6572
  %v7274 = vpop.f32.mrb[0].mxu0
  %v7275 = vadd.f32 0.0, %v7274
  %v7276 = vpop.f32.mrb[0].mxu0
  %7277 = vdwg.mxu0
  %7286 = vrot.lane.b32.xlu0 %v6920, 1
  %v7287 = vpop.permute.xlu0 %7286
  %7288 = vrot.lane.b32.xlu0 %v6925, 1
  %v7289 = vpop.permute.xlu0 %7288
  %7290 = vrot.lane.b32.xlu0 %v6930, 1
  %v7291 = vpop.permute.xlu0 %7290
  %7292 = vrot.lane.b32.xlu0 %v6935, 1
  %v7293 = vpop.permute.xlu0 %7292
  %7294 = vrot.lane.b32.xlu0 %v6940, 1
  %v7295 = vpop.permute.xlu0 %7294
  %7296 = vrot.lane.b32.xlu0 %v6945, 1
  %v7297 = vpop.permute.xlu0 %7296
  %7298 = vrot.lane.b32.xlu0 %v6950, 1
  %v7299 = vpop.permute.xlu0 %7298
  %7300 = vrot.lane.b32.xlu0 %v6955, 1
  %v7301 = vpop.permute.xlu0 %7300
  %v7310 = vlaneseq
  %v7311 = vshrl.u32 %v7310, 7
  %v7312 = vsub.s32 3, %v7311
  %v7313 = vrot.slane %v75, %v7312
  %v7314 = vmul.f32 %v7287, %v7313
  %v7315 = vmul.f32 %v7289, %v7313
  %v7316 = vmul.f32 %v7291, %v7313
  %v7317 = vmul.f32 %v7293, %v7313
  %v7318 = vmul.f32 %v7295, %v7313
  %v7319 = vmul.f32 %v7297, %v7313
  %v7320 = vmul.f32 %v7299, %v7313
  %v7321 = vmul.f32 %v7301, %v7313
  %v7322 = vadd.f32 %v6840, %v7314
  %v7323 = vadd.f32 %v6845, %v7315
  %v7324 = vadd.f32 %v6850, %v7316
  %v7325 = vadd.f32 %v6855, %v7317
  %v7326 = vadd.f32 %v6860, %v7318
  %v7327 = vadd.f32 %v6865, %v7319
  %v7328 = vadd.f32 %v6870, %v7320
  %v7329 = vadd.f32 %v6875, %v7321
  %7338 = vrot.lane.b32.xlu0 %v7160, 8
  %v7339 = vpop.permute.xlu0 %7338
  %7340 = vrot.lane.b32.xlu0 %v7165, 8
  %v7341 = vpop.permute.xlu0 %7340
  %7342 = vrot.lane.b32.xlu0 %v7170, 8
  %v7343 = vpop.permute.xlu0 %7342
  %7344 = vrot.lane.b32.xlu0 %v7175, 8
  %v7345 = vpop.permute.xlu0 %7344
  %7346 = vrot.lane.b32.xlu0 %v7180, 8
  %v7347 = vpop.permute.xlu0 %7346
  %7348 = vrot.lane.b32.xlu0 %v7185, 8
  %v7349 = vpop.permute.xlu0 %7348
  %7350 = vrot.lane.b32.xlu0 %v7190, 8
  %v7351 = vpop.permute.xlu0 %7350
  %7352 = vrot.lane.b32.xlu0 %v7195, 8
  %v7353 = vpop.permute.xlu0 %7352
  %vm7362 = vcmask 64512
  %v7363 = vlaneseq
  %v7364 = vshrl.u32 %v7363, 7
  %v7365 = vsub.s32 1, %v7364
  %v7366 = vrot.slane %v75, %v7365
  %v7367 = vmul.f32 %v7339, %v7366
  %v7368 = vmul.f32 %v7341, %v7366
  %v7369 = vmul.f32 %v7343, %v7366
  %v7370 = vmul.f32 %v7345, %v7366
  %v7371 = vmul.f32 %v7347, %v7366
  %v7372 = vmul.f32 %v7349, %v7366
  %v7373 = vmul.f32 %v7351, %v7366
  %v7374 = vmul.f32 %v7353, %v7366
  %v7375 = vadd.f32 %v7322, %v7367
  %v7376 = vadd.f32 %v7323, %v7368
  %v7377 = vadd.f32 %v7324, %v7369
  %v7378 = vadd.f32 %v7325, %v7370
  %v7379 = vadd.f32 %v7326, %v7371
  %v7380 = vadd.f32 %v7327, %v7372
  %v7381 = vadd.f32 %v7328, %v7373
  %v7382 = vadd.f32 %v7329, %v7374
  %7391 = vrot.lane.b32.xlu0 %v7240, 9
  %v7392 = vpop.permute.xlu0 %7391
  %7393 = vrot.lane.b32.xlu0 %v7245, 9
  %v7394 = vpop.permute.xlu0 %7393
  %7395 = vrot.lane.b32.xlu0 %v7250, 9
  %v7396 = vpop.permute.xlu0 %7395
  %7397 = vrot.lane.b32.xlu0 %v7255, 9
  %v7398 = vpop.permute.xlu0 %7397
  %7399 = vrot.lane.b32.xlu0 %v7260, 9
  %v7400 = vpop.permute.xlu0 %7399
  %7401 = vrot.lane.b32.xlu0 %v7265, 9
  %v7402 = vpop.permute.xlu0 %7401
  %7403 = vrot.lane.b32.xlu0 %v7270, 9
  %v7404 = vpop.permute.xlu0 %7403
  %7405 = vrot.lane.b32.xlu0 %v7275, 9
  %v7406 = vpop.permute.xlu0 %7405
  %v7415 = vlaneseq
  %v7416 = vshrl.u32 %v7415, 7
  %v7417 = vsub.s32 0, %v7416
  %v7418 = vrot.slane %v75, %v7417
  %v7419 = vmul.f32 %v7392, %v7418
  %v7420 = vmul.f32 %v7394, %v7418
  %v7421 = vmul.f32 %v7396, %v7418
  %v7422 = vmul.f32 %v7398, %v7418
  %v7423 = vmul.f32 %v7400, %v7418
  %v7424 = vmul.f32 %v7402, %v7418
  %v7425 = vmul.f32 %v7404, %v7418
  %v7426 = vmul.f32 %v7406, %v7418
  %v7427 = vadd.f32 %v7375, %v7419
  %v7428 = vadd.f32 %v7376, %v7420
  %v7429 = vadd.f32 %v7377, %v7421
  %v7430 = vadd.f32 %v7378, %v7422
  %v7431 = vadd.f32 %v7379, %v7423
  %v7432 = vadd.f32 %v7380, %v7424
  %v7433 = vadd.f32 %v7381, %v7425
  %v7434 = vadd.f32 %v7382, %v7426
  %7443 = vrot.lane.b32.xlu0 %v6800, 127
  %v7444 = vpop.permute.xlu0 %7443
  %7445 = vrot.lane.b32.xlu0 %v6805, 127
  %v7446 = vpop.permute.xlu0 %7445
  %7447 = vrot.lane.b32.xlu0 %v6810, 127
  %v7448 = vpop.permute.xlu0 %7447
  %7449 = vrot.lane.b32.xlu0 %v6815, 127
  %v7450 = vpop.permute.xlu0 %7449
  %7451 = vrot.lane.b32.xlu0 %v6820, 127
  %v7452 = vpop.permute.xlu0 %7451
  %7453 = vrot.lane.b32.xlu0 %v6825, 127
  %v7454 = vpop.permute.xlu0 %7453
  %7455 = vrot.lane.b32.xlu0 %v6830, 127
  %v7456 = vpop.permute.xlu0 %7455
  %7457 = vrot.lane.b32.xlu0 %v6835, 127
  %v7458 = vpop.permute.xlu0 %7457
  %vm7467 = vcmask 1039360
  %v7468 = vlaneseq
  %v7469 = vshrl.u32 %v7468, 7
  %v7470 = vsub.s32 5, %v7469
  %v7471 = vrot.slane %v75, %v7470
  %v7472 = vmul.f32 %v7444, %v7471
  %v7473 = vmul.f32 %v7446, %v7471
  %v7474 = vmul.f32 %v7448, %v7471
  %v7475 = vmul.f32 %v7450, %v7471
  %v7476 = vmul.f32 %v7452, %v7471
  %v7477 = vmul.f32 %v7454, %v7471
  %v7478 = vmul.f32 %v7456, %v7471
  %v7479 = vmul.f32 %v7458, %v7471
  %v7480 = vadd.f32 %v6880, %v7472
  %v7481 = vadd.f32 %v6885, %v7473
  %v7482 = vadd.f32 %v6890, %v7474
  %v7483 = vadd.f32 %v6895, %v7475
  %v7484 = vadd.f32 %v6900, %v7476
  %v7485 = vadd.f32 %v6905, %v7477
  %v7486 = vadd.f32 %v6910, %v7478
  %v7487 = vadd.f32 %v6915, %v7479
  %7496 = vrot.lane.b32.xlu0 %v7200, 8
  %v7497 = vpop.permute.xlu0 %7496
  %7498 = vrot.lane.b32.xlu0 %v7205, 8
  %v7499 = vpop.permute.xlu0 %7498
  %7500 = vrot.lane.b32.xlu0 %v7210, 8
  %v7501 = vpop.permute.xlu0 %7500
  %7502 = vrot.lane.b32.xlu0 %v7215, 8
  %v7503 = vpop.permute.xlu0 %7502
  %7504 = vrot.lane.b32.xlu0 %v7220, 8
  %v7505 = vpop.permute.xlu0 %7504
  %7506 = vrot.lane.b32.xlu0 %v7225, 8
  %v7507 = vpop.permute.xlu0 %7506
  %7508 = vrot.lane.b32.xlu0 %v7230, 8
  %v7509 = vpop.permute.xlu0 %7508
  %7510 = vrot.lane.b32.xlu0 %v7235, 8
  %v7511 = vpop.permute.xlu0 %7510
  %v7520 = vmul.f32 %v7497, %v7366
  %v7521 = vmul.f32 %v7499, %v7366
  %v7522 = vmul.f32 %v7501, %v7366
  %v7523 = vmul.f32 %v7503, %v7366
  %v7524 = vmul.f32 %v7505, %v7366
  %v7525 = vmul.f32 %v7507, %v7366
  %v7526 = vmul.f32 %v7509, %v7366
  %v7527 = vmul.f32 %v7511, %v7366
  %v7528 = vadd.f32 %v7480, %v7520
  %v7529 = vadd.f32 %v7481, %v7521
  %v7530 = vadd.f32 %v7482, %v7522
  %v7531 = vadd.f32 %v7483, %v7523
  %v7532 = vadd.f32 %v7484, %v7524
  %v7533 = vadd.f32 %v7485, %v7525
  %v7534 = vadd.f32 %v7486, %v7526
  %v7535 = vadd.f32 %v7487, %v7527
  %7544 = vrot.lane.b32.xlu0 %v7120, 7
  %v7545 = vpop.permute.xlu0 %7544
  %7546 = vrot.lane.b32.xlu0 %v7125, 7
  %v7547 = vpop.permute.xlu0 %7546
  %7548 = vrot.lane.b32.xlu0 %v7130, 7
  %v7549 = vpop.permute.xlu0 %7548
  %7550 = vrot.lane.b32.xlu0 %v7135, 7
  %v7551 = vpop.permute.xlu0 %7550
  %7552 = vrot.lane.b32.xlu0 %v7140, 7
  %v7553 = vpop.permute.xlu0 %7552
  %7554 = vrot.lane.b32.xlu0 %v7145, 7
  %v7555 = vpop.permute.xlu0 %7554
  %7556 = vrot.lane.b32.xlu0 %v7150, 7
  %v7557 = vpop.permute.xlu0 %7556
  %7558 = vrot.lane.b32.xlu0 %v7155, 7
  %v7559 = vpop.permute.xlu0 %7558
  %v7568 = vlaneseq
  %v7569 = vshrl.u32 %v7568, 7
  %v7570 = vsub.s32 2, %v7569
  %v7571 = vrot.slane %v75, %v7570
  %v7572 = vmul.f32 %v7545, %v7571
  %v7573 = vmul.f32 %v7547, %v7571
  %v7574 = vmul.f32 %v7549, %v7571
  %v7575 = vmul.f32 %v7551, %v7571
  %v7576 = vmul.f32 %v7553, %v7571
  %v7577 = vmul.f32 %v7555, %v7571
  %v7578 = vmul.f32 %v7557, %v7571
  %v7579 = vmul.f32 %v7559, %v7571
  %v7580 = vadd.f32 %v7528, %v7572
  %v7581 = vadd.f32 %v7529, %v7573
  %v7582 = vadd.f32 %v7530, %v7574
  %v7583 = vadd.f32 %v7531, %v7575
  %v7584 = vadd.f32 %v7532, %v7576
  %v7585 = vadd.f32 %v7533, %v7577
  %v7586 = vadd.f32 %v7534, %v7578
  %v7587 = vadd.f32 %v7535, %v7579
  %7596 = vrot.lane.b32.xlu0 %v7080, 1
  %v7597 = vpop.permute.xlu0 %7596
  %7598 = vrot.lane.b32.xlu0 %v7085, 1
  %v7599 = vpop.permute.xlu0 %7598
  %7600 = vrot.lane.b32.xlu0 %v7090, 1
  %v7601 = vpop.permute.xlu0 %7600
  %7602 = vrot.lane.b32.xlu0 %v7095, 1
  %v7603 = vpop.permute.xlu0 %7602
  %7604 = vrot.lane.b32.xlu0 %v7100, 1
  %v7605 = vpop.permute.xlu0 %7604
  %7606 = vrot.lane.b32.xlu0 %v7105, 1
  %v7607 = vpop.permute.xlu0 %7606
  %7608 = vrot.lane.b32.xlu0 %v7110, 1
  %v7609 = vpop.permute.xlu0 %7608
  %7610 = vrot.lane.b32.xlu0 %v7115, 1
  %v7611 = vpop.permute.xlu0 %7610
  %v7620 = vmul.f32 %v7597, %v7313
  %v7621 = vmul.f32 %v7599, %v7313
  %v7622 = vmul.f32 %v7601, %v7313
  %v7623 = vmul.f32 %v7603, %v7313
  %v7624 = vmul.f32 %v7605, %v7313
  %v7625 = vmul.f32 %v7607, %v7313
  %v7626 = vmul.f32 %v7609, %v7313
  %v7627 = vmul.f32 %v7611, %v7313
  %v7628 = vadd.f32 %v7000, %v7620
  %v7629 = vadd.f32 %v7005, %v7621
  %v7630 = vadd.f32 %v7010, %v7622
  %v7631 = vadd.f32 %v7015, %v7623
  %v7632 = vadd.f32 %v7020, %v7624
  %v7633 = vadd.f32 %v7025, %v7625
  %v7634 = vadd.f32 %v7030, %v7626
  %v7635 = vadd.f32 %v7035, %v7627
  %7644 = vrot.lane.b32.xlu0 %v6680, 120
  %v7645 = vpop.permute.xlu0 %7644
  %7646 = vrot.lane.b32.xlu0 %v6685, 120
  %v7647 = vpop.permute.xlu0 %7646
  %7648 = vrot.lane.b32.xlu0 %v6690, 120
  %v7649 = vpop.permute.xlu0 %7648
  %7650 = vrot.lane.b32.xlu0 %v6695, 120
  %v7651 = vpop.permute.xlu0 %7650
  %7652 = vrot.lane.b32.xlu0 %v6700, 120
  %v7653 = vpop.permute.xlu0 %7652
  %7654 = vrot.lane.b32.xlu0 %v6705, 120
  %v7655 = vpop.permute.xlu0 %7654
  %7656 = vrot.lane.b32.xlu0 %v6710, 120
  %v7657 = vpop.permute.xlu0 %7656
  %7658 = vrot.lane.b32.xlu0 %v6715, 120
  %v7659 = vpop.permute.xlu0 %7658
  %v7668 = vlaneseq
  %v7669 = vshrl.u32 %v7668, 7
  %v7670 = vsub.s32 7, %v7669
  %v7671 = vrot.slane %v75, %v7670
  %v7672 = vmul.f32 %v7645, %v7671
  %v7673 = vmul.f32 %v7647, %v7671
  %v7674 = vmul.f32 %v7649, %v7671
  %v7675 = vmul.f32 %v7651, %v7671
  %v7676 = vmul.f32 %v7653, %v7671
  %v7677 = vmul.f32 %v7655, %v7671
  %v7678 = vmul.f32 %v7657, %v7671
  %v7679 = vmul.f32 %v7659, %v7671
  %v7680 = vadd.f32 %v7628, %v7672
  %v7681 = vadd.f32 %v7629, %v7673
  %v7682 = vadd.f32 %v7630, %v7674
  %v7683 = vadd.f32 %v7631, %v7675
  %v7684 = vadd.f32 %v7632, %v7676
  %v7685 = vadd.f32 %v7633, %v7677
  %v7686 = vadd.f32 %v7634, %v7678
  %v7687 = vadd.f32 %v7635, %v7679
  %7696 = vrot.lane.b32.xlu0 %v6760, 121
  %v7697 = vpop.permute.xlu0 %7696
  %7698 = vrot.lane.b32.xlu0 %v6765, 121
  %v7699 = vpop.permute.xlu0 %7698
  %7700 = vrot.lane.b32.xlu0 %v6770, 121
  %v7701 = vpop.permute.xlu0 %7700
  %7702 = vrot.lane.b32.xlu0 %v6775, 121
  %v7703 = vpop.permute.xlu0 %7702
  %7704 = vrot.lane.b32.xlu0 %v6780, 121
  %v7705 = vpop.permute.xlu0 %7704
  %7706 = vrot.lane.b32.xlu0 %v6785, 121
  %v7707 = vpop.permute.xlu0 %7706
  %7708 = vrot.lane.b32.xlu0 %v6790, 121
  %v7709 = vpop.permute.xlu0 %7708
  %7710 = vrot.lane.b32.xlu0 %v6795, 121
  %v7711 = vpop.permute.xlu0 %7710
  %v7720 = vlaneseq
  %v7721 = vshrl.u32 %v7720, 7
  %v7722 = vsub.s32 6, %v7721
  %v7723 = vrot.slane %v75, %v7722
  %v7724 = vmul.f32 %v7697, %v7723
  %v7725 = vmul.f32 %v7699, %v7723
  %v7726 = vmul.f32 %v7701, %v7723
  %v7727 = vmul.f32 %v7703, %v7723
  %v7728 = vmul.f32 %v7705, %v7723
  %v7729 = vmul.f32 %v7707, %v7723
  %v7730 = vmul.f32 %v7709, %v7723
  %v7731 = vmul.f32 %v7711, %v7723
  %v7732 = vadd.f32 %v7680, %v7724
  %v7733 = vadd.f32 %v7681, %v7725
  %v7734 = vadd.f32 %v7682, %v7726
  %v7735 = vadd.f32 %v7683, %v7727
  %v7736 = vadd.f32 %v7684, %v7728
  %v7737 = vadd.f32 %v7685, %v7729
  %v7738 = vadd.f32 %v7686, %v7730
  %v7739 = vadd.f32 %v7687, %v7731
  %7748 = vrot.lane.b32.xlu0 %v6960, 127
  %v7749 = vpop.permute.xlu0 %7748
  %7750 = vrot.lane.b32.xlu0 %v6965, 127
  %v7751 = vpop.permute.xlu0 %7750
  %7752 = vrot.lane.b32.xlu0 %v6970, 127
  %v7753 = vpop.permute.xlu0 %7752
  %7754 = vrot.lane.b32.xlu0 %v6975, 127
  %v7755 = vpop.permute.xlu0 %7754
  %7756 = vrot.lane.b32.xlu0 %v6980, 127
  %v7757 = vpop.permute.xlu0 %7756
  %7758 = vrot.lane.b32.xlu0 %v6985, 127
  %v7759 = vpop.permute.xlu0 %7758
  %7760 = vrot.lane.b32.xlu0 %v6990, 127
  %v7761 = vpop.permute.xlu0 %7760
  %7762 = vrot.lane.b32.xlu0 %v6995, 127
  %v7763 = vpop.permute.xlu0 %7762
  %v7772 = vmul.f32 %v7749, %v7471
  %v7773 = vmul.f32 %v7751, %v7471
  %v7774 = vmul.f32 %v7753, %v7471
  %v7775 = vmul.f32 %v7755, %v7471
  %v7776 = vmul.f32 %v7757, %v7471
  %v7777 = vmul.f32 %v7759, %v7471
  %v7778 = vmul.f32 %v7761, %v7471
  %v7779 = vmul.f32 %v7763, %v7471
  %v7780 = vadd.f32 %v7040, %v7772
  %v7781 = vadd.f32 %v7045, %v7773
  %v7782 = vadd.f32 %v7050, %v7774
  %v7783 = vadd.f32 %v7055, %v7775
  %v7784 = vadd.f32 %v7060, %v7776
  %v7785 = vadd.f32 %v7065, %v7777
  %v7786 = vadd.f32 %v7070, %v7778
  %v7787 = vadd.f32 %v7075, %v7779
  %7796 = vrot.lane.b32.xlu0 %v6720, 120
  %v7797 = vpop.permute.xlu0 %7796
  %7798 = vrot.lane.b32.xlu0 %v6725, 120
  %v7799 = vpop.permute.xlu0 %7798
  %7800 = vrot.lane.b32.xlu0 %v6730, 120
  %v7801 = vpop.permute.xlu0 %7800
  %7802 = vrot.lane.b32.xlu0 %v6735, 120
  %v7803 = vpop.permute.xlu0 %7802
  %7804 = vrot.lane.b32.xlu0 %v6740, 120
  %v7805 = vpop.permute.xlu0 %7804
  %7806 = vrot.lane.b32.xlu0 %v6745, 120
  %v7807 = vpop.permute.xlu0 %7806
  %7808 = vrot.lane.b32.xlu0 %v6750, 120
  %v7809 = vpop.permute.xlu0 %7808
  %7810 = vrot.lane.b32.xlu0 %v6755, 120
  %v7811 = vpop.permute.xlu0 %7810
  %v7820 = vmul.f32 %v7797, %v7671
  %v7821 = vmul.f32 %v7799, %v7671
  %v7822 = vmul.f32 %v7801, %v7671
  %v7823 = vmul.f32 %v7803, %v7671
  %v7824 = vmul.f32 %v7805, %v7671
  %v7825 = vmul.f32 %v7807, %v7671
  %v7826 = vmul.f32 %v7809, %v7671
  %v7827 = vmul.f32 %v7811, %v7671
  %v7828 = vadd.f32 %v7780, %v7820
  %v7829 = vadd.f32 %v7781, %v7821
  %v7830 = vadd.f32 %v7782, %v7822
  %v7831 = vadd.f32 %v7783, %v7823
  %v7832 = vadd.f32 %v7784, %v7824
  %v7833 = vadd.f32 %v7785, %v7825
  %v7834 = vadd.f32 %v7786, %v7826
  %v7835 = vadd.f32 %v7787, %v7827
  %7844 = vrot.lane.b32.xlu0 %v6640, 119
  %v7845 = vpop.permute.xlu0 %7844
  %7846 = vrot.lane.b32.xlu0 %v6645, 119
  %v7847 = vpop.permute.xlu0 %7846
  %7848 = vrot.lane.b32.xlu0 %v6650, 119
  %v7849 = vpop.permute.xlu0 %7848
  %7850 = vrot.lane.b32.xlu0 %v6655, 119
  %v7851 = vpop.permute.xlu0 %7850
  %7852 = vrot.lane.b32.xlu0 %v6660, 119
  %v7853 = vpop.permute.xlu0 %7852
  %7854 = vrot.lane.b32.xlu0 %v6665, 119
  %v7855 = vpop.permute.xlu0 %7854
  %7856 = vrot.lane.b32.xlu0 %v6670, 119
  %v7857 = vpop.permute.xlu0 %7856
  %7858 = vrot.lane.b32.xlu0 %v6675, 119
  %v7859 = vpop.permute.xlu0 %7858
  %v7868 = vlaneseq
  %v7869 = vshrl.u32 %v7868, 7
  %v7870 = vsub.s32 0, %v7869
  %v7871 = vrot.slane %v76, %v7870
  %v7872 = vmul.f32 %v7845, %v7871
  %v7873 = vmul.f32 %v7847, %v7871
  %v7874 = vmul.f32 %v7849, %v7871
  %v7875 = vmul.f32 %v7851, %v7871
  %v7876 = vmul.f32 %v7853, %v7871
  %v7877 = vmul.f32 %v7855, %v7871
  %v7878 = vmul.f32 %v7857, %v7871
  %v7879 = vmul.f32 %v7859, %v7871
  %v7880 = vadd.f32 %v7828, %v7872
  %v7881 = vadd.f32 %v7829, %v7873
  %v7882 = vadd.f32 %v7830, %v7874
  %v7883 = vadd.f32 %v7831, %v7875
  %v7884 = vadd.f32 %v7832, %v7876
  %v7885 = vadd.f32 %v7833, %v7877
  %v7886 = vadd.f32 %v7834, %v7878
  %v7887 = vadd.f32 %v7835, %v7879
  %v7888 = vld [vmem:[%s8] sm:$0xff]
  %v7889 = vld [vmem:[%s8 + $0x8] sm:$0xff]
  %v7890 = vld [vmem:[%s8 + $0x10] sm:$0xff]
  %v7891 = vld [vmem:[%s8 + $0x18] sm:$0xff]
  %v7892 = vld [vmem:[%s8 + $0x20] sm:$0xff]
  %v7893 = vld [vmem:[%s8 + $0x28] sm:$0xff]
  %v7894 = vld [vmem:[%s8 + $0x30] sm:$0xff]
  %v7895 = vld [vmem:[%s8 + $0x38] sm:$0xff]
  %v7896 = vld [vmem:[%s8 + $0x40] sm:$0xff]
  %v7897 = vld [vmem:[%s8 + $0x48] sm:$0xff]
  %v7898 = vld [vmem:[%s8 + $0x50] sm:$0xff]
  %v7899 = vld [vmem:[%s8 + $0x58] sm:$0xff]
  %v7900 = vld [vmem:[%s8 + $0x60] sm:$0xff]
  %v7901 = vld [vmem:[%s8 + $0x68] sm:$0xff]
  %v7902 = vld [vmem:[%s8 + $0x70] sm:$0xff]
  %v7903 = vld [vmem:[%s8 + $0x78] sm:$0xff]
  %v7904 = vld [vmem:[%s8 + $0x80] sm:$0xff]
  %v7905 = vld [vmem:[%s8 + $0x88] sm:$0xff]
  %v7906 = vld [vmem:[%s8 + $0x90] sm:$0xff]
  %v7907 = vld [vmem:[%s8 + $0x98] sm:$0xff]
  %v7908 = vld [vmem:[%s8 + $0xa0] sm:$0xff]
  %v7909 = vld [vmem:[%s8 + $0xa8] sm:$0xff]
  %v7910 = vld [vmem:[%s8 + $0xb0] sm:$0xff]
  %v7911 = vld [vmem:[%s8 + $0xb8] sm:$0xff]
  %v7912 = vld [vmem:[%s8 + $0xc0] sm:$0xff]
  %v7913 = vld [vmem:[%s8 + $0xc8] sm:$0xff]
  %v7914 = vld [vmem:[%s8 + $0xd0] sm:$0xff]
  %v7915 = vld [vmem:[%s8 + $0xd8] sm:$0xff]
  %v7916 = vld [vmem:[%s8 + $0xe0] sm:$0xff]
  %v7917 = vld [vmem:[%s8 + $0xe8] sm:$0xff]
  %v7918 = vld [vmem:[%s8 + $0xf0] sm:$0xff]
  %v7919 = vld [vmem:[%s8 + $0xf8] sm:$0xff]
  %v7920 = vld [vmem:[%s8 + $0x100] sm:$0xff]
  %v7921 = vld [vmem:[%s8 + $0x108] sm:$0xff]
  %v7922 = vld [vmem:[%s8 + $0x110] sm:$0xff]
  %v7923 = vld [vmem:[%s8 + $0x118] sm:$0xff]
  %v7924 = vld [vmem:[%s8 + $0x120] sm:$0xff]
  %v7925 = vld [vmem:[%s8 + $0x128] sm:$0xff]
  %v7926 = vld [vmem:[%s8 + $0x130] sm:$0xff]
  %v7927 = vld [vmem:[%s8 + $0x138] sm:$0xff]
  %v7928 = vld [vmem:[%s8 + $0x140] sm:$0xff]
  %v7929 = vld [vmem:[%s8 + $0x148] sm:$0xff]
  %v7930 = vld [vmem:[%s8 + $0x150] sm:$0xff]
  %v7931 = vld [vmem:[%s8 + $0x158] sm:$0xff]
  %v7932 = vld [vmem:[%s8 + $0x160] sm:$0xff]
  %v7933 = vld [vmem:[%s8 + $0x168] sm:$0xff]
  %v7934 = vld [vmem:[%s8 + $0x170] sm:$0xff]
  %v7935 = vld [vmem:[%s8 + $0x178] sm:$0xff]
  %v7936 = vld [vmem:[%s8 + $0x180] sm:$0xff]
  %v7937 = vld [vmem:[%s8 + $0x188] sm:$0xff]
  %v7938 = vld [vmem:[%s8 + $0x190] sm:$0xff]
  %v7939 = vld [vmem:[%s8 + $0x198] sm:$0xff]
  %v7940 = vld [vmem:[%s8 + $0x1a0] sm:$0xff]
  %v7941 = vld [vmem:[%s8 + $0x1a8] sm:$0xff]
  %v7942 = vld [vmem:[%s8 + $0x1b0] sm:$0xff]
  %v7943 = vld [vmem:[%s8 + $0x1b8] sm:$0xff]
  %v7944 = vld [vmem:[%s8 + $0x1c0] sm:$0xff]
  %v7945 = vld [vmem:[%s8 + $0x1c8] sm:$0xff]
  %v7946 = vld [vmem:[%s8 + $0x1d0] sm:$0xff]
  %v7947 = vld [vmem:[%s8 + $0x1d8] sm:$0xff]
  %v7948 = vld [vmem:[%s8 + $0x1e0] sm:$0xff]
  %v7949 = vld [vmem:[%s8 + $0x1e8] sm:$0xff]
  %v7950 = vld [vmem:[%s8 + $0x1f0] sm:$0xff]
  %v7951 = vld [vmem:[%s8 + $0x1f8] sm:$0xff]
  %7960 = vrot.lane.b32.xlu0 %v7580, 64
  %v7961 = vpop.permute.xlu0 %7960
  %7962 = vrot.lane.b32.xlu0 %v7581, 64
  %v7963 = vpop.permute.xlu0 %7962
  %7964 = vrot.lane.b32.xlu0 %v7582, 64
  %v7965 = vpop.permute.xlu0 %7964
  %7966 = vrot.lane.b32.xlu0 %v7583, 64
  %v7967 = vpop.permute.xlu0 %7966
  %7968 = vrot.lane.b32.xlu0 %v7584, 64
  %v7969 = vpop.permute.xlu0 %7968
  %7970 = vrot.lane.b32.xlu0 %v7585, 64
  %v7971 = vpop.permute.xlu0 %7970
  %7972 = vrot.lane.b32.xlu0 %v7586, 64
  %v7973 = vpop.permute.xlu0 %7972
  %7974 = vrot.lane.b32.xlu0 %v7587, 64
  %v7975 = vpop.permute.xlu0 %7974
  %7992 = vrot.lane.b32.xlu0 %v7880, 64
  %v7993 = vpop.permute.xlu0 %7992
  %7994 = vrot.lane.b32.xlu0 %v7881, 64
  %v7995 = vpop.permute.xlu0 %7994
  %7996 = vrot.lane.b32.xlu0 %v7882, 64
  %v7997 = vpop.permute.xlu0 %7996
  %7998 = vrot.lane.b32.xlu0 %v7883, 64
  %v7999 = vpop.permute.xlu0 %7998
  %8000 = vrot.lane.b32.xlu0 %v7884, 64
  %v8001 = vpop.permute.xlu0 %8000
  %8002 = vrot.lane.b32.xlu0 %v7885, 64
  %v8003 = vpop.permute.xlu0 %8002
  %8004 = vrot.lane.b32.xlu0 %v7886, 64
  %v8005 = vpop.permute.xlu0 %8004
  %8006 = vrot.lane.b32.xlu0 %v7887, 64
  %v8007 = vpop.permute.xlu0 %8006
  %v8016 = vsel %vm5370, %v7427, %v7961
  %v8017 = vsel %vm5370, %v7428, %v7963
  %v8018 = vsel %vm5370, %v7429, %v7965
  %v8019 = vsel %vm5370, %v7430, %v7967
  %v8020 = vsel %vm5370, %v7431, %v7969
  %v8021 = vsel %vm5370, %v7432, %v7971
  %v8022 = vsel %vm5370, %v7433, %v7973
  %v8023 = vsel %vm5370, %v7434, %v7975
  %v8024 = vsel %vm5370, %v7732, %v7993
  %v8025 = vsel %vm5370, %v7733, %v7995
  %v8026 = vsel %vm5370, %v7734, %v7997
  %v8027 = vsel %vm5370, %v7735, %v7999
  %v8028 = vsel %vm5370, %v7736, %v8001
  %v8029 = vsel %vm5370, %v7737, %v8003
  %v8030 = vsel %vm5370, %v7738, %v8005
  %v8031 = vsel %vm5370, %v7739, %v8007
  %8032 = vmatprep.subr.mxu0 %v7889
  %8033 = vmatpush1.msra.mxu0 %v7888
  %8034 = vmatprep.subr.mxu0 %v7891
  %8035 = vmatpush1.msra.mxu0 %v7890
  %8036 = vmatprep.subr.mxu0 %v7893
  %8037 = vmatpush1.msra.mxu0 %v7892
  %8038 = vmatprep.subr.mxu0 %v7895
  %8039 = vmatpush1.msra.mxu0 %v7894
  %8040 = vmatprep.subr.mxu0 %v7897
  %8041 = vmatpush1.msra.mxu0 %v7896
  %8042 = vmatprep.subr.mxu0 %v7899
  %8043 = vmatpush1.msra.mxu0 %v7898
  %8044 = vmatprep.subr.mxu0 %v7901
  %8045 = vmatpush1.msra.mxu0 %v7900
  %8046 = vmatprep.subr.mxu0 %v7903
  %8047 = vmatpush1.msra.mxu0 %v7902
  %8048 = vmatprep.subr.mxu0 %v7905
  %8049 = vmatpush1.msra.mxu0 %v7904
  %8050 = vmatprep.subr.mxu0 %v7907
  %8051 = vmatpush1.msra.mxu0 %v7906
  %8052 = vmatprep.subr.mxu0 %v7909
  %8053 = vmatpush1.msra.mxu0 %v7908
  %8054 = vmatprep.subr.mxu0 %v7911
  %8055 = vmatpush1.msra.mxu0 %v7910
  %8056 = vmatprep.subr.mxu0 %v7913
  %8057 = vmatpush1.msra.mxu0 %v7912
  %8058 = vmatprep.subr.mxu0 %v7915
  %8059 = vmatpush1.msra.mxu0 %v7914
  %8060 = vmatprep.subr.mxu0 %v7917
  %8061 = vmatpush1.msra.mxu0 %v7916
  %8062 = vmatprep.subr.mxu0 %v7919
  %8063 = vmatpush1.msra.mxu0 %v7918
  %8064 = vmatprep.subr.mxu0 %v7921
  %8065 = vmatpush1.msra.mxu0 %v7920
  %8066 = vmatprep.subr.mxu0 %v7923
  %8067 = vmatpush1.msra.mxu0 %v7922
  %8068 = vmatprep.subr.mxu0 %v7925
  %8069 = vmatpush1.msra.mxu0 %v7924
  %8070 = vmatprep.subr.mxu0 %v7927
  %8071 = vmatpush1.msra.mxu0 %v7926
  %8072 = vmatprep.subr.mxu0 %v7929
  %8073 = vmatpush1.msra.mxu0 %v7928
  %8074 = vmatprep.subr.mxu0 %v7931
  %8075 = vmatpush1.msra.mxu0 %v7930
  %8076 = vmatprep.subr.mxu0 %v7933
  %8077 = vmatpush1.msra.mxu0 %v7932
  %8078 = vmatprep.subr.mxu0 %v7935
  %8079 = vmatpush1.msra.mxu0 %v7934
  %8080 = vmatprep.subr.mxu0 %v7937
  %8081 = vmatpush1.msra.mxu0 %v7936
  %8082 = vmatprep.subr.mxu0 %v7939
  %8083 = vmatpush1.msra.mxu0 %v7938
  %8084 = vmatprep.subr.mxu0 %v7941
  %8085 = vmatpush1.msra.mxu0 %v7940
  %8086 = vmatprep.subr.mxu0 %v7943
  %8087 = vmatpush1.msra.mxu0 %v7942
  %8088 = vmatprep.subr.mxu0 %v7945
  %8089 = vmatpush1.msra.mxu0 %v7944
  %8090 = vmatprep.subr.mxu0 %v7947
  %8091 = vmatpush1.msra.mxu0 %v7946
  %8092 = vmatprep.subr.mxu0 %v7949
  %8093 = vmatpush1.msra.mxu0 %v7948
  %8094 = vmatprep.subr.mxu0 %v7951
  %8095 = vmatpush1.msra.mxu0 %v7950
  %8096 = vmatprep.mubr.f32.mxu0 %v8024
  %8097 = vmatmul.mubr.f32.gmra.mrb[0].mxu0 %v8016
  %v8098 = vpop.f32.mrb[0].mxu0
  %v8099 = vadd.f32 0.0, %v8098
  %v8100 = vpop.f32.mrb[0].mxu0
  %v8101 = vadd.f32 0.0, %v8100
  %8102 = vmatprep.mubr.f32.mxu0 %v8025
  %8103 = vmatmul.mubr.f32.gmra.mrb[0].mxu0 %v8017
  %v8104 = vpop.f32.mrb[0].mxu0
  %v8105 = vadd.f32 0.0, %v8104
  %v8106 = vpop.f32.mrb[0].mxu0
  %v8107 = vadd.f32 0.0, %v8106
  %8108 = vmatprep.mubr.f32.mxu0 %v8026
  %8109 = vmatmul.mubr.f32.gmra.mrb[0].mxu0 %v8018
  %v8110 = vpop.f32.mrb[0].mxu0
  %v8111 = vadd.f32 0.0, %v8110
  %v8112 = vpop.f32.mrb[0].mxu0
  %v8113 = vadd.f32 0.0, %v8112
  %8114 = vmatprep.mubr.f32.mxu0 %v8027
  %8115 = vmatmul.mubr.f32.gmra.mrb[0].mxu0 %v8019
  %v8116 = vpop.f32.mrb[0].mxu0
  %v8117 = vadd.f32 0.0, %v8116
  %v8118 = vpop.f32.mrb[0].mxu0
  %v8119 = vadd.f32 0.0, %v8118
  %8120 = vmatprep.mubr.f32.mxu0 %v8028
  %8121 = vmatmul.mubr.f32.gmra.mrb[0].mxu0 %v8020
  %v8122 = vpop.f32.mrb[0].mxu0
  %v8123 = vadd.f32 0.0, %v8122
  %v8124 = vpop.f32.mrb[0].mxu0
  %v8125 = vadd.f32 0.0, %v8124
  %8126 = vmatprep.mubr.f32.mxu0 %v8029
  %8127 = vmatmul.mubr.f32.gmra.mrb[0].mxu0 %v8021
  %v8128 = vpop.f32.mrb[0].mxu0
  %v8129 = vadd.f32 0.0, %v8128
  %v8130 = vpop.f32.mrb[0].mxu0
  %v8131 = vadd.f32 0.0, %v8130
  %8132 = vmatprep.mubr.f32.mxu0 %v8030
  %8133 = vmatmul.mubr.f32.gmra.mrb[0].mxu0 %v8022
  %v8134 = vpop.f32.mrb[0].mxu0
  %v8135 = vadd.f32 0.0, %v8134
  %v8136 = vpop.f32.mrb[0].mxu0
  %v8137 = vadd.f32 0.0, %v8136
  %8138 = vmatprep.mubr.f32.mxu0 %v8031
  %8139 = vmatmul.mubr.f32.gmra.mrb[0].mxu0 %v8023
  %v8140 = vpop.f32.mrb[0].mxu0
  %v8141 = vadd.f32 0.0, %v8140
  %v8142 = vpop.f32.mrb[0].mxu0
  %v8143 = vadd.f32 0.0, %v8142
  %8144 = vdwg.mxu0
  %8153 = vrot.lane.b32.xlu0 %v7427, 64
  %v8154 = vpop.permute.xlu0 %8153
  %8155 = vrot.lane.b32.xlu0 %v7428, 64
  %v8156 = vpop.permute.xlu0 %8155
  %8157 = vrot.lane.b32.xlu0 %v7429, 64
  %v8158 = vpop.permute.xlu0 %8157
  %8159 = vrot.lane.b32.xlu0 %v7430, 64
  %v8160 = vpop.permute.xlu0 %8159
  %8161 = vrot.lane.b32.xlu0 %v7431, 64
  %v8162 = vpop.permute.xlu0 %8161
  %8163 = vrot.lane.b32.xlu0 %v7432, 64
  %v8164 = vpop.permute.xlu0 %8163
  %8165 = vrot.lane.b32.xlu0 %v7433, 64
  %v8166 = vpop.permute.xlu0 %8165
  %8167 = vrot.lane.b32.xlu0 %v7434, 64
  %v8168 = vpop.permute.xlu0 %8167
  %8185 = vrot.lane.b32.xlu0 %v7732, 64
  %v8186 = vpop.permute.xlu0 %8185
  %8187 = vrot.lane.b32.xlu0 %v7733, 64
  %v8188 = vpop.permute.xlu0 %8187
  %8189 = vrot.lane.b32.xlu0 %v7734, 64
  %v8190 = vpop.permute.xlu0 %8189
  %8191 = vrot.lane.b32.xlu0 %v7735, 64
  %v8192 = vpop.permute.xlu0 %8191
  %8193 = vrot.lane.b32.xlu0 %v7736, 64
  %v8194 = vpop.permute.xlu0 %8193
  %8195 = vrot.lane.b32.xlu0 %v7737, 64
  %v8196 = vpop.permute.xlu0 %8195
  %8197 = vrot.lane.b32.xlu0 %v7738, 64
  %v8198 = vpop.permute.xlu0 %8197
  %8199 = vrot.lane.b32.xlu0 %v7739, 64
  %v8200 = vpop.permute.xlu0 %8199
  %v8209 = vsel %vm5370, %v8154, %v7580
  %v8210 = vsel %vm5370, %v8156, %v7581
  %v8211 = vsel %vm5370, %v8158, %v7582
  %v8212 = vsel %vm5370, %v8160, %v7583
  %v8213 = vsel %vm5370, %v8162, %v7584
  %v8214 = vsel %vm5370, %v8164, %v7585
  %v8215 = vsel %vm5370, %v8166, %v7586
  %v8216 = vsel %vm5370, %v8168, %v7587
  %v8217 = vsel %vm5370, %v8186, %v7880
  %v8218 = vsel %vm5370, %v8188, %v7881
  %v8219 = vsel %vm5370, %v8190, %v7882
  %v8220 = vsel %vm5370, %v8192, %v7883
  %v8221 = vsel %vm5370, %v8194, %v7884
  %v8222 = vsel %vm5370, %v8196, %v7885
  %v8223 = vsel %vm5370, %v8198, %v7886
  %v8224 = vsel %vm5370, %v8200, %v7887
  %8225 = vmatprep.subr.mxu0 %v7889
  %8226 = vmatpush1.msra.mxu0 %v7888
  %8227 = vmatprep.subr.mxu0 %v7891
  %8228 = vmatpush1.msra.mxu0 %v7890
  %8229 = vmatprep.subr.mxu0 %v7893
  %8230 = vmatpush1.msra.mxu0 %v7892
  %8231 = vmatprep.subr.mxu0 %v7895
  %8232 = vmatpush1.msra.mxu0 %v7894
  %8233 = vmatprep.subr.mxu0 %v7897
  %8234 = vmatpush1.msra.mxu0 %v7896
  %8235 = vmatprep.subr.mxu0 %v7899
  %8236 = vmatpush1.msra.mxu0 %v7898
  %8237 = vmatprep.subr.mxu0 %v7901
  %8238 = vmatpush1.msra.mxu0 %v7900
  %8239 = vmatprep.subr.mxu0 %v7903
  %8240 = vmatpush1.msra.mxu0 %v7902
  %8241 = vmatprep.subr.mxu0 %v7905
  %8242 = vmatpush1.msra.mxu0 %v7904
  %8243 = vmatprep.subr.mxu0 %v7907
  %8244 = vmatpush1.msra.mxu0 %v7906
  %8245 = vmatprep.subr.mxu0 %v7909
  %8246 = vmatpush1.msra.mxu0 %v7908
  %8247 = vmatprep.subr.mxu0 %v7911
  %8248 = vmatpush1.msra.mxu0 %v7910
  %8249 = vmatprep.subr.mxu0 %v7913
  %8250 = vmatpush1.msra.mxu0 %v7912
  %8251 = vmatprep.subr.mxu0 %v7915
  %8252 = vmatpush1.msra.mxu0 %v7914
  %8253 = vmatprep.subr.mxu0 %v7917
  %8254 = vmatpush1.msra.mxu0 %v7916
  %8255 = vmatprep.subr.mxu0 %v7919
  %8256 = vmatpush1.msra.mxu0 %v7918
  %8257 = vmatprep.subr.mxu0 %v7921
  %8258 = vmatpush1.msra.mxu0 %v7920
  %8259 = vmatprep.subr.mxu0 %v7923
  %8260 = vmatpush1.msra.mxu0 %v7922
  %8261 = vmatprep.subr.mxu0 %v7925
  %8262 = vmatpush1.msra.mxu0 %v7924
  %8263 = vmatprep.subr.mxu0 %v7927
  %8264 = vmatpush1.msra.mxu0 %v7926
  %8265 = vmatprep.subr.mxu0 %v7929
  %8266 = vmatpush1.msra.mxu0 %v7928
  %8267 = vmatprep.subr.mxu0 %v7931
  %8268 = vmatpush1.msra.mxu0 %v7930
  %8269 = vmatprep.subr.mxu0 %v7933
  %8270 = vmatpush1.msra.mxu0 %v7932
  %8271 = vmatprep.subr.mxu0 %v7935
  %8272 = vmatpush1.msra.mxu0 %v7934
  %8273 = vmatprep.subr.mxu0 %v7937
  %8274 = vmatpush1.msra.mxu0 %v7936
  %8275 = vmatprep.subr.mxu0 %v7939
  %8276 = vmatpush1.msra.mxu0 %v7938
  %8277 = vmatprep.subr.mxu0 %v7941
  %8278 = vmatpush1.msra.mxu0 %v7940
  %8279 = vmatprep.subr.mxu0 %v7943
  %8280 = vmatpush1.msra.mxu0 %v7942
  %8281 = vmatprep.subr.mxu0 %v7945
  %8282 = vmatpush1.msra.mxu0 %v7944
  %8283 = vmatprep.subr.mxu0 %v7947
  %8284 = vmatpush1.msra.mxu0 %v7946
  %8285 = vmatprep.subr.mxu0 %v7949
  %8286 = vmatpush1.msra.mxu0 %v7948
  %8287 = vmatprep.subr.mxu0 %v7951
  %8288 = vmatpush1.msra.mxu0 %v7950
  %8289 = vmatprep.mubr.f32.mxu0 %v8217
  %8290 = vmatmul.mubr.f32.gmra.mrb[0].mxu0 %v8209
  %v8291 = vpop.f32.mrb[0].mxu0
  %v8292 = vadd.f32 0.0, %v8291
  %v8293 = vpop.f32.mrb[0].mxu0
  %v8294 = vadd.f32 0.0, %v8293
  %8295 = vmatprep.mubr.f32.mxu0 %v8218
  %8296 = vmatmul.mubr.f32.gmra.mrb[0].mxu0 %v8210
  %v8297 = vpop.f32.mrb[0].mxu0
  %v8298 = vadd.f32 0.0, %v8297
  %v8299 = vpop.f32.mrb[0].mxu0
  %v8300 = vadd.f32 0.0, %v8299
  %8301 = vmatprep.mubr.f32.mxu0 %v8219
  %8302 = vmatmul.mubr.f32.gmra.mrb[0].mxu0 %v8211
  %v8303 = vpop.f32.mrb[0].mxu0
  %v8304 = vadd.f32 0.0, %v8303
  %v8305 = vpop.f32.mrb[0].mxu0
  %v8306 = vadd.f32 0.0, %v8305
  %8307 = vmatprep.mubr.f32.mxu0 %v8220
  %8308 = vmatmul.mubr.f32.gmra.mrb[0].mxu0 %v8212
  %v8309 = vpop.f32.mrb[0].mxu0
  %v8310 = vadd.f32 0.0, %v8309
  %v8311 = vpop.f32.mrb[0].mxu0
  %v8312 = vadd.f32 0.0, %v8311
  %8313 = vmatprep.mubr.f32.mxu0 %v8221
  %8314 = vmatmul.mubr.f32.gmra.mrb[0].mxu0 %v8213
  %v8315 = vpop.f32.mrb[0].mxu0
  %v8316 = vadd.f32 0.0, %v8315
  %v8317 = vpop.f32.mrb[0].mxu0
  %v8318 = vadd.f32 0.0, %v8317
  %8319 = vmatprep.mubr.f32.mxu0 %v8222
  %8320 = vmatmul.mubr.f32.gmra.mrb[0].mxu0 %v8214
  %v8321 = vpop.f32.mrb[0].mxu0
  %v8322 = vadd.f32 0.0, %v8321
  %v8323 = vpop.f32.mrb[0].mxu0
  %v8324 = vadd.f32 0.0, %v8323
  %8325 = vmatprep.mubr.f32.mxu0 %v8223
  %8326 = vmatmul.mubr.f32.gmra.mrb[0].mxu0 %v8215
  %v8327 = vpop.f32.mrb[0].mxu0
  %v8328 = vadd.f32 0.0, %v8327
  %v8329 = vpop.f32.mrb[0].mxu0
  %v8330 = vadd.f32 0.0, %v8329
  %8331 = vmatprep.mubr.f32.mxu0 %v8224
  %8332 = vmatmul.mubr.f32.gmra.mrb[0].mxu0 %v8216
  %v8333 = vpop.f32.mrb[0].mxu0
  %v8334 = vadd.f32 0.0, %v8333
  %v8335 = vpop.f32.mrb[0].mxu0
  %v8336 = vadd.f32 0.0, %v8335
  %8337 = vdwg.mxu0
  %v8338 = vadd.f32 %v8099, %v8101
  %v8339 = vadd.f32 %v8338, %v8292
  %v8340 = vadd.f32 %v8339, %v8294
  %8341 = vadd.xlane.f32.xlu0 %v8340
  %v8342 = vpop.xlane.xlu0 %8341
  %v8343 = vadd.f32 %v8105, %v8107
  %v8344 = vadd.f32 %v8343, %v8298
  %v8345 = vadd.f32 %v8344, %v8300
  %8346 = vadd.xlane.f32.xlu0 %v8345
  %v8347 = vpop.xlane.xlu0 %8346
  %v8348 = vadd.f32 %v8111, %v8113
  %v8349 = vadd.f32 %v8348, %v8304
  %v8350 = vadd.f32 %v8349, %v8306
  %8351 = vadd.xlane.f32.xlu0 %v8350
  %v8352 = vpop.xlane.xlu0 %8351
  %v8353 = vadd.f32 %v8117, %v8119
  %v8354 = vadd.f32 %v8353, %v8310
  %v8355 = vadd.f32 %v8354, %v8312
  %8356 = vadd.xlane.f32.xlu0 %v8355
  %v8357 = vpop.xlane.xlu0 %8356
  %v8358 = vadd.f32 %v8123, %v8125
  %v8359 = vadd.f32 %v8358, %v8316
  %v8360 = vadd.f32 %v8359, %v8318
  %8361 = vadd.xlane.f32.xlu0 %v8360
  %v8362 = vpop.xlane.xlu0 %8361
  %v8363 = vadd.f32 %v8129, %v8131
  %v8364 = vadd.f32 %v8363, %v8322
  %v8365 = vadd.f32 %v8364, %v8324
  %8366 = vadd.xlane.f32.xlu0 %v8365
  %v8367 = vpop.xlane.xlu0 %8366
  %v8368 = vadd.f32 %v8135, %v8137
  %v8369 = vadd.f32 %v8368, %v8328
  %v8370 = vadd.f32 %v8369, %v8330
  %8371 = vadd.xlane.f32.xlu0 %v8370
  %v8372 = vpop.xlane.xlu0 %8371
  %v8373 = vadd.f32 %v8141, %v8143
  %v8374 = vadd.f32 %v8373, %v8334
  %v8375 = vadd.f32 %v8374, %v8336
  %8376 = vadd.xlane.f32.xlu0 %v8375
  %v8377 = vpop.xlane.xlu0 %8376
  %v8378 = vmul.f32 %v8099, %v8099
  %v8379 = vmul.f32 %v8101, %v8101
  %v8380 = vmul.f32 %v8292, %v8292
  %v8381 = vmul.f32 %v8294, %v8294
  %v8382 = vmul.f32 %v8105, %v8105
  %v8383 = vmul.f32 %v8107, %v8107
  %v8384 = vmul.f32 %v8298, %v8298
  %v8385 = vmul.f32 %v8300, %v8300
  %v8386 = vmul.f32 %v8111, %v8111
  %v8387 = vmul.f32 %v8113, %v8113
  %v8388 = vmul.f32 %v8304, %v8304
  %v8389 = vmul.f32 %v8306, %v8306
  %v8390 = vmul.f32 %v8117, %v8117
  %v8391 = vmul.f32 %v8119, %v8119
  %v8392 = vmul.f32 %v8310, %v8310
  %v8393 = vmul.f32 %v8312, %v8312
  %v8394 = vmul.f32 %v8123, %v8123
  %v8395 = vmul.f32 %v8125, %v8125
  %v8396 = vmul.f32 %v8316, %v8316
  %v8397 = vmul.f32 %v8318, %v8318
  %v8398 = vmul.f32 %v8129, %v8129
  %v8399 = vmul.f32 %v8131, %v8131
  %v8400 = vmul.f32 %v8322, %v8322
  %v8401 = vmul.f32 %v8324, %v8324
  %v8402 = vmul.f32 %v8135, %v8135
  %v8403 = vmul.f32 %v8137, %v8137
  %v8404 = vmul.f32 %v8328, %v8328
  %v8405 = vmul.f32 %v8330, %v8330
  %v8406 = vmul.f32 %v8141, %v8141
  %v8407 = vmul.f32 %v8143, %v8143
  %v8408 = vmul.f32 %v8334, %v8334
  %v8409 = vmul.f32 %v8336, %v8336
  %v8410 = vadd.f32 %v8378, %v8379
  %v8411 = vadd.f32 %v8410, %v8380
  %v8412 = vadd.f32 %v8411, %v8381
  %8413 = vadd.xlane.f32.xlu0 %v8412
  %v8414 = vpop.xlane.xlu0 %8413
  %v8415 = vadd.f32 %v8382, %v8383
  %v8416 = vadd.f32 %v8415, %v8384
  %v8417 = vadd.f32 %v8416, %v8385
  %8418 = vadd.xlane.f32.xlu0 %v8417
  %v8419 = vpop.xlane.xlu0 %8418
  %v8420 = vadd.f32 %v8386, %v8387
  %v8421 = vadd.f32 %v8420, %v8388
  %v8422 = vadd.f32 %v8421, %v8389
  %8423 = vadd.xlane.f32.xlu0 %v8422
  %v8424 = vpop.xlane.xlu0 %8423
  %v8425 = vadd.f32 %v8390, %v8391
  %v8426 = vadd.f32 %v8425, %v8392
  %v8427 = vadd.f32 %v8426, %v8393
  %8428 = vadd.xlane.f32.xlu0 %v8427
  %v8429 = vpop.xlane.xlu0 %8428
  %v8430 = vadd.f32 %v8394, %v8395
  %v8431 = vadd.f32 %v8430, %v8396
  %v8432 = vadd.f32 %v8431, %v8397
  %8433 = vadd.xlane.f32.xlu0 %v8432
  %v8434 = vpop.xlane.xlu0 %8433
  %v8435 = vadd.f32 %v8398, %v8399
  %v8436 = vadd.f32 %v8435, %v8400
  %v8437 = vadd.f32 %v8436, %v8401
  %8438 = vadd.xlane.f32.xlu0 %v8437
  %v8439 = vpop.xlane.xlu0 %8438
  %v8440 = vadd.f32 %v8402, %v8403
  %v8441 = vadd.f32 %v8440, %v8404
  %v8442 = vadd.f32 %v8441, %v8405
  %8443 = vadd.xlane.f32.xlu0 %v8442
  %v8444 = vpop.xlane.xlu0 %8443
  %v8445 = vadd.f32 %v8406, %v8407
  %v8446 = vadd.f32 %v8445, %v8408
  %v8447 = vadd.f32 %v8446, %v8409
  %8448 = vadd.xlane.f32.xlu0 %v8447
  %v8449 = vpop.xlane.xlu0 %8448
  %v8450 = vmul.f32 %v8342, 0.001953125
  %v8451 = vmul.f32 %v8347, 0.001953125
  %v8452 = vmul.f32 %v8352, 0.001953125
  %v8453 = vmul.f32 %v8357, 0.001953125
  %v8454 = vmul.f32 %v8362, 0.001953125
  %v8455 = vmul.f32 %v8367, 0.001953125
  %v8456 = vmul.f32 %v8372, 0.001953125
  %v8457 = vmul.f32 %v8377, 0.001953125
  %v8458 = vmul.f32 %v8414, 0.001953125
  %v8459 = vmul.f32 %v8419, 0.001953125
  %v8460 = vmul.f32 %v8424, 0.001953125
  %v8461 = vmul.f32 %v8429, 0.001953125
  %v8462 = vmul.f32 %v8434, 0.001953125
  %v8463 = vmul.f32 %v8439, 0.001953125
  %v8464 = vmul.f32 %v8444, 0.001953125
  %v8465 = vmul.f32 %v8449, 0.001953125
  %v8466 = vmul.f32 %v8450, %v8450
  %v8467 = vmul.f32 %v8451, %v8451
  %v8468 = vmul.f32 %v8452, %v8452
  %v8469 = vmul.f32 %v8453, %v8453
  %v8470 = vmul.f32 %v8454, %v8454
  %v8471 = vmul.f32 %v8455, %v8455
  %v8472 = vmul.f32 %v8456, %v8456
  %v8473 = vmul.f32 %v8457, %v8457
  %v8474 = vsub.f32 %v8458, %v8466
  %v8475 = vsub.f32 %v8459, %v8467
  %v8476 = vsub.f32 %v8460, %v8468
  %v8477 = vsub.f32 %v8461, %v8469
  %v8478 = vsub.f32 %v8462, %v8470
  %v8479 = vsub.f32 %v8463, %v8471
  %v8480 = vsub.f32 %v8464, %v8472
  %v8481 = vsub.f32 %v8465, %v8473
  %v8482 = vadd.f32 %v8474, 1e-05
  %v8483 = vadd.f32 %v8475, 1e-05
  %v8484 = vadd.f32 %v8476, 1e-05
  %v8485 = vadd.f32 %v8477, 1e-05
  %v8486 = vadd.f32 %v8478, 1e-05
  %v8487 = vadd.f32 %v8479, 1e-05
  %v8488 = vadd.f32 %v8480, 1e-05
  %v8489 = vadd.f32 %v8481, 1e-05
  %v8490 = vrsqrt.pop %v8482
  %v8491 = vrsqrt.pop %v8483
  %v8492 = vrsqrt.pop %v8484
  %v8493 = vrsqrt.pop %v8485
  %v8494 = vrsqrt.pop %v8486
  %v8495 = vrsqrt.pop %v8487
  %v8496 = vrsqrt.pop %v8488
  %v8497 = vrsqrt.pop %v8489
  %v8498 = vmul.f32 %v41, %v8490
  %v8499 = vmul.f32 %v42, %v8491
  %v8500 = vmul.f32 %v43, %v8492
  %v8501 = vmul.f32 %v44, %v8493
  %v8502 = vmul.f32 %v45, %v8494
  %v8503 = vmul.f32 %v46, %v8495
  %v8504 = vmul.f32 %v47, %v8496
  %v8505 = vmul.f32 %v48, %v8497
  %v8506 = vsub.f32 %v8099, %v8450
  %v8507 = vsub.f32 %v8101, %v8450
  %v8508 = vsub.f32 %v8292, %v8450
  %v8509 = vsub.f32 %v8294, %v8450
  %v8510 = vsub.f32 %v8105, %v8451
  %v8511 = vsub.f32 %v8107, %v8451
  %v8512 = vsub.f32 %v8298, %v8451
  %v8513 = vsub.f32 %v8300, %v8451
  %v8514 = vsub.f32 %v8111, %v8452
  %v8515 = vsub.f32 %v8113, %v8452
  %v8516 = vsub.f32 %v8304, %v8452
  %v8517 = vsub.f32 %v8306, %v8452
  %v8518 = vsub.f32 %v8117, %v8453
  %v8519 = vsub.f32 %v8119, %v8453
  %v8520 = vsub.f32 %v8310, %v8453
  %v8521 = vsub.f32 %v8312, %v8453
  %v8522 = vsub.f32 %v8123, %v8454
  %v8523 = vsub.f32 %v8125, %v8454
  %v8524 = vsub.f32 %v8316, %v8454
  %v8525 = vsub.f32 %v8318, %v8454
  %v8526 = vsub.f32 %v8129, %v8455
  %v8527 = vsub.f32 %v8131, %v8455
  %v8528 = vsub.f32 %v8322, %v8455
  %v8529 = vsub.f32 %v8324, %v8455
  %v8530 = vsub.f32 %v8135, %v8456
  %v8531 = vsub.f32 %v8137, %v8456
  %v8532 = vsub.f32 %v8328, %v8456
  %v8533 = vsub.f32 %v8330, %v8456
  %v8534 = vsub.f32 %v8141, %v8457
  %v8535 = vsub.f32 %v8143, %v8457
  %v8536 = vsub.f32 %v8334, %v8457
  %v8537 = vsub.f32 %v8336, %v8457
  %8539 = vset.pattern.permute.xlu0 4
  %8540 = vperm.xlu0 %8539, %v8498
  %v8541 = vpop.permute.xlu0 %8540
  %8544 = vset.pattern.permute.xlu0 4
  %8545 = vperm.xlu0 %8544, %v8499
  %v8546 = vpop.permute.xlu0 %8545
  %8549 = vset.pattern.permute.xlu0 4
  %8550 = vperm.xlu0 %8549, %v8500
  %v8551 = vpop.permute.xlu0 %8550
  %8554 = vset.pattern.permute.xlu0 4
  %8555 = vperm.xlu0 %8554, %v8501
  %v8556 = vpop.permute.xlu0 %8555
  %8559 = vset.pattern.permute.xlu0 4
  %8560 = vperm.xlu0 %8559, %v8502
  %v8561 = vpop.permute.xlu0 %8560
  %8564 = vset.pattern.permute.xlu0 4
  %8565 = vperm.xlu0 %8564, %v8503
  %v8566 = vpop.permute.xlu0 %8565
  %8569 = vset.pattern.permute.xlu0 4
  %8570 = vperm.xlu0 %8569, %v8504
  %v8571 = vpop.permute.xlu0 %8570
  %8574 = vset.pattern.permute.xlu0 4
  %8575 = vperm.xlu0 %8574, %v8505
  %v8576 = vpop.permute.xlu0 %8575
  %v8578 = vmul.f32 %v8506, %v8541
  %v8579 = vmul.f32 %v8507, %v8541
  %v8580 = vmul.f32 %v8508, %v8541
  %v8581 = vmul.f32 %v8509, %v8541
  %v8582 = vmul.f32 %v8510, %v8546
  %v8583 = vmul.f32 %v8511, %v8546
  %v8584 = vmul.f32 %v8512, %v8546
  %v8585 = vmul.f32 %v8513, %v8546
  %v8586 = vmul.f32 %v8514, %v8551
  %v8587 = vmul.f32 %v8515, %v8551
  %v8588 = vmul.f32 %v8516, %v8551
  %v8589 = vmul.f32 %v8517, %v8551
  %v8590 = vmul.f32 %v8518, %v8556
  %v8591 = vmul.f32 %v8519, %v8556
  %v8592 = vmul.f32 %v8520, %v8556
  %v8593 = vmul.f32 %v8521, %v8556
  %v8594 = vmul.f32 %v8522, %v8561
  %v8595 = vmul.f32 %v8523, %v8561
  %v8596 = vmul.f32 %v8524, %v8561
  %v8597 = vmul.f32 %v8525, %v8561
  %v8598 = vmul.f32 %v8526, %v8566
  %v8599 = vmul.f32 %v8527, %v8566
  %v8600 = vmul.f32 %v8528, %v8566
  %v8601 = vmul.f32 %v8529, %v8566
  %v8602 = vmul.f32 %v8530, %v8571
  %v8603 = vmul.f32 %v8531, %v8571
  %v8604 = vmul.f32 %v8532, %v8571
  %v8605 = vmul.f32 %v8533, %v8571
  %v8606 = vmul.f32 %v8534, %v8576
  %v8607 = vmul.f32 %v8535, %v8576
  %v8608 = vmul.f32 %v8536, %v8576
  %v8609 = vmul.f32 %v8537, %v8576
  %8610 = vset.pattern.permute.xlu0 5
  %8611 = vperm.xlu0 %8610, %v41
  %v8612 = vpop.permute.xlu0 %8611
  %8614 = vset.pattern.permute.xlu0 5
  %8615 = vperm.xlu0 %8614, %v42
  %v8616 = vpop.permute.xlu0 %8615
  %8618 = vset.pattern.permute.xlu0 5
  %8619 = vperm.xlu0 %8618, %v43
  %v8620 = vpop.permute.xlu0 %8619
  %8622 = vset.pattern.permute.xlu0 5
  %8623 = vperm.xlu0 %8622, %v44
  %v8624 = vpop.permute.xlu0 %8623
  %8626 = vset.pattern.permute.xlu0 5
  %8627 = vperm.xlu0 %8626, %v45
  %v8628 = vpop.permute.xlu0 %8627
  %8630 = vset.pattern.permute.xlu0 5
  %8631 = vperm.xlu0 %8630, %v46
  %v8632 = vpop.permute.xlu0 %8631
  %8634 = vset.pattern.permute.xlu0 5
  %8635 = vperm.xlu0 %8634, %v47
  %v8636 = vpop.permute.xlu0 %8635
  %8638 = vset.pattern.permute.xlu0 5
  %8639 = vperm.xlu0 %8638, %v48
  %v8640 = vpop.permute.xlu0 %8639
  %v8642 = vadd.f32 %v8578, %v8612
  %v8643 = vadd.f32 %v8579, %v8612
  %v8644 = vadd.f32 %v8580, %v8612
  %v8645 = vadd.f32 %v8581, %v8612
  %v8646 = vadd.f32 %v8582, %v8616
  %v8647 = vadd.f32 %v8583, %v8616
  %v8648 = vadd.f32 %v8584, %v8616
  %v8649 = vadd.f32 %v8585, %v8616
  %v8650 = vadd.f32 %v8586, %v8620
  %v8651 = vadd.f32 %v8587, %v8620
  %v8652 = vadd.f32 %v8588, %v8620
  %v8653 = vadd.f32 %v8589, %v8620
  %v8654 = vadd.f32 %v8590, %v8624
  %v8655 = vadd.f32 %v8591, %v8624
  %v8656 = vadd.f32 %v8592, %v8624
  %v8657 = vadd.f32 %v8593, %v8624
  %v8658 = vadd.f32 %v8594, %v8628
  %v8659 = vadd.f32 %v8595, %v8628
  %v8660 = vadd.f32 %v8596, %v8628
  %v8661 = vadd.f32 %v8597, %v8628
  %v8662 = vadd.f32 %v8598, %v8632
  %v8663 = vadd.f32 %v8599, %v8632
  %v8664 = vadd.f32 %v8600, %v8632
  %v8665 = vadd.f32 %v8601, %v8632
  %v8666 = vadd.f32 %v8602, %v8636
  %v8667 = vadd.f32 %v8603, %v8636
  %v8668 = vadd.f32 %v8604, %v8636
  %v8669 = vadd.f32 %v8605, %v8636
  %v8670 = vadd.f32 %v8606, %v8640
  %v8671 = vadd.f32 %v8607, %v8640
  %v8672 = vadd.f32 %v8608, %v8640
  %v8673 = vadd.f32 %v8609, %v8640
  %v8674 = vmax.f32 %v8642, 0.0
  %v8675 = vmax.f32 %v8643, 0.0
  %v8676 = vmax.f32 %v8644, 0.0
  %v8677 = vmax.f32 %v8645, 0.0
  %v8678 = vmax.f32 %v8646, 0.0
  %v8679 = vmax.f32 %v8647, 0.0
  %v8680 = vmax.f32 %v8648, 0.0
  %v8681 = vmax.f32 %v8649, 0.0
  %v8682 = vmax.f32 %v8650, 0.0
  %v8683 = vmax.f32 %v8651, 0.0
  %v8684 = vmax.f32 %v8652, 0.0
  %v8685 = vmax.f32 %v8653, 0.0
  %v8686 = vmax.f32 %v8654, 0.0
  %v8687 = vmax.f32 %v8655, 0.0
  %v8688 = vmax.f32 %v8656, 0.0
  %v8689 = vmax.f32 %v8657, 0.0
  %v8690 = vmax.f32 %v8658, 0.0
  %v8691 = vmax.f32 %v8659, 0.0
  %v8692 = vmax.f32 %v8660, 0.0
  %v8693 = vmax.f32 %v8661, 0.0
  %v8694 = vmax.f32 %v8662, 0.0
  %v8695 = vmax.f32 %v8663, 0.0
  %v8696 = vmax.f32 %v8664, 0.0
  %v8697 = vmax.f32 %v8665, 0.0
  %v8698 = vmax.f32 %v8666, 0.0
  %v8699 = vmax.f32 %v8667, 0.0
  %v8700 = vmax.f32 %v8668, 0.0
  %v8701 = vmax.f32 %v8669, 0.0
  %v8702 = vmax.f32 %v8670, 0.0
  %v8703 = vmax.f32 %v8671, 0.0
  %v8704 = vmax.f32 %v8672, 0.0
  %v8705 = vmax.f32 %v8673, 0.0
  %v8706 = vld [vmem:[%s4] sm:$0xff]
  %v8707 = vld [vmem:[%s4 + $0x8] sm:$0xff]
  %v8708 = vld [vmem:[%s4 + $0x10] sm:$0xff]
  %v8709 = vld [vmem:[%s4 + $0x18] sm:$0xff]
  %v8710 = vld [vmem:[%s4 + $0x20] sm:$0xff]
  %v8711 = vld [vmem:[%s4 + $0x28] sm:$0xff]
  %v8712 = vld [vmem:[%s4 + $0x30] sm:$0xff]
  %v8713 = vld [vmem:[%s4 + $0x38] sm:$0xff]
  %v8714 = vld [vmem:[%s4 + $0x40] sm:$0xff]
  %v8715 = vld [vmem:[%s4 + $0x48] sm:$0xff]
  %v8716 = vld [vmem:[%s4 + $0x50] sm:$0xff]
  %v8717 = vld [vmem:[%s4 + $0x58] sm:$0xff]
  %v8718 = vld [vmem:[%s4 + $0x60] sm:$0xff]
  %v8719 = vld [vmem:[%s4 + $0x68] sm:$0xff]
  %v8720 = vld [vmem:[%s4 + $0x70] sm:$0xff]
  %v8721 = vld [vmem:[%s4 + $0x78] sm:$0xff]
  %v8723 = vsel %vm5370, %v8706, 0
  %v8726 = vsel %vm5370, %v8707, 0
  %v8729 = vsel %vm5370, %v8708, 0
  %v8732 = vsel %vm5370, %v8709, 0
  %v8735 = vsel %vm5370, %v8710, 0
  %v8738 = vsel %vm5370, %v8711, 0
  %v8741 = vsel %vm5370, %v8712, 0
  %v8744 = vsel %vm5370, %v8713, 0
  %v8747 = vsel %vm5370, %v8714, 0
  %v8750 = vsel %vm5370, %v8715, 0
  %v8753 = vsel %vm5370, %v8716, 0
  %v8756 = vsel %vm5370, %v8717, 0
  %v8759 = vsel %vm5370, %v8718, 0
  %v8762 = vsel %vm5370, %v8719, 0
  %v8765 = vsel %vm5370, %v8720, 0
  %v8768 = vsel %vm5370, %v8721, 0
  %8770 = vmatprep.subr.mxu0 %v8675
  %8771 = vmatpush1.msra.mxu0 %v8674
  %8772 = vmatprep.subr.mxu0 %v8679
  %8773 = vmatpush1.msra.mxu0 %v8678
  %8774 = vmatprep.subr.mxu0 %v8683
  %8775 = vmatpush1.msra.mxu0 %v8682
  %8776 = vmatprep.subr.mxu0 %v8687
  %8777 = vmatpush1.msra.mxu0 %v8686
  %8778 = vmatprep.subr.mxu0 %v8691
  %8779 = vmatpush1.msra.mxu0 %v8690
  %8780 = vmatprep.subr.mxu0 %v8695
  %8781 = vmatpush1.msra.mxu0 %v8694
  %8782 = vmatprep.subr.mxu0 %v8699
  %8783 = vmatpush1.msra.mxu0 %v8698
  %8784 = vmatprep.subr.mxu0 %v8703
  %8785 = vmatpush1.msra.mxu0 %v8702
  %8786 = vmatprep.subr.mxu0 0.0
  %8787 = vmatpush1.msra.mxu0 0.0
  %8788 = vmatprep.subr.mxu0 0.0
  %8789 = vmatpush1.msra.mxu0 0.0
  %8790 = vmatprep.subr.mxu0 0.0
  %8791 = vmatpush1.msra.mxu0 0.0
  %8792 = vmatprep.subr.mxu0 0.0
  %8793 = vmatpush1.msra.mxu0 0.0
  %8794 = vmatprep.subr.mxu0 0.0
  %8795 = vmatpush1.msra.mxu0 0.0
  %8796 = vmatprep.subr.mxu0 0.0
  %8797 = vmatpush1.msra.mxu0 0.0
  %8798 = vmatprep.subr.mxu0 0.0
  %8799 = vmatpush1.msra.mxu0 0.0
  %8800 = vmatprep.subr.mxu0 0.0
  %8801 = vmatpush1.msra.mxu0 0.0
  %8802 = vmatprep.subr.mxu0 0.0
  %8803 = vmatpush1.msra.mxu0 0.0
  %8804 = vmatprep.subr.mxu0 0.0
  %8805 = vmatpush1.msra.mxu0 0.0
  %8806 = vmatprep.subr.mxu0 0.0
  %8807 = vmatpush1.msra.mxu0 0.0
  %8808 = vmatprep.subr.mxu0 0.0
  %8809 = vmatpush1.msra.mxu0 0.0
  %8810 = vmatprep.subr.mxu0 0.0
  %8811 = vmatpush1.msra.mxu0 0.0
  %8812 = vmatprep.subr.mxu0 0.0
  %8813 = vmatpush1.msra.mxu0 0.0
  %8814 = vmatprep.subr.mxu0 0.0
  %8815 = vmatpush1.msra.mxu0 0.0
  %8816 = vmatprep.subr.mxu0 0.0
  %8817 = vmatpush1.msra.mxu0 0.0
  %8818 = vmatprep.subr.mxu0 0.0
  %8819 = vmatpush1.msra.mxu0 0.0
  %8820 = vmatprep.subr.mxu0 0.0
  %8821 = vmatpush1.msra.mxu0 0.0
  %8822 = vmatprep.subr.mxu0 0.0
  %8823 = vmatpush1.msra.mxu0 0.0
  %8824 = vmatprep.subr.mxu0 0.0
  %8825 = vmatpush1.msra.mxu0 0.0
  %8826 = vmatprep.subr.mxu0 0.0
  %8827 = vmatpush1.msra.mxu0 0.0
  %8828 = vmatprep.subr.mxu0 0.0
  %8829 = vmatpush1.msra.mxu0 0.0
  %8830 = vmatprep.subr.mxu0 0.0
  %8831 = vmatpush1.msra.mxu0 0.0
  %8832 = vmatprep.subr.mxu0 0.0
  %8833 = vmatpush1.msra.mxu0 0.0
  %8834 = vmatprep.mubr.f32.mxu0 0.0
  %8835 = vmatmul.mubr.f32.gmra.mrb[0].mxu0 %v8723
  %v8836 = vpop.f32.mrb[0].mxu0
  %v8837 = vadd.f32 0.0, %v8836
  %v8838 = vpop.f32.mrb[0].mxu0
  %v8839 = vadd.f32 0.0, %v8838
  %8840 = vmatprep.mubr.f32.mxu0 0.0
  %8841 = vmatmul.mubr.f32.gmra.mrb[0].mxu0 %v8726
  %v8842 = vpop.f32.mrb[0].mxu0
  %v8843 = vadd.f32 0.0, %v8842
  %v8844 = vpop.f32.mrb[0].mxu0
  %v8845 = vadd.f32 0.0, %v8844
  %8846 = vmatprep.mubr.f32.mxu0 0.0
  %8847 = vmatmul.mubr.f32.gmra.mrb[0].mxu0 %v8729
  %v8848 = vpop.f32.mrb[0].mxu0
  %v8849 = vadd.f32 0.0, %v8848
  %v8850 = vpop.f32.mrb[0].mxu0
  %v8851 = vadd.f32 0.0, %v8850
  %8852 = vmatprep.mubr.f32.mxu0 0.0
  %8853 = vmatmul.mubr.f32.gmra.mrb[0].mxu0 %v8732
  %v8854 = vpop.f32.mrb[0].mxu0
  %v8855 = vadd.f32 0.0, %v8854
  %v8856 = vpop.f32.mrb[0].mxu0
  %v8857 = vadd.f32 0.0, %v8856
  %8858 = vmatprep.mubr.f32.mxu0 0.0
  %8859 = vmatmul.mubr.f32.gmra.mrb[0].mxu0 %v8735
  %v8860 = vpop.f32.mrb[0].mxu0
  %v8861 = vadd.f32 0.0, %v8860
  %v8862 = vpop.f32.mrb[0].mxu0
  %v8863 = vadd.f32 0.0, %v8862
  %8864 = vmatprep.mubr.f32.mxu0 0.0
  %8865 = vmatmul.mubr.f32.gmra.mrb[0].mxu0 %v8738
  %v8866 = vpop.f32.mrb[0].mxu0
  %v8867 = vadd.f32 0.0, %v8866
  %v8868 = vpop.f32.mrb[0].mxu0
  %v8869 = vadd.f32 0.0, %v8868
  %8870 = vmatprep.mubr.f32.mxu0 0.0
  %8871 = vmatmul.mubr.f32.gmra.mrb[0].mxu0 %v8741
  %v8872 = vpop.f32.mrb[0].mxu0
  %v8873 = vadd.f32 0.0, %v8872
  %v8874 = vpop.f32.mrb[0].mxu0
  %v8875 = vadd.f32 0.0, %v8874
  %8876 = vmatprep.mubr.f32.mxu0 0.0
  %8877 = vmatmul.mubr.f32.gmra.mrb[0].mxu0 %v8744
  %v8878 = vpop.f32.mrb[0].mxu0
  %v8879 = vadd.f32 0.0, %v8878
  %v8880 = vpop.f32.mrb[0].mxu0
  %v8881 = vadd.f32 0.0, %v8880
  %8882 = vmatprep.mubr.f32.mxu0 0.0
  %8883 = vmatmul.mubr.f32.gmra.mrb[0].mxu0 %v8747
  %v8884 = vpop.f32.mrb[0].mxu0
  %v8885 = vadd.f32 0.0, %v8884
  %v8886 = vpop.f32.mrb[0].mxu0
  %v8887 = vadd.f32 0.0, %v8886
  %8888 = vmatprep.mubr.f32.mxu0 0.0
  %8889 = vmatmul.mubr.f32.gmra.mrb[0].mxu0 %v8750
  %v8890 = vpop.f32.mrb[0].mxu0
  %v8891 = vadd.f32 0.0, %v8890
  %v8892 = vpop.f32.mrb[0].mxu0
  %v8893 = vadd.f32 0.0, %v8892
  %8894 = vmatprep.mubr.f32.mxu0 0.0
  %8895 = vmatmul.mubr.f32.gmra.mrb[0].mxu0 %v8753
  %v8896 = vpop.f32.mrb[0].mxu0
  %v8897 = vadd.f32 0.0, %v8896
  %v8898 = vpop.f32.mrb[0].mxu0
  %v8899 = vadd.f32 0.0, %v8898
  %8900 = vmatprep.mubr.f32.mxu0 0.0
  %8901 = vmatmul.mubr.f32.gmra.mrb[0].mxu0 %v8756
  %v8902 = vpop.f32.mrb[0].mxu0
  %v8903 = vadd.f32 0.0, %v8902
  %v8904 = vpop.f32.mrb[0].mxu0
  %v8905 = vadd.f32 0.0, %v8904
  %8906 = vmatprep.mubr.f32.mxu0 0.0
  %8907 = vmatmul.mubr.f32.gmra.mrb[0].mxu0 %v8759
  %v8908 = vpop.f32.mrb[0].mxu0
  %v8909 = vadd.f32 0.0, %v8908
  %v8910 = vpop.f32.mrb[0].mxu0
  %v8911 = vadd.f32 0.0, %v8910
  %8912 = vmatprep.mubr.f32.mxu0 0.0
  %8913 = vmatmul.mubr.f32.gmra.mrb[0].mxu0 %v8762
  %v8914 = vpop.f32.mrb[0].mxu0
  %v8915 = vadd.f32 0.0, %v8914
  %v8916 = vpop.f32.mrb[0].mxu0
  %v8917 = vadd.f32 0.0, %v8916
  %8918 = vmatprep.mubr.f32.mxu0 0.0
  %8919 = vmatmul.mubr.f32.gmra.mrb[0].mxu0 %v8765
  %v8920 = vpop.f32.mrb[0].mxu0
  %v8921 = vadd.f32 0.0, %v8920
  %v8922 = vpop.f32.mrb[0].mxu0
  %v8923 = vadd.f32 0.0, %v8922
  %8924 = vmatprep.mubr.f32.mxu0 0.0
  %8925 = vmatmul.mubr.f32.gmra.mrb[0].mxu0 %v8768
  %v8926 = vpop.f32.mrb[0].mxu0
  %v8927 = vadd.f32 0.0, %v8926
  %v8928 = vpop.f32.mrb[0].mxu0
  %v8929 = vadd.f32 0.0, %v8928
  %8930 = vdwg.mxu0
  %8931 = vmatprep.subr.mxu0 %v8677
  %8932 = vmatpush1.msra.mxu0 %v8676
  %8933 = vmatprep.subr.mxu0 %v8681
  %8934 = vmatpush1.msra.mxu0 %v8680
  %8935 = vmatprep.subr.mxu0 %v8685
  %8936 = vmatpush1.msra.mxu0 %v8684
  %8937 = vmatprep.subr.mxu0 %v8689
  %8938 = vmatpush1.msra.mxu0 %v8688
  %8939 = vmatprep.subr.mxu0 %v8693
  %8940 = vmatpush1.msra.mxu0 %v8692
  %8941 = vmatprep.subr.mxu0 %v8697
  %8942 = vmatpush1.msra.mxu0 %v8696
  %8943 = vmatprep.subr.mxu0 %v8701
  %8944 = vmatpush1.msra.mxu0 %v8700
  %8945 = vmatprep.subr.mxu0 %v8705
  %8946 = vmatpush1.msra.mxu0 %v8704
  %8947 = vmatprep.subr.mxu0 0.0
  %8948 = vmatpush1.msra.mxu0 0.0
  %8949 = vmatprep.subr.mxu0 0.0
  %8950 = vmatpush1.msra.mxu0 0.0
  %8951 = vmatprep.subr.mxu0 0.0
  %8952 = vmatpush1.msra.mxu0 0.0
  %8953 = vmatprep.subr.mxu0 0.0
  %8954 = vmatpush1.msra.mxu0 0.0
  %8955 = vmatprep.subr.mxu0 0.0
  %8956 = vmatpush1.msra.mxu0 0.0
  %8957 = vmatprep.subr.mxu0 0.0
  %8958 = vmatpush1.msra.mxu0 0.0
  %8959 = vmatprep.subr.mxu0 0.0
  %8960 = vmatpush1.msra.mxu0 0.0
  %8961 = vmatprep.subr.mxu0 0.0
  %8962 = vmatpush1.msra.mxu0 0.0
  %8963 = vmatprep.subr.mxu0 0.0
  %8964 = vmatpush1.msra.mxu0 0.0
  %8965 = vmatprep.subr.mxu0 0.0
  %8966 = vmatpush1.msra.mxu0 0.0
  %8967 = vmatprep.subr.mxu0 0.0
  %8968 = vmatpush1.msra.mxu0 0.0
  %8969 = vmatprep.subr.mxu0 0.0
  %8970 = vmatpush1.msra.mxu0 0.0
  %8971 = vmatprep.subr.mxu0 0.0
  %8972 = vmatpush1.msra.mxu0 0.0
  %8973 = vmatprep.subr.mxu0 0.0
  %8974 = vmatpush1.msra.mxu0 0.0
  %8975 = vmatprep.subr.mxu0 0.0
  %8976 = vmatpush1.msra.mxu0 0.0
  %8977 = vmatprep.subr.mxu0 0.0
  %8978 = vmatpush1.msra.mxu0 0.0
  %8979 = vmatprep.subr.mxu0 0.0
  %8980 = vmatpush1.msra.mxu0 0.0
  %8981 = vmatprep.subr.mxu0 0.0
  %8982 = vmatpush1.msra.mxu0 0.0
  %8983 = vmatprep.subr.mxu0 0.0
  %8984 = vmatpush1.msra.mxu0 0.0
  %8985 = vmatprep.subr.mxu0 0.0
  %8986 = vmatpush1.msra.mxu0 0.0
  %8987 = vmatprep.subr.mxu0 0.0
  %8988 = vmatpush1.msra.mxu0 0.0
  %8989 = vmatprep.subr.mxu0 0.0
  %8990 = vmatpush1.msra.mxu0 0.0
  %8991 = vmatprep.subr.mxu0 0.0
  %8992 = vmatpush1.msra.mxu0 0.0
  %8993 = vmatprep.subr.mxu0 0.0
  %8994 = vmatpush1.msra.mxu0 0.0
  %8995 = vmatprep.mubr.f32.mxu0 0.0
  %8996 = vmatmul.mubr.f32.gmra.mrb[0].mxu0 %v8723
  %v8997 = vpop.f32.mrb[0].mxu0
  %v8998 = vadd.f32 0.0, %v8997
  %v8999 = vpop.f32.mrb[0].mxu0
  %v9000 = vadd.f32 0.0, %v8999
  %9001 = vmatprep.mubr.f32.mxu0 0.0
  %9002 = vmatmul.mubr.f32.gmra.mrb[0].mxu0 %v8726
  %v9003 = vpop.f32.mrb[0].mxu0
  %v9004 = vadd.f32 0.0, %v9003
  %v9005 = vpop.f32.mrb[0].mxu0
  %v9006 = vadd.f32 0.0, %v9005
  %9007 = vmatprep.mubr.f32.mxu0 0.0
  %9008 = vmatmul.mubr.f32.gmra.mrb[0].mxu0 %v8729
  %v9009 = vpop.f32.mrb[0].mxu0
  %v9010 = vadd.f32 0.0, %v9009
  %v9011 = vpop.f32.mrb[0].mxu0
  %v9012 = vadd.f32 0.0, %v9011
  %9013 = vmatprep.mubr.f32.mxu0 0.0
  %9014 = vmatmul.mubr.f32.gmra.mrb[0].mxu0 %v8732
  %v9015 = vpop.f32.mrb[0].mxu0
  %v9016 = vadd.f32 0.0, %v9015
  %v9017 = vpop.f32.mrb[0].mxu0
  %v9018 = vadd.f32 0.0, %v9017
  %9019 = vmatprep.mubr.f32.mxu0 0.0
  %9020 = vmatmul.mubr.f32.gmra.mrb[0].mxu0 %v8735
  %v9021 = vpop.f32.mrb[0].mxu0
  %v9022 = vadd.f32 0.0, %v9021
  %v9023 = vpop.f32.mrb[0].mxu0
  %v9024 = vadd.f32 0.0, %v9023
  %9025 = vmatprep.mubr.f32.mxu0 0.0
  %9026 = vmatmul.mubr.f32.gmra.mrb[0].mxu0 %v8738
  %v9027 = vpop.f32.mrb[0].mxu0
  %v9028 = vadd.f32 0.0, %v9027
  %v9029 = vpop.f32.mrb[0].mxu0
  %v9030 = vadd.f32 0.0, %v9029
  %9031 = vmatprep.mubr.f32.mxu0 0.0
  %9032 = vmatmul.mubr.f32.gmra.mrb[0].mxu0 %v8741
  %v9033 = vpop.f32.mrb[0].mxu0
  %v9034 = vadd.f32 0.0, %v9033
  %v9035 = vpop.f32.mrb[0].mxu0
  %v9036 = vadd.f32 0.0, %v9035
  %9037 = vmatprep.mubr.f32.mxu0 0.0
  %9038 = vmatmul.mubr.f32.gmra.mrb[0].mxu0 %v8744
  %v9039 = vpop.f32.mrb[0].mxu0
  %v9040 = vadd.f32 0.0, %v9039
  %v9041 = vpop.f32.mrb[0].mxu0
  %v9042 = vadd.f32 0.0, %v9041
  %9043 = vmatprep.mubr.f32.mxu0 0.0
  %9044 = vmatmul.mubr.f32.gmra.mrb[0].mxu0 %v8747
  %v9045 = vpop.f32.mrb[0].mxu0
  %v9046 = vadd.f32 0.0, %v9045
  %v9047 = vpop.f32.mrb[0].mxu0
  %v9048 = vadd.f32 0.0, %v9047
  %9049 = vmatprep.mubr.f32.mxu0 0.0
  %9050 = vmatmul.mubr.f32.gmra.mrb[0].mxu0 %v8750
  %v9051 = vpop.f32.mrb[0].mxu0
  %v9052 = vadd.f32 0.0, %v9051
  %v9053 = vpop.f32.mrb[0].mxu0
  %v9054 = vadd.f32 0.0, %v9053
  %9055 = vmatprep.mubr.f32.mxu0 0.0
  %9056 = vmatmul.mubr.f32.gmra.mrb[0].mxu0 %v8753
  %v9057 = vpop.f32.mrb[0].mxu0
  %v9058 = vadd.f32 0.0, %v9057
  %v9059 = vpop.f32.mrb[0].mxu0
  %v9060 = vadd.f32 0.0, %v9059
  %9061 = vmatprep.mubr.f32.mxu0 0.0
  %9062 = vmatmul.mubr.f32.gmra.mrb[0].mxu0 %v8756
  %v9063 = vpop.f32.mrb[0].mxu0
  %v9064 = vadd.f32 0.0, %v9063
  %v9065 = vpop.f32.mrb[0].mxu0
  %v9066 = vadd.f32 0.0, %v9065
  %9067 = vmatprep.mubr.f32.mxu0 0.0
  %9068 = vmatmul.mubr.f32.gmra.mrb[0].mxu0 %v8759
  %v9069 = vpop.f32.mrb[0].mxu0
  %v9070 = vadd.f32 0.0, %v9069
  %v9071 = vpop.f32.mrb[0].mxu0
  %v9072 = vadd.f32 0.0, %v9071
  %9073 = vmatprep.mubr.f32.mxu0 0.0
  %9074 = vmatmul.mubr.f32.gmra.mrb[0].mxu0 %v8762
  %v9075 = vpop.f32.mrb[0].mxu0
  %v9076 = vadd.f32 0.0, %v9075
  %v9077 = vpop.f32.mrb[0].mxu0
  %v9078 = vadd.f32 0.0, %v9077
  %9079 = vmatprep.mubr.f32.mxu0 0.0
  %9080 = vmatmul.mubr.f32.gmra.mrb[0].mxu0 %v8765
  %v9081 = vpop.f32.mrb[0].mxu0
  %v9082 = vadd.f32 0.0, %v9081
  %v9083 = vpop.f32.mrb[0].mxu0
  %v9084 = vadd.f32 0.0, %v9083
  %9085 = vmatprep.mubr.f32.mxu0 0.0
  %9086 = vmatmul.mubr.f32.gmra.mrb[0].mxu0 %v8768
  %v9087 = vpop.f32.mrb[0].mxu0
  %v9088 = vadd.f32 0.0, %v9087
  %v9089 = vpop.f32.mrb[0].mxu0
  %v9090 = vadd.f32 0.0, %v9089
  %9091 = vdwg.mxu0
  %9093 = vrot.lane.b32.xlu0 %v9042, 1
  %v9094 = vpop.permute.xlu0 %9093
  %9099 = vrot.lane.b32.xlu0 %v8879, 1
  %v9100 = vpop.permute.xlu0 %9099
  %9101 = vrot.lane.b32.xlu0 %v8881, 1
  %v9102 = vpop.permute.xlu0 %9101
  %9103 = vrot.lane.b32.xlu0 %v9040, 1
  %v9104 = vpop.permute.xlu0 %9103
  %v9105 = vsel %vm3272, %v9100, %v9102
  %v9106 = vsel %vm3272, %v9102, %v9104
  %v9107 = vsel %vm3272, %v9104, %v9094
  %v9112 = vsel %vm3272, %v9094, %v9100
  %v9113 = vlaneseq
  %v9114 = vshrl.u32 %v9113, 7
  %v9115 = vsub.s32 3, %v9114
  %v9116 = vrot.slane %v77, %v9115
  %v9117 = vlaneseq
  %v9118 = vshrl.u32 %v9117, 7
  %v9119 = vsub.s32 3, %v9118
  %v9120 = vrot.slane %v78, %v9119
  %v9121 = vlaneseq
  %v9122 = vshrl.u32 %v9121, 7
  %v9123 = vsub.s32 3, %v9122
  %v9124 = vrot.slane %v79, %v9123
  %v9125 = vlaneseq
  %v9126 = vshrl.u32 %v9125, 7
  %v9127 = vsub.s32 3, %v9126
  %v9128 = vrot.slane %v80, %v9127
  %v9129 = vmul.f32 %v9112, %v9116
  %v9130 = vmul.f32 %v9105, %v9120
  %v9131 = vmul.f32 %v9106, %v9124
  %v9132 = vmul.f32 %v9107, %v9128
  %v9133 = vadd.f32 %v8867, %v9129
  %v9134 = vadd.f32 %v8869, %v9130
  %v9135 = vadd.f32 %v9028, %v9131
  %v9136 = vadd.f32 %v9030, %v9132
  %9138 = vrot.lane.b32.xlu0 %v9078, 16
  %v9139 = vpop.permute.xlu0 %9138
  %9144 = vrot.lane.b32.xlu0 %v8915, 16
  %v9145 = vpop.permute.xlu0 %9144
  %9146 = vrot.lane.b32.xlu0 %v8917, 16
  %v9147 = vpop.permute.xlu0 %9146
  %9148 = vrot.lane.b32.xlu0 %v9076, 16
  %v9149 = vpop.permute.xlu0 %9148
  %v9150 = vsel %vm5320, %v9145, %v9147
  %v9151 = vsel %vm5320, %v9147, %v9149
  %v9152 = vsel %vm5320, %v9149, %v9139
  %v9157 = vsel %vm5320, %v9139, %v9145
  %v9158 = vlaneseq
  %v9159 = vshrl.u32 %v9158, 7
  %v9160 = vsub.s32 1, %v9159
  %v9161 = vrot.slane %v77, %v9160
  %v9162 = vlaneseq
  %v9163 = vshrl.u32 %v9162, 7
  %v9164 = vsub.s32 1, %v9163
  %v9165 = vrot.slane %v78, %v9164
  %v9166 = vlaneseq
  %v9167 = vshrl.u32 %v9166, 7
  %v9168 = vsub.s32 1, %v9167
  %v9169 = vrot.slane %v79, %v9168
  %v9170 = vlaneseq
  %v9171 = vshrl.u32 %v9170, 7
  %v9172 = vsub.s32 1, %v9171
  %v9173 = vrot.slane %v80, %v9172
  %v9174 = vmul.f32 %v9157, %v9161
  %v9175 = vmul.f32 %v9150, %v9165
  %v9176 = vmul.f32 %v9151, %v9169
  %v9177 = vmul.f32 %v9152, %v9173
  %v9178 = vadd.f32 %v9133, %v9174
  %v9179 = vadd.f32 %v9134, %v9175
  %v9180 = vadd.f32 %v9135, %v9176
  %v9181 = vadd.f32 %v9136, %v9177
  %9183 = vrot.lane.b32.xlu0 %v9090, 17
  %v9184 = vpop.permute.xlu0 %9183
  %9189 = vrot.lane.b32.xlu0 %v8927, 17
  %v9190 = vpop.permute.xlu0 %9189
  %9191 = vrot.lane.b32.xlu0 %v8929, 17
  %v9192 = vpop.permute.xlu0 %9191
  %9193 = vrot.lane.b32.xlu0 %v9088, 17
  %v9194 = vpop.permute.xlu0 %9193
  %vm9195 = vcmask 138240
  %v9196 = vsel %vm9195, %v9190, %v9192
  %v9197 = vsel %vm9195, %v9192, %v9194
  %v9198 = vsel %vm9195, %v9194, %v9184
  %v9203 = vsel %vm9195, %v9184, %v9190
  %v9204 = vlaneseq
  %v9205 = vshrl.u32 %v9204, 7
  %v9206 = vsub.s32 0, %v9205
  %v9207 = vrot.slane %v77, %v9206
  %v9208 = vlaneseq
  %v9209 = vshrl.u32 %v9208, 7
  %v9210 = vsub.s32 0, %v9209
  %v9211 = vrot.slane %v78, %v9210
  %v9212 = vlaneseq
  %v9213 = vshrl.u32 %v9212, 7
  %v9214 = vsub.s32 0, %v9213
  %v9215 = vrot.slane %v79, %v9214
  %v9216 = vlaneseq
  %v9217 = vshrl.u32 %v9216, 7
  %v9218 = vsub.s32 0, %v9217
  %v9219 = vrot.slane %v80, %v9218
  %v9220 = vmul.f32 %v9203, %v9207
  %v9221 = vmul.f32 %v9196, %v9211
  %v9222 = vmul.f32 %v9197, %v9215
  %v9223 = vmul.f32 %v9198, %v9219
  %v9224 = vadd.f32 %v9178, %v9220
  %v9225 = vadd.f32 %v9179, %v9221
  %v9226 = vadd.f32 %v9180, %v9222
  %v9227 = vadd.f32 %v9181, %v9223
  %9232 = vrot.lane.b32.xlu0 %v8861, 127
  %v9233 = vpop.permute.xlu0 %9232
  %9234 = vrot.lane.b32.xlu0 %v8863, 127
  %v9235 = vpop.permute.xlu0 %9234
  %9236 = vrot.lane.b32.xlu0 %v9022, 127
  %v9237 = vpop.permute.xlu0 %9236
  %9238 = vrot.lane.b32.xlu0 %v9024, 127
  %v9239 = vpop.permute.xlu0 %9238
  %v9240 = vsel %vm7467, %v9233, %v9235
  %v9241 = vsel %vm7467, %v9235, %v9237
  %v9242 = vsel %vm7467, %v9237, %v9239
  %v9248 = vsel %vm7467, %v9239, %v9233
  %v9249 = vlaneseq
  %v9250 = vshrl.u32 %v9249, 7
  %v9251 = vsub.s32 5, %v9250
  %v9252 = vrot.slane %v77, %v9251
  %v9253 = vlaneseq
  %v9254 = vshrl.u32 %v9253, 7
  %v9255 = vsub.s32 5, %v9254
  %v9256 = vrot.slane %v78, %v9255
  %v9257 = vlaneseq
  %v9258 = vshrl.u32 %v9257, 7
  %v9259 = vsub.s32 5, %v9258
  %v9260 = vrot.slane %v79, %v9259
  %v9261 = vlaneseq
  %v9262 = vshrl.u32 %v9261, 7
  %v9263 = vsub.s32 5, %v9262
  %v9264 = vrot.slane %v80, %v9263
  %v9265 = vmul.f32 %v9240, %v9252
  %v9266 = vmul.f32 %v9241, %v9256
  %v9267 = vmul.f32 %v9242, %v9260
  %v9268 = vmul.f32 %v9248, %v9264
  %v9269 = vadd.f32 %v8873, %v9265
  %v9270 = vadd.f32 %v8875, %v9266
  %v9271 = vadd.f32 %v9034, %v9267
  %v9272 = vadd.f32 %v9036, %v9268
  %9274 = vrot.lane.b32.xlu0 %v9084, 16
  %v9275 = vpop.permute.xlu0 %9274
  %9280 = vrot.lane.b32.xlu0 %v8921, 16
  %v9281 = vpop.permute.xlu0 %9280
  %9282 = vrot.lane.b32.xlu0 %v8923, 16
  %v9283 = vpop.permute.xlu0 %9282
  %9284 = vrot.lane.b32.xlu0 %v9082, 16
  %v9285 = vpop.permute.xlu0 %9284
  %v9286 = vsel %vm5320, %v9281, %v9283
  %v9287 = vsel %vm5320, %v9283, %v9285
  %v9288 = vsel %vm5320, %v9285, %v9275
  %v9293 = vsel %vm5320, %v9275, %v9281
  %v9294 = vmul.f32 %v9293, %v9161
  %v9295 = vmul.f32 %v9286, %v9165
  %v9296 = vmul.f32 %v9287, %v9169
  %v9297 = vmul.f32 %v9288, %v9173
  %v9298 = vadd.f32 %v9269, %v9294
  %v9299 = vadd.f32 %v9270, %v9295
  %v9300 = vadd.f32 %v9271, %v9296
  %v9301 = vadd.f32 %v9272, %v9297
  %9303 = vrot.lane.b32.xlu0 %v9072, 15
  %v9304 = vpop.permute.xlu0 %9303
  %9309 = vrot.lane.b32.xlu0 %v8909, 15
  %v9310 = vpop.permute.xlu0 %9309
  %9311 = vrot.lane.b32.xlu0 %v8911, 15
  %v9312 = vpop.permute.xlu0 %9311
  %9313 = vrot.lane.b32.xlu0 %v9070, 15
  %v9314 = vpop.permute.xlu0 %9313
  %vm9315 = vcmask 121856
  %v9316 = vsel %vm9315, %v9310, %v9312
  %v9317 = vsel %vm9315, %v9312, %v9314
  %v9318 = vsel %vm9315, %v9314, %v9304
  %v9323 = vsel %vm9315, %v9304, %v9310
  %v9324 = vlaneseq
  %v9325 = vshrl.u32 %v9324, 7
  %v9326 = vsub.s32 2, %v9325
  %v9327 = vrot.slane %v77, %v9326
  %v9328 = vlaneseq
  %v9329 = vshrl.u32 %v9328, 7
  %v9330 = vsub.s32 2, %v9329
  %v9331 = vrot.slane %v78, %v9330
  %v9332 = vlaneseq
  %v9333 = vshrl.u32 %v9332, 7
  %v9334 = vsub.s32 2, %v9333
  %v9335 = vrot.slane %v79, %v9334
  %v9336 = vlaneseq
  %v9337 = vshrl.u32 %v9336, 7
  %v9338 = vsub.s32 2, %v9337
  %v9339 = vrot.slane %v80, %v9338
  %v9340 = vmul.f32 %v9323, %v9327
  %v9341 = vmul.f32 %v9316, %v9331
  %v9342 = vmul.f32 %v9317, %v9335
  %v9343 = vmul.f32 %v9318, %v9339
  %v9344 = vadd.f32 %v9298, %v9340
  %v9345 = vadd.f32 %v9299, %v9341
  %v9346 = vadd.f32 %v9300, %v9342
  %v9347 = vadd.f32 %v9301, %v9343
  %9349 = vrot.lane.b32.xlu0 %v9066, 1
  %v9350 = vpop.permute.xlu0 %9349
  %9355 = vrot.lane.b32.xlu0 %v8903, 1
  %v9356 = vpop.permute.xlu0 %9355
  %9357 = vrot.lane.b32.xlu0 %v8905, 1
  %v9358 = vpop.permute.xlu0 %9357
  %9359 = vrot.lane.b32.xlu0 %v9064, 1
  %v9360 = vpop.permute.xlu0 %9359
  %v9361 = vsel %vm3272, %v9356, %v9358
  %v9362 = vsel %vm3272, %v9358, %v9360
  %v9363 = vsel %vm3272, %v9360, %v9350
  %v9368 = vsel %vm3272, %v9350, %v9356
  %v9369 = vmul.f32 %v9368, %v9116
  %v9370 = vmul.f32 %v9361, %v9120
  %v9371 = vmul.f32 %v9362, %v9124
  %v9372 = vmul.f32 %v9363, %v9128
  %v9373 = vadd.f32 %v8891, %v9369
  %v9374 = vadd.f32 %v8893, %v9370
  %v9375 = vadd.f32 %v9052, %v9371
  %v9376 = vadd.f32 %v9054, %v9372
  %9381 = vrot.lane.b32.xlu0 %v8843, 112
  %v9382 = vpop.permute.xlu0 %9381
  %9383 = vrot.lane.b32.xlu0 %v8845, 112
  %v9384 = vpop.permute.xlu0 %9383
  %9385 = vrot.lane.b32.xlu0 %v9004, 112
  %v9386 = vpop.permute.xlu0 %9385
  %9387 = vrot.lane.b32.xlu0 %v9006, 112
  %v9388 = vpop.permute.xlu0 %9387
  %vm9389 = vcmask 916480
  %v9390 = vsel %vm9389, %v9382, %v9384
  %v9391 = vsel %vm9389, %v9384, %v9386
  %v9392 = vsel %vm9389, %v9386, %v9388
  %v9398 = vsel %vm9389, %v9388, %v9382
  %v9399 = vlaneseq
  %v9400 = vshrl.u32 %v9399, 7
  %v9401 = vsub.s32 7, %v9400
  %v9402 = vrot.slane %v77, %v9401
  %v9403 = vlaneseq
  %v9404 = vshrl.u32 %v9403, 7
  %v9405 = vsub.s32 7, %v9404
  %v9406 = vrot.slane %v78, %v9405
  %v9407 = vlaneseq
  %v9408 = vshrl.u32 %v9407, 7
  %v9409 = vsub.s32 7, %v9408
  %v9410 = vrot.slane %v79, %v9409
  %v9411 = vlaneseq
  %v9412 = vshrl.u32 %v9411, 7
  %v9413 = vsub.s32 7, %v9412
  %v9414 = vrot.slane %v80, %v9413
  %v9415 = vmul.f32 %v9390, %v9402
  %v9416 = vmul.f32 %v9391, %v9406
  %v9417 = vmul.f32 %v9392, %v9410
  %v9418 = vmul.f32 %v9398, %v9414
  %v9419 = vadd.f32 %v9373, %v9415
  %v9420 = vadd.f32 %v9374, %v9416
  %v9421 = vadd.f32 %v9375, %v9417
  %v9422 = vadd.f32 %v9376, %v9418
  %9427 = vrot.lane.b32.xlu0 %v8855, 113
  %v9428 = vpop.permute.xlu0 %9427
  %9429 = vrot.lane.b32.xlu0 %v8857, 113
  %v9430 = vpop.permute.xlu0 %9429
  %9431 = vrot.lane.b32.xlu0 %v9016, 113
  %v9432 = vpop.permute.xlu0 %9431
  %9433 = vrot.lane.b32.xlu0 %v9018, 113
  %v9434 = vpop.permute.xlu0 %9433
  %vm9435 = vcmask 924672
  %v9436 = vsel %vm9435, %v9428, %v9430
  %v9437 = vsel %vm9435, %v9430, %v9432
  %v9438 = vsel %vm9435, %v9432, %v9434
  %v9444 = vsel %vm9435, %v9434, %v9428
  %v9445 = vlaneseq
  %v9446 = vshrl.u32 %v9445, 7
  %v9447 = vsub.s32 6, %v9446
  %v9448 = vrot.slane %v77, %v9447
  %v9449 = vlaneseq
  %v9450 = vshrl.u32 %v9449, 7
  %v9451 = vsub.s32 6, %v9450
  %v9452 = vrot.slane %v78, %v9451
  %v9453 = vlaneseq
  %v9454 = vshrl.u32 %v9453, 7
  %v9455 = vsub.s32 6, %v9454
  %v9456 = vrot.slane %v79, %v9455
  %v9457 = vlaneseq
  %v9458 = vshrl.u32 %v9457, 7
  %v9459 = vsub.s32 6, %v9458
  %v9460 = vrot.slane %v80, %v9459
  %v9461 = vmul.f32 %v9436, %v9448
  %v9462 = vmul.f32 %v9437, %v9452
  %v9463 = vmul.f32 %v9438, %v9456
  %v9464 = vmul.f32 %v9444, %v9460
  %v9465 = vadd.f32 %v9419, %v9461
  %v9466 = vadd.f32 %v9420, %v9462
  %v9467 = vadd.f32 %v9421, %v9463
  %v9468 = vadd.f32 %v9422, %v9464
  %9473 = vrot.lane.b32.xlu0 %v8885, 127
  %v9474 = vpop.permute.xlu0 %9473
  %9475 = vrot.lane.b32.xlu0 %v8887, 127
  %v9476 = vpop.permute.xlu0 %9475
  %9477 = vrot.lane.b32.xlu0 %v9046, 127
  %v9478 = vpop.permute.xlu0 %9477
  %9479 = vrot.lane.b32.xlu0 %v9048, 127
  %v9480 = vpop.permute.xlu0 %9479
  %v9481 = vsel %vm7467, %v9474, %v9476
  %v9482 = vsel %vm7467, %v9476, %v9478
  %v9483 = vsel %vm7467, %v9478, %v9480
  %v9489 = vsel %vm7467, %v9480, %v9474
  %v9490 = vmul.f32 %v9481, %v9252
  %v9491 = vmul.f32 %v9482, %v9256
  %v9492 = vmul.f32 %v9483, %v9260
  %v9493 = vmul.f32 %v9489, %v9264
  %v9494 = vadd.f32 %v8897, %v9490
  %v9495 = vadd.f32 %v8899, %v9491
  %v9496 = vadd.f32 %v9058, %v9492
  %v9497 = vadd.f32 %v9060, %v9493
  %9502 = vrot.lane.b32.xlu0 %v8849, 112
  %v9503 = vpop.permute.xlu0 %9502
  %9504 = vrot.lane.b32.xlu0 %v8851, 112
  %v9505 = vpop.permute.xlu0 %9504
  %9506 = vrot.lane.b32.xlu0 %v9010, 112
  %v9507 = vpop.permute.xlu0 %9506
  %9508 = vrot.lane.b32.xlu0 %v9012, 112
  %v9509 = vpop.permute.xlu0 %9508
  %v9510 = vsel %vm9389, %v9503, %v9505
  %v9511 = vsel %vm9389, %v9505, %v9507
  %v9512 = vsel %vm9389, %v9507, %v9509
  %v9518 = vsel %vm9389, %v9509, %v9503
  %v9519 = vmul.f32 %v9510, %v9402
  %v9520 = vmul.f32 %v9511, %v9406
  %v9521 = vmul.f32 %v9512, %v9410
  %v9522 = vmul.f32 %v9518, %v9414
  %v9523 = vadd.f32 %v9494, %v9519
  %v9524 = vadd.f32 %v9495, %v9520
  %v9525 = vadd.f32 %v9496, %v9521
  %v9526 = vadd.f32 %v9497, %v9522
  %9531 = vrot.lane.b32.xlu0 %v8837, 111
  %v9532 = vpop.permute.xlu0 %9531
  %9533 = vrot.lane.b32.xlu0 %v8839, 111
  %v9534 = vpop.permute.xlu0 %9533
  %9535 = vrot.lane.b32.xlu0 %v8998, 111
  %v9536 = vpop.permute.xlu0 %9535
  %9537 = vrot.lane.b32.xlu0 %v9000, 111
  %v9538 = vpop.permute.xlu0 %9537
  %vm9539 = vcmask 908288
  %v9540 = vsel %vm9539, %v9532, %v9534
  %v9541 = vsel %vm9539, %v9534, %v9536
  %v9542 = vsel %vm9539, %v9536, %v9538
  %v9548 = vsel %vm9539, %v9538, %v9532
  %v9549 = vlaneseq
  %v9550 = vshrl.u32 %v9549, 7
  %v9551 = vsub.s32 0, %v9550
  %v9552 = vrot.slane %v81, %v9551
  %v9553 = vlaneseq
  %v9554 = vshrl.u32 %v9553, 7
  %v9555 = vsub.s32 0, %v9554
  %v9556 = vrot.slane %v82, %v9555
  %v9557 = vlaneseq
  %v9558 = vshrl.u32 %v9557, 7
  %v9559 = vsub.s32 0, %v9558
  %v9560 = vrot.slane %v83, %v9559
  %v9561 = vlaneseq
  %v9562 = vshrl.u32 %v9561, 7
  %v9563 = vsub.s32 0, %v9562
  %v9564 = vrot.slane %v84, %v9563
  %v9565 = vmul.f32 %v9540, %v9552
  %v9566 = vmul.f32 %v9541, %v9556
  %v9567 = vmul.f32 %v9542, %v9560
  %v9568 = vmul.f32 %v9548, %v9564
  %v9569 = vadd.f32 %v9523, %v9565
  %v9570 = vadd.f32 %v9524, %v9566
  %v9571 = vadd.f32 %v9525, %v9567
  %v9572 = vadd.f32 %v9526, %v9568
  %v9573 = vadd.f32 %v9224, %v9225
  %v9574 = vadd.f32 %v9573, %v9226
  %v9575 = vadd.f32 %v9574, %v9227
  %v9576 = vadd.f32 %v9575, %v9344
  %v9577 = vadd.f32 %v9576, %v9345
  %v9578 = vadd.f32 %v9577, %v9346
  %v9579 = vadd.f32 %v9578, %v9347
  %v9580 = vadd.f32 %v9579, %v9465
  %v9581 = vadd.f32 %v9580, %v9466
  %v9582 = vadd.f32 %v9581, %v9467
  %v9583 = vadd.f32 %v9582, %v9468
  %v9584 = vadd.f32 %v9583, %v9569
  %v9585 = vadd.f32 %v9584, %v9570
  %v9586 = vadd.f32 %v9585, %v9571
  %v9587 = vadd.f32 %v9586, %v9572
  %9588 = vadd.xlane.f32.xlu0 %v9587
  %v9589 = vpop.xlane.xlu0 %9588
  %v9590 = vmul.f32 %v9224, %v9224
  %v9591 = vmul.f32 %v9225, %v9225
  %v9592 = vmul.f32 %v9226, %v9226
  %v9593 = vmul.f32 %v9227, %v9227
  %v9594 = vmul.f32 %v9344, %v9344
  %v9595 = vmul.f32 %v9345, %v9345
  %v9596 = vmul.f32 %v9346, %v9346
  %v9597 = vmul.f32 %v9347, %v9347
  %v9598 = vmul.f32 %v9465, %v9465
  %v9599 = vmul.f32 %v9466, %v9466
  %v9600 = vmul.f32 %v9467, %v9467
  %v9601 = vmul.f32 %v9468, %v9468
  %v9602 = vmul.f32 %v9569, %v9569
  %v9603 = vmul.f32 %v9570, %v9570
  %v9604 = vmul.f32 %v9571, %v9571
  %v9605 = vmul.f32 %v9572, %v9572
  %v9606 = vadd.f32 %v9590, %v9591
  %v9607 = vadd.f32 %v9606, %v9592
  %v9608 = vadd.f32 %v9607, %v9593
  %v9609 = vadd.f32 %v9608, %v9594
  %v9610 = vadd.f32 %v9609, %v9595
  %v9611 = vadd.f32 %v9610, %v9596
  %v9612 = vadd.f32 %v9611, %v9597
  %v9613 = vadd.f32 %v9612, %v9598
  %v9614 = vadd.f32 %v9613, %v9599
  %v9615 = vadd.f32 %v9614, %v9600
  %v9616 = vadd.f32 %v9615, %v9601
  %v9617 = vadd.f32 %v9616, %v9602
  %v9618 = vadd.f32 %v9617, %v9603
  %v9619 = vadd.f32 %v9618, %v9604
  %v9620 = vadd.f32 %v9619, %v9605
  %9621 = vadd.xlane.f32.xlu0 %v9620
  %v9622 = vpop.xlane.xlu0 %9621
  %v9623 = vmul.f32 %v9589, 0.00048828125
  %v9624 = vmul.f32 %v9622, 0.00048828125
  %v9625 = vmul.f32 %v9623, %v9623
  %v9626 = vsub.f32 %v9624, %v9625
  %v9627 = vadd.f32 %v9626, 1e-05
  %v9628 = vrsqrt.pop %v9627
  %v9629 = vmul.f32 %v41, %v9628
  %v9630 = vsub.f32 %v9224, %v9623
  %v9631 = vsub.f32 %v9225, %v9623
  %v9632 = vsub.f32 %v9226, %v9623
  %v9633 = vsub.f32 %v9227, %v9623
  %v9634 = vsub.f32 %v9344, %v9623
  %v9635 = vsub.f32 %v9345, %v9623
  %v9636 = vsub.f32 %v9346, %v9623
  %v9637 = vsub.f32 %v9347, %v9623
  %v9638 = vsub.f32 %v9465, %v9623
  %v9639 = vsub.f32 %v9466, %v9623
  %v9640 = vsub.f32 %v9467, %v9623
  %v9641 = vsub.f32 %v9468, %v9623
  %v9642 = vsub.f32 %v9569, %v9623
  %v9643 = vsub.f32 %v9570, %v9623
  %v9644 = vsub.f32 %v9571, %v9623
  %v9645 = vsub.f32 %v9572, %v9623
  %9647 = vset.pattern.permute.xlu0 6
  %9648 = vperm.xlu0 %9647, %v9629
  %v9649 = vpop.permute.xlu0 %9648
  %v9651 = vmul.f32 %v9630, %v9649
  %v9652 = vmul.f32 %v9631, %v9649
  %v9653 = vmul.f32 %v9632, %v9649
  %v9654 = vmul.f32 %v9633, %v9649
  %v9655 = vmul.f32 %v9634, %v9649
  %v9656 = vmul.f32 %v9635, %v9649
  %v9657 = vmul.f32 %v9636, %v9649
  %v9658 = vmul.f32 %v9637, %v9649
  %v9659 = vmul.f32 %v9638, %v9649
  %v9660 = vmul.f32 %v9639, %v9649
  %v9661 = vmul.f32 %v9640, %v9649
  %v9662 = vmul.f32 %v9641, %v9649
  %v9663 = vmul.f32 %v9642, %v9649
  %v9664 = vmul.f32 %v9643, %v9649
  %v9665 = vmul.f32 %v9644, %v9649
  %v9666 = vmul.f32 %v9645, %v9649
  %9667 = vset.pattern.permute.xlu0 7
  %9668 = vperm.xlu0 %9667, %v41
  %v9669 = vpop.permute.xlu0 %9668
  %v9671 = vadd.f32 %v9651, %v9669
  %v9672 = vadd.f32 %v9652, %v9669
  %v9673 = vadd.f32 %v9653, %v9669
  %v9674 = vadd.f32 %v9654, %v9669
  %v9675 = vadd.f32 %v9655, %v9669
  %v9676 = vadd.f32 %v9656, %v9669
  %v9677 = vadd.f32 %v9657, %v9669
  %v9678 = vadd.f32 %v9658, %v9669
  %v9679 = vadd.f32 %v9659, %v9669
  %v9680 = vadd.f32 %v9660, %v9669
  %v9681 = vadd.f32 %v9661, %v9669
  %v9682 = vadd.f32 %v9662, %v9669
  %v9683 = vadd.f32 %v9663, %v9669
  %v9684 = vadd.f32 %v9664, %v9669
  %v9685 = vadd.f32 %v9665, %v9669
  %v9686 = vadd.f32 %v9666, %v9669
  %v9687 = vmax.f32 %v9671, 0.0
  %v9688 = vmax.f32 %v9672, 0.0
  %v9689 = vmax.f32 %v9673, 0.0
  %v9690 = vmax.f32 %v9674, 0.0
  %v9691 = vmax.f32 %v9675, 0.0
  %v9692 = vmax.f32 %v9676, 0.0
  %v9693 = vmax.f32 %v9677, 0.0
  %v9694 = vmax.f32 %v9678, 0.0
  %v9695 = vmax.f32 %v9679, 0.0
  %v9696 = vmax.f32 %v9680, 0.0
  %v9697 = vmax.f32 %v9681, 0.0
  %v9698 = vmax.f32 %v9682, 0.0
  %v9699 = vmax.f32 %v9683, 0.0
  %v9700 = vmax.f32 %v9684, 0.0
  %v9701 = vmax.f32 %v9685, 0.0
  %v9702 = vmax.f32 %v9686, 0.0
  %v9703 = vld [vmem:[%s5] sm:$0xff]
  %v9704 = vld [vmem:[%s5 + $0x8] sm:$0xff]
  %v9705 = vld [vmem:[%s5 + $0x10] sm:$0xff]
  %v9706 = vld [vmem:[%s5 + $0x18] sm:$0xff]
  %v9707 = vld [vmem:[%s5 + $0x20] sm:$0xff]
  %v9708 = vld [vmem:[%s5 + $0x28] sm:$0xff]
  %v9709 = vld [vmem:[%s5 + $0x30] sm:$0xff]
  %v9710 = vld [vmem:[%s5 + $0x38] sm:$0xff]
  %v9711 = vld [vmem:[%s5 + $0x40] sm:$0xff]
  %v9712 = vld [vmem:[%s5 + $0x48] sm:$0xff]
  %v9713 = vld [vmem:[%s5 + $0x50] sm:$0xff]
  %v9714 = vld [vmem:[%s5 + $0x58] sm:$0xff]
  %v9715 = vld [vmem:[%s5 + $0x60] sm:$0xff]
  %v9716 = vld [vmem:[%s5 + $0x68] sm:$0xff]
  %v9717 = vld [vmem:[%s5 + $0x70] sm:$0xff]
  %v9718 = vld [vmem:[%s5 + $0x78] sm:$0xff]
  %v9720 = vsel %vm7362, %v9703, 0
  %v9723 = vsel %vm7362, %v9704, 0
  %v9726 = vsel %vm7362, %v9705, 0
  %v9729 = vsel %vm7362, %v9706, 0
  %v9732 = vsel %vm7362, %v9707, 0
  %v9735 = vsel %vm7362, %v9708, 0
  %v9738 = vsel %vm7362, %v9709, 0
  %v9741 = vsel %vm7362, %v9710, 0
  %v9744 = vsel %vm7362, %v9711, 0
  %v9747 = vsel %vm7362, %v9712, 0
  %v9750 = vsel %vm7362, %v9713, 0
  %v9753 = vsel %vm7362, %v9714, 0
  %v9756 = vsel %vm7362, %v9715, 0
  %v9759 = vsel %vm7362, %v9716, 0
  %v9762 = vsel %vm7362, %v9717, 0
  %v9765 = vsel %vm7362, %v9718, 0
  %9767 = vmatprep.subr.mxu0 %v9688
  %9768 = vmatpush1.msra.mxu0 %v9687
  %9769 = vmatprep.subr.mxu0 0.0
  %9770 = vmatpush1.msra.mxu0 0.0
  %9771 = vmatprep.subr.mxu0 0.0
  %9772 = vmatpush1.msra.mxu0 0.0
  %9773 = vmatprep.subr.mxu0 0.0
  %9774 = vmatpush1.msra.mxu0 0.0
  %9775 = vmatprep.subr.mxu0 0.0
  %9776 = vmatpush1.msra.mxu0 0.0
  %9777 = vmatprep.subr.mxu0 0.0
  %9778 = vmatpush1.msra.mxu0 0.0
  %9779 = vmatprep.subr.mxu0 0.0
  %9780 = vmatpush1.msra.mxu0 0.0
  %9781 = vmatprep.subr.mxu0 0.0
  %9782 = vmatpush1.msra.mxu0 0.0
  %9783 = vmatprep.subr.mxu0 0.0
  %9784 = vmatpush1.msra.mxu0 0.0
  %9785 = vmatprep.subr.mxu0 0.0
  %9786 = vmatpush1.msra.mxu0 0.0
  %9787 = vmatprep.subr.mxu0 0.0
  %9788 = vmatpush1.msra.mxu0 0.0
  %9789 = vmatprep.subr.mxu0 0.0
  %9790 = vmatpush1.msra.mxu0 0.0
  %9791 = vmatprep.subr.mxu0 0.0
  %9792 = vmatpush1.msra.mxu0 0.0
  %9793 = vmatprep.subr.mxu0 0.0
  %9794 = vmatpush1.msra.mxu0 0.0
  %9795 = vmatprep.subr.mxu0 0.0
  %9796 = vmatpush1.msra.mxu0 0.0
  %9797 = vmatprep.subr.mxu0 0.0
  %9798 = vmatpush1.msra.mxu0 0.0
  %9799 = vmatprep.subr.mxu0 0.0
  %9800 = vmatpush1.msra.mxu0 0.0
  %9801 = vmatprep.subr.mxu0 0.0
  %9802 = vmatpush1.msra.mxu0 0.0
  %9803 = vmatprep.subr.mxu0 0.0
  %9804 = vmatpush1.msra.mxu0 0.0
  %9805 = vmatprep.subr.mxu0 0.0
  %9806 = vmatpush1.msra.mxu0 0.0
  %9807 = vmatprep.subr.mxu0 0.0
  %9808 = vmatpush1.msra.mxu0 0.0
  %9809 = vmatprep.subr.mxu0 0.0
  %9810 = vmatpush1.msra.mxu0 0.0
  %9811 = vmatprep.subr.mxu0 0.0
  %9812 = vmatpush1.msra.mxu0 0.0
  %9813 = vmatprep.subr.mxu0 0.0
  %9814 = vmatpush1.msra.mxu0 0.0
  %9815 = vmatprep.subr.mxu0 0.0
  %9816 = vmatpush1.msra.mxu0 0.0
  %9817 = vmatprep.subr.mxu0 0.0
  %9818 = vmatpush1.msra.mxu0 0.0
  %9819 = vmatprep.subr.mxu0 0.0
  %9820 = vmatpush1.msra.mxu0 0.0
  %9821 = vmatprep.subr.mxu0 0.0
  %9822 = vmatpush1.msra.mxu0 0.0
  %9823 = vmatprep.subr.mxu0 0.0
  %9824 = vmatpush1.msra.mxu0 0.0
  %9825 = vmatprep.subr.mxu0 0.0
  %9826 = vmatpush1.msra.mxu0 0.0
  %9827 = vmatprep.subr.mxu0 0.0
  %9828 = vmatpush1.msra.mxu0 0.0
  %9829 = vmatprep.subr.mxu0 0.0
  %9830 = vmatpush1.msra.mxu0 0.0
  %9831 = vmatprep.mubr.f32.mxu0 0.0
  %9832 = vmatmul.mubr.f32.gmra.mrb[0].mxu0 %v9720
  %v9833 = vpop.f32.mrb[0].mxu0
  %v9834 = vadd.f32 0.0, %v9833
  %v9835 = vpop.f32.mrb[0].mxu0
  %v9836 = vadd.f32 0.0, %v9835
  %9837 = vmatprep.mubr.f32.mxu0 0.0
  %9838 = vmatmul.mubr.f32.gmra.mrb[0].mxu0 %v9723
  %v9839 = vpop.f32.mrb[0].mxu0
  %v9840 = vadd.f32 0.0, %v9839
  %v9841 = vpop.f32.mrb[0].mxu0
  %v9842 = vadd.f32 0.0, %v9841
  %9843 = vmatprep.mubr.f32.mxu0 0.0
  %9844 = vmatmul.mubr.f32.gmra.mrb[0].mxu0 %v9726
  %v9845 = vpop.f32.mrb[0].mxu0
  %v9846 = vadd.f32 0.0, %v9845
  %v9847 = vpop.f32.mrb[0].mxu0
  %v9848 = vadd.f32 0.0, %v9847
  %9849 = vmatprep.mubr.f32.mxu0 0.0
  %9850 = vmatmul.mubr.f32.gmra.mrb[0].mxu0 %v9729
  %v9851 = vpop.f32.mrb[0].mxu0
  %v9852 = vadd.f32 0.0, %v9851
  %v9853 = vpop.f32.mrb[0].mxu0
  %v9854 = vadd.f32 0.0, %v9853
  %9855 = vmatprep.mubr.f32.mxu0 0.0
  %9856 = vmatmul.mubr.f32.gmra.mrb[0].mxu0 %v9732
  %v9857 = vpop.f32.mrb[0].mxu0
  %v9858 = vadd.f32 0.0, %v9857
  %v9859 = vpop.f32.mrb[0].mxu0
  %v9860 = vadd.f32 0.0, %v9859
  %9861 = vmatprep.mubr.f32.mxu0 0.0
  %9862 = vmatmul.mubr.f32.gmra.mrb[0].mxu0 %v9735
  %v9863 = vpop.f32.mrb[0].mxu0
  %v9864 = vadd.f32 0.0, %v9863
  %v9865 = vpop.f32.mrb[0].mxu0
  %v9866 = vadd.f32 0.0, %v9865
  %9867 = vmatprep.mubr.f32.mxu0 0.0
  %9868 = vmatmul.mubr.f32.gmra.mrb[0].mxu0 %v9738
  %v9869 = vpop.f32.mrb[0].mxu0
  %v9870 = vadd.f32 0.0, %v9869
  %v9871 = vpop.f32.mrb[0].mxu0
  %v9872 = vadd.f32 0.0, %v9871
  %9873 = vmatprep.mubr.f32.mxu0 0.0
  %9874 = vmatmul.mubr.f32.gmra.mrb[0].mxu0 %v9741
  %v9875 = vpop.f32.mrb[0].mxu0
  %v9876 = vadd.f32 0.0, %v9875
  %v9877 = vpop.f32.mrb[0].mxu0
  %v9878 = vadd.f32 0.0, %v9877
  %9879 = vmatprep.mubr.f32.mxu0 0.0
  %9880 = vmatmul.mubr.f32.gmra.mrb[0].mxu0 %v9744
  %v9881 = vpop.f32.mrb[0].mxu0
  %v9882 = vadd.f32 0.0, %v9881
  %v9883 = vpop.f32.mrb[0].mxu0
  %v9884 = vadd.f32 0.0, %v9883
  %9885 = vmatprep.mubr.f32.mxu0 0.0
  %9886 = vmatmul.mubr.f32.gmra.mrb[0].mxu0 %v9747
  %v9887 = vpop.f32.mrb[0].mxu0
  %v9888 = vadd.f32 0.0, %v9887
  %v9889 = vpop.f32.mrb[0].mxu0
  %v9890 = vadd.f32 0.0, %v9889
  %9891 = vmatprep.mubr.f32.mxu0 0.0
  %9892 = vmatmul.mubr.f32.gmra.mrb[0].mxu0 %v9750
  %v9893 = vpop.f32.mrb[0].mxu0
  %v9894 = vadd.f32 0.0, %v9893
  %v9895 = vpop.f32.mrb[0].mxu0
  %v9896 = vadd.f32 0.0, %v9895
  %9897 = vmatprep.mubr.f32.mxu0 0.0
  %9898 = vmatmul.mubr.f32.gmra.mrb[0].mxu0 %v9753
  %v9899 = vpop.f32.mrb[0].mxu0
  %v9900 = vadd.f32 0.0, %v9899
  %v9901 = vpop.f32.mrb[0].mxu0
  %v9902 = vadd.f32 0.0, %v9901
  %9903 = vmatprep.mubr.f32.mxu0 0.0
  %9904 = vmatmul.mubr.f32.gmra.mrb[0].mxu0 %v9756
  %v9905 = vpop.f32.mrb[0].mxu0
  %v9906 = vadd.f32 0.0, %v9905
  %v9907 = vpop.f32.mrb[0].mxu0
  %v9908 = vadd.f32 0.0, %v9907
  %9909 = vmatprep.mubr.f32.mxu0 0.0
  %9910 = vmatmul.mubr.f32.gmra.mrb[0].mxu0 %v9759
  %v9911 = vpop.f32.mrb[0].mxu0
  %v9912 = vadd.f32 0.0, %v9911
  %v9913 = vpop.f32.mrb[0].mxu0
  %v9914 = vadd.f32 0.0, %v9913
  %9915 = vmatprep.mubr.f32.mxu0 0.0
  %9916 = vmatmul.mubr.f32.gmra.mrb[0].mxu0 %v9762
  %v9917 = vpop.f32.mrb[0].mxu0
  %v9918 = vadd.f32 0.0, %v9917
  %v9919 = vpop.f32.mrb[0].mxu0
  %v9920 = vadd.f32 0.0, %v9919
  %9921 = vmatprep.mubr.f32.mxu0 0.0
  %9922 = vmatmul.mubr.f32.gmra.mrb[0].mxu0 %v9765
  %v9923 = vpop.f32.mrb[0].mxu0
  %v9924 = vadd.f32 0.0, %v9923
  %v9925 = vpop.f32.mrb[0].mxu0
  %v9926 = vadd.f32 0.0, %v9925
  %9927 = vdwg.mxu0
  %9928 = vmatprep.subr.mxu0 %v9690
  %9929 = vmatpush1.msra.mxu0 %v9689
  %9930 = vmatprep.subr.mxu0 0.0
  %9931 = vmatpush1.msra.mxu0 0.0
  %9932 = vmatprep.subr.mxu0 0.0
  %9933 = vmatpush1.msra.mxu0 0.0
  %9934 = vmatprep.subr.mxu0 0.0
  %9935 = vmatpush1.msra.mxu0 0.0
  %9936 = vmatprep.subr.mxu0 0.0
  %9937 = vmatpush1.msra.mxu0 0.0
  %9938 = vmatprep.subr.mxu0 0.0
  %9939 = vmatpush1.msra.mxu0 0.0
  %9940 = vmatprep.subr.mxu0 0.0
  %9941 = vmatpush1.msra.mxu0 0.0
  %9942 = vmatprep.subr.mxu0 0.0
  %9943 = vmatpush1.msra.mxu0 0.0
  %9944 = vmatprep.subr.mxu0 0.0
  %9945 = vmatpush1.msra.mxu0 0.0
  %9946 = vmatprep.subr.mxu0 0.0
  %9947 = vmatpush1.msra.mxu0 0.0
  %9948 = vmatprep.subr.mxu0 0.0
  %9949 = vmatpush1.msra.mxu0 0.0
  %9950 = vmatprep.subr.mxu0 0.0
  %9951 = vmatpush1.msra.mxu0 0.0
  %9952 = vmatprep.subr.mxu0 0.0
  %9953 = vmatpush1.msra.mxu0 0.0
  %9954 = vmatprep.subr.mxu0 0.0
  %9955 = vmatpush1.msra.mxu0 0.0
  %9956 = vmatprep.subr.mxu0 0.0
  %9957 = vmatpush1.msra.mxu0 0.0
  %9958 = vmatprep.subr.mxu0 0.0
  %9959 = vmatpush1.msra.mxu0 0.0
  %9960 = vmatprep.subr.mxu0 0.0
  %9961 = vmatpush1.msra.mxu0 0.0
  %9962 = vmatprep.subr.mxu0 0.0
  %9963 = vmatpush1.msra.mxu0 0.0
  %9964 = vmatprep.subr.mxu0 0.0
  %9965 = vmatpush1.msra.mxu0 0.0
  %9966 = vmatprep.subr.mxu0 0.0
  %9967 = vmatpush1.msra.mxu0 0.0
  %9968 = vmatprep.subr.mxu0 0.0
  %9969 = vmatpush1.msra.mxu0 0.0
  %9970 = vmatprep.subr.mxu0 0.0
  %9971 = vmatpush1.msra.mxu0 0.0
  %9972 = vmatprep.subr.mxu0 0.0
  %9973 = vmatpush1.msra.mxu0 0.0
  %9974 = vmatprep.subr.mxu0 0.0
  %9975 = vmatpush1.msra.mxu0 0.0
  %9976 = vmatprep.subr.mxu0 0.0
  %9977 = vmatpush1.msra.mxu0 0.0
  %9978 = vmatprep.subr.mxu0 0.0
  %9979 = vmatpush1.msra.mxu0 0.0
  %9980 = vmatprep.subr.mxu0 0.0
  %9981 = vmatpush1.msra.mxu0 0.0
  %9982 = vmatprep.subr.mxu0 0.0
  %9983 = vmatpush1.msra.mxu0 0.0
  %9984 = vmatprep.subr.mxu0 0.0
  %9985 = vmatpush1.msra.mxu0 0.0
  %9986 = vmatprep.subr.mxu0 0.0
  %9987 = vmatpush1.msra.mxu0 0.0
  %9988 = vmatprep.subr.mxu0 0.0
  %9989 = vmatpush1.msra.mxu0 0.0
  %9990 = vmatprep.subr.mxu0 0.0
  %9991 = vmatpush1.msra.mxu0 0.0
  %9992 = vmatprep.mubr.f32.mxu0 0.0
  %9993 = vmatmul.mubr.f32.gmra.mrb[0].mxu0 %v9720
  %v9994 = vpop.f32.mrb[0].mxu0
  %v9995 = vadd.f32 0.0, %v9994
  %v9996 = vpop.f32.mrb[0].mxu0
  %v9997 = vadd.f32 0.0, %v9996
  %9998 = vmatprep.mubr.f32.mxu0 0.0
  %9999 = vmatmul.mubr.f32.gmra.mrb[0].mxu0 %v9723
  %v10000 = vpop.f32.mrb[0].mxu0
  %v10001 = vadd.f32 0.0, %v10000
  %v10002 = vpop.f32.mrb[0].mxu0
  %v10003 = vadd.f32 0.0, %v10002
  %10004 = vmatprep.mubr.f32.mxu0 0.0
  %10005 = vmatmul.mubr.f32.gmra.mrb[0].mxu0 %v9726
  %v10006 = vpop.f32.mrb[0].mxu0
  %v10007 = vadd.f32 0.0, %v10006
  %v10008 = vpop.f32.mrb[0].mxu0
  %v10009 = vadd.f32 0.0, %v10008
  %10010 = vmatprep.mubr.f32.mxu0 0.0
  %10011 = vmatmul.mubr.f32.gmra.mrb[0].mxu0 %v9729
  %v10012 = vpop.f32.mrb[0].mxu0
  %v10013 = vadd.f32 0.0, %v10012
  %v10014 = vpop.f32.mrb[0].mxu0
  %v10015 = vadd.f32 0.0, %v10014
  %10016 = vmatprep.mubr.f32.mxu0 0.0
  %10017 = vmatmul.mubr.f32.gmra.mrb[0].mxu0 %v9732
  %v10018 = vpop.f32.mrb[0].mxu0
  %v10019 = vadd.f32 0.0, %v10018
  %v10020 = vpop.f32.mrb[0].mxu0
  %v10021 = vadd.f32 0.0, %v10020
  %10022 = vmatprep.mubr.f32.mxu0 0.0
  %10023 = vmatmul.mubr.f32.gmra.mrb[0].mxu0 %v9735
  %v10024 = vpop.f32.mrb[0].mxu0
  %v10025 = vadd.f32 0.0, %v10024
  %v10026 = vpop.f32.mrb[0].mxu0
  %v10027 = vadd.f32 0.0, %v10026
  %10028 = vmatprep.mubr.f32.mxu0 0.0
  %10029 = vmatmul.mubr.f32.gmra.mrb[0].mxu0 %v9738
  %v10030 = vpop.f32.mrb[0].mxu0
  %v10031 = vadd.f32 0.0, %v10030
  %v10032 = vpop.f32.mrb[0].mxu0
  %v10033 = vadd.f32 0.0, %v10032
  %10034 = vmatprep.mubr.f32.mxu0 0.0
  %10035 = vmatmul.mubr.f32.gmra.mrb[0].mxu0 %v9741
  %v10036 = vpop.f32.mrb[0].mxu0
  %v10037 = vadd.f32 0.0, %v10036
  %v10038 = vpop.f32.mrb[0].mxu0
  %v10039 = vadd.f32 0.0, %v10038
  %10040 = vmatprep.mubr.f32.mxu0 0.0
  %10041 = vmatmul.mubr.f32.gmra.mrb[0].mxu0 %v9744
  %v10042 = vpop.f32.mrb[0].mxu0
  %v10043 = vadd.f32 0.0, %v10042
  %v10044 = vpop.f32.mrb[0].mxu0
  %v10045 = vadd.f32 0.0, %v10044
  %10046 = vmatprep.mubr.f32.mxu0 0.0
  %10047 = vmatmul.mubr.f32.gmra.mrb[0].mxu0 %v9747
  %v10048 = vpop.f32.mrb[0].mxu0
  %v10049 = vadd.f32 0.0, %v10048
  %v10050 = vpop.f32.mrb[0].mxu0
  %v10051 = vadd.f32 0.0, %v10050
  %10052 = vmatprep.mubr.f32.mxu0 0.0
  %10053 = vmatmul.mubr.f32.gmra.mrb[0].mxu0 %v9750
  %v10054 = vpop.f32.mrb[0].mxu0
  %v10055 = vadd.f32 0.0, %v10054
  %v10056 = vpop.f32.mrb[0].mxu0
  %v10057 = vadd.f32 0.0, %v10056
  %10058 = vmatprep.mubr.f32.mxu0 0.0
  %10059 = vmatmul.mubr.f32.gmra.mrb[0].mxu0 %v9753
  %v10060 = vpop.f32.mrb[0].mxu0
  %v10061 = vadd.f32 0.0, %v10060
  %v10062 = vpop.f32.mrb[0].mxu0
  %v10063 = vadd.f32 0.0, %v10062
  %10064 = vmatprep.mubr.f32.mxu0 0.0
  %10065 = vmatmul.mubr.f32.gmra.mrb[0].mxu0 %v9756
  %v10066 = vpop.f32.mrb[0].mxu0
  %v10067 = vadd.f32 0.0, %v10066
  %v10068 = vpop.f32.mrb[0].mxu0
  %v10069 = vadd.f32 0.0, %v10068
  %10070 = vmatprep.mubr.f32.mxu0 0.0
  %10071 = vmatmul.mubr.f32.gmra.mrb[0].mxu0 %v9759
  %v10072 = vpop.f32.mrb[0].mxu0
  %v10073 = vadd.f32 0.0, %v10072
  %v10074 = vpop.f32.mrb[0].mxu0
  %v10075 = vadd.f32 0.0, %v10074
  %10076 = vmatprep.mubr.f32.mxu0 0.0
  %10077 = vmatmul.mubr.f32.gmra.mrb[0].mxu0 %v9762
  %v10078 = vpop.f32.mrb[0].mxu0
  %v10079 = vadd.f32 0.0, %v10078
  %v10080 = vpop.f32.mrb[0].mxu0
  %v10081 = vadd.f32 0.0, %v10080
  %10082 = vmatprep.mubr.f32.mxu0 0.0
  %10083 = vmatmul.mubr.f32.gmra.mrb[0].mxu0 %v9765
  %v10084 = vpop.f32.mrb[0].mxu0
  %v10085 = vadd.f32 0.0, %v10084
  %v10086 = vpop.f32.mrb[0].mxu0
  %v10087 = vadd.f32 0.0, %v10086
  %10088 = vdwg.mxu0
  %10089 = vmatprep.subr.mxu0 %v9692
  %10090 = vmatpush1.msra.mxu0 %v9691
  %10091 = vmatprep.subr.mxu0 0.0
  %10092 = vmatpush1.msra.mxu0 0.0
  %10093 = vmatprep.subr.mxu0 0.0
  %10094 = vmatpush1.msra.mxu0 0.0
  %10095 = vmatprep.subr.mxu0 0.0
  %10096 = vmatpush1.msra.mxu0 0.0
  %10097 = vmatprep.subr.mxu0 0.0
  %10098 = vmatpush1.msra.mxu0 0.0
  %10099 = vmatprep.subr.mxu0 0.0
  %10100 = vmatpush1.msra.mxu0 0.0
  %10101 = vmatprep.subr.mxu0 0.0
  %10102 = vmatpush1.msra.mxu0 0.0
  %10103 = vmatprep.subr.mxu0 0.0
  %10104 = vmatpush1.msra.mxu0 0.0
  %10105 = vmatprep.subr.mxu0 0.0
  %10106 = vmatpush1.msra.mxu0 0.0
  %10107 = vmatprep.subr.mxu0 0.0
  %10108 = vmatpush1.msra.mxu0 0.0
  %10109 = vmatprep.subr.mxu0 0.0
  %10110 = vmatpush1.msra.mxu0 0.0
  %10111 = vmatprep.subr.mxu0 0.0
  %10112 = vmatpush1.msra.mxu0 0.0
  %10113 = vmatprep.subr.mxu0 0.0
  %10114 = vmatpush1.msra.mxu0 0.0
  %10115 = vmatprep.subr.mxu0 0.0
  %10116 = vmatpush1.msra.mxu0 0.0
  %10117 = vmatprep.subr.mxu0 0.0
  %10118 = vmatpush1.msra.mxu0 0.0
  %10119 = vmatprep.subr.mxu0 0.0
  %10120 = vmatpush1.msra.mxu0 0.0
  %10121 = vmatprep.subr.mxu0 0.0
  %10122 = vmatpush1.msra.mxu0 0.0
  %10123 = vmatprep.subr.mxu0 0.0
  %10124 = vmatpush1.msra.mxu0 0.0
  %10125 = vmatprep.subr.mxu0 0.0
  %10126 = vmatpush1.msra.mxu0 0.0
  %10127 = vmatprep.subr.mxu0 0.0
  %10128 = vmatpush1.msra.mxu0 0.0
  %10129 = vmatprep.subr.mxu0 0.0
  %10130 = vmatpush1.msra.mxu0 0.0
  %10131 = vmatprep.subr.mxu0 0.0
  %10132 = vmatpush1.msra.mxu0 0.0
  %10133 = vmatprep.subr.mxu0 0.0
  %10134 = vmatpush1.msra.mxu0 0.0
  %10135 = vmatprep.subr.mxu0 0.0
  %10136 = vmatpush1.msra.mxu0 0.0
  %10137 = vmatprep.subr.mxu0 0.0
  %10138 = vmatpush1.msra.mxu0 0.0
  %10139 = vmatprep.subr.mxu0 0.0
  %10140 = vmatpush1.msra.mxu0 0.0
  %10141 = vmatprep.subr.mxu0 0.0
  %10142 = vmatpush1.msra.mxu0 0.0
  %10143 = vmatprep.subr.mxu0 0.0
  %10144 = vmatpush1.msra.mxu0 0.0
  %10145 = vmatprep.subr.mxu0 0.0
  %10146 = vmatpush1.msra.mxu0 0.0
  %10147 = vmatprep.subr.mxu0 0.0
  %10148 = vmatpush1.msra.mxu0 0.0
  %10149 = vmatprep.subr.mxu0 0.0
  %10150 = vmatpush1.msra.mxu0 0.0
  %10151 = vmatprep.subr.mxu0 0.0
  %10152 = vmatpush1.msra.mxu0 0.0
  %10153 = vmatprep.mubr.f32.mxu0 0.0
  %10154 = vmatmul.mubr.f32.gmra.mrb[0].mxu0 %v9720
  %v10155 = vpop.f32.mrb[0].mxu0
  %v10156 = vadd.f32 0.0, %v10155
  %v10157 = vpop.f32.mrb[0].mxu0
  %v10158 = vadd.f32 0.0, %v10157
  %10159 = vmatprep.mubr.f32.mxu0 0.0
  %10160 = vmatmul.mubr.f32.gmra.mrb[0].mxu0 %v9723
  %v10161 = vpop.f32.mrb[0].mxu0
  %v10162 = vadd.f32 0.0, %v10161
  %v10163 = vpop.f32.mrb[0].mxu0
  %v10164 = vadd.f32 0.0, %v10163
  %10165 = vmatprep.mubr.f32.mxu0 0.0
  %10166 = vmatmul.mubr.f32.gmra.mrb[0].mxu0 %v9726
  %v10167 = vpop.f32.mrb[0].mxu0
  %v10168 = vadd.f32 0.0, %v10167
  %v10169 = vpop.f32.mrb[0].mxu0
  %v10170 = vadd.f32 0.0, %v10169
  %10171 = vmatprep.mubr.f32.mxu0 0.0
  %10172 = vmatmul.mubr.f32.gmra.mrb[0].mxu0 %v9729
  %v10173 = vpop.f32.mrb[0].mxu0
  %v10174 = vadd.f32 0.0, %v10173
  %v10175 = vpop.f32.mrb[0].mxu0
  %v10176 = vadd.f32 0.0, %v10175
  %10177 = vmatprep.mubr.f32.mxu0 0.0
  %10178 = vmatmul.mubr.f32.gmra.mrb[0].mxu0 %v9732
  %v10179 = vpop.f32.mrb[0].mxu0
  %v10180 = vadd.f32 0.0, %v10179
  %v10181 = vpop.f32.mrb[0].mxu0
  %v10182 = vadd.f32 0.0, %v10181
  %10183 = vmatprep.mubr.f32.mxu0 0.0
  %10184 = vmatmul.mubr.f32.gmra.mrb[0].mxu0 %v9735
  %v10185 = vpop.f32.mrb[0].mxu0
  %v10186 = vadd.f32 0.0, %v10185
  %v10187 = vpop.f32.mrb[0].mxu0
  %v10188 = vadd.f32 0.0, %v10187
  %10189 = vmatprep.mubr.f32.mxu0 0.0
  %10190 = vmatmul.mubr.f32.gmra.mrb[0].mxu0 %v9738
  %v10191 = vpop.f32.mrb[0].mxu0
  %v10192 = vadd.f32 0.0, %v10191
  %v10193 = vpop.f32.mrb[0].mxu0
  %v10194 = vadd.f32 0.0, %v10193
  %10195 = vmatprep.mubr.f32.mxu0 0.0
  %10196 = vmatmul.mubr.f32.gmra.mrb[0].mxu0 %v9741
  %v10197 = vpop.f32.mrb[0].mxu0
  %v10198 = vadd.f32 0.0, %v10197
  %v10199 = vpop.f32.mrb[0].mxu0
  %v10200 = vadd.f32 0.0, %v10199
  %10201 = vmatprep.mubr.f32.mxu0 0.0
  %10202 = vmatmul.mubr.f32.gmra.mrb[0].mxu0 %v9744
  %v10203 = vpop.f32.mrb[0].mxu0
  %v10204 = vadd.f32 0.0, %v10203
  %v10205 = vpop.f32.mrb[0].mxu0
  %v10206 = vadd.f32 0.0, %v10205
  %10207 = vmatprep.mubr.f32.mxu0 0.0
  %10208 = vmatmul.mubr.f32.gmra.mrb[0].mxu0 %v9747
  %v10209 = vpop.f32.mrb[0].mxu0
  %v10210 = vadd.f32 0.0, %v10209
  %v10211 = vpop.f32.mrb[0].mxu0
  %v10212 = vadd.f32 0.0, %v10211
  %10213 = vmatprep.mubr.f32.mxu0 0.0
  %10214 = vmatmul.mubr.f32.gmra.mrb[0].mxu0 %v9750
  %v10215 = vpop.f32.mrb[0].mxu0
  %v10216 = vadd.f32 0.0, %v10215
  %v10217 = vpop.f32.mrb[0].mxu0
  %v10218 = vadd.f32 0.0, %v10217
  %10219 = vmatprep.mubr.f32.mxu0 0.0
  %10220 = vmatmul.mubr.f32.gmra.mrb[0].mxu0 %v9753
  %v10221 = vpop.f32.mrb[0].mxu0
  %v10222 = vadd.f32 0.0, %v10221
  %v10223 = vpop.f32.mrb[0].mxu0
  %v10224 = vadd.f32 0.0, %v10223
  %10225 = vmatprep.mubr.f32.mxu0 0.0
  %10226 = vmatmul.mubr.f32.gmra.mrb[0].mxu0 %v9756
  %v10227 = vpop.f32.mrb[0].mxu0
  %v10228 = vadd.f32 0.0, %v10227
  %v10229 = vpop.f32.mrb[0].mxu0
  %v10230 = vadd.f32 0.0, %v10229
  %10231 = vmatprep.mubr.f32.mxu0 0.0
  %10232 = vmatmul.mubr.f32.gmra.mrb[0].mxu0 %v9759
  %v10233 = vpop.f32.mrb[0].mxu0
  %v10234 = vadd.f32 0.0, %v10233
  %v10235 = vpop.f32.mrb[0].mxu0
  %v10236 = vadd.f32 0.0, %v10235
  %10237 = vmatprep.mubr.f32.mxu0 0.0
  %10238 = vmatmul.mubr.f32.gmra.mrb[0].mxu0 %v9762
  %v10239 = vpop.f32.mrb[0].mxu0
  %v10240 = vadd.f32 0.0, %v10239
  %v10241 = vpop.f32.mrb[0].mxu0
  %v10242 = vadd.f32 0.0, %v10241
  %10243 = vmatprep.mubr.f32.mxu0 0.0
  %10244 = vmatmul.mubr.f32.gmra.mrb[0].mxu0 %v9765
  %v10245 = vpop.f32.mrb[0].mxu0
  %v10246 = vadd.f32 0.0, %v10245
  %v10247 = vpop.f32.mrb[0].mxu0
  %v10248 = vadd.f32 0.0, %v10247
  %10249 = vdwg.mxu0
  %10250 = vmatprep.subr.mxu0 %v9694
  %10251 = vmatpush1.msra.mxu0 %v9693
  %10252 = vmatprep.subr.mxu0 0.0
  %10253 = vmatpush1.msra.mxu0 0.0
  %10254 = vmatprep.subr.mxu0 0.0
  %10255 = vmatpush1.msra.mxu0 0.0
  %10256 = vmatprep.subr.mxu0 0.0
  %10257 = vmatpush1.msra.mxu0 0.0
  %10258 = vmatprep.subr.mxu0 0.0
  %10259 = vmatpush1.msra.mxu0 0.0
  %10260 = vmatprep.subr.mxu0 0.0
  %10261 = vmatpush1.msra.mxu0 0.0
  %10262 = vmatprep.subr.mxu0 0.0
  %10263 = vmatpush1.msra.mxu0 0.0
  %10264 = vmatprep.subr.mxu0 0.0
  %10265 = vmatpush1.msra.mxu0 0.0
  %10266 = vmatprep.subr.mxu0 0.0
  %10267 = vmatpush1.msra.mxu0 0.0
  %10268 = vmatprep.subr.mxu0 0.0
  %10269 = vmatpush1.msra.mxu0 0.0
  %10270 = vmatprep.subr.mxu0 0.0
  %10271 = vmatpush1.msra.mxu0 0.0
  %10272 = vmatprep.subr.mxu0 0.0
  %10273 = vmatpush1.msra.mxu0 0.0
  %10274 = vmatprep.subr.mxu0 0.0
  %10275 = vmatpush1.msra.mxu0 0.0
  %10276 = vmatprep.subr.mxu0 0.0
  %10277 = vmatpush1.msra.mxu0 0.0
  %10278 = vmatprep.subr.mxu0 0.0
  %10279 = vmatpush1.msra.mxu0 0.0
  %10280 = vmatprep.subr.mxu0 0.0
  %10281 = vmatpush1.msra.mxu0 0.0
  %10282 = vmatprep.subr.mxu0 0.0
  %10283 = vmatpush1.msra.mxu0 0.0
  %10284 = vmatprep.subr.mxu0 0.0
  %10285 = vmatpush1.msra.mxu0 0.0
  %10286 = vmatprep.subr.mxu0 0.0
  %10287 = vmatpush1.msra.mxu0 0.0
  %10288 = vmatprep.subr.mxu0 0.0
  %10289 = vmatpush1.msra.mxu0 0.0
  %10290 = vmatprep.subr.mxu0 0.0
  %10291 = vmatpush1.msra.mxu0 0.0
  %10292 = vmatprep.subr.mxu0 0.0
  %10293 = vmatpush1.msra.mxu0 0.0
  %10294 = vmatprep.subr.mxu0 0.0
  %10295 = vmatpush1.msra.mxu0 0.0
  %10296 = vmatprep.subr.mxu0 0.0
  %10297 = vmatpush1.msra.mxu0 0.0
  %10298 = vmatprep.subr.mxu0 0.0
  %10299 = vmatpush1.msra.mxu0 0.0
  %10300 = vmatprep.subr.mxu0 0.0
  %10301 = vmatpush1.msra.mxu0 0.0
  %10302 = vmatprep.subr.mxu0 0.0
  %10303 = vmatpush1.msra.mxu0 0.0
  %10304 = vmatprep.subr.mxu0 0.0
  %10305 = vmatpush1.msra.mxu0 0.0
  %10306 = vmatprep.subr.mxu0 0.0
  %10307 = vmatpush1.msra.mxu0 0.0
  %10308 = vmatprep.subr.mxu0 0.0
  %10309 = vmatpush1.msra.mxu0 0.0
  %10310 = vmatprep.subr.mxu0 0.0
  %10311 = vmatpush1.msra.mxu0 0.0
  %10312 = vmatprep.subr.mxu0 0.0
  %10313 = vmatpush1.msra.mxu0 0.0
  %10314 = vmatprep.mubr.f32.mxu0 0.0
  %10315 = vmatmul.mubr.f32.gmra.mrb[0].mxu0 %v9720
  %v10316 = vpop.f32.mrb[0].mxu0
  %v10317 = vadd.f32 0.0, %v10316
  %v10318 = vpop.f32.mrb[0].mxu0
  %v10319 = vadd.f32 0.0, %v10318
  %10320 = vmatprep.mubr.f32.mxu0 0.0
  %10321 = vmatmul.mubr.f32.gmra.mrb[0].mxu0 %v9723
  %v10322 = vpop.f32.mrb[0].mxu0
  %v10323 = vadd.f32 0.0, %v10322
  %v10324 = vpop.f32.mrb[0].mxu0
  %v10325 = vadd.f32 0.0, %v10324
  %10326 = vmatprep.mubr.f32.mxu0 0.0
  %10327 = vmatmul.mubr.f32.gmra.mrb[0].mxu0 %v9726
  %v10328 = vpop.f32.mrb[0].mxu0
  %v10329 = vadd.f32 0.0, %v10328
  %v10330 = vpop.f32.mrb[0].mxu0
  %v10331 = vadd.f32 0.0, %v10330
  %10332 = vmatprep.mubr.f32.mxu0 0.0
  %10333 = vmatmul.mubr.f32.gmra.mrb[0].mxu0 %v9729
  %v10334 = vpop.f32.mrb[0].mxu0
  %v10335 = vadd.f32 0.0, %v10334
  %v10336 = vpop.f32.mrb[0].mxu0
  %v10337 = vadd.f32 0.0, %v10336
  %10338 = vmatprep.mubr.f32.mxu0 0.0
  %10339 = vmatmul.mubr.f32.gmra.mrb[0].mxu0 %v9732
  %v10340 = vpop.f32.mrb[0].mxu0
  %v10341 = vadd.f32 0.0, %v10340
  %v10342 = vpop.f32.mrb[0].mxu0
  %v10343 = vadd.f32 0.0, %v10342
  %10344 = vmatprep.mubr.f32.mxu0 0.0
  %10345 = vmatmul.mubr.f32.gmra.mrb[0].mxu0 %v9735
  %v10346 = vpop.f32.mrb[0].mxu0
  %v10347 = vadd.f32 0.0, %v10346
  %v10348 = vpop.f32.mrb[0].mxu0
  %v10349 = vadd.f32 0.0, %v10348
  %10350 = vmatprep.mubr.f32.mxu0 0.0
  %10351 = vmatmul.mubr.f32.gmra.mrb[0].mxu0 %v9738
  %v10352 = vpop.f32.mrb[0].mxu0
  %v10353 = vadd.f32 0.0, %v10352
  %v10354 = vpop.f32.mrb[0].mxu0
  %v10355 = vadd.f32 0.0, %v10354
  %10356 = vmatprep.mubr.f32.mxu0 0.0
  %10357 = vmatmul.mubr.f32.gmra.mrb[0].mxu0 %v9741
  %v10358 = vpop.f32.mrb[0].mxu0
  %v10359 = vadd.f32 0.0, %v10358
  %v10360 = vpop.f32.mrb[0].mxu0
  %v10361 = vadd.f32 0.0, %v10360
  %10362 = vmatprep.mubr.f32.mxu0 0.0
  %10363 = vmatmul.mubr.f32.gmra.mrb[0].mxu0 %v9744
  %v10364 = vpop.f32.mrb[0].mxu0
  %v10365 = vadd.f32 0.0, %v10364
  %v10366 = vpop.f32.mrb[0].mxu0
  %v10367 = vadd.f32 0.0, %v10366
  %10368 = vmatprep.mubr.f32.mxu0 0.0
  %10369 = vmatmul.mubr.f32.gmra.mrb[0].mxu0 %v9747
  %v10370 = vpop.f32.mrb[0].mxu0
  %v10371 = vadd.f32 0.0, %v10370
  %v10372 = vpop.f32.mrb[0].mxu0
  %v10373 = vadd.f32 0.0, %v10372
  %10374 = vmatprep.mubr.f32.mxu0 0.0
  %10375 = vmatmul.mubr.f32.gmra.mrb[0].mxu0 %v9750
  %v10376 = vpop.f32.mrb[0].mxu0
  %v10377 = vadd.f32 0.0, %v10376
  %v10378 = vpop.f32.mrb[0].mxu0
  %v10379 = vadd.f32 0.0, %v10378
  %10380 = vmatprep.mubr.f32.mxu0 0.0
  %10381 = vmatmul.mubr.f32.gmra.mrb[0].mxu0 %v9753
  %v10382 = vpop.f32.mrb[0].mxu0
  %v10383 = vadd.f32 0.0, %v10382
  %v10384 = vpop.f32.mrb[0].mxu0
  %v10385 = vadd.f32 0.0, %v10384
  %10386 = vmatprep.mubr.f32.mxu0 0.0
  %10387 = vmatmul.mubr.f32.gmra.mrb[0].mxu0 %v9756
  %v10388 = vpop.f32.mrb[0].mxu0
  %v10389 = vadd.f32 0.0, %v10388
  %v10390 = vpop.f32.mrb[0].mxu0
  %v10391 = vadd.f32 0.0, %v10390
  %10392 = vmatprep.mubr.f32.mxu0 0.0
  %10393 = vmatmul.mubr.f32.gmra.mrb[0].mxu0 %v9759
  %v10394 = vpop.f32.mrb[0].mxu0
  %v10395 = vadd.f32 0.0, %v10394
  %v10396 = vpop.f32.mrb[0].mxu0
  %v10397 = vadd.f32 0.0, %v10396
  %10398 = vmatprep.mubr.f32.mxu0 0.0
  %10399 = vmatmul.mubr.f32.gmra.mrb[0].mxu0 %v9762
  %v10400 = vpop.f32.mrb[0].mxu0
  %v10401 = vadd.f32 0.0, %v10400
  %v10402 = vpop.f32.mrb[0].mxu0
  %v10403 = vadd.f32 0.0, %v10402
  %10404 = vmatprep.mubr.f32.mxu0 0.0
  %10405 = vmatmul.mubr.f32.gmra.mrb[0].mxu0 %v9765
  %v10406 = vpop.f32.mrb[0].mxu0
  %v10407 = vadd.f32 0.0, %v10406
  %v10408 = vpop.f32.mrb[0].mxu0
  %v10409 = vadd.f32 0.0, %v10408
  %10410 = vdwg.mxu0
  %10411 = vmatprep.subr.mxu0 %v9696
  %10412 = vmatpush1.msra.mxu0 %v9695
  %10413 = vmatprep.subr.mxu0 0.0
  %10414 = vmatpush1.msra.mxu0 0.0
  %10415 = vmatprep.subr.mxu0 0.0
  %10416 = vmatpush1.msra.mxu0 0.0
  %10417 = vmatprep.subr.mxu0 0.0
  %10418 = vmatpush1.msra.mxu0 0.0
  %10419 = vmatprep.subr.mxu0 0.0
  %10420 = vmatpush1.msra.mxu0 0.0
  %10421 = vmatprep.subr.mxu0 0.0
  %10422 = vmatpush1.msra.mxu0 0.0
  %10423 = vmatprep.subr.mxu0 0.0
  %10424 = vmatpush1.msra.mxu0 0.0
  %10425 = vmatprep.subr.mxu0 0.0
  %10426 = vmatpush1.msra.mxu0 0.0
  %10427 = vmatprep.subr.mxu0 0.0
  %10428 = vmatpush1.msra.mxu0 0.0
  %10429 = vmatprep.subr.mxu0 0.0
  %10430 = vmatpush1.msra.mxu0 0.0
  %10431 = vmatprep.subr.mxu0 0.0
  %10432 = vmatpush1.msra.mxu0 0.0
  %10433 = vmatprep.subr.mxu0 0.0
  %10434 = vmatpush1.msra.mxu0 0.0
  %10435 = vmatprep.subr.mxu0 0.0
  %10436 = vmatpush1.msra.mxu0 0.0
  %10437 = vmatprep.subr.mxu0 0.0
  %10438 = vmatpush1.msra.mxu0 0.0
  %10439 = vmatprep.subr.mxu0 0.0
  %10440 = vmatpush1.msra.mxu0 0.0
  %10441 = vmatprep.subr.mxu0 0.0
  %10442 = vmatpush1.msra.mxu0 0.0
  %10443 = vmatprep.subr.mxu0 0.0
  %10444 = vmatpush1.msra.mxu0 0.0
  %10445 = vmatprep.subr.mxu0 0.0
  %10446 = vmatpush1.msra.mxu0 0.0
  %10447 = vmatprep.subr.mxu0 0.0
  %10448 = vmatpush1.msra.mxu0 0.0
  %10449 = vmatprep.subr.mxu0 0.0
  %10450 = vmatpush1.msra.mxu0 0.0
  %10451 = vmatprep.subr.mxu0 0.0
  %10452 = vmatpush1.msra.mxu0 0.0
  %10453 = vmatprep.subr.mxu0 0.0
  %10454 = vmatpush1.msra.mxu0 0.0
  %10455 = vmatprep.subr.mxu0 0.0
  %10456 = vmatpush1.msra.mxu0 0.0
  %10457 = vmatprep.subr.mxu0 0.0
  %10458 = vmatpush1.msra.mxu0 0.0
  %10459 = vmatprep.subr.mxu0 0.0
  %10460 = vmatpush1.msra.mxu0 0.0
  %10461 = vmatprep.subr.mxu0 0.0
  %10462 = vmatpush1.msra.mxu0 0.0
  %10463 = vmatprep.subr.mxu0 0.0
  %10464 = vmatpush1.msra.mxu0 0.0
  %10465 = vmatprep.subr.mxu0 0.0
  %10466 = vmatpush1.msra.mxu0 0.0
  %10467 = vmatprep.subr.mxu0 0.0
  %10468 = vmatpush1.msra.mxu0 0.0
  %10469 = vmatprep.subr.mxu0 0.0
  %10470 = vmatpush1.msra.mxu0 0.0
  %10471 = vmatprep.subr.mxu0 0.0
  %10472 = vmatpush1.msra.mxu0 0.0
  %10473 = vmatprep.subr.mxu0 0.0
  %10474 = vmatpush1.msra.mxu0 0.0
  %10475 = vmatprep.mubr.f32.mxu0 0.0
  %10476 = vmatmul.mubr.f32.gmra.mrb[0].mxu0 %v9720
  %v10477 = vpop.f32.mrb[0].mxu0
  %v10478 = vadd.f32 0.0, %v10477
  %v10479 = vpop.f32.mrb[0].mxu0
  %v10480 = vadd.f32 0.0, %v10479
  %10481 = vmatprep.mubr.f32.mxu0 0.0
  %10482 = vmatmul.mubr.f32.gmra.mrb[0].mxu0 %v9723
  %v10483 = vpop.f32.mrb[0].mxu0
  %v10484 = vadd.f32 0.0, %v10483
  %v10485 = vpop.f32.mrb[0].mxu0
  %v10486 = vadd.f32 0.0, %v10485
  %10487 = vmatprep.mubr.f32.mxu0 0.0
  %10488 = vmatmul.mubr.f32.gmra.mrb[0].mxu0 %v9726
  %v10489 = vpop.f32.mrb[0].mxu0
  %v10490 = vadd.f32 0.0, %v10489
  %v10491 = vpop.f32.mrb[0].mxu0
  %v10492 = vadd.f32 0.0, %v10491
  %10493 = vmatprep.mubr.f32.mxu0 0.0
  %10494 = vmatmul.mubr.f32.gmra.mrb[0].mxu0 %v9729
  %v10495 = vpop.f32.mrb[0].mxu0
  %v10496 = vadd.f32 0.0, %v10495
  %v10497 = vpop.f32.mrb[0].mxu0
  %v10498 = vadd.f32 0.0, %v10497
  %10499 = vmatprep.mubr.f32.mxu0 0.0
  %10500 = vmatmul.mubr.f32.gmra.mrb[0].mxu0 %v9732
  %v10501 = vpop.f32.mrb[0].mxu0
  %v10502 = vadd.f32 0.0, %v10501
  %v10503 = vpop.f32.mrb[0].mxu0
  %v10504 = vadd.f32 0.0, %v10503
  %10505 = vmatprep.mubr.f32.mxu0 0.0
  %10506 = vmatmul.mubr.f32.gmra.mrb[0].mxu0 %v9735
  %v10507 = vpop.f32.mrb[0].mxu0
  %v10508 = vadd.f32 0.0, %v10507
  %v10509 = vpop.f32.mrb[0].mxu0
  %v10510 = vadd.f32 0.0, %v10509
  %10511 = vmatprep.mubr.f32.mxu0 0.0
  %10512 = vmatmul.mubr.f32.gmra.mrb[0].mxu0 %v9738
  %v10513 = vpop.f32.mrb[0].mxu0
  %v10514 = vadd.f32 0.0, %v10513
  %v10515 = vpop.f32.mrb[0].mxu0
  %v10516 = vadd.f32 0.0, %v10515
  %10517 = vmatprep.mubr.f32.mxu0 0.0
  %10518 = vmatmul.mubr.f32.gmra.mrb[0].mxu0 %v9741
  %v10519 = vpop.f32.mrb[0].mxu0
  %v10520 = vadd.f32 0.0, %v10519
  %v10521 = vpop.f32.mrb[0].mxu0
  %v10522 = vadd.f32 0.0, %v10521
  %10523 = vmatprep.mubr.f32.mxu0 0.0
  %10524 = vmatmul.mubr.f32.gmra.mrb[0].mxu0 %v9744
  %v10525 = vpop.f32.mrb[0].mxu0
  %v10526 = vadd.f32 0.0, %v10525
  %v10527 = vpop.f32.mrb[0].mxu0
  %v10528 = vadd.f32 0.0, %v10527
  %10529 = vmatprep.mubr.f32.mxu0 0.0
  %10530 = vmatmul.mubr.f32.gmra.mrb[0].mxu0 %v9747
  %v10531 = vpop.f32.mrb[0].mxu0
  %v10532 = vadd.f32 0.0, %v10531
  %v10533 = vpop.f32.mrb[0].mxu0
  %v10534 = vadd.f32 0.0, %v10533
  %10535 = vmatprep.mubr.f32.mxu0 0.0
  %10536 = vmatmul.mubr.f32.gmra.mrb[0].mxu0 %v9750
  %v10537 = vpop.f32.mrb[0].mxu0
  %v10538 = vadd.f32 0.0, %v10537
  %v10539 = vpop.f32.mrb[0].mxu0
  %v10540 = vadd.f32 0.0, %v10539
  %10541 = vmatprep.mubr.f32.mxu0 0.0
  %10542 = vmatmul.mubr.f32.gmra.mrb[0].mxu0 %v9753
  %v10543 = vpop.f32.mrb[0].mxu0
  %v10544 = vadd.f32 0.0, %v10543
  %v10545 = vpop.f32.mrb[0].mxu0
  %v10546 = vadd.f32 0.0, %v10545
  %10547 = vmatprep.mubr.f32.mxu0 0.0
  %10548 = vmatmul.mubr.f32.gmra.mrb[0].mxu0 %v9756
  %v10549 = vpop.f32.mrb[0].mxu0
  %v10550 = vadd.f32 0.0, %v10549
  %v10551 = vpop.f32.mrb[0].mxu0
  %v10552 = vadd.f32 0.0, %v10551
  %10553 = vmatprep.mubr.f32.mxu0 0.0
  %10554 = vmatmul.mubr.f32.gmra.mrb[0].mxu0 %v9759
  %v10555 = vpop.f32.mrb[0].mxu0
  %v10556 = vadd.f32 0.0, %v10555
  %v10557 = vpop.f32.mrb[0].mxu0
  %v10558 = vadd.f32 0.0, %v10557
  %10559 = vmatprep.mubr.f32.mxu0 0.0
  %10560 = vmatmul.mubr.f32.gmra.mrb[0].mxu0 %v9762
  %v10561 = vpop.f32.mrb[0].mxu0
  %v10562 = vadd.f32 0.0, %v10561
  %v10563 = vpop.f32.mrb[0].mxu0
  %v10564 = vadd.f32 0.0, %v10563
  %10565 = vmatprep.mubr.f32.mxu0 0.0
  %10566 = vmatmul.mubr.f32.gmra.mrb[0].mxu0 %v9765
  %v10567 = vpop.f32.mrb[0].mxu0
  %v10568 = vadd.f32 0.0, %v10567
  %v10569 = vpop.f32.mrb[0].mxu0
  %v10570 = vadd.f32 0.0, %v10569
  %10571 = vdwg.mxu0
  %10572 = vmatprep.subr.mxu0 %v9698
  %10573 = vmatpush1.msra.mxu0 %v9697
  %10574 = vmatprep.subr.mxu0 0.0
  %10575 = vmatpush1.msra.mxu0 0.0
  %10576 = vmatprep.subr.mxu0 0.0
  %10577 = vmatpush1.msra.mxu0 0.0
  %10578 = vmatprep.subr.mxu0 0.0
  %10579 = vmatpush1.msra.mxu0 0.0
  %10580 = vmatprep.subr.mxu0 0.0
  %10581 = vmatpush1.msra.mxu0 0.0
  %10582 = vmatprep.subr.mxu0 0.0
  %10583 = vmatpush1.msra.mxu0 0.0
  %10584 = vmatprep.subr.mxu0 0.0
  %10585 = vmatpush1.msra.mxu0 0.0
  %10586 = vmatprep.subr.mxu0 0.0
  %10587 = vmatpush1.msra.mxu0 0.0
  %10588 = vmatprep.subr.mxu0 0.0
  %10589 = vmatpush1.msra.mxu0 0.0
  %10590 = vmatprep.subr.mxu0 0.0
  %10591 = vmatpush1.msra.mxu0 0.0
  %10592 = vmatprep.subr.mxu0 0.0
  %10593 = vmatpush1.msra.mxu0 0.0
  %10594 = vmatprep.subr.mxu0 0.0
  %10595 = vmatpush1.msra.mxu0 0.0
  %10596 = vmatprep.subr.mxu0 0.0
  %10597 = vmatpush1.msra.mxu0 0.0
  %10598 = vmatprep.subr.mxu0 0.0
  %10599 = vmatpush1.msra.mxu0 0.0
  %10600 = vmatprep.subr.mxu0 0.0
  %10601 = vmatpush1.msra.mxu0 0.0
  %10602 = vmatprep.subr.mxu0 0.0
  %10603 = vmatpush1.msra.mxu0 0.0
  %10604 = vmatprep.subr.mxu0 0.0
  %10605 = vmatpush1.msra.mxu0 0.0
  %10606 = vmatprep.subr.mxu0 0.0
  %10607 = vmatpush1.msra.mxu0 0.0
  %10608 = vmatprep.subr.mxu0 0.0
  %10609 = vmatpush1.msra.mxu0 0.0
  %10610 = vmatprep.subr.mxu0 0.0
  %10611 = vmatpush1.msra.mxu0 0.0
  %10612 = vmatprep.subr.mxu0 0.0
  %10613 = vmatpush1.msra.mxu0 0.0
  %10614 = vmatprep.subr.mxu0 0.0
  %10615 = vmatpush1.msra.mxu0 0.0
  %10616 = vmatprep.subr.mxu0 0.0
  %10617 = vmatpush1.msra.mxu0 0.0
  %10618 = vmatprep.subr.mxu0 0.0
  %10619 = vmatpush1.msra.mxu0 0.0
  %10620 = vmatprep.subr.mxu0 0.0
  %10621 = vmatpush1.msra.mxu0 0.0
  %10622 = vmatprep.subr.mxu0 0.0
  %10623 = vmatpush1.msra.mxu0 0.0
  %10624 = vmatprep.subr.mxu0 0.0
  %10625 = vmatpush1.msra.mxu0 0.0
  %10626 = vmatprep.subr.mxu0 0.0
  %10627 = vmatpush1.msra.mxu0 0.0
  %10628 = vmatprep.subr.mxu0 0.0
  %10629 = vmatpush1.msra.mxu0 0.0
  %10630 = vmatprep.subr.mxu0 0.0
  %10631 = vmatpush1.msra.mxu0 0.0
  %10632 = vmatprep.subr.mxu0 0.0
  %10633 = vmatpush1.msra.mxu0 0.0
  %10634 = vmatprep.subr.mxu0 0.0
  %10635 = vmatpush1.msra.mxu0 0.0
  %10636 = vmatprep.mubr.f32.mxu0 0.0
  %10637 = vmatmul.mubr.f32.gmra.mrb[0].mxu0 %v9720
  %v10638 = vpop.f32.mrb[0].mxu0
  %v10639 = vadd.f32 0.0, %v10638
  %v10640 = vpop.f32.mrb[0].mxu0
  %v10641 = vadd.f32 0.0, %v10640
  %10642 = vmatprep.mubr.f32.mxu0 0.0
  %10643 = vmatmul.mubr.f32.gmra.mrb[0].mxu0 %v9723
  %v10644 = vpop.f32.mrb[0].mxu0
  %v10645 = vadd.f32 0.0, %v10644
  %v10646 = vpop.f32.mrb[0].mxu0
  %v10647 = vadd.f32 0.0, %v10646
  %10648 = vmatprep.mubr.f32.mxu0 0.0
  %10649 = vmatmul.mubr.f32.gmra.mrb[0].mxu0 %v9726
  %v10650 = vpop.f32.mrb[0].mxu0
  %v10651 = vadd.f32 0.0, %v10650
  %v10652 = vpop.f32.mrb[0].mxu0
  %v10653 = vadd.f32 0.0, %v10652
  %10654 = vmatprep.mubr.f32.mxu0 0.0
  %10655 = vmatmul.mubr.f32.gmra.mrb[0].mxu0 %v9729
  %v10656 = vpop.f32.mrb[0].mxu0
  %v10657 = vadd.f32 0.0, %v10656
  %v10658 = vpop.f32.mrb[0].mxu0
  %v10659 = vadd.f32 0.0, %v10658
  %10660 = vmatprep.mubr.f32.mxu0 0.0
  %10661 = vmatmul.mubr.f32.gmra.mrb[0].mxu0 %v9732
  %v10662 = vpop.f32.mrb[0].mxu0
  %v10663 = vadd.f32 0.0, %v10662
  %v10664 = vpop.f32.mrb[0].mxu0
  %v10665 = vadd.f32 0.0, %v10664
  %10666 = vmatprep.mubr.f32.mxu0 0.0
  %10667 = vmatmul.mubr.f32.gmra.mrb[0].mxu0 %v9735
  %v10668 = vpop.f32.mrb[0].mxu0
  %v10669 = vadd.f32 0.0, %v10668
  %v10670 = vpop.f32.mrb[0].mxu0
  %v10671 = vadd.f32 0.0, %v10670
  %10672 = vmatprep.mubr.f32.mxu0 0.0
  %10673 = vmatmul.mubr.f32.gmra.mrb[0].mxu0 %v9738
  %v10674 = vpop.f32.mrb[0].mxu0
  %v10675 = vadd.f32 0.0, %v10674
  %v10676 = vpop.f32.mrb[0].mxu0
  %v10677 = vadd.f32 0.0, %v10676
  %10678 = vmatprep.mubr.f32.mxu0 0.0
  %10679 = vmatmul.mubr.f32.gmra.mrb[0].mxu0 %v9741
  %v10680 = vpop.f32.mrb[0].mxu0
  %v10681 = vadd.f32 0.0, %v10680
  %v10682 = vpop.f32.mrb[0].mxu0
  %v10683 = vadd.f32 0.0, %v10682
  %10684 = vmatprep.mubr.f32.mxu0 0.0
  %10685 = vmatmul.mubr.f32.gmra.mrb[0].mxu0 %v9744
  %v10686 = vpop.f32.mrb[0].mxu0
  %v10687 = vadd.f32 0.0, %v10686
  %v10688 = vpop.f32.mrb[0].mxu0
  %v10689 = vadd.f32 0.0, %v10688
  %10690 = vmatprep.mubr.f32.mxu0 0.0
  %10691 = vmatmul.mubr.f32.gmra.mrb[0].mxu0 %v9747
  %v10692 = vpop.f32.mrb[0].mxu0
  %v10693 = vadd.f32 0.0, %v10692
  %v10694 = vpop.f32.mrb[0].mxu0
  %v10695 = vadd.f32 0.0, %v10694
  %10696 = vmatprep.mubr.f32.mxu0 0.0
  %10697 = vmatmul.mubr.f32.gmra.mrb[0].mxu0 %v9750
  %v10698 = vpop.f32.mrb[0].mxu0
  %v10699 = vadd.f32 0.0, %v10698
  %v10700 = vpop.f32.mrb[0].mxu0
  %v10701 = vadd.f32 0.0, %v10700
  %10702 = vmatprep.mubr.f32.mxu0 0.0
  %10703 = vmatmul.mubr.f32.gmra.mrb[0].mxu0 %v9753
  %v10704 = vpop.f32.mrb[0].mxu0
  %v10705 = vadd.f32 0.0, %v10704
  %v10706 = vpop.f32.mrb[0].mxu0
  %v10707 = vadd.f32 0.0, %v10706
  %10708 = vmatprep.mubr.f32.mxu0 0.0
  %10709 = vmatmul.mubr.f32.gmra.mrb[0].mxu0 %v9756
  %v10710 = vpop.f32.mrb[0].mxu0
  %v10711 = vadd.f32 0.0, %v10710
  %v10712 = vpop.f32.mrb[0].mxu0
  %v10713 = vadd.f32 0.0, %v10712
  %10714 = vmatprep.mubr.f32.mxu0 0.0
  %10715 = vmatmul.mubr.f32.gmra.mrb[0].mxu0 %v9759
  %v10716 = vpop.f32.mrb[0].mxu0
  %v10717 = vadd.f32 0.0, %v10716
  %v10718 = vpop.f32.mrb[0].mxu0
  %v10719 = vadd.f32 0.0, %v10718
  %10720 = vmatprep.mubr.f32.mxu0 0.0
  %10721 = vmatmul.mubr.f32.gmra.mrb[0].mxu0 %v9762
  %v10722 = vpop.f32.mrb[0].mxu0
  %v10723 = vadd.f32 0.0, %v10722
  %v10724 = vpop.f32.mrb[0].mxu0
  %v10725 = vadd.f32 0.0, %v10724
  %10726 = vmatprep.mubr.f32.mxu0 0.0
  %10727 = vmatmul.mubr.f32.gmra.mrb[0].mxu0 %v9765
  %v10728 = vpop.f32.mrb[0].mxu0
  %v10729 = vadd.f32 0.0, %v10728
  %v10730 = vpop.f32.mrb[0].mxu0
  %v10731 = vadd.f32 0.0, %v10730
  %10732 = vdwg.mxu0
  %10733 = vmatprep.subr.mxu0 %v9700
  %10734 = vmatpush1.msra.mxu0 %v9699
  %10735 = vmatprep.subr.mxu0 0.0
  %10736 = vmatpush1.msra.mxu0 0.0
  %10737 = vmatprep.subr.mxu0 0.0
  %10738 = vmatpush1.msra.mxu0 0.0
  %10739 = vmatprep.subr.mxu0 0.0
  %10740 = vmatpush1.msra.mxu0 0.0
  %10741 = vmatprep.subr.mxu0 0.0
  %10742 = vmatpush1.msra.mxu0 0.0
  %10743 = vmatprep.subr.mxu0 0.0
  %10744 = vmatpush1.msra.mxu0 0.0
  %10745 = vmatprep.subr.mxu0 0.0
  %10746 = vmatpush1.msra.mxu0 0.0
  %10747 = vmatprep.subr.mxu0 0.0
  %10748 = vmatpush1.msra.mxu0 0.0
  %10749 = vmatprep.subr.mxu0 0.0
  %10750 = vmatpush1.msra.mxu0 0.0
  %10751 = vmatprep.subr.mxu0 0.0
  %10752 = vmatpush1.msra.mxu0 0.0
  %10753 = vmatprep.subr.mxu0 0.0
  %10754 = vmatpush1.msra.mxu0 0.0
  %10755 = vmatprep.subr.mxu0 0.0
  %10756 = vmatpush1.msra.mxu0 0.0
  %10757 = vmatprep.subr.mxu0 0.0
  %10758 = vmatpush1.msra.mxu0 0.0
  %10759 = vmatprep.subr.mxu0 0.0
  %10760 = vmatpush1.msra.mxu0 0.0
  %10761 = vmatprep.subr.mxu0 0.0
  %10762 = vmatpush1.msra.mxu0 0.0
  %10763 = vmatprep.subr.mxu0 0.0
  %10764 = vmatpush1.msra.mxu0 0.0
  %10765 = vmatprep.subr.mxu0 0.0
  %10766 = vmatpush1.msra.mxu0 0.0
  %10767 = vmatprep.subr.mxu0 0.0
  %10768 = vmatpush1.msra.mxu0 0.0
  %10769 = vmatprep.subr.mxu0 0.0
  %10770 = vmatpush1.msra.mxu0 0.0
  %10771 = vmatprep.subr.mxu0 0.0
  %10772 = vmatpush1.msra.mxu0 0.0
  %10773 = vmatprep.subr.mxu0 0.0
  %10774 = vmatpush1.msra.mxu0 0.0
  %10775 = vmatprep.subr.mxu0 0.0
  %10776 = vmatpush1.msra.mxu0 0.0
  %10777 = vmatprep.subr.mxu0 0.0
  %10778 = vmatpush1.msra.mxu0 0.0
  %10779 = vmatprep.subr.mxu0 0.0
  %10780 = vmatpush1.msra.mxu0 0.0
  %10781 = vmatprep.subr.mxu0 0.0
  %10782 = vmatpush1.msra.mxu0 0.0
  %10783 = vmatprep.subr.mxu0 0.0
  %10784 = vmatpush1.msra.mxu0 0.0
  %10785 = vmatprep.subr.mxu0 0.0
  %10786 = vmatpush1.msra.mxu0 0.0
  %10787 = vmatprep.subr.mxu0 0.0
  %10788 = vmatpush1.msra.mxu0 0.0
  %10789 = vmatprep.subr.mxu0 0.0
  %10790 = vmatpush1.msra.mxu0 0.0
  %10791 = vmatprep.subr.mxu0 0.0
  %10792 = vmatpush1.msra.mxu0 0.0
  %10793 = vmatprep.subr.mxu0 0.0
  %10794 = vmatpush1.msra.mxu0 0.0
  %10795 = vmatprep.subr.mxu0 0.0
  %10796 = vmatpush1.msra.mxu0 0.0
  %10797 = vmatprep.mubr.f32.mxu0 0.0
  %10798 = vmatmul.mubr.f32.gmra.mrb[0].mxu0 %v9720
  %v10799 = vpop.f32.mrb[0].mxu0
  %v10800 = vadd.f32 0.0, %v10799
  %v10801 = vpop.f32.mrb[0].mxu0
  %v10802 = vadd.f32 0.0, %v10801
  %10803 = vmatprep.mubr.f32.mxu0 0.0
  %10804 = vmatmul.mubr.f32.gmra.mrb[0].mxu0 %v9723
  %v10805 = vpop.f32.mrb[0].mxu0
  %v10806 = vadd.f32 0.0, %v10805
  %v10807 = vpop.f32.mrb[0].mxu0
  %v10808 = vadd.f32 0.0, %v10807
  %10809 = vmatprep.mubr.f32.mxu0 0.0
  %10810 = vmatmul.mubr.f32.gmra.mrb[0].mxu0 %v9726
  %v10811 = vpop.f32.mrb[0].mxu0
  %v10812 = vadd.f32 0.0, %v10811
  %v10813 = vpop.f32.mrb[0].mxu0
  %v10814 = vadd.f32 0.0, %v10813
  %10815 = vmatprep.mubr.f32.mxu0 0.0
  %10816 = vmatmul.mubr.f32.gmra.mrb[0].mxu0 %v9729
  %v10817 = vpop.f32.mrb[0].mxu0
  %v10818 = vadd.f32 0.0, %v10817
  %v10819 = vpop.f32.mrb[0].mxu0
  %v10820 = vadd.f32 0.0, %v10819
  %10821 = vmatprep.mubr.f32.mxu0 0.0
  %10822 = vmatmul.mubr.f32.gmra.mrb[0].mxu0 %v9732
  %v10823 = vpop.f32.mrb[0].mxu0
  %v10824 = vadd.f32 0.0, %v10823
  %v10825 = vpop.f32.mrb[0].mxu0
  %v10826 = vadd.f32 0.0, %v10825
  %10827 = vmatprep.mubr.f32.mxu0 0.0
  %10828 = vmatmul.mubr.f32.gmra.mrb[0].mxu0 %v9735
  %v10829 = vpop.f32.mrb[0].mxu0
  %v10830 = vadd.f32 0.0, %v10829
  %v10831 = vpop.f32.mrb[0].mxu0
  %v10832 = vadd.f32 0.0, %v10831
  %10833 = vmatprep.mubr.f32.mxu0 0.0
  %10834 = vmatmul.mubr.f32.gmra.mrb[0].mxu0 %v9738
  %v10835 = vpop.f32.mrb[0].mxu0
  %v10836 = vadd.f32 0.0, %v10835
  %v10837 = vpop.f32.mrb[0].mxu0
  %v10838 = vadd.f32 0.0, %v10837
  %10839 = vmatprep.mubr.f32.mxu0 0.0
  %10840 = vmatmul.mubr.f32.gmra.mrb[0].mxu0 %v9741
  %v10841 = vpop.f32.mrb[0].mxu0
  %v10842 = vadd.f32 0.0, %v10841
  %v10843 = vpop.f32.mrb[0].mxu0
  %v10844 = vadd.f32 0.0, %v10843
  %10845 = vmatprep.mubr.f32.mxu0 0.0
  %10846 = vmatmul.mubr.f32.gmra.mrb[0].mxu0 %v9744
  %v10847 = vpop.f32.mrb[0].mxu0
  %v10848 = vadd.f32 0.0, %v10847
  %v10849 = vpop.f32.mrb[0].mxu0
  %v10850 = vadd.f32 0.0, %v10849
  %10851 = vmatprep.mubr.f32.mxu0 0.0
  %10852 = vmatmul.mubr.f32.gmra.mrb[0].mxu0 %v9747
  %v10853 = vpop.f32.mrb[0].mxu0
  %v10854 = vadd.f32 0.0, %v10853
  %v10855 = vpop.f32.mrb[0].mxu0
  %v10856 = vadd.f32 0.0, %v10855
  %10857 = vmatprep.mubr.f32.mxu0 0.0
  %10858 = vmatmul.mubr.f32.gmra.mrb[0].mxu0 %v9750
  %v10859 = vpop.f32.mrb[0].mxu0
  %v10860 = vadd.f32 0.0, %v10859
  %v10861 = vpop.f32.mrb[0].mxu0
  %v10862 = vadd.f32 0.0, %v10861
  %10863 = vmatprep.mubr.f32.mxu0 0.0
  %10864 = vmatmul.mubr.f32.gmra.mrb[0].mxu0 %v9753
  %v10865 = vpop.f32.mrb[0].mxu0
  %v10866 = vadd.f32 0.0, %v10865
  %v10867 = vpop.f32.mrb[0].mxu0
  %v10868 = vadd.f32 0.0, %v10867
  %10869 = vmatprep.mubr.f32.mxu0 0.0
  %10870 = vmatmul.mubr.f32.gmra.mrb[0].mxu0 %v9756
  %v10871 = vpop.f32.mrb[0].mxu0
  %v10872 = vadd.f32 0.0, %v10871
  %v10873 = vpop.f32.mrb[0].mxu0
  %v10874 = vadd.f32 0.0, %v10873
  %10875 = vmatprep.mubr.f32.mxu0 0.0
  %10876 = vmatmul.mubr.f32.gmra.mrb[0].mxu0 %v9759
  %v10877 = vpop.f32.mrb[0].mxu0
  %v10878 = vadd.f32 0.0, %v10877
  %v10879 = vpop.f32.mrb[0].mxu0
  %v10880 = vadd.f32 0.0, %v10879
  %10881 = vmatprep.mubr.f32.mxu0 0.0
  %10882 = vmatmul.mubr.f32.gmra.mrb[0].mxu0 %v9762
  %v10883 = vpop.f32.mrb[0].mxu0
  %v10884 = vadd.f32 0.0, %v10883
  %v10885 = vpop.f32.mrb[0].mxu0
  %v10886 = vadd.f32 0.0, %v10885
  %10887 = vmatprep.mubr.f32.mxu0 0.0
  %10888 = vmatmul.mubr.f32.gmra.mrb[0].mxu0 %v9765
  %v10889 = vpop.f32.mrb[0].mxu0
  %v10890 = vadd.f32 0.0, %v10889
  %v10891 = vpop.f32.mrb[0].mxu0
  %v10892 = vadd.f32 0.0, %v10891
  %10893 = vdwg.mxu0
  %10894 = vmatprep.subr.mxu0 %v9702
  %10895 = vmatpush1.msra.mxu0 %v9701
  %10896 = vmatprep.subr.mxu0 0.0
  %10897 = vmatpush1.msra.mxu0 0.0
  %10898 = vmatprep.subr.mxu0 0.0
  %10899 = vmatpush1.msra.mxu0 0.0
  %10900 = vmatprep.subr.mxu0 0.0
  %10901 = vmatpush1.msra.mxu0 0.0
  %10902 = vmatprep.subr.mxu0 0.0
  %10903 = vmatpush1.msra.mxu0 0.0
  %10904 = vmatprep.subr.mxu0 0.0
  %10905 = vmatpush1.msra.mxu0 0.0
  %10906 = vmatprep.subr.mxu0 0.0
  %10907 = vmatpush1.msra.mxu0 0.0
  %10908 = vmatprep.subr.mxu0 0.0
  %10909 = vmatpush1.msra.mxu0 0.0
  %10910 = vmatprep.subr.mxu0 0.0
  %10911 = vmatpush1.msra.mxu0 0.0
  %10912 = vmatprep.subr.mxu0 0.0
  %10913 = vmatpush1.msra.mxu0 0.0
  %10914 = vmatprep.subr.mxu0 0.0
  %10915 = vmatpush1.msra.mxu0 0.0
  %10916 = vmatprep.subr.mxu0 0.0
  %10917 = vmatpush1.msra.mxu0 0.0
  %10918 = vmatprep.subr.mxu0 0.0
  %10919 = vmatpush1.msra.mxu0 0.0
  %10920 = vmatprep.subr.mxu0 0.0
  %10921 = vmatpush1.msra.mxu0 0.0
  %10922 = vmatprep.subr.mxu0 0.0
  %10923 = vmatpush1.msra.mxu0 0.0
  %10924 = vmatprep.subr.mxu0 0.0
  %10925 = vmatpush1.msra.mxu0 0.0
  %10926 = vmatprep.subr.mxu0 0.0
  %10927 = vmatpush1.msra.mxu0 0.0
  %10928 = vmatprep.subr.mxu0 0.0
  %10929 = vmatpush1.msra.mxu0 0.0
  %10930 = vmatprep.subr.mxu0 0.0
  %10931 = vmatpush1.msra.mxu0 0.0
  %10932 = vmatprep.subr.mxu0 0.0
  %10933 = vmatpush1.msra.mxu0 0.0
  %10934 = vmatprep.subr.mxu0 0.0
  %10935 = vmatpush1.msra.mxu0 0.0
  %10936 = vmatprep.subr.mxu0 0.0
  %10937 = vmatpush1.msra.mxu0 0.0
  %10938 = vmatprep.subr.mxu0 0.0
  %10939 = vmatpush1.msra.mxu0 0.0
  %10940 = vmatprep.subr.mxu0 0.0
  %10941 = vmatpush1.msra.mxu0 0.0
  %10942 = vmatprep.subr.mxu0 0.0
  %10943 = vmatpush1.msra.mxu0 0.0
  %10944 = vmatprep.subr.mxu0 0.0
  %10945 = vmatpush1.msra.mxu0 0.0
  %10946 = vmatprep.subr.mxu0 0.0
  %10947 = vmatpush1.msra.mxu0 0.0
  %10948 = vmatprep.subr.mxu0 0.0
  %10949 = vmatpush1.msra.mxu0 0.0
  %10950 = vmatprep.subr.mxu0 0.0
  %10951 = vmatpush1.msra.mxu0 0.0
  %10952 = vmatprep.subr.mxu0 0.0
  %10953 = vmatpush1.msra.mxu0 0.0
  %10954 = vmatprep.subr.mxu0 0.0
  %10955 = vmatpush1.msra.mxu0 0.0
  %10956 = vmatprep.subr.mxu0 0.0
  %10957 = vmatpush1.msra.mxu0 0.0
  %10958 = vmatprep.mubr.f32.mxu0 0.0
  %10959 = vmatmul.mubr.f32.gmra.mrb[0].mxu0 %v9720
  %v10960 = vpop.f32.mrb[0].mxu0
  %v10961 = vadd.f32 0.0, %v10960
  %v10962 = vpop.f32.mrb[0].mxu0
  %v10963 = vadd.f32 0.0, %v10962
  %10964 = vmatprep.mubr.f32.mxu0 0.0
  %10965 = vmatmul.mubr.f32.gmra.mrb[0].mxu0 %v9723
  %v10966 = vpop.f32.mrb[0].mxu0
  %v10967 = vadd.f32 0.0, %v10966
  %v10968 = vpop.f32.mrb[0].mxu0
  %v10969 = vadd.f32 0.0, %v10968
  %10970 = vmatprep.mubr.f32.mxu0 0.0
  %10971 = vmatmul.mubr.f32.gmra.mrb[0].mxu0 %v9726
  %v10972 = vpop.f32.mrb[0].mxu0
  %v10973 = vadd.f32 0.0, %v10972
  %v10974 = vpop.f32.mrb[0].mxu0
  %v10975 = vadd.f32 0.0, %v10974
  %10976 = vmatprep.mubr.f32.mxu0 0.0
  %10977 = vmatmul.mubr.f32.gmra.mrb[0].mxu0 %v9729
  %v10978 = vpop.f32.mrb[0].mxu0
  %v10979 = vadd.f32 0.0, %v10978
  %v10980 = vpop.f32.mrb[0].mxu0
  %v10981 = vadd.f32 0.0, %v10980
  %10982 = vmatprep.mubr.f32.mxu0 0.0
  %10983 = vmatmul.mubr.f32.gmra.mrb[0].mxu0 %v9732
  %v10984 = vpop.f32.mrb[0].mxu0
  %v10985 = vadd.f32 0.0, %v10984
  %v10986 = vpop.f32.mrb[0].mxu0
  %v10987 = vadd.f32 0.0, %v10986
  %10988 = vmatprep.mubr.f32.mxu0 0.0
  %10989 = vmatmul.mubr.f32.gmra.mrb[0].mxu0 %v9735
  %v10990 = vpop.f32.mrb[0].mxu0
  %v10991 = vadd.f32 0.0, %v10990
  %v10992 = vpop.f32.mrb[0].mxu0
  %v10993 = vadd.f32 0.0, %v10992
  %10994 = vmatprep.mubr.f32.mxu0 0.0
  %10995 = vmatmul.mubr.f32.gmra.mrb[0].mxu0 %v9738
  %v10996 = vpop.f32.mrb[0].mxu0
  %v10997 = vadd.f32 0.0, %v10996
  %v10998 = vpop.f32.mrb[0].mxu0
  %v10999 = vadd.f32 0.0, %v10998
  %11000 = vmatprep.mubr.f32.mxu0 0.0
  %11001 = vmatmul.mubr.f32.gmra.mrb[0].mxu0 %v9741
  %v11002 = vpop.f32.mrb[0].mxu0
  %v11003 = vadd.f32 0.0, %v11002
  %v11004 = vpop.f32.mrb[0].mxu0
  %v11005 = vadd.f32 0.0, %v11004
  %11006 = vmatprep.mubr.f32.mxu0 0.0
  %11007 = vmatmul.mubr.f32.gmra.mrb[0].mxu0 %v9744
  %v11008 = vpop.f32.mrb[0].mxu0
  %v11009 = vadd.f32 0.0, %v11008
  %v11010 = vpop.f32.mrb[0].mxu0
  %v11011 = vadd.f32 0.0, %v11010
  %11012 = vmatprep.mubr.f32.mxu0 0.0
  %11013 = vmatmul.mubr.f32.gmra.mrb[0].mxu0 %v9747
  %v11014 = vpop.f32.mrb[0].mxu0
  %v11015 = vadd.f32 0.0, %v11014
  %v11016 = vpop.f32.mrb[0].mxu0
  %v11017 = vadd.f32 0.0, %v11016
  %11018 = vmatprep.mubr.f32.mxu0 0.0
  %11019 = vmatmul.mubr.f32.gmra.mrb[0].mxu0 %v9750
  %v11020 = vpop.f32.mrb[0].mxu0
  %v11021 = vadd.f32 0.0, %v11020
  %v11022 = vpop.f32.mrb[0].mxu0
  %v11023 = vadd.f32 0.0, %v11022
  %11024 = vmatprep.mubr.f32.mxu0 0.0
  %11025 = vmatmul.mubr.f32.gmra.mrb[0].mxu0 %v9753
  %v11026 = vpop.f32.mrb[0].mxu0
  %v11027 = vadd.f32 0.0, %v11026
  %v11028 = vpop.f32.mrb[0].mxu0
  %v11029 = vadd.f32 0.0, %v11028
  %11030 = vmatprep.mubr.f32.mxu0 0.0
  %11031 = vmatmul.mubr.f32.gmra.mrb[0].mxu0 %v9756
  %v11032 = vpop.f32.mrb[0].mxu0
  %v11033 = vadd.f32 0.0, %v11032
  %v11034 = vpop.f32.mrb[0].mxu0
  %v11035 = vadd.f32 0.0, %v11034
  %11036 = vmatprep.mubr.f32.mxu0 0.0
  %11037 = vmatmul.mubr.f32.gmra.mrb[0].mxu0 %v9759
  %v11038 = vpop.f32.mrb[0].mxu0
  %v11039 = vadd.f32 0.0, %v11038
  %v11040 = vpop.f32.mrb[0].mxu0
  %v11041 = vadd.f32 0.0, %v11040
  %11042 = vmatprep.mubr.f32.mxu0 0.0
  %11043 = vmatmul.mubr.f32.gmra.mrb[0].mxu0 %v9762
  %v11044 = vpop.f32.mrb[0].mxu0
  %v11045 = vadd.f32 0.0, %v11044
  %v11046 = vpop.f32.mrb[0].mxu0
  %v11047 = vadd.f32 0.0, %v11046
  %11048 = vmatprep.mubr.f32.mxu0 0.0
  %11049 = vmatmul.mubr.f32.gmra.mrb[0].mxu0 %v9765
  %v11050 = vpop.f32.mrb[0].mxu0
  %v11051 = vadd.f32 0.0, %v11050
  %v11052 = vpop.f32.mrb[0].mxu0
  %v11053 = vadd.f32 0.0, %v11052
  %11054 = vdwg.mxu0
  %11056 = vrot.lane.b32.xlu0 %v10361, 1
  %v11057 = vpop.permute.xlu0 %11056
  %11062 = vrot.lane.b32.xlu0 %v10198, 1
  %v11063 = vpop.permute.xlu0 %11062
  %11064 = vrot.lane.b32.xlu0 %v10200, 1
  %v11065 = vpop.permute.xlu0 %11064
  %11066 = vrot.lane.b32.xlu0 %v10359, 1
  %v11067 = vpop.permute.xlu0 %11066
  %v11068 = vsel %vm3272, %v11063, %v11065
  %v11069 = vsel %vm3272, %v11065, %v11067
  %v11070 = vsel %vm3272, %v11067, %v11057
  %v11075 = vsel %vm3272, %v11057, %v11063
  %v11076 = vmul.f32 %v11075, %v9116
  %v11077 = vmul.f32 %v11068, %v9120
  %v11078 = vmul.f32 %v11069, %v9124
  %v11079 = vmul.f32 %v11070, %v9128
  %v11080 = vadd.f32 %v9864, %v11076
  %v11081 = vadd.f32 %v9866, %v11077
  %v11082 = vadd.f32 %v10025, %v11078
  %v11083 = vadd.f32 %v10027, %v11079
  %11085 = vrot.lane.b32.xlu0 %v10719, 16
  %v11086 = vpop.permute.xlu0 %11085
  %11091 = vrot.lane.b32.xlu0 %v10556, 16
  %v11092 = vpop.permute.xlu0 %11091
  %11093 = vrot.lane.b32.xlu0 %v10558, 16
  %v11094 = vpop.permute.xlu0 %11093
  %11095 = vrot.lane.b32.xlu0 %v10717, 16
  %v11096 = vpop.permute.xlu0 %11095
  %v11097 = vsel %vm5320, %v11092, %v11094
  %v11098 = vsel %vm5320, %v11094, %v11096
  %v11099 = vsel %vm5320, %v11096, %v11086
  %v11104 = vsel %vm5320, %v11086, %v11092
  %v11105 = vmul.f32 %v11104, %v9161
  %v11106 = vmul.f32 %v11097, %v9165
  %v11107 = vmul.f32 %v11098, %v9169
  %v11108 = vmul.f32 %v11099, %v9173
  %v11109 = vadd.f32 %v11080, %v11105
  %v11110 = vadd.f32 %v11081, %v11106
  %v11111 = vadd.f32 %v11082, %v11107
  %v11112 = vadd.f32 %v11083, %v11108
  %11114 = vrot.lane.b32.xlu0 %v11053, 17
  %v11115 = vpop.permute.xlu0 %11114
  %11120 = vrot.lane.b32.xlu0 %v10890, 17
  %v11121 = vpop.permute.xlu0 %11120
  %11122 = vrot.lane.b32.xlu0 %v10892, 17
  %v11123 = vpop.permute.xlu0 %11122
  %11124 = vrot.lane.b32.xlu0 %v11051, 17
  %v11125 = vpop.permute.xlu0 %11124
  %v11126 = vsel %vm9195, %v11121, %v11123
  %v11127 = vsel %vm9195, %v11123, %v11125
  %v11128 = vsel %vm9195, %v11125, %v11115
  %v11133 = vsel %vm9195, %v11115, %v11121
  %v11134 = vmul.f32 %v11133, %v9207
  %v11135 = vmul.f32 %v11126, %v9211
  %v11136 = vmul.f32 %v11127, %v9215
  %v11137 = vmul.f32 %v11128, %v9219
  %v11138 = vadd.f32 %v11109, %v11134
  %v11139 = vadd.f32 %v11110, %v11135
  %v11140 = vadd.f32 %v11111, %v11136
  %v11141 = vadd.f32 %v11112, %v11137
  %11142 = vset.pattern.permute.xlu0 8
  %11143 = vperm.xlu0 %11142, %v41
  %v11144 = vpop.permute.xlu0 %11143
  %v11146 = vadd.f32 %v11138, %v11144
  %v11147 = vadd.f32 %v11139, %v11144
  %v11148 = vadd.f32 %v11140, %v11144
  %v11149 = vadd.f32 %v11141, %v11144
  %v11150 = vtanh.pop %v11146
  %v11151 = vtanh.pop %v11147
  %v11152 = vtanh.pop %v11148
  %v11153 = vtanh.pop %v11149
  %v11154 = vadd.f32 %v9870, %v10180
  %v11155 = vadd.f32 %v9872, %v10182
  %v11156 = vadd.f32 %v10031, %v10341
  %v11157 = vadd.f32 %v10033, %v10343
  %11159 = vrot.lane.b32.xlu0 %v10725, 16
  %v11160 = vpop.permute.xlu0 %11159
  %11165 = vrot.lane.b32.xlu0 %v10562, 16
  %v11166 = vpop.permute.xlu0 %11165
  %11167 = vrot.lane.b32.xlu0 %v10564, 16
  %v11168 = vpop.permute.xlu0 %11167
  %11169 = vrot.lane.b32.xlu0 %v10723, 16
  %v11170 = vpop.permute.xlu0 %11169
  %v11171 = vsel %vm5320, %v11166, %v11168
  %v11172 = vsel %vm5320, %v11168, %v11170
  %v11173 = vsel %vm5320, %v11170, %v11160
  %v11178 = vsel %vm5320, %v11160, %v11166
  %v11179 = vmul.f32 %v11178, %v9161
  %v11180 = vmul.f32 %v11171, %v9165
  %v11181 = vmul.f32 %v11172, %v9169
  %v11182 = vmul.f32 %v11173, %v9173
  %v11183 = vadd.f32 %v11154, %v11179
  %v11184 = vadd.f32 %v11155, %v11180
  %v11185 = vadd.f32 %v11156, %v11181
  %v11186 = vadd.f32 %v11157, %v11182
  %11188 = vrot.lane.b32.xlu0 %v11035, 16
  %v11189 = vpop.permute.xlu0 %11188
  %11194 = vrot.lane.b32.xlu0 %v10872, 16
  %v11195 = vpop.permute.xlu0 %11194
  %11196 = vrot.lane.b32.xlu0 %v10874, 16
  %v11197 = vpop.permute.xlu0 %11196
  %11198 = vrot.lane.b32.xlu0 %v11033, 16
  %v11199 = vpop.permute.xlu0 %11198
  %v11200 = vsel %vm5320, %v11195, %v11197
  %v11201 = vsel %vm5320, %v11197, %v11199
  %v11202 = vsel %vm5320, %v11199, %v11189
  %v11207 = vsel %vm5320, %v11189, %v11195
  %v11208 = vmul.f32 %v11207, %v9161
  %v11209 = vmul.f32 %v11200, %v9165
  %v11210 = vmul.f32 %v11201, %v9169
  %v11211 = vmul.f32 %v11202, %v9173
  %v11212 = vadd.f32 %v11183, %v11208
  %v11213 = vadd.f32 %v11184, %v11209
  %v11214 = vadd.f32 %v11185, %v11210
  %v11215 = vadd.f32 %v11186, %v11211
  %v11216 = vadd.f32 %v11212, %v11144
  %v11217 = vadd.f32 %v11213, %v11144
  %v11218 = vadd.f32 %v11214, %v11144
  %v11219 = vadd.f32 %v11215, %v11144
  %v11220 = vtanh.pop %v11216
  %v11221 = vtanh.pop %v11217
  %v11222 = vtanh.pop %v11218
  %v11223 = vtanh.pop %v11219
  %v11224 = vadd.f32 %v9876, %v10186
  %v11225 = vadd.f32 %v9878, %v10188
  %v11226 = vadd.f32 %v10037, %v10347
  %v11227 = vadd.f32 %v10039, %v10349
  %11229 = vrot.lane.b32.xlu0 %v10731, 16
  %v11230 = vpop.permute.xlu0 %11229
  %11235 = vrot.lane.b32.xlu0 %v10568, 16
  %v11236 = vpop.permute.xlu0 %11235
  %11237 = vrot.lane.b32.xlu0 %v10570, 16
  %v11238 = vpop.permute.xlu0 %11237
  %11239 = vrot.lane.b32.xlu0 %v10729, 16
  %v11240 = vpop.permute.xlu0 %11239
  %v11241 = vsel %vm5320, %v11236, %v11238
  %v11242 = vsel %vm5320, %v11238, %v11240
  %v11243 = vsel %vm5320, %v11240, %v11230
  %v11248 = vsel %vm5320, %v11230, %v11236
  %v11249 = vmul.f32 %v11248, %v9161
  %v11250 = vmul.f32 %v11241, %v9165
  %v11251 = vmul.f32 %v11242, %v9169
  %v11252 = vmul.f32 %v11243, %v9173
  %v11253 = vadd.f32 %v11224, %v11249
  %v11254 = vadd.f32 %v11225, %v11250
  %v11255 = vadd.f32 %v11226, %v11251
  %v11256 = vadd.f32 %v11227, %v11252
  %11258 = vrot.lane.b32.xlu0 %v11041, 16
  %v11259 = vpop.permute.xlu0 %11258
  %11264 = vrot.lane.b32.xlu0 %v10878, 16
  %v11265 = vpop.permute.xlu0 %11264
  %11266 = vrot.lane.b32.xlu0 %v10880, 16
  %v11267 = vpop.permute.xlu0 %11266
  %11268 = vrot.lane.b32.xlu0 %v11039, 16
  %v11269 = vpop.permute.xlu0 %11268
  %v11270 = vsel %vm5320, %v11265, %v11267
  %v11271 = vsel %vm5320, %v11267, %v11269
  %v11272 = vsel %vm5320, %v11269, %v11259
  %v11277 = vsel %vm5320, %v11259, %v11265
  %v11278 = vmul.f32 %v11277, %v9161
  %v11279 = vmul.f32 %v11270, %v9165
  %v11280 = vmul.f32 %v11271, %v9169
  %v11281 = vmul.f32 %v11272, %v9173
  %v11282 = vadd.f32 %v11253, %v11278
  %v11283 = vadd.f32 %v11254, %v11279
  %v11284 = vadd.f32 %v11255, %v11280
  %v11285 = vadd.f32 %v11256, %v11281
  %v11286 = vadd.f32 %v11282, %v11144
  %v11287 = vadd.f32 %v11283, %v11144
  %v11288 = vadd.f32 %v11284, %v11144
  %v11289 = vadd.f32 %v11285, %v11144
  %v11290 = vtanh.pop %v11286
  %v11291 = vtanh.pop %v11287
  %v11292 = vtanh.pop %v11288
  %v11293 = vtanh.pop %v11289
  %11298 = vrot.lane.b32.xlu0 %v9858, 127
  %v11299 = vpop.permute.xlu0 %11298
  %11300 = vrot.lane.b32.xlu0 %v9860, 127
  %v11301 = vpop.permute.xlu0 %11300
  %11302 = vrot.lane.b32.xlu0 %v10019, 127
  %v11303 = vpop.permute.xlu0 %11302
  %11304 = vrot.lane.b32.xlu0 %v10021, 127
  %v11305 = vpop.permute.xlu0 %11304
  %v11306 = vsel %vm7467, %v11299, %v11301
  %v11307 = vsel %vm7467, %v11301, %v11303
  %v11308 = vsel %vm7467, %v11303, %v11305
  %v11314 = vsel %vm7467, %v11305, %v11299
  %v11315 = vmul.f32 %v11306, %v9252
  %v11316 = vmul.f32 %v11307, %v9256
  %v11317 = vmul.f32 %v11308, %v9260
  %v11318 = vmul.f32 %v11314, %v9264
  %v11319 = vadd.f32 %v11315, %v10192
  %v11320 = vadd.f32 %v11316, %v10194
  %v11321 = vadd.f32 %v11317, %v10353
  %v11322 = vadd.f32 %v11318, %v10355
  %11324 = vrot.lane.b32.xlu0 %v10713, 15
  %v11325 = vpop.permute.xlu0 %11324
  %11330 = vrot.lane.b32.xlu0 %v10550, 15
  %v11331 = vpop.permute.xlu0 %11330
  %11332 = vrot.lane.b32.xlu0 %v10552, 15
  %v11333 = vpop.permute.xlu0 %11332
  %11334 = vrot.lane.b32.xlu0 %v10711, 15
  %v11335 = vpop.permute.xlu0 %11334
  %v11336 = vsel %vm9315, %v11331, %v11333
  %v11337 = vsel %vm9315, %v11333, %v11335
  %v11338 = vsel %vm9315, %v11335, %v11325
  %v11343 = vsel %vm9315, %v11325, %v11331
  %v11344 = vmul.f32 %v11343, %v9327
  %v11345 = vmul.f32 %v11336, %v9331
  %v11346 = vmul.f32 %v11337, %v9335
  %v11347 = vmul.f32 %v11338, %v9339
  %v11348 = vadd.f32 %v11319, %v11344
  %v11349 = vadd.f32 %v11320, %v11345
  %v11350 = vadd.f32 %v11321, %v11346
  %v11351 = vadd.f32 %v11322, %v11347
  %11353 = vrot.lane.b32.xlu0 %v11047, 16
  %v11354 = vpop.permute.xlu0 %11353
  %11359 = vrot.lane.b32.xlu0 %v10884, 16
  %v11360 = vpop.permute.xlu0 %11359
  %11361 = vrot.lane.b32.xlu0 %v10886, 16
  %v11362 = vpop.permute.xlu0 %11361
  %11363 = vrot.lane.b32.xlu0 %v11045, 16
  %v11364 = vpop.permute.xlu0 %11363
  %v11365 = vsel %vm5320, %v11360, %v11362
  %v11366 = vsel %vm5320, %v11362, %v11364
  %v11367 = vsel %vm5320, %v11364, %v11354
  %v11372 = vsel %vm5320, %v11354, %v11360
  %v11373 = vmul.f32 %v11372, %v9161
  %v11374 = vmul.f32 %v11365, %v9165
  %v11375 = vmul.f32 %v11366, %v9169
  %v11376 = vmul.f32 %v11367, %v9173
  %v11377 = vadd.f32 %v11348, %v11373
  %v11378 = vadd.f32 %v11349, %v11374
  %v11379 = vadd.f32 %v11350, %v11375
  %v11380 = vadd.f32 %v11351, %v11376
  %v11381 = vadd.f32 %v11377, %v11144
  %v11382 = vadd.f32 %v11378, %v11144
  %v11383 = vadd.f32 %v11379, %v11144
  %v11384 = vadd.f32 %v11380, %v11144
  %v11385 = vtanh.pop %v11381
  %v11386 = vtanh.pop %v11382
  %v11387 = vtanh.pop %v11383
  %v11388 = vtanh.pop %v11384
  %11390 = vrot.lane.b32.xlu0 %v10385, 1
  %v11391 = vpop.permute.xlu0 %11390
  %11396 = vrot.lane.b32.xlu0 %v10222, 1
  %v11397 = vpop.permute.xlu0 %11396
  %11398 = vrot.lane.b32.xlu0 %v10224, 1
  %v11399 = vpop.permute.xlu0 %11398
  %11400 = vrot.lane.b32.xlu0 %v10383, 1
  %v11401 = vpop.permute.xlu0 %11400
  %v11402 = vsel %vm3272, %v11397, %v11399
  %v11403 = vsel %vm3272, %v11399, %v11401
  %v11404 = vsel %vm3272, %v11401, %v11391
  %v11409 = vsel %vm3272, %v11391, %v11397
  %v11410 = vmul.f32 %v11409, %v9116
  %v11411 = vmul.f32 %v11402, %v9120
  %v11412 = vmul.f32 %v11403, %v9124
  %v11413 = vmul.f32 %v11404, %v9128
  %v11414 = vadd.f32 %v9888, %v11410
  %v11415 = vadd.f32 %v9890, %v11411
  %v11416 = vadd.f32 %v10049, %v11412
  %v11417 = vadd.f32 %v10051, %v11413
  %v11418 = vadd.f32 %v11414, %v10484
  %v11419 = vadd.f32 %v11415, %v10486
  %v11420 = vadd.f32 %v11416, %v10645
  %v11421 = vadd.f32 %v11417, %v10647
  %11423 = vrot.lane.b32.xlu0 %v10981, 1
  %v11424 = vpop.permute.xlu0 %11423
  %11429 = vrot.lane.b32.xlu0 %v10818, 1
  %v11430 = vpop.permute.xlu0 %11429
  %11431 = vrot.lane.b32.xlu0 %v10820, 1
  %v11432 = vpop.permute.xlu0 %11431
  %11433 = vrot.lane.b32.xlu0 %v10979, 1
  %v11434 = vpop.permute.xlu0 %11433
  %v11435 = vsel %vm3272, %v11430, %v11432
  %v11436 = vsel %vm3272, %v11432, %v11434
  %v11437 = vsel %vm3272, %v11434, %v11424
  %v11442 = vsel %vm3272, %v11424, %v11430
  %v11443 = vmul.f32 %v11442, %v9116
  %v11444 = vmul.f32 %v11435, %v9120
  %v11445 = vmul.f32 %v11436, %v9124
  %v11446 = vmul.f32 %v11437, %v9128
  %v11447 = vadd.f32 %v11418, %v11443
  %v11448 = vadd.f32 %v11419, %v11444
  %v11449 = vadd.f32 %v11420, %v11445
  %v11450 = vadd.f32 %v11421, %v11446
  %v11451 = vadd.f32 %v11447, %v11144
  %v11452 = vadd.f32 %v11448, %v11144
  %v11453 = vadd.f32 %v11449, %v11144
  %v11454 = vadd.f32 %v11450, %v11144
  %v11455 = vtanh.pop %v11451
  %v11456 = vtanh.pop %v11452
  %v11457 = vtanh.pop %v11453
  %v11458 = vtanh.pop %v11454
  %v11459 = vadd.f32 %v9894, %v10204
  %v11460 = vadd.f32 %v9896, %v10206
  %v11461 = vadd.f32 %v10055, %v10365
  %v11462 = vadd.f32 %v10057, %v10367
  %v11463 = vadd.f32 %v11459, %v10490
  %v11464 = vadd.f32 %v11460, %v10492
  %v11465 = vadd.f32 %v11461, %v10651
  %v11466 = vadd.f32 %v11462, %v10653
  %v11467 = vadd.f32 %v11463, %v10800
  %v11468 = vadd.f32 %v11464, %v10802
  %v11469 = vadd.f32 %v11465, %v10961
  %v11470 = vadd.f32 %v11466, %v10963
  %v11471 = vadd.f32 %v11467, %v11144
  %v11472 = vadd.f32 %v11468, %v11144
  %v11473 = vadd.f32 %v11469, %v11144
  %v11474 = vadd.f32 %v11470, %v11144
  %v11475 = vtanh.pop %v11471
  %v11476 = vtanh.pop %v11472
  %v11477 = vtanh.pop %v11473
  %v11478 = vtanh.pop %v11474
  %v11479 = vadd.f32 %v9900, %v10210
  %v11480 = vadd.f32 %v9902, %v10212
  %v11481 = vadd.f32 %v10061, %v10371
  %v11482 = vadd.f32 %v10063, %v10373
  %v11483 = vadd.f32 %v11479, %v10496
  %v11484 = vadd.f32 %v11480, %v10498
  %v11485 = vadd.f32 %v11481, %v10657
  %v11486 = vadd.f32 %v11482, %v10659
  %v11487 = vadd.f32 %v11483, %v10806
  %v11488 = vadd.f32 %v11484, %v10808
  %v11489 = vadd.f32 %v11485, %v10967
  %v11490 = vadd.f32 %v11486, %v10969
  %v11491 = vadd.f32 %v11487, %v11144
  %v11492 = vadd.f32 %v11488, %v11144
  %v11493 = vadd.f32 %v11489, %v11144
  %v11494 = vadd.f32 %v11490, %v11144
  %v11495 = vtanh.pop %v11491
  %v11496 = vtanh.pop %v11492
  %v11497 = vtanh.pop %v11493
  %v11498 = vtanh.pop %v11494
  %11503 = vrot.lane.b32.xlu0 %v9882, 127
  %v11504 = vpop.permute.xlu0 %11503
  %11505 = vrot.lane.b32.xlu0 %v9884, 127
  %v11506 = vpop.permute.xlu0 %11505
  %11507 = vrot.lane.b32.xlu0 %v10043, 127
  %v11508 = vpop.permute.xlu0 %11507
  %11509 = vrot.lane.b32.xlu0 %v10045, 127
  %v11510 = vpop.permute.xlu0 %11509
  %v11511 = vsel %vm7467, %v11504, %v11506
  %v11512 = vsel %vm7467, %v11506, %v11508
  %v11513 = vsel %vm7467, %v11508, %v11510
  %v11519 = vsel %vm7467, %v11510, %v11504
  %v11520 = vmul.f32 %v11511, %v9252
  %v11521 = vmul.f32 %v11512, %v9256
  %v11522 = vmul.f32 %v11513, %v9260
  %v11523 = vmul.f32 %v11519, %v9264
  %v11524 = vadd.f32 %v11520, %v10216
  %v11525 = vadd.f32 %v11521, %v10218
  %v11526 = vadd.f32 %v11522, %v10377
  %v11527 = vadd.f32 %v11523, %v10379
  %11532 = vrot.lane.b32.xlu0 %v10478, 127
  %v11533 = vpop.permute.xlu0 %11532
  %11534 = vrot.lane.b32.xlu0 %v10480, 127
  %v11535 = vpop.permute.xlu0 %11534
  %11536 = vrot.lane.b32.xlu0 %v10639, 127
  %v11537 = vpop.permute.xlu0 %11536
  %11538 = vrot.lane.b32.xlu0 %v10641, 127
  %v11539 = vpop.permute.xlu0 %11538
  %v11540 = vsel %vm7467, %v11533, %v11535
  %v11541 = vsel %vm7467, %v11535, %v11537
  %v11542 = vsel %vm7467, %v11537, %v11539
  %v11548 = vsel %vm7467, %v11539, %v11533
  %v11549 = vmul.f32 %v11540, %v9252
  %v11550 = vmul.f32 %v11541, %v9256
  %v11551 = vmul.f32 %v11542, %v9260
  %v11552 = vmul.f32 %v11548, %v9264
  %v11553 = vadd.f32 %v11524, %v11549
  %v11554 = vadd.f32 %v11525, %v11550
  %v11555 = vadd.f32 %v11526, %v11551
  %v11556 = vadd.f32 %v11527, %v11552
  %v11557 = vadd.f32 %v11553, %v10812
  %v11558 = vadd.f32 %v11554, %v10814
  %v11559 = vadd.f32 %v11555, %v10973
  %v11560 = vadd.f32 %v11556, %v10975
  %v11561 = vadd.f32 %v11557, %v11144
  %v11562 = vadd.f32 %v11558, %v11144
  %v11563 = vadd.f32 %v11559, %v11144
  %v11564 = vadd.f32 %v11560, %v11144
  %v11565 = vtanh.pop %v11561
  %v11566 = vtanh.pop %v11562
  %v11567 = vtanh.pop %v11563
  %v11568 = vtanh.pop %v11564
  %11570 = vrot.lane.b32.xlu0 %v10409, 1
  %v11571 = vpop.permute.xlu0 %11570
  %11576 = vrot.lane.b32.xlu0 %v10246, 1
  %v11577 = vpop.permute.xlu0 %11576
  %11578 = vrot.lane.b32.xlu0 %v10248, 1
  %v11579 = vpop.permute.xlu0 %11578
  %11580 = vrot.lane.b32.xlu0 %v10407, 1
  %v11581 = vpop.permute.xlu0 %11580
  %v11582 = vsel %vm3272, %v11577, %v11579
  %v11583 = vsel %vm3272, %v11579, %v11581
  %v11584 = vsel %vm3272, %v11581, %v11571
  %v11589 = vsel %vm3272, %v11571, %v11577
  %v11590 = vmul.f32 %v11589, %v9116
  %v11591 = vmul.f32 %v11582, %v9120
  %v11592 = vmul.f32 %v11583, %v9124
  %v11593 = vmul.f32 %v11584, %v9128
  %v11594 = vadd.f32 %v9912, %v11590
  %v11595 = vadd.f32 %v9914, %v11591
  %v11596 = vadd.f32 %v10073, %v11592
  %v11597 = vadd.f32 %v10075, %v11593
  %v11598 = vadd.f32 %v11594, %v10508
  %v11599 = vadd.f32 %v11595, %v10510
  %v11600 = vadd.f32 %v11596, %v10669
  %v11601 = vadd.f32 %v11597, %v10671
  %11603 = vrot.lane.b32.xlu0 %v11005, 1
  %v11604 = vpop.permute.xlu0 %11603
  %11609 = vrot.lane.b32.xlu0 %v10842, 1
  %v11610 = vpop.permute.xlu0 %11609
  %11611 = vrot.lane.b32.xlu0 %v10844, 1
  %v11612 = vpop.permute.xlu0 %11611
  %11613 = vrot.lane.b32.xlu0 %v11003, 1
  %v11614 = vpop.permute.xlu0 %11613
  %v11615 = vsel %vm3272, %v11610, %v11612
  %v11616 = vsel %vm3272, %v11612, %v11614
  %v11617 = vsel %vm3272, %v11614, %v11604
  %v11622 = vsel %vm3272, %v11604, %v11610
  %v11623 = vmul.f32 %v11622, %v9116
  %v11624 = vmul.f32 %v11615, %v9120
  %v11625 = vmul.f32 %v11616, %v9124
  %v11626 = vmul.f32 %v11617, %v9128
  %v11627 = vadd.f32 %v11598, %v11623
  %v11628 = vadd.f32 %v11599, %v11624
  %v11629 = vadd.f32 %v11600, %v11625
  %v11630 = vadd.f32 %v11601, %v11626
  %v11631 = vadd.f32 %v11627, %v11144
  %v11632 = vadd.f32 %v11628, %v11144
  %v11633 = vadd.f32 %v11629, %v11144
  %v11634 = vadd.f32 %v11630, %v11144
  %v11635 = vtanh.pop %v11631
  %v11636 = vtanh.pop %v11632
  %v11637 = vtanh.pop %v11633
  %v11638 = vtanh.pop %v11634
  %v11639 = vadd.f32 %v9918, %v10228
  %v11640 = vadd.f32 %v9920, %v10230
  %v11641 = vadd.f32 %v10079, %v10389
  %v11642 = vadd.f32 %v10081, %v10391
  %v11643 = vadd.f32 %v11639, %v10514
  %v11644 = vadd.f32 %v11640, %v10516
  %v11645 = vadd.f32 %v11641, %v10675
  %v11646 = vadd.f32 %v11642, %v10677
  %v11647 = vadd.f32 %v11643, %v10824
  %v11648 = vadd.f32 %v11644, %v10826
  %v11649 = vadd.f32 %v11645, %v10985
  %v11650 = vadd.f32 %v11646, %v10987
  %v11651 = vadd.f32 %v11647, %v11144
  %v11652 = vadd.f32 %v11648, %v11144
  %v11653 = vadd.f32 %v11649, %v11144
  %v11654 = vadd.f32 %v11650, %v11144
  %v11655 = vtanh.pop %v11651
  %v11656 = vtanh.pop %v11652
  %v11657 = vtanh.pop %v11653
  %v11658 = vtanh.pop %v11654
  %v11659 = vadd.f32 %v9924, %v10234
  %v11660 = vadd.f32 %v9926, %v10236
  %v11661 = vadd.f32 %v10085, %v10395
  %v11662 = vadd.f32 %v10087, %v10397
  %v11663 = vadd.f32 %v11659, %v10520
  %v11664 = vadd.f32 %v11660, %v10522
  %v11665 = vadd.f32 %v11661, %v10681
  %v11666 = vadd.f32 %v11662, %v10683
  %v11667 = vadd.f32 %v11663, %v10830
  %v11668 = vadd.f32 %v11664, %v10832
  %v11669 = vadd.f32 %v11665, %v10991
  %v11670 = vadd.f32 %v11666, %v10993
  %v11671 = vadd.f32 %v11667, %v11144
  %v11672 = vadd.f32 %v11668, %v11144
  %v11673 = vadd.f32 %v11669, %v11144
  %v11674 = vadd.f32 %v11670, %v11144
  %v11675 = vtanh.pop %v11671
  %v11676 = vtanh.pop %v11672
  %v11677 = vtanh.pop %v11673
  %v11678 = vtanh.pop %v11674
  %11683 = vrot.lane.b32.xlu0 %v9906, 127
  %v11684 = vpop.permute.xlu0 %11683
  %11685 = vrot.lane.b32.xlu0 %v9908, 127
  %v11686 = vpop.permute.xlu0 %11685
  %11687 = vrot.lane.b32.xlu0 %v10067, 127
  %v11688 = vpop.permute.xlu0 %11687
  %11689 = vrot.lane.b32.xlu0 %v10069, 127
  %v11690 = vpop.permute.xlu0 %11689
  %v11691 = vsel %vm7467, %v11684, %v11686
  %v11692 = vsel %vm7467, %v11686, %v11688
  %v11693 = vsel %vm7467, %v11688, %v11690
  %v11699 = vsel %vm7467, %v11690, %v11684
  %v11700 = vmul.f32 %v11691, %v9252
  %v11701 = vmul.f32 %v11692, %v9256
  %v11702 = vmul.f32 %v11693, %v9260
  %v11703 = vmul.f32 %v11699, %v9264
  %v11704 = vadd.f32 %v11700, %v10240
  %v11705 = vadd.f32 %v11701, %v10242
  %v11706 = vadd.f32 %v11702, %v10401
  %v11707 = vadd.f32 %v11703, %v10403
  %11712 = vrot.lane.b32.xlu0 %v10502, 127
  %v11713 = vpop.permute.xlu0 %11712
  %11714 = vrot.lane.b32.xlu0 %v10504, 127
  %v11715 = vpop.permute.xlu0 %11714
  %11716 = vrot.lane.b32.xlu0 %v10663, 127
  %v11717 = vpop.permute.xlu0 %11716
  %11718 = vrot.lane.b32.xlu0 %v10665, 127
  %v11719 = vpop.permute.xlu0 %11718
  %v11720 = vsel %vm7467, %v11713, %v11715
  %v11721 = vsel %vm7467, %v11715, %v11717
  %v11722 = vsel %vm7467, %v11717, %v11719
  %v11728 = vsel %vm7467, %v11719, %v11713
  %v11729 = vmul.f32 %v11720, %v9252
  %v11730 = vmul.f32 %v11721, %v9256
  %v11731 = vmul.f32 %v11722, %v9260
  %v11732 = vmul.f32 %v11728, %v9264
  %v11733 = vadd.f32 %v11704, %v11729
  %v11734 = vadd.f32 %v11705, %v11730
  %v11735 = vadd.f32 %v11706, %v11731
  %v11736 = vadd.f32 %v11707, %v11732
  %v11737 = vadd.f32 %v11733, %v10836
  %v11738 = vadd.f32 %v11734, %v10838
  %v11739 = vadd.f32 %v11735, %v10997
  %v11740 = vadd.f32 %v11736, %v10999
  %v11741 = vadd.f32 %v11737, %v11144
  %v11742 = vadd.f32 %v11738, %v11144
  %v11743 = vadd.f32 %v11739, %v11144
  %v11744 = vadd.f32 %v11740, %v11144
  %v11745 = vtanh.pop %v11741
  %v11746 = vtanh.pop %v11742
  %v11747 = vtanh.pop %v11743
  %v11748 = vtanh.pop %v11744
  %11753 = vrot.lane.b32.xlu0 %v9840, 112
  %v11754 = vpop.permute.xlu0 %11753
  %11755 = vrot.lane.b32.xlu0 %v9842, 112
  %v11756 = vpop.permute.xlu0 %11755
  %11757 = vrot.lane.b32.xlu0 %v10001, 112
  %v11758 = vpop.permute.xlu0 %11757
  %11759 = vrot.lane.b32.xlu0 %v10003, 112
  %v11760 = vpop.permute.xlu0 %11759
  %v11761 = vsel %vm9389, %v11754, %v11756
  %v11762 = vsel %vm9389, %v11756, %v11758
  %v11763 = vsel %vm9389, %v11758, %v11760
  %v11769 = vsel %vm9389, %v11760, %v11754
  %v11770 = vmul.f32 %v11761, %v9402
  %v11771 = vmul.f32 %v11762, %v9406
  %v11772 = vmul.f32 %v11763, %v9410
  %v11773 = vmul.f32 %v11769, %v9414
  %11778 = vrot.lane.b32.xlu0 %v10174, 113
  %v11779 = vpop.permute.xlu0 %11778
  %11780 = vrot.lane.b32.xlu0 %v10176, 113
  %v11781 = vpop.permute.xlu0 %11780
  %11782 = vrot.lane.b32.xlu0 %v10335, 113
  %v11783 = vpop.permute.xlu0 %11782
  %11784 = vrot.lane.b32.xlu0 %v10337, 113
  %v11785 = vpop.permute.xlu0 %11784
  %v11786 = vsel %vm9435, %v11779, %v11781
  %v11787 = vsel %vm9435, %v11781, %v11783
  %v11788 = vsel %vm9435, %v11783, %v11785
  %v11794 = vsel %vm9435, %v11785, %v11779
  %v11795 = vmul.f32 %v11786, %v9448
  %v11796 = vmul.f32 %v11787, %v9452
  %v11797 = vmul.f32 %v11788, %v9456
  %v11798 = vmul.f32 %v11794, %v9460
  %v11799 = vadd.f32 %v11770, %v11795
  %v11800 = vadd.f32 %v11771, %v11796
  %v11801 = vadd.f32 %v11772, %v11797
  %v11802 = vadd.f32 %v11773, %v11798
  %v11803 = vadd.f32 %v11799, %v10532
  %v11804 = vadd.f32 %v11800, %v10534
  %v11805 = vadd.f32 %v11801, %v10693
  %v11806 = vadd.f32 %v11802, %v10695
  %11808 = vrot.lane.b32.xlu0 %v11029, 1
  %v11809 = vpop.permute.xlu0 %11808
  %11814 = vrot.lane.b32.xlu0 %v10866, 1
  %v11815 = vpop.permute.xlu0 %11814
  %11816 = vrot.lane.b32.xlu0 %v10868, 1
  %v11817 = vpop.permute.xlu0 %11816
  %11818 = vrot.lane.b32.xlu0 %v11027, 1
  %v11819 = vpop.permute.xlu0 %11818
  %v11820 = vsel %vm3272, %v11815, %v11817
  %v11821 = vsel %vm3272, %v11817, %v11819
  %v11822 = vsel %vm3272, %v11819, %v11809
  %v11827 = vsel %vm3272, %v11809, %v11815
  %v11828 = vmul.f32 %v11827, %v9116
  %v11829 = vmul.f32 %v11820, %v9120
  %v11830 = vmul.f32 %v11821, %v9124
  %v11831 = vmul.f32 %v11822, %v9128
  %v11832 = vadd.f32 %v11803, %v11828
  %v11833 = vadd.f32 %v11804, %v11829
  %v11834 = vadd.f32 %v11805, %v11830
  %v11835 = vadd.f32 %v11806, %v11831
  %v11836 = vadd.f32 %v11832, %v11144
  %v11837 = vadd.f32 %v11833, %v11144
  %v11838 = vadd.f32 %v11834, %v11144
  %v11839 = vadd.f32 %v11835, %v11144
  %v11840 = vtanh.pop %v11836
  %v11841 = vtanh.pop %v11837
  %v11842 = vtanh.pop %v11838
  %v11843 = vtanh.pop %v11839
  %11848 = vrot.lane.b32.xlu0 %v9846, 112
  %v11849 = vpop.permute.xlu0 %11848
  %11850 = vrot.lane.b32.xlu0 %v9848, 112
  %v11851 = vpop.permute.xlu0 %11850
  %11852 = vrot.lane.b32.xlu0 %v10007, 112
  %v11853 = vpop.permute.xlu0 %11852
  %11854 = vrot.lane.b32.xlu0 %v10009, 112
  %v11855 = vpop.permute.xlu0 %11854
  %v11856 = vsel %vm9389, %v11849, %v11851
  %v11857 = vsel %vm9389, %v11851, %v11853
  %v11858 = vsel %vm9389, %v11853, %v11855
  %v11864 = vsel %vm9389, %v11855, %v11849
  %v11865 = vmul.f32 %v11856, %v9402
  %v11866 = vmul.f32 %v11857, %v9406
  %v11867 = vmul.f32 %v11858, %v9410
  %v11868 = vmul.f32 %v11864, %v9414
  %11873 = vrot.lane.b32.xlu0 %v10156, 112
  %v11874 = vpop.permute.xlu0 %11873
  %11875 = vrot.lane.b32.xlu0 %v10158, 112
  %v11876 = vpop.permute.xlu0 %11875
  %11877 = vrot.lane.b32.xlu0 %v10317, 112
  %v11878 = vpop.permute.xlu0 %11877
  %11879 = vrot.lane.b32.xlu0 %v10319, 112
  %v11880 = vpop.permute.xlu0 %11879
  %v11881 = vsel %vm9389, %v11874, %v11876
  %v11882 = vsel %vm9389, %v11876, %v11878
  %v11883 = vsel %vm9389, %v11878, %v11880
  %v11889 = vsel %vm9389, %v11880, %v11874
  %v11890 = vmul.f32 %v11881, %v9402
  %v11891 = vmul.f32 %v11882, %v9406
  %v11892 = vmul.f32 %v11883, %v9410
  %v11893 = vmul.f32 %v11889, %v9414
  %v11894 = vadd.f32 %v11865, %v11890
  %v11895 = vadd.f32 %v11866, %v11891
  %v11896 = vadd.f32 %v11867, %v11892
  %v11897 = vadd.f32 %v11868, %v11893
  %v11898 = vadd.f32 %v11894, %v10538
  %v11899 = vadd.f32 %v11895, %v10540
  %v11900 = vadd.f32 %v11896, %v10699
  %v11901 = vadd.f32 %v11897, %v10701
  %v11902 = vadd.f32 %v11898, %v10848
  %v11903 = vadd.f32 %v11899, %v10850
  %v11904 = vadd.f32 %v11900, %v11009
  %v11905 = vadd.f32 %v11901, %v11011
  %v11906 = vadd.f32 %v11902, %v11144
  %v11907 = vadd.f32 %v11903, %v11144
  %v11908 = vadd.f32 %v11904, %v11144
  %v11909 = vadd.f32 %v11905, %v11144
  %v11910 = vtanh.pop %v11906
  %v11911 = vtanh.pop %v11907
  %v11912 = vtanh.pop %v11908
  %v11913 = vtanh.pop %v11909
  %11918 = vrot.lane.b32.xlu0 %v9852, 112
  %v11919 = vpop.permute.xlu0 %11918
  %11920 = vrot.lane.b32.xlu0 %v9854, 112
  %v11921 = vpop.permute.xlu0 %11920
  %11922 = vrot.lane.b32.xlu0 %v10013, 112
  %v11923 = vpop.permute.xlu0 %11922
  %11924 = vrot.lane.b32.xlu0 %v10015, 112
  %v11925 = vpop.permute.xlu0 %11924
  %v11926 = vsel %vm9389, %v11919, %v11921
  %v11927 = vsel %vm9389, %v11921, %v11923
  %v11928 = vsel %vm9389, %v11923, %v11925
  %v11934 = vsel %vm9389, %v11925, %v11919
  %v11935 = vmul.f32 %v11926, %v9402
  %v11936 = vmul.f32 %v11927, %v9406
  %v11937 = vmul.f32 %v11928, %v9410
  %v11938 = vmul.f32 %v11934, %v9414
  %11943 = vrot.lane.b32.xlu0 %v10162, 112
  %v11944 = vpop.permute.xlu0 %11943
  %11945 = vrot.lane.b32.xlu0 %v10164, 112
  %v11946 = vpop.permute.xlu0 %11945
  %11947 = vrot.lane.b32.xlu0 %v10323, 112
  %v11948 = vpop.permute.xlu0 %11947
  %11949 = vrot.lane.b32.xlu0 %v10325, 112
  %v11950 = vpop.permute.xlu0 %11949
  %v11951 = vsel %vm9389, %v11944, %v11946
  %v11952 = vsel %vm9389, %v11946, %v11948
  %v11953 = vsel %vm9389, %v11948, %v11950
  %v11959 = vsel %vm9389, %v11950, %v11944
  %v11960 = vmul.f32 %v11951, %v9402
  %v11961 = vmul.f32 %v11952, %v9406
  %v11962 = vmul.f32 %v11953, %v9410
  %v11963 = vmul.f32 %v11959, %v9414
  %v11964 = vadd.f32 %v11935, %v11960
  %v11965 = vadd.f32 %v11936, %v11961
  %v11966 = vadd.f32 %v11937, %v11962
  %v11967 = vadd.f32 %v11938, %v11963
  %v11968 = vadd.f32 %v11964, %v10544
  %v11969 = vadd.f32 %v11965, %v10546
  %v11970 = vadd.f32 %v11966, %v10705
  %v11971 = vadd.f32 %v11967, %v10707
  %v11972 = vadd.f32 %v11968, %v10854
  %v11973 = vadd.f32 %v11969, %v10856
  %v11974 = vadd.f32 %v11970, %v11015
  %v11975 = vadd.f32 %v11971, %v11017
  %v11976 = vadd.f32 %v11972, %v11144
  %v11977 = vadd.f32 %v11973, %v11144
  %v11978 = vadd.f32 %v11974, %v11144
  %v11979 = vadd.f32 %v11975, %v11144
  %v11980 = vtanh.pop %v11976
  %v11981 = vtanh.pop %v11977
  %v11982 = vtanh.pop %v11978
  %v11983 = vtanh.pop %v11979
  %11988 = vrot.lane.b32.xlu0 %v9834, 111
  %v11989 = vpop.permute.xlu0 %11988
  %11990 = vrot.lane.b32.xlu0 %v9836, 111
  %v11991 = vpop.permute.xlu0 %11990
  %11992 = vrot.lane.b32.xlu0 %v9995, 111
  %v11993 = vpop.permute.xlu0 %11992
  %11994 = vrot.lane.b32.xlu0 %v9997, 111
  %v11995 = vpop.permute.xlu0 %11994
  %v11996 = vsel %vm9539, %v11989, %v11991
  %v11997 = vsel %vm9539, %v11991, %v11993
  %v11998 = vsel %vm9539, %v11993, %v11995
  %v12004 = vsel %vm9539, %v11995, %v11989
  %v12005 = vmul.f32 %v11996, %v9552
  %v12006 = vmul.f32 %v11997, %v9556
  %v12007 = vmul.f32 %v11998, %v9560
  %v12008 = vmul.f32 %v12004, %v9564
  %12013 = vrot.lane.b32.xlu0 %v10168, 112
  %v12014 = vpop.permute.xlu0 %12013
  %12015 = vrot.lane.b32.xlu0 %v10170, 112
  %v12016 = vpop.permute.xlu0 %12015
  %12017 = vrot.lane.b32.xlu0 %v10329, 112
  %v12018 = vpop.permute.xlu0 %12017
  %12019 = vrot.lane.b32.xlu0 %v10331, 112
  %v12020 = vpop.permute.xlu0 %12019
  %v12021 = vsel %vm9389, %v12014, %v12016
  %v12022 = vsel %vm9389, %v12016, %v12018
  %v12023 = vsel %vm9389, %v12018, %v12020
  %v12029 = vsel %vm9389, %v12020, %v12014
  %v12030 = vmul.f32 %v12021, %v9402
  %v12031 = vmul.f32 %v12022, %v9406
  %v12032 = vmul.f32 %v12023, %v9410
  %v12033 = vmul.f32 %v12029, %v9414
  %v12034 = vadd.f32 %v12005, %v12030
  %v12035 = vadd.f32 %v12006, %v12031
  %v12036 = vadd.f32 %v12007, %v12032
  %v12037 = vadd.f32 %v12008, %v12033
  %12042 = vrot.lane.b32.xlu0 %v10526, 127
  %v12043 = vpop.permute.xlu0 %12042
  %12044 = vrot.lane.b32.xlu0 %v10528, 127
  %v12045 = vpop.permute.xlu0 %12044
  %12046 = vrot.lane.b32.xlu0 %v10687, 127
  %v12047 = vpop.permute.xlu0 %12046
  %12048 = vrot.lane.b32.xlu0 %v10689, 127
  %v12049 = vpop.permute.xlu0 %12048
  %v12050 = vsel %vm7467, %v12043, %v12045
  %v12051 = vsel %vm7467, %v12045, %v12047
  %v12052 = vsel %vm7467, %v12047, %v12049
  %v12058 = vsel %vm7467, %v12049, %v12043
  %v12059 = vmul.f32 %v12050, %v9252
  %v12060 = vmul.f32 %v12051, %v9256
  %v12061 = vmul.f32 %v12052, %v9260
  %v12062 = vmul.f32 %v12058, %v9264
  %v12063 = vadd.f32 %v12034, %v12059
  %v12064 = vadd.f32 %v12035, %v12060
  %v12065 = vadd.f32 %v12036, %v12061
  %v12066 = vadd.f32 %v12037, %v12062
  %v12067 = vadd.f32 %v12063, %v10860
  %v12068 = vadd.f32 %v12064, %v10862
  %v12069 = vadd.f32 %v12065, %v11021
  %v12070 = vadd.f32 %v12066, %v11023
  %v12071 = vadd.f32 %v12067, %v11144
  %v12072 = vadd.f32 %v12068, %v11144
  %v12073 = vadd.f32 %v12069, %v11144
  %v12074 = vadd.f32 %v12070, %v11144
  %v12075 = vtanh.pop %v12071
  %v12076 = vtanh.pop %v12072
  %v12077 = vtanh.pop %v12073
  %v12078 = vtanh.pop %v12074
  %12079 = vst [vmem:[%s12] sm:$0xff] %v11150
  %12080 = vst [vmem:[%s12 + $0x8] sm:$0xff] %v11151
  %12081 = vst [vmem:[%s12 + $0x10] sm:$0xff] %v11152
  %12082 = vst [vmem:[%s12 + $0x18] sm:$0xff] %v11153
  %12083 = vst [vmem:[%s12 + $0x20] sm:$0xff] %v11220
  %12084 = vst [vmem:[%s12 + $0x28] sm:$0xff] %v11221
  %12085 = vst [vmem:[%s12 + $0x30] sm:$0xff] %v11222
  %12086 = vst [vmem:[%s12 + $0x38] sm:$0xff] %v11223
  %12087 = vst [vmem:[%s12 + $0x40] sm:$0xff] %v11290
  %12088 = vst [vmem:[%s12 + $0x48] sm:$0xff] %v11291
  %12089 = vst [vmem:[%s12 + $0x50] sm:$0xff] %v11292
  %12090 = vst [vmem:[%s12 + $0x58] sm:$0xff] %v11293
  %12091 = vst [vmem:[%s12 + $0x60] sm:$0xff] %v11385
  %12092 = vst [vmem:[%s12 + $0x68] sm:$0xff] %v11386
  %12093 = vst [vmem:[%s12 + $0x70] sm:$0xff] %v11387
  %12094 = vst [vmem:[%s12 + $0x78] sm:$0xff] %v11388
  %12095 = vst [vmem:[%s12 + $0x80] sm:$0xff] %v11455
  %12096 = vst [vmem:[%s12 + $0x88] sm:$0xff] %v11456
  %12097 = vst [vmem:[%s12 + $0x90] sm:$0xff] %v11457
  %12098 = vst [vmem:[%s12 + $0x98] sm:$0xff] %v11458
  %12099 = vst [vmem:[%s12 + $0xa0] sm:$0xff] %v11475
  %12100 = vst [vmem:[%s12 + $0xa8] sm:$0xff] %v11476
  %12101 = vst [vmem:[%s12 + $0xb0] sm:$0xff] %v11477
  %12102 = vst [vmem:[%s12 + $0xb8] sm:$0xff] %v11478
  %12103 = vst [vmem:[%s12 + $0xc0] sm:$0xff] %v11495
  %12104 = vst [vmem:[%s12 + $0xc8] sm:$0xff] %v11496
  %12105 = vst [vmem:[%s12 + $0xd0] sm:$0xff] %v11497
  %12106 = vst [vmem:[%s12 + $0xd8] sm:$0xff] %v11498
  %12107 = vst [vmem:[%s12 + $0xe0] sm:$0xff] %v11565
  %12108 = vst [vmem:[%s12 + $0xe8] sm:$0xff] %v11566
  %12109 = vst [vmem:[%s12 + $0xf0] sm:$0xff] %v11567
  %12110 = vst [vmem:[%s12 + $0xf8] sm:$0xff] %v11568
  %12111 = vst [vmem:[%s12 + $0x100] sm:$0xff] %v11635
  %12112 = vst [vmem:[%s12 + $0x108] sm:$0xff] %v11636
  %12113 = vst [vmem:[%s12 + $0x110] sm:$0xff] %v11637
  %12114 = vst [vmem:[%s12 + $0x118] sm:$0xff] %v11638
  %12115 = vst [vmem:[%s12 + $0x120] sm:$0xff] %v11655
  %12116 = vst [vmem:[%s12 + $0x128] sm:$0xff] %v11656
  %12117 = vst [vmem:[%s12 + $0x130] sm:$0xff] %v11657
  %12118 = vst [vmem:[%s12 + $0x138] sm:$0xff] %v11658
  %12119 = vst [vmem:[%s12 + $0x140] sm:$0xff] %v11675
  %12120 = vst [vmem:[%s12 + $0x148] sm:$0xff] %v11676
  %12121 = vst [vmem:[%s12 + $0x150] sm:$0xff] %v11677
  %12122 = vst [vmem:[%s12 + $0x158] sm:$0xff] %v11678
  %12123 = vst [vmem:[%s12 + $0x160] sm:$0xff] %v11745
  %12124 = vst [vmem:[%s12 + $0x168] sm:$0xff] %v11746
  %12125 = vst [vmem:[%s12 + $0x170] sm:$0xff] %v11747
  %12126 = vst [vmem:[%s12 + $0x178] sm:$0xff] %v11748
  %12127 = vst [vmem:[%s12 + $0x180] sm:$0xff] %v11840
  %12128 = vst [vmem:[%s12 + $0x188] sm:$0xff] %v11841
  %12129 = vst [vmem:[%s12 + $0x190] sm:$0xff] %v11842
  %12130 = vst [vmem:[%s12 + $0x198] sm:$0xff] %v11843
  %12131 = vst [vmem:[%s12 + $0x1a0] sm:$0xff] %v11910
  %12132 = vst [vmem:[%s12 + $0x1a8] sm:$0xff] %v11911
  %12133 = vst [vmem:[%s12 + $0x1b0] sm:$0xff] %v11912
  %12134 = vst [vmem:[%s12 + $0x1b8] sm:$0xff] %v11913
  %12135 = vst [vmem:[%s12 + $0x1c0] sm:$0xff] %v11980
  %12136 = vst [vmem:[%s12 + $0x1c8] sm:$0xff] %v11981
  %12137 = vst [vmem:[%s12 + $0x1d0] sm:$0xff] %v11982
  %12138 = vst [vmem:[%s12 + $0x1d8] sm:$0xff] %v11983
  %12139 = vst [vmem:[%s12 + $0x1e0] sm:$0xff] %v12075
  %12140 = vst [vmem:[%s12 + $0x1e8] sm:$0xff] %v12076
  %12141 = vst [vmem:[%s12 + $0x1f0] sm:$0xff] %v12077
  %12142 = vst [vmem:[%s12 + $0x1f8] sm:$0xff] %v12078
  // Predicated region
  $region50: #{generator_forward.1} parent=0 // pred_check
    _
  $region51: #{generator_forward.1} parent=0 // pred_check_branch
    %12144 = sbr.rel (0) target = $region53
  $region52: #{generator_forward.1} parent=0 // pred_region
    _
  $region53: #{generator_forward.1} parent=0 // pred_fallthru
    _
  // Predicated region
  $region54: #{generator_forward.1} parent=0 // pred_check
    _
  $region55: #{generator_forward.1} parent=0 // pred_check_branch
    %12146 = sbr.rel (0) target = $region57
  $region56: #{generator_forward.1} parent=0 // pred_region
    _
  $region57: #{generator_forward.1} parent=0 // pred_fallthru
    _

</llo_original>
